<compile_context>
chip_gen: v6e
topology: v6e:2x2x1
jax: 0.10.0
libtpu: 0.0.40
codegen_flags: <defaults>
</compile_context>

<pallas_src>
import functools
import math

import jax
import jax.numpy as jnp
from jax.experimental import pallas as pl
from jax.experimental.pallas import tpu as pltpu

LN_EPS = 1e-6          # both LayerNorms in the module use eps=1e-6
NEG_INF = -1e18        # masked_fill value used by the module


def _layer_norm(x, w, b):
    # Single-pass LN: var = E[x^2] - mean^2 (halves the cross-lane reductions).
    mean = jnp.mean(x, axis=-1, keepdims=True)
    mean_sq = jnp.mean(x * x, axis=-1, keepdims=True)
    var = mean_sq - mean * mean
    return (x - mean) * jax.lax.rsqrt(var + LN_EPS) * w + b


def _gelu(x):
    # 0.5 * x * (1 + tanh(sqrt(2/pi) * (x + 0.044715 * x^3)))  (module's gelu)
    c = math.sqrt(2.0 / math.pi)
    return 0.5 * x * (1.0 + jnp.tanh(c * (x + 0.044715 * x * x * x)))


def _encoder_layer_kernel(heads, apply_input_ln,
                          x_ref, mask_ref,
                          w_qkv_ref, w_out_ref, w1_ref, w2_ref, vec_ref,
                          o_ref):
    """One grid step == `Bblk` full sequences (attention + FFN), flattened."""
    Bblk, S, D = x_ref.shape
    d_ff = w1_ref.shape[1]
    dh = D // heads
    G = Bblk * heads                            # attention batch = (seq, head)

    x = x_ref[...].reshape(Bblk * S, D)         # (M, D) flattened batch*seq

    vec = vec_ref[...]                          # (8, W) packed small vectors
    b_qkv = vec[0:1, 0:3 * D]
    b_out = vec[1:2, 0:D]
    b2    = vec[1:2, D:2 * D]
    ln1_w = vec[2:3, 0:D]
    ln1_b = vec[2:3, D:2 * D]
    ln2_w = vec[3:4, 0:D]
    ln2_b = vec[3:4, D:2 * D]
    b1    = vec[4:5, 0:d_ff]

    # --- TransformerEncoderLayer: optional input LayerNorm (iter != 0) ---
    xn = _layer_norm(x, ln1_w, ln1_b) if apply_input_ln else x

    # --- MultiHeadedAttention (self-attention, no cache) ---
    # Fused Q/K/V projection: one MXU matmul, M = Bblk*S rows, bf16 operands.
    qkv = jnp.dot(xn.astype(jnp.bfloat16), w_qkv_ref[...],
                  preferred_element_type=jnp.float32) + b_qkv      # (M, 3D) f32
    scale = 1.0 / math.sqrt(dh)
    q = qkv[:, 0:D] * scale
    k = qkv[:, D:2 * D]
    v = qkv[:, 2 * D:3 * D]

    def head_stack(t):
        # (M, D) -> (G, S, dh); all slices are (8,128)-aligned when dh % 128 == 0.
        parts = [t[b * S:(b + 1) * S, h * dh:(h + 1) * dh]
                 for b in range(Bblk) for h in range(heads)]
        return jnp.stack(parts, axis=0)

    qh = head_stack(q).astype(jnp.bfloat16)
    kh = head_stack(k).astype(jnp.bfloat16)
    vh = head_stack(v).astype(jnp.bfloat16)

    mask_rows = mask_ref[...]                   # (Bblk, 1, S) f32, 1 = masked key
    mask_g = jnp.stack([mask_rows[b] for b in range(Bblk) for _ in range(heads)],
                       axis=0)                  # (G, 1, S)

    # One batched matmul for all (seq, head) score matrices + ONE softmax.
    scores = jnp.einsum('gqd,gkd->gqk', qh, kh,
                        preferred_element_type=jnp.float32)        # (G, S, S)
    scores = jnp.where(mask_g > 0.0, NEG_INF, scores)              # masked_fill
    m = jnp.max(scores, axis=-1, keepdims=True)
    p = jnp.exp(scores - m)
    denom = jnp.sum(p, axis=-1, keepdims=True)
    p = p * pl.reciprocal(denom, approx=True)                      # EUP divide

    ctx_h = jnp.einsum('gqk,gkd->gqd', p.astype(jnp.bfloat16), vh,
                       preferred_element_type=jnp.float32)         # (G, S, dh)
    # Re-pack heads back into lane-aligned (M, D) (128-wide aligned concats).
    ctx = jnp.concatenate(
        [jnp.concatenate([ctx_h[b * heads + h] for h in range(heads)], axis=-1)
         for b in range(Bblk)], axis=0)                            # (M, D)

    attn_out = jnp.dot(ctx.astype(jnp.bfloat16), w_out_ref[...],
                       preferred_element_type=jnp.float32) + b_out
    out = attn_out + x              # dropout(context) + inputs  (dropout = id)

    # --- PositionwiseFeedForward (pre-LN, residual) ---
    on = _layer_norm(out, ln2_w, ln2_b)
    inter = _gelu(jnp.dot(on.astype(jnp.bfloat16), w1_ref[...],
                          preferred_element_type=jnp.float32) + b1)
    y = jnp.dot(inter.astype(jnp.bfloat16), w2_ref[...],
                preferred_element_type=jnp.float32) + b2 + out

    o_ref[...] = y.reshape(Bblk, S, D)


def transformer_encoder_layer_pallas(iter_, inputs, mask, params, *, heads,
                                     batch_block=None):
    """inputs: (B, S, D) f32; mask: (B, S), 1 = masked key.  Returns (B, S, D)."""
    B, S, D = inputs.shape
    w_qkv, w_out, w1, w2, vec_slab = params

    if batch_block is None:
        # Keep >= 2 grid steps so both v7x TensorCores get work; on v5e/v6e the
        # second step is just ~0.35us overhead.  Set batch_block=B to collapse.
        batch_block = max(1, B // 2)
    assert B % batch_block == 0
    grid_b = B // batch_block

    mask3 = mask.reshape(B, 1, S).astype(jnp.float32)

    kernel = functools.partial(_encoder_layer_kernel, heads, bool(iter_ != 0))

    grid_spec = pltpu.PrefetchScalarGridSpec(
        num_scalar_prefetch=0,
        grid=(grid_b,),
        in_specs=[
            pl.BlockSpec((batch_block, S, D), lambda b: (b, 0, 0)),   # inputs
            pl.BlockSpec((batch_block, 1, S), lambda b: (b, 0, 0)),   # mask
            pl.BlockSpec(w_qkv.shape, lambda b: (0, 0)),              # fused Wqkv (bf16)
            pl.BlockSpec(w_out.shape, lambda b: (0, 0)),              # Wout (bf16)
            pl.BlockSpec(w1.shape, lambda b: (0, 0)),                 # FFN W1 (bf16)
            pl.BlockSpec(w2.shape, lambda b: (0, 0)),                 # FFN W2 (bf16)
            pl.BlockSpec(vec_slab.shape, lambda b: (0, 0)),           # packed vectors
        ],
        out_specs=pl.BlockSpec((batch_block, S, D), lambda b: (b, 0, 0)),
    )

    return pl.pallas_call(
        kernel,
        out_shape=jax.ShapeDtypeStruct((B, S, D), jnp.float32),
        grid_spec=grid_spec,
        compiler_params=pltpu.CompilerParams(
            dimension_semantics=("parallel",)),     # batch axis -> megacore on v7x
    )(inputs, mask3, w_qkv, w_out, w1, w2, vec_slab)


# ----------------------------- pure-JAX reference ---------------------------
def transformer_encoder_layer_ref(iter_, inputs, mask, params, *, heads):
    w_qkv, w_out, w1, w2, vec = params
    B, S, D = inputs.shape
    d_ff = w1.shape[1]
    dh = D // heads
    bf16 = jnp.bfloat16

    b_qkv = vec[0:1, 0:3 * D]
    b_out = vec[1:2, 0:D]
    b2    = vec[1:2, D:2 * D]
    ln1_w, ln1_b = vec[2:3, 0:D], vec[2:3, D:2 * D]
    ln2_w, ln2_b = vec[3:4, 0:D], vec[3:4, D:2 * D]
    b1    = vec[4:5, 0:d_ff]

    x = inputs
    xn = _layer_norm(x, ln1_w, ln1_b) if iter_ != 0 else x

    qkv = jnp.einsum('bsd,df->bsf', xn.astype(bf16), w_qkv,
                     preferred_element_type=jnp.float32) + b_qkv
    scale = 1.0 / math.sqrt(dh)
    q = qkv[..., :D] * scale
    k = qkv[..., D:2 * D]
    v = qkv[..., 2 * D:]

    def shape_heads(t):                              # (B, S, D) -> (B, H, S, dh)
        return t.reshape(B, S, heads, dh).transpose(0, 2, 1, 3)

    qh = shape_heads(q).astype(bf16)
    kh = shape_heads(k).astype(bf16)
    vh = shape_heads(v).astype(bf16)
    scores = jnp.einsum('bhqd,bhkd->bhqk', qh, kh,
                        preferred_element_type=jnp.float32)
    m = (mask > 0)[:, None, None, :]                 # (B,1,1,S)
    scores = jnp.where(m, NEG_INF, scores)
    mx = jnp.max(scores, axis=-1, keepdims=True)
    p = jnp.exp(scores - mx)
    p = p / jnp.sum(p, axis=-1, keepdims=True)
    ctx = jnp.einsum('bhqk,bhkd->bhqd', p.astype(bf16), vh,
                     preferred_element_type=jnp.float32)
    ctx = ctx.transpose(0, 2, 1, 3).reshape(B, S, D)

    attn_out = jnp.einsum('bsd,de->bse', ctx.astype(bf16), w_out,
                          preferred_element_type=jnp.float32) + b_out
    out = attn_out + x
    on = _layer_norm(out, ln2_w, ln2_b)
    inter = _gelu(jnp.einsum('bsd,df->bsf', on.astype(bf16), w1,
                             preferred_element_type=jnp.float32) + b1)
    return jnp.einsum('bsf,fd->bsd', inter.astype(bf16), w2,
                      preferred_element_type=jnp.float32) + b2 + out


# ----------------------------- parameter init -------------------------------
def init_params(key, d_model, d_ff):
    ks = jax.random.split(key, 16)
    s = 1.0 / math.sqrt(d_model)
    sf = 1.0 / math.sqrt(d_ff)
    wq = jax.random.uniform(ks[0], (d_model, d_model), jnp.float32, -s, s)
    wk = jax.random.uniform(ks[1], (d_model, d_model), jnp.float32, -s, s)
    wv = jax.random.uniform(ks[2], (d_model, d_model), jnp.float32, -s, s)
    w_qkv = jnp.concatenate([wq, wk, wv], axis=1)               # (D, 3D), [Q|K|V]
    b_qkv = jax.random.uniform(ks[3], (1, 3 * d_model), jnp.float32, -s, s)
    w_out = jax.random.uniform(ks[4], (d_model, d_model), jnp.float32, -s, s)
    b_out = jax.random.uniform(ks[5], (1, d_model), jnp.float32, -s, s)
    w1 = jax.random.uniform(ks[6], (d_model, d_ff), jnp.float32, -s, s)
    b1 = jax.random.uniform(ks[7], (1, d_ff), jnp.float32, -s, s)
    w2 = jax.random.uniform(ks[8], (d_ff, d_model), jnp.float32, -sf, sf)
    b2 = jax.random.uniform(ks[9], (1, d_model), jnp.float32, -sf, sf)
    ln1_w = 1.0 + 0.05 * jax.random.normal(ks[10], (1, d_model), jnp.float32)
    ln1_b = 0.05 * jax.random.normal(ks[11], (1, d_model), jnp.float32)
    ln2_w = 1.0 + 0.05 * jax.random.normal(ks[12], (1, d_model), jnp.float32)
    ln2_b = 0.05 * jax.random.normal(ks[13], (1, d_model), jnp.float32)

    # Pack ALL small vectors into one (8, W) f32 slab (one DMA descriptor):
    #   row0: b_qkv | row1: [b_out | b2] | row2: [ln1_w | ln1_b]
    #   row3: [ln2_w | ln2_b] | row4: b1 | rows 5-7: pad
    slab_w = max(3 * d_model, d_ff)
    slab_w = ((slab_w + 127) // 128) * 128

    def pad_row(v):
        return jnp.pad(v, ((0, 0), (0, slab_w - v.shape[1])))

    vec_slab = jnp.concatenate([
        pad_row(b_qkv),
        pad_row(jnp.concatenate([b_out, b2], axis=1)),
        pad_row(jnp.concatenate([ln1_w, ln1_b], axis=1)),
        pad_row(jnp.concatenate([ln2_w, ln2_b], axis=1)),
        pad_row(b1),
        jnp.zeros((3, slab_w), jnp.float32),
    ], axis=0)                                                  # (8, slab_w)

    # MXU weights in bf16 (f32 accumulation via preferred_element_type).
    bf16 = jnp.bfloat16
    return (w_qkv.astype(bf16), w_out.astype(bf16),
            w1.astype(bf16), w2.astype(bf16), vec_slab)


if __name__ == "__main__":
    # dim_per_head = 512 / 4 = 128 -> all head slices are lane-aligned.
    BATCH, SEQ, HEADS, D_MODEL, D_FF = 4, 16, 4, 512, 1024

    key = jax.random.PRNGKey(0)
    kx, kp = jax.random.split(key)
    inputs = jax.random.normal(kx, (BATCH, SEQ, D_MODEL), jnp.float32)
    # Padding mask: 1 = masked key (trailing positions padded per sequence).
    valid_len = jnp.array([[SEQ], [SEQ - 3], [SEQ - 5], [SEQ - 7]], jnp.int32)
    mask = (jnp.arange(SEQ)[None, :] >= valid_len).astype(jnp.float32)  # (B, S)
    params = init_params(kp, D_MODEL, D_FF)

    for it in (0, 1):   # exercise both the no-LN (iter==0) and LN (iter!=0) paths
        y = transformer_encoder_layer_pallas(it, inputs, mask, params, heads=HEADS)
        jax.block_until_ready(y)
        y_ref = transformer_encoder_layer_ref(it, inputs, mask, params, heads=HEADS)
        assert y.shape == (BATCH, SEQ, D_MODEL)
        err = float(jnp.max(jnp.abs(y - y_ref)))
        # bf16 matmuls + approx reciprocal => loose-but-meaningful tolerance.
        assert jnp.allclose(y, y_ref, atol=2e-2, rtol=2e-2), f"iter={it} err={err}"

    print("KERNEL_OK")
</pallas_src>

<mosaic_0001>
module attributes {stable_mosaic.version = 11 : i64} {
  func.func @_encoder_layer_kernel(%arg0: i32, %arg1: memref<2x16x512xf32, #tpu.memory_space<vmem>>, %arg2: memref<2x1x16xf32, #tpu.memory_space<vmem>>, %arg3: memref<512x1536xbf16, #tpu.memory_space<vmem>>, %arg4: memref<512x512xbf16, #tpu.memory_space<vmem>>, %arg5: memref<512x1024xbf16, #tpu.memory_space<vmem>>, %arg6: memref<1024x512xbf16, #tpu.memory_space<vmem>>, %arg7: memref<8x1536xf32, #tpu.memory_space<vmem>>, %arg8: memref<2x16x512xf32, #tpu.memory_space<vmem>>) attributes {dimension_semantics = [#tpu.dimension_semantics<parallel>], iteration_bounds = array<i64: 2>, scalar_prefetch = 0 : i64, scratch_operands = 0 : i64, tpu.core_type = #tpu.core_type<tc>, window_params = [{transform_indices = @transform_0, window_bounds = array<i64: 2, 16, 512>}, {transform_indices = @transform_1, window_bounds = array<i64: 2, 1, 16>}, {pipeline_mode = #tpu.pipeline_mode<synchronous>, transform_indices = @transform_2, window_bounds = array<i64: 512, 1536>}, {pipeline_mode = #tpu.pipeline_mode<synchronous>, transform_indices = @transform_3, window_bounds = array<i64: 512, 512>}, {pipeline_mode = #tpu.pipeline_mode<synchronous>, transform_indices = @transform_4, window_bounds = array<i64: 512, 1024>}, {pipeline_mode = #tpu.pipeline_mode<synchronous>, transform_indices = @transform_5, window_bounds = array<i64: 1024, 512>}, {pipeline_mode = #tpu.pipeline_mode<synchronous>, transform_indices = @transform_6, window_bounds = array<i64: 8, 1536>}, {transform_indices = @transform_7, window_bounds = array<i64: 2, 16, 512>}]} {
    %c0 = arith.constant 0 : index
    %c0_0 = arith.constant 0 : index
    %c0_1 = arith.constant 0 : index
    %0 = vector.load %arg1[%c0, %c0_0, %c0_1] : memref<2x16x512xf32, #tpu.memory_space<vmem>>, vector<2x16x512xf32>
    %1 = vector.shape_cast %0 : vector<2x16x512xf32> to vector<32x512xf32>
    %c0_2 = arith.constant 0 : index
    %c0_3 = arith.constant 0 : index
    %2 = vector.load %arg7[%c0_2, %c0_3] : memref<8x1536xf32, #tpu.memory_space<vmem>>, vector<8x1536xf32>
    %3 = vector.extract_strided_slice %2 {offsets = [0, 0], sizes = [1, 1536], strides = [1, 1]} : vector<8x1536xf32> to vector<1x1536xf32>
    %4 = vector.extract_strided_slice %2 {offsets = [1, 0], sizes = [1, 512], strides = [1, 1]} : vector<8x1536xf32> to vector<1x512xf32>
    %5 = vector.extract_strided_slice %2 {offsets = [1, 512], sizes = [1, 512], strides = [1, 1]} : vector<8x1536xf32> to vector<1x512xf32>
    %6 = vector.extract_strided_slice %2 {offsets = [3, 0], sizes = [1, 512], strides = [1, 1]} : vector<8x1536xf32> to vector<1x512xf32>
    %7 = vector.extract_strided_slice %2 {offsets = [3, 512], sizes = [1, 512], strides = [1, 1]} : vector<8x1536xf32> to vector<1x512xf32>
    %8 = vector.extract_strided_slice %2 {offsets = [4, 0], sizes = [1, 1024], strides = [1, 1]} : vector<8x1536xf32> to vector<1x1024xf32>
    %9 = arith.truncf %1 : vector<32x512xf32> to vector<32x512xbf16>
    %c0_4 = arith.constant 0 : index
    %c0_5 = arith.constant 0 : index
    %10 = vector.load %arg3[%c0_4, %c0_5] : memref<512x1536xbf16, #tpu.memory_space<vmem>>, vector<512x1536xbf16>
    %cst = arith.constant dense<0.000000e+00> : vector<32x1536xf32>
    %11 = tpu.matmul %9, %10, %cst {dimension_numbers = #tpu.dot_dimension_numbers<[1], [0], [0], [1], [0, 0, 1, 1], [], []>} : vector<32x512xbf16>, vector<512x1536xbf16>, vector<32x1536xf32> -> vector<32x1536xf32>
    %12 = vector.broadcast %3 : vector<1x1536xf32> to vector<32x1536xf32>
    %13 = arith.addf %11, %12 : vector<32x1536xf32>
    %14 = vector.extract_strided_slice %13 {offsets = [0, 0], sizes = [32, 512], strides = [1, 1]} : vector<32x1536xf32> to vector<32x512xf32>
    %cst_6 = arith.constant 0.0883883461 : f32
    %15 = vector.broadcast %cst_6 : f32 to vector<32x512xf32>
    %16 = arith.mulf %14, %15 : vector<32x512xf32>
    %17 = vector.extract_strided_slice %13 {offsets = [0, 512], sizes = [32, 512], strides = [1, 1]} : vector<32x1536xf32> to vector<32x512xf32>
    %18 = vector.extract_strided_slice %13 {offsets = [0, 1024], sizes = [32, 512], strides = [1, 1]} : vector<32x1536xf32> to vector<32x512xf32>
    %19 = vector.extract_strided_slice %16 {offsets = [0, 0], sizes = [16, 128], strides = [1, 1]} : vector<32x512xf32> to vector<16x128xf32>
    %20 = vector.extract_strided_slice %16 {offsets = [0, 128], sizes = [16, 128], strides = [1, 1]} : vector<32x512xf32> to vector<16x128xf32>
    %21 = vector.extract_strided_slice %16 {offsets = [0, 256], sizes = [16, 128], strides = [1, 1]} : vector<32x512xf32> to vector<16x128xf32>
    %22 = vector.extract_strided_slice %16 {offsets = [0, 384], sizes = [16, 128], strides = [1, 1]} : vector<32x512xf32> to vector<16x128xf32>
    %23 = vector.extract_strided_slice %16 {offsets = [16, 0], sizes = [16, 128], strides = [1, 1]} : vector<32x512xf32> to vector<16x128xf32>
    %24 = vector.extract_strided_slice %16 {offsets = [16, 128], sizes = [16, 128], strides = [1, 1]} : vector<32x512xf32> to vector<16x128xf32>
    %25 = vector.extract_strided_slice %16 {offsets = [16, 256], sizes = [16, 128], strides = [1, 1]} : vector<32x512xf32> to vector<16x128xf32>
    %26 = vector.extract_strided_slice %16 {offsets = [16, 384], sizes = [16, 128], strides = [1, 1]} : vector<32x512xf32> to vector<16x128xf32>
    %27 = vector.shape_cast %19 : vector<16x128xf32> to vector<1x16x128xf32>
    %28 = vector.shape_cast %20 : vector<16x128xf32> to vector<1x16x128xf32>
    %29 = vector.shape_cast %21 : vector<16x128xf32> to vector<1x16x128xf32>
    %30 = vector.shape_cast %22 : vector<16x128xf32> to vector<1x16x128xf32>
    %31 = vector.shape_cast %23 : vector<16x128xf32> to vector<1x16x128xf32>
    %32 = vector.shape_cast %24 : vector<16x128xf32> to vector<1x16x128xf32>
    %33 = vector.shape_cast %25 : vector<16x128xf32> to vector<1x16x128xf32>
    %34 = vector.shape_cast %26 : vector<16x128xf32> to vector<1x16x128xf32>
    %35 = tpu.concatenate %27, %28, %29, %30, %31, %32, %33, %34 in 0 : vector<1x16x128xf32>, vector<1x16x128xf32>, vector<1x16x128xf32>, vector<1x16x128xf32>, vector<1x16x128xf32>, vector<1x16x128xf32>, vector<1x16x128xf32>, vector<1x16x128xf32> -> vector<8x16x128xf32>
    %36 = arith.truncf %35 : vector<8x16x128xf32> to vector<8x16x128xbf16>
    %37 = vector.extract_strided_slice %17 {offsets = [0, 0], sizes = [16, 128], strides = [1, 1]} : vector<32x512xf32> to vector<16x128xf32>
    %38 = vector.extract_strided_slice %17 {offsets = [0, 128], sizes = [16, 128], strides = [1, 1]} : vector<32x512xf32> to vector<16x128xf32>
    %39 = vector.extract_strided_slice %17 {offsets = [0, 256], sizes = [16, 128], strides = [1, 1]} : vector<32x512xf32> to vector<16x128xf32>
    %40 = vector.extract_strided_slice %17 {offsets = [0, 384], sizes = [16, 128], strides = [1, 1]} : vector<32x512xf32> to vector<16x128xf32>
    %41 = vector.extract_strided_slice %17 {offsets = [16, 0], sizes = [16, 128], strides = [1, 1]} : vector<32x512xf32> to vector<16x128xf32>
    %42 = vector.extract_strided_slice %17 {offsets = [16, 128], sizes = [16, 128], strides = [1, 1]} : vector<32x512xf32> to vector<16x128xf32>
    %43 = vector.extract_strided_slice %17 {offsets = [16, 256], sizes = [16, 128], strides = [1, 1]} : vector<32x512xf32> to vector<16x128xf32>
    %44 = vector.extract_strided_slice %17 {offsets = [16, 384], sizes = [16, 128], strides = [1, 1]} : vector<32x512xf32> to vector<16x128xf32>
    %45 = vector.shape_cast %37 : vector<16x128xf32> to vector<1x16x128xf32>
    %46 = vector.shape_cast %38 : vector<16x128xf32> to vector<1x16x128xf32>
    %47 = vector.shape_cast %39 : vector<16x128xf32> to vector<1x16x128xf32>
    %48 = vector.shape_cast %40 : vector<16x128xf32> to vector<1x16x128xf32>
    %49 = vector.shape_cast %41 : vector<16x128xf32> to vector<1x16x128xf32>
    %50 = vector.shape_cast %42 : vector<16x128xf32> to vector<1x16x128xf32>
    %51 = vector.shape_cast %43 : vector<16x128xf32> to vector<1x16x128xf32>
    %52 = vector.shape_cast %44 : vector<16x128xf32> to vector<1x16x128xf32>
    %53 = tpu.concatenate %45, %46, %47, %48, %49, %50, %51, %52 in 0 : vector<1x16x128xf32>, vector<1x16x128xf32>, vector<1x16x128xf32>, vector<1x16x128xf32>, vector<1x16x128xf32>, vector<1x16x128xf32>, vector<1x16x128xf32>, vector<1x16x128xf32> -> vector<8x16x128xf32>
    %54 = arith.truncf %53 : vector<8x16x128xf32> to vector<8x16x128xbf16>
    %55 = vector.extract_strided_slice %18 {offsets = [0, 0], sizes = [16, 128], strides = [1, 1]} : vector<32x512xf32> to vector<16x128xf32>
    %56 = vector.extract_strided_slice %18 {offsets = [0, 128], sizes = [16, 128], strides = [1, 1]} : vector<32x512xf32> to vector<16x128xf32>
    %57 = vector.extract_strided_slice %18 {offsets = [0, 256], sizes = [16, 128], strides = [1, 1]} : vector<32x512xf32> to vector<16x128xf32>
    %58 = vector.extract_strided_slice %18 {offsets = [0, 384], sizes = [16, 128], strides = [1, 1]} : vector<32x512xf32> to vector<16x128xf32>
    %59 = vector.extract_strided_slice %18 {offsets = [16, 0], sizes = [16, 128], strides = [1, 1]} : vector<32x512xf32> to vector<16x128xf32>
    %60 = vector.extract_strided_slice %18 {offsets = [16, 128], sizes = [16, 128], strides = [1, 1]} : vector<32x512xf32> to vector<16x128xf32>
    %61 = vector.extract_strided_slice %18 {offsets = [16, 256], sizes = [16, 128], strides = [1, 1]} : vector<32x512xf32> to vector<16x128xf32>
    %62 = vector.extract_strided_slice %18 {offsets = [16, 384], sizes = [16, 128], strides = [1, 1]} : vector<32x512xf32> to vector<16x128xf32>
    %63 = vector.shape_cast %55 : vector<16x128xf32> to vector<1x16x128xf32>
    %64 = vector.shape_cast %56 : vector<16x128xf32> to vector<1x16x128xf32>
    %65 = vector.shape_cast %57 : vector<16x128xf32> to vector<1x16x128xf32>
    %66 = vector.shape_cast %58 : vector<16x128xf32> to vector<1x16x128xf32>
    %67 = vector.shape_cast %59 : vector<16x128xf32> to vector<1x16x128xf32>
    %68 = vector.shape_cast %60 : vector<16x128xf32> to vector<1x16x128xf32>
    %69 = vector.shape_cast %61 : vector<16x128xf32> to vector<1x16x128xf32>
    %70 = vector.shape_cast %62 : vector<16x128xf32> to vector<1x16x128xf32>
    %71 = tpu.concatenate %63, %64, %65, %66, %67, %68, %69, %70 in 0 : vector<1x16x128xf32>, vector<1x16x128xf32>, vector<1x16x128xf32>, vector<1x16x128xf32>, vector<1x16x128xf32>, vector<1x16x128xf32>, vector<1x16x128xf32>, vector<1x16x128xf32> -> vector<8x16x128xf32>
    %72 = arith.truncf %71 : vector<8x16x128xf32> to vector<8x16x128xbf16>
    %c0_7 = arith.constant 0 : index
    %c0_8 = arith.constant 0 : index
    %c0_9 = arith.constant 0 : index
    %73 = vector.load %arg2[%c0_7, %c0_8, %c0_9] : memref<2x1x16xf32, #tpu.memory_space<vmem>>, vector<2x1x16xf32>
    %74 = vector.extract_strided_slice %73 {offsets = [0, 0, 0], sizes = [1, 1, 16], strides = [1, 1, 1]} : vector<2x1x16xf32> to vector<1x1x16xf32>
    %75 = vector.shape_cast %74 : vector<1x1x16xf32> to vector<1x16xf32>
    %76 = vector.extract_strided_slice %73 {offsets = [0, 0, 0], sizes = [1, 1, 16], strides = [1, 1, 1]} : vector<2x1x16xf32> to vector<1x1x16xf32>
    %77 = vector.shape_cast %76 : vector<1x1x16xf32> to vector<1x16xf32>
    %78 = vector.extract_strided_slice %73 {offsets = [0, 0, 0], sizes = [1, 1, 16], strides = [1, 1, 1]} : vector<2x1x16xf32> to vector<1x1x16xf32>
    %79 = vector.shape_cast %78 : vector<1x1x16xf32> to vector<1x16xf32>
    %80 = vector.extract_strided_slice %73 {offsets = [0, 0, 0], sizes = [1, 1, 16], strides = [1, 1, 1]} : vector<2x1x16xf32> to vector<1x1x16xf32>
    %81 = vector.shape_cast %80 : vector<1x1x16xf32> to vector<1x16xf32>
    %82 = vector.extract_strided_slice %73 {offsets = [1, 0, 0], sizes = [1, 1, 16], strides = [1, 1, 1]} : vector<2x1x16xf32> to vector<1x1x16xf32>
    %83 = vector.shape_cast %82 : vector<1x1x16xf32> to vector<1x16xf32>
    %84 = vector.extract_strided_slice %73 {offsets = [1, 0, 0], sizes = [1, 1, 16], strides = [1, 1, 1]} : vector<2x1x16xf32> to vector<1x1x16xf32>
    %85 = vector.shape_cast %84 : vector<1x1x16xf32> to vector<1x16xf32>
    %86 = vector.extract_strided_slice %73 {offsets = [1, 0, 0], sizes = [1, 1, 16], strides = [1, 1, 1]} : vector<2x1x16xf32> to vector<1x1x16xf32>
    %87 = vector.shape_cast %86 : vector<1x1x16xf32> to vector<1x16xf32>
    %88 = vector.extract_strided_slice %73 {offsets = [1, 0, 0], sizes = [1, 1, 16], strides = [1, 1, 1]} : vector<2x1x16xf32> to vector<1x1x16xf32>
    %89 = vector.shape_cast %88 : vector<1x1x16xf32> to vector<1x16xf32>
    %90 = vector.shape_cast %75 : vector<1x16xf32> to vector<1x1x16xf32>
    %91 = vector.shape_cast %77 : vector<1x16xf32> to vector<1x1x16xf32>
    %92 = vector.shape_cast %79 : vector<1x16xf32> to vector<1x1x16xf32>
    %93 = vector.shape_cast %81 : vector<1x16xf32> to vector<1x1x16xf32>
    %94 = vector.shape_cast %83 : vector<1x16xf32> to vector<1x1x16xf32>
    %95 = vector.shape_cast %85 : vector<1x16xf32> to vector<1x1x16xf32>
    %96 = vector.shape_cast %87 : vector<1x16xf32> to vector<1x1x16xf32>
    %97 = vector.shape_cast %89 : vector<1x16xf32> to vector<1x1x16xf32>
    %98 = tpu.concatenate %90, %91, %92, %93, %94, %95, %96, %97 in 0 : vector<1x1x16xf32>, vector<1x1x16xf32>, vector<1x1x16xf32>, vector<1x1x16xf32>, vector<1x1x16xf32>, vector<1x1x16xf32>, vector<1x1x16xf32>, vector<1x1x16xf32> -> vector<8x1x16xf32>
    "tpu.trace_start"() <{level = 10 : i32, message = "gqd,gkd->gqk"}> : () -> ()
    %cst_10 = arith.constant dense<0.000000e+00> : vector<8x16x16xf32>
    %99 = tpu.matmul %36, %54, %cst_10 {dimension_numbers = #tpu.dot_dimension_numbers<[2], [2], [1], [1], [0, 0, 0, 1, 1, 1], [0], [0]>} : vector<8x16x128xbf16>, vector<8x16x128xbf16>, vector<8x16x16xf32> -> vector<8x16x16xf32>
    %cst_11 = arith.constant 0.000000e+00 : f32
    "tpu.trace_stop"() : () -> ()
    %100 = vector.broadcast %cst_11 : f32 to vector<8x1x16xf32>
    %101 = arith.cmpf ogt, %98, %100 : vector<8x1x16xf32>
    %cst_12 = arith.constant -9.99999984E+17 : f32
    %102 = vector.shape_cast %101 : vector<8x1x16xi1> to vector<8x1x16xi1>
    %103 = vector.broadcast %102 : vector<8x1x16xi1> to vector<8x16x16xi1>
    %104 = vector.broadcast %cst_12 : f32 to vector<8x16x16xf32>
    %105 = arith.select %103, %104, %99 : vector<8x16x16xi1>, vector<8x16x16xf32>
    %cst_13 = arith.constant dense<0xFF800000> : vector<8x16xf32>
    %106 = vector.multi_reduction <maximumf>, %105, %cst_13 [2] : vector<8x16x16xf32> to vector<8x16xf32>
    %107 = vector.shape_cast %106 : vector<8x16xf32> to vector<8x16x1xf32>
    %108 = vector.broadcast %107 : vector<8x16x1xf32> to vector<8x16x16xf32>
    %109 = arith.subf %105, %108 : vector<8x16x16xf32>
    %110 = math.exp %109 : vector<8x16x16xf32>
    %cst_14 = arith.constant dense<0.000000e+00> : vector<8x16xf32>
    %111 = vector.multi_reduction <add>, %110, %cst_14 [2] : vector<8x16x16xf32> to vector<8x16xf32>
    %112 = vector.shape_cast %111 : vector<8x16xf32> to vector<8x16x1xf32>
    %113 = tpu.reciprocal %112 {approx = true} : vector<8x16x1xf32> -> vector<8x16x1xf32>
    %114 = vector.broadcast %113 : vector<8x16x1xf32> to vector<8x16x16xf32>
    %115 = arith.mulf %110, %114 : vector<8x16x16xf32>
    %116 = arith.truncf %115 : vector<8x16x16xf32> to vector<8x16x16xbf16>
    "tpu.trace_start"() <{level = 10 : i32, message = "gqk,gkd->gqd"}> : () -> ()
    %cst_15 = arith.constant dense<0.000000e+00> : vector<8x16x128xf32>
    %117 = tpu.matmul %116, %72, %cst_15 {dimension_numbers = #tpu.dot_dimension_numbers<[2], [1], [1], [2], [0, 0, 0, 1, 1, 2], [0], [0]>} : vector<8x16x16xbf16>, vector<8x16x128xbf16>, vector<8x16x128xf32> -> vector<8x16x128xf32>
    "tpu.trace_stop"() : () -> ()
    %118 = vector.extract_strided_slice %117 {offsets = [0, 0, 0], sizes = [1, 16, 128], strides = [1, 1, 1]} : vector<8x16x128xf32> to vector<1x16x128xf32>
    %119 = vector.shape_cast %118 : vector<1x16x128xf32> to vector<16x128xf32>
    %120 = vector.extract_strided_slice %117 {offsets = [1, 0, 0], sizes = [1, 16, 128], strides = [1, 1, 1]} : vector<8x16x128xf32> to vector<1x16x128xf32>
    %121 = vector.shape_cast %120 : vector<1x16x128xf32> to vector<16x128xf32>
    %122 = vector.extract_strided_slice %117 {offsets = [2, 0, 0], sizes = [1, 16, 128], strides = [1, 1, 1]} : vector<8x16x128xf32> to vector<1x16x128xf32>
    %123 = vector.shape_cast %122 : vector<1x16x128xf32> to vector<16x128xf32>
    %124 = vector.extract_strided_slice %117 {offsets = [3, 0, 0], sizes = [1, 16, 128], strides = [1, 1, 1]} : vector<8x16x128xf32> to vector<1x16x128xf32>
    %125 = vector.shape_cast %124 : vector<1x16x128xf32> to vector<16x128xf32>
    %126 = tpu.concatenate %119, %121, %123, %125 in 1 : vector<16x128xf32>, vector<16x128xf32>, vector<16x128xf32>, vector<16x128xf32> -> vector<16x512xf32>
    %127 = vector.extract_strided_slice %117 {offsets = [4, 0, 0], sizes = [1, 16, 128], strides = [1, 1, 1]} : vector<8x16x128xf32> to vector<1x16x128xf32>
    %128 = vector.shape_cast %127 : vector<1x16x128xf32> to vector<16x128xf32>
    %129 = vector.extract_strided_slice %117 {offsets = [5, 0, 0], sizes = [1, 16, 128], strides = [1, 1, 1]} : vector<8x16x128xf32> to vector<1x16x128xf32>
    %130 = vector.shape_cast %129 : vector<1x16x128xf32> to vector<16x128xf32>
    %131 = vector.extract_strided_slice %117 {offsets = [6, 0, 0], sizes = [1, 16, 128], strides = [1, 1, 1]} : vector<8x16x128xf32> to vector<1x16x128xf32>
    %132 = vector.shape_cast %131 : vector<1x16x128xf32> to vector<16x128xf32>
    %133 = vector.extract_strided_slice %117 {offsets = [7, 0, 0], sizes = [1, 16, 128], strides = [1, 1, 1]} : vector<8x16x128xf32> to vector<1x16x128xf32>
    %134 = vector.shape_cast %133 : vector<1x16x128xf32> to vector<16x128xf32>
    %135 = tpu.concatenate %128, %130, %132, %134 in 1 : vector<16x128xf32>, vector<16x128xf32>, vector<16x128xf32>, vector<16x128xf32> -> vector<16x512xf32>
    %136 = tpu.concatenate %126, %135 in 0 : vector<16x512xf32>, vector<16x512xf32> -> vector<32x512xf32>
    %137 = arith.truncf %136 : vector<32x512xf32> to vector<32x512xbf16>
    %c0_16 = arith.constant 0 : index
    %c0_17 = arith.constant 0 : index
    %138 = vector.load %arg4[%c0_16, %c0_17] : memref<512x512xbf16, #tpu.memory_space<vmem>>, vector<512x512xbf16>
    %cst_18 = arith.constant dense<0.000000e+00> : vector<32x512xf32>
    %139 = tpu.matmul %137, %138, %cst_18 {dimension_numbers = #tpu.dot_dimension_numbers<[1], [0], [0], [1], [0, 0, 1, 1], [], []>} : vector<32x512xbf16>, vector<512x512xbf16>, vector<32x512xf32> -> vector<32x512xf32>
    %140 = vector.broadcast %4 : vector<1x512xf32> to vector<32x512xf32>
    %141 = arith.addf %139, %140 : vector<32x512xf32>
    %142 = arith.addf %141, %1 : vector<32x512xf32>
    %cst_19 = arith.constant dense<0.000000e+00> : vector<32xf32>
    %143 = vector.multi_reduction <add>, %142, %cst_19 [1] : vector<32x512xf32> to vector<32xf32>
    %144 = vector.shape_cast %143 : vector<32xf32> to vector<32x1xf32>
    %cst_20 = arith.constant 5.120000e+02 : f32
    %145 = vector.broadcast %cst_20 : f32 to vector<32x1xf32>
    %146 = arith.divf %144, %145 : vector<32x1xf32>
    %147 = arith.mulf %142, %142 : vector<32x512xf32>
    %cst_21 = arith.constant dense<0.000000e+00> : vector<32xf32>
    %148 = vector.multi_reduction <add>, %147, %cst_21 [1] : vector<32x512xf32> to vector<32xf32>
    %149 = vector.shape_cast %148 : vector<32xf32> to vector<32x1xf32>
    %cst_22 = arith.constant 5.120000e+02 : f32
    %150 = vector.broadcast %cst_22 : f32 to vector<32x1xf32>
    %151 = arith.divf %149, %150 : vector<32x1xf32>
    %152 = arith.mulf %146, %146 : vector<32x1xf32>
    %153 = arith.subf %151, %152 : vector<32x1xf32>
    %154 = vector.broadcast %146 : vector<32x1xf32> to vector<32x512xf32>
    %155 = arith.subf %142, %154 : vector<32x512xf32>
    %cst_23 = arith.constant 9.99999997E-7 : f32
    %156 = vector.broadcast %cst_23 : f32 to vector<32x1xf32>
    %157 = arith.addf %153, %156 : vector<32x1xf32>
    %158 = math.rsqrt %157 : vector<32x1xf32>
    %159 = vector.broadcast %158 : vector<32x1xf32> to vector<32x512xf32>
    %160 = arith.mulf %155, %159 : vector<32x512xf32>
    %161 = vector.broadcast %6 : vector<1x512xf32> to vector<32x512xf32>
    %162 = arith.mulf %160, %161 : vector<32x512xf32>
    %163 = vector.broadcast %7 : vector<1x512xf32> to vector<32x512xf32>
    %164 = arith.addf %162, %163 : vector<32x512xf32>
    %165 = arith.truncf %164 : vector<32x512xf32> to vector<32x512xbf16>
    %c0_24 = arith.constant 0 : index
    %c0_25 = arith.constant 0 : index
    %166 = vector.load %arg5[%c0_24, %c0_25] : memref<512x1024xbf16, #tpu.memory_space<vmem>>, vector<512x1024xbf16>
    %cst_26 = arith.constant dense<0.000000e+00> : vector<32x1024xf32>
    %167 = tpu.matmul %165, %166, %cst_26 {dimension_numbers = #tpu.dot_dimension_numbers<[1], [0], [0], [1], [0, 0, 1, 1], [], []>} : vector<32x512xbf16>, vector<512x1024xbf16>, vector<32x1024xf32> -> vector<32x1024xf32>
    %168 = vector.broadcast %8 : vector<1x1024xf32> to vector<32x1024xf32>
    %169 = arith.addf %167, %168 : vector<32x1024xf32>
    %cst_27 = arith.constant 5.000000e-01 : f32
    %170 = vector.broadcast %cst_27 : f32 to vector<32x1024xf32>
    %171 = arith.mulf %170, %169 : vector<32x1024xf32>
    %cst_28 = arith.constant 4.471500e-02 : f32
    %172 = vector.broadcast %cst_28 : f32 to vector<32x1024xf32>
    %173 = arith.mulf %172, %169 : vector<32x1024xf32>
    %174 = arith.mulf %173, %169 : vector<32x1024xf32>
    %175 = arith.mulf %174, %169 : vector<32x1024xf32>
    %176 = arith.addf %169, %175 : vector<32x1024xf32>
    %cst_29 = arith.constant 0.797884583 : f32
    %177 = vector.broadcast %cst_29 : f32 to vector<32x1024xf32>
    %178 = arith.mulf %177, %176 : vector<32x1024xf32>
    %179 = math.tanh %178 : vector<32x1024xf32>
    %cst_30 = arith.constant 1.000000e+00 : f32
    %180 = vector.broadcast %cst_30 : f32 to vector<32x1024xf32>
    %181 = arith.addf %180, %179 : vector<32x1024xf32>
    %182 = arith.mulf %171, %181 : vector<32x1024xf32>
    %183 = arith.truncf %182 : vector<32x1024xf32> to vector<32x1024xbf16>
    %c0_31 = arith.constant 0 : index
    %c0_32 = arith.constant 0 : index
    %184 = vector.load %arg6[%c0_31, %c0_32] : memref<1024x512xbf16, #tpu.memory_space<vmem>>, vector<1024x512xbf16>
    %cst_33 = arith.constant dense<0.000000e+00> : vector<32x512xf32>
    %185 = tpu.matmul %183, %184, %cst_33 {dimension_numbers = #tpu.dot_dimension_numbers<[1], [0], [0], [1], [0, 0, 1, 1], [], []>} : vector<32x1024xbf16>, vector<1024x512xbf16>, vector<32x512xf32> -> vector<32x512xf32>
    %186 = vector.broadcast %5 : vector<1x512xf32> to vector<32x512xf32>
    %187 = arith.addf %185, %186 : vector<32x512xf32>
    %188 = arith.addf %187, %142 : vector<32x512xf32>
    %189 = vector.shape_cast %188 : vector<32x512xf32> to vector<2x16x512xf32>
    %c0_34 = arith.constant 0 : index
    %c0_35 = arith.constant 0 : index
    %c0_36 = arith.constant 0 : index
    %190 = vector.load %arg8[%c0_34, %c0_35, %c0_36] : memref<2x16x512xf32, #tpu.memory_space<vmem>>, vector<2x16x512xf32>
    tpu.vector_store %arg8[%c0_34, %c0_35, %c0_36], %189 {strides = array<i32>} : memref<2x16x512xf32, #tpu.memory_space<vmem>>, vector<2x16x512xf32>,
    return
  }
  func.func @transform_0(%arg0: i32) -> (i32, i32, i32) {
    %c0_i32 = arith.constant 0 : i32
    %c0_i32_0 = arith.constant 0 : i32
    %c0_i32_1 = arith.constant 0 : i32
    return %arg0, %c0_i32, %c0_i32_0 : i32, i32, i32
  }
  func.func @transform_1(%arg0: i32) -> (i32, i32, i32) {
    %c0_i32 = arith.constant 0 : i32
    %c0_i32_0 = arith.constant 0 : i32
    %c0_i32_1 = arith.constant 0 : i32
    return %arg0, %c0_i32, %c0_i32_0 : i32, i32, i32
  }
  func.func @transform_2(%arg0: i32) -> (i32, i32) {
    %c0_i32 = arith.constant 0 : i32
    %c0_i32_0 = arith.constant 0 : i32
    %c0_i32_1 = arith.constant 0 : i32
    return %c0_i32, %c0_i32_0 : i32, i32
  }
  func.func @transform_3(%arg0: i32) -> (i32, i32) {
    %c0_i32 = arith.constant 0 : i32
    %c0_i32_0 = arith.constant 0 : i32
    %c0_i32_1 = arith.constant 0 : i32
    return %c0_i32, %c0_i32_0 : i32, i32
  }
  func.func @transform_4(%arg0: i32) -> (i32, i32) {
    %c0_i32 = arith.constant 0 : i32
    %c0_i32_0 = arith.constant 0 : i32
    %c0_i32_1 = arith.constant 0 : i32
    return %c0_i32, %c0_i32_0 : i32, i32
  }
  func.func @transform_5(%arg0: i32) -> (i32, i32) {
    %c0_i32 = arith.constant 0 : i32
    %c0_i32_0 = arith.constant 0 : i32
    %c0_i32_1 = arith.constant 0 : i32
    return %c0_i32, %c0_i32_0 : i32, i32
  }
  func.func @transform_6(%arg0: i32) -> (i32, i32) {
    %c0_i32 = arith.constant 0 : i32
    %c0_i32_0 = arith.constant 0 : i32
    %c0_i32_1 = arith.constant 0 : i32
    return %c0_i32, %c0_i32_0 : i32, i32
  }
  func.func @transform_7(%arg0: i32) -> (i32, i32, i32) {
    %c0_i32 = arith.constant 0 : i32
    %c0_i32_0 = arith.constant 0 : i32
    %c0_i32_1 = arith.constant 0 : i32
    return %arg0, %c0_i32, %c0_i32_0 : i32, i32, i32
  }
}

</mosaic_0001>

<llo_original>
// kernel: tpu_custom_call.1
$region0: #{tpu_custom_call.1}
  #allocation0 [shape = 'u32[]', space=smem, size = 0x4, offset = 0x4, fixed_abs, tag = 'smem constant byte address 0x4 - core index']
  #allocation1 [shape = 'u32[144,128]{1,0:T(1,128)}', space=vmem, size = 0x12000, scoped, tag = 'internal scratch']
  %s0 = inlined_call_operand.hbm [shape: f32[4,16,512], index: 0, kind: input, shape index: {}]
  %s1 = inlined_call_operand.hbm [shape: f32[4,1,16], index: 1, kind: input, shape index: {}]
  %s2 = inlined_call_operand.hbm [shape: bf16[512,1536], index: 2, kind: input, shape index: {}]
  %s3 = inlined_call_operand.hbm [shape: bf16[512,512], index: 3, kind: input, shape index: {}]
  %s4 = inlined_call_operand.hbm [shape: bf16[512,1024], index: 4, kind: input, shape index: {}]
  %s5 = inlined_call_operand.hbm [shape: bf16[1024,512], index: 5, kind: input, shape index: {}]
  %s6 = inlined_call_operand.hbm [shape: f32[8,1536], index: 6, kind: input, shape index: {}]
  %s7 = inlined_call_operand.hbm [shape: f32[4,16,512], index: 7, kind: output, shape index: {}]
  %s8 = sld [smem:[#allocation0]]
  $region89: #{tpu_custom_call.1} parent=0
    _
  %s10 = ssub.s32 1, %s8
  %s11 = scalar_select 0, %s10, %s8
  $region1: #{tpu_custom_call.1} parent=0
    #allocation2 [shape = 'u8[131072]{0}', space=vmem, size = 0x20000, scoped, tag = 'input window, operand 0']
    #allocation3 [shape = 's32[2]{0}', space=sflag, size = 0x8, scoped, tag = 'scoped memory for tpu_custom_call.1']
    #allocation4 [shape = 's32[2]{0}', space=sflag, size = 0x8, scoped, tag = 'scoped memory for tpu_custom_call.1']
    #allocation5 [shape = 'u8[2048]{0}', space=vmem, size = 0x800, scoped, tag = 'input window, operand 1']
    #allocation6 [shape = 's32[2]{0}', space=sflag, size = 0x8, scoped, tag = 'scoped memory for tpu_custom_call.1']
    #allocation7 [shape = 'u8[1572864]{0}', space=vmem, size = 0x180000, scoped, tag = 'input window, operand 2, single buffered']
    #allocation8 [shape = 'u8[524288]{0}', space=vmem, size = 0x80000, scoped, tag = 'input window, operand 3, single buffered']
    #allocation9 [shape = 's32[1]{0}', space=sflag, size = 0x4, scoped, tag = 'scoped memory for tpu_custom_call.1']
    #allocation10 [shape = 'u8[1048576]{0}', space=vmem, size = 0x100000, scoped, tag = 'input window, operand 4, single buffered']
    #allocation11 [shape = 'u8[1048576]{0}', space=vmem, size = 0x100000, scoped, tag = 'input window, operand 5, single buffered']
    #allocation12 [shape = 's32[1]{0}', space=sflag, size = 0x4, scoped, tag = 'scoped memory for tpu_custom_call.1']
    #allocation13 [shape = 'u8[49152]{0}', space=vmem, size = 0xc000, scoped, tag = 'input window, operand 6, single buffered']
    #allocation14 [shape = 'u8[131072]{0}', space=vmem, size = 0x20000, scoped, tag = 'output window, operand 0']
    %12 = vsyncpa [#allocation3], 0
    %s13 = scalar_lea.sflag [#allocation3], 1
    %14 = vsyncpa %s13, 0
    %15 = vsyncpa [#allocation6], 0
    %s16 = scalar_lea.sflag [#allocation6], 1
    %17 = vsyncpa %s16, 0
    %18 = vsyncpa [#allocation9], 0
    %19 = vsyncpa [#allocation12], 0
    %20 = vsyncpa [#allocation4], 0
    %s21 = scalar_lea.sflag [#allocation4], 1
    %22 = vsyncpa %s21, 0
    loop: start=0, step=1, limit=4
    $region2: #{tpu_custom_call.1} parent=1 // loop_pre_header
      _
    $region3: #{tpu_custom_call.1} parent=1 // loop_header
      %s24 = sphi 0, %s28
      %p25 = scmp.ge.s32.totalorder %s24, 4
      %s34 = sphi 0, %s36
      %s37 = sphi 0, %s34
      %s38 = sphi 0, %s37
      %s54 = sphi 0, %s38
      %s60 = sphi 0, %s62
      %s63 = sphi 0, %s60
      %s64 = sphi 0, %s63
      %s80 = sphi 0, %s64
      %s84 = sphi 0, %s84
      %s86 = sphi 0, %s84
      %s87 = sphi 0, %s86
      %s101 = sphi 0, %s87
      %s105 = sphi 0, %s105
      %s107 = sphi 0, %s105
      %s108 = sphi 0, %s107
      %s122 = sphi 0, %s108
      %s126 = sphi 0, %s126
      %s128 = sphi 0, %s126
      %s129 = sphi 0, %s128
      %s143 = sphi 0, %s129
      %s147 = sphi 0, %s147
      %s149 = sphi 0, %s147
      %s150 = sphi 0, %s149
      %s164 = sphi 0, %s150
      %s168 = sphi 0, %s168
      %s170 = sphi 0, %s168
      %s171 = sphi 0, %s170
      %s185 = sphi 0, %s171
      %s191 = sphi 0, %s193
      %s194 = sphi 0, %s191
      %s195 = sphi 0, %s194
      %s211 = sphi 0, %s195
    $region4: #{tpu_custom_call.1} parent=1 // loop_header_branch
      %27 = sbr.rel (%p25) target = $region8
    $region5: #{tpu_custom_call.1} parent=1 // loop_body
      %s29 = ssub.s32 %s24, 1
      %s30 = ssub.s32 %s24, 2
      %s31 = sadd.s32 %s24, 1
      %s32 = ssub.s32 %s24, %s31
      %p33 = scmp.eq.s32.totalorder %s32, 0
      %s35 = sadd.s32 %s34, 1
      %s36 = scalar_select %p33, %s34, %s35
      %p39 = pneg %p33
      %p40 = scmp.eq.s32.totalorder %s24, 1
      %p41 = por %p39, %p40
      %p42 = scmp.ne.s32.totalorder %s34, %s37
      %p43 = scmp.eq.s32.totalorder %s24, 0
      %p44 = por %p42, %p43
      %p45 = scmp.ne.s32.totalorder %s34, %s37
      %p46 = scmp.eq.s32.totalorder %s29, 1
      %p47 = por %p45, %p46
      %p48 = scmp.ne.s32.totalorder %s37, %s38
      %p49 = scmp.eq.s32.totalorder %s29, 0
      %p50 = por %p48, %p49
      %p51 = scmp.ne.s32.totalorder %s37, %s38
      %p52 = scmp.eq.s32.totalorder %s30, 1
      %p53 = por %p51, %p52
      %p55 = scmp.ne.s32.totalorder %s38, %s54
      %p56 = scmp.eq.s32.totalorder %s30, 0
      %p57 = por %p55, %p56
      %s58 = ssub.s32 %s24, %s31
      %p59 = scmp.eq.s32.totalorder %s58, 0
      %s61 = sadd.s32 %s60, 1
      %s62 = scalar_select %p59, %s60, %s61
      %p65 = pneg %p59
      %p66 = scmp.eq.s32.totalorder %s24, 1
      %p67 = por %p65, %p66
      %p68 = scmp.ne.s32.totalorder %s60, %s63
      %p69 = scmp.eq.s32.totalorder %s24, 0
      %p70 = por %p68, %p69
      %p71 = scmp.ne.s32.totalorder %s60, %s63
      %p72 = scmp.eq.s32.totalorder %s29, 1
      %p73 = por %p71, %p72
      %p74 = scmp.ne.s32.totalorder %s63, %s64
      %p75 = scmp.eq.s32.totalorder %s29, 0
      %p76 = por %p74, %p75
      %p77 = scmp.ne.s32.totalorder %s63, %s64
      %p78 = scmp.eq.s32.totalorder %s30, 1
      %p79 = por %p77, %p78
      %p81 = scmp.ne.s32.totalorder %s64, %s80
      %p82 = scmp.eq.s32.totalorder %s30, 0
      %p83 = por %p81, %p82
      %s85 = sadd.s32 %s84, 1
      %p88 = scmp.eq.s32.totalorder %s24, 1
      %p89 = scmp.ne.s32.totalorder %s84, %s86
      %p90 = scmp.eq.s32.totalorder %s24, 0
      %p91 = por %p89, %p90
      %p92 = scmp.ne.s32.totalorder %s84, %s86
      %p93 = scmp.eq.s32.totalorder %s29, 1
      %p94 = por %p92, %p93
      %p95 = scmp.ne.s32.totalorder %s86, %s87
      %p96 = scmp.eq.s32.totalorder %s29, 0
      %p97 = por %p95, %p96
      %p98 = scmp.ne.s32.totalorder %s86, %s87
      %p99 = scmp.eq.s32.totalorder %s30, 1
      %p100 = por %p98, %p99
      %p102 = scmp.ne.s32.totalorder %s87, %s101
      %p103 = scmp.eq.s32.totalorder %s30, 0
      %p104 = por %p102, %p103
      %s106 = sadd.s32 %s105, 1
      %p109 = scmp.eq.s32.totalorder %s24, 1
      %p110 = scmp.ne.s32.totalorder %s105, %s107
      %p111 = scmp.eq.s32.totalorder %s24, 0
      %p112 = por %p110, %p111
      %p113 = scmp.ne.s32.totalorder %s105, %s107
      %p114 = scmp.eq.s32.totalorder %s29, 1
      %p115 = por %p113, %p114
      %p116 = scmp.ne.s32.totalorder %s107, %s108
      %p117 = scmp.eq.s32.totalorder %s29, 0
      %p118 = por %p116, %p117
      %p119 = scmp.ne.s32.totalorder %s107, %s108
      %p120 = scmp.eq.s32.totalorder %s30, 1
      %p121 = por %p119, %p120
      %p123 = scmp.ne.s32.totalorder %s108, %s122
      %p124 = scmp.eq.s32.totalorder %s30, 0
      %p125 = por %p123, %p124
      %s127 = sadd.s32 %s126, 1
      %p130 = scmp.eq.s32.totalorder %s24, 1
      %p131 = scmp.ne.s32.totalorder %s126, %s128
      %p132 = scmp.eq.s32.totalorder %s24, 0
      %p133 = por %p131, %p132
      %p134 = scmp.ne.s32.totalorder %s126, %s128
      %p135 = scmp.eq.s32.totalorder %s29, 1
      %p136 = por %p134, %p135
      %p137 = scmp.ne.s32.totalorder %s128, %s129
      %p138 = scmp.eq.s32.totalorder %s29, 0
      %p139 = por %p137, %p138
      %p140 = scmp.ne.s32.totalorder %s128, %s129
      %p141 = scmp.eq.s32.totalorder %s30, 1
      %p142 = por %p140, %p141
      %p144 = scmp.ne.s32.totalorder %s129, %s143
      %p145 = scmp.eq.s32.totalorder %s30, 0
      %p146 = por %p144, %p145
      %s148 = sadd.s32 %s147, 1
      %p151 = scmp.eq.s32.totalorder %s24, 1
      %p152 = scmp.ne.s32.totalorder %s147, %s149
      %p153 = scmp.eq.s32.totalorder %s24, 0
      %p154 = por %p152, %p153
      %p155 = scmp.ne.s32.totalorder %s147, %s149
      %p156 = scmp.eq.s32.totalorder %s29, 1
      %p157 = por %p155, %p156
      %p158 = scmp.ne.s32.totalorder %s149, %s150
      %p159 = scmp.eq.s32.totalorder %s29, 0
      %p160 = por %p158, %p159
      %p161 = scmp.ne.s32.totalorder %s149, %s150
      %p162 = scmp.eq.s32.totalorder %s30, 1
      %p163 = por %p161, %p162
      %p165 = scmp.ne.s32.totalorder %s150, %s164
      %p166 = scmp.eq.s32.totalorder %s30, 0
      %p167 = por %p165, %p166
      %s169 = sadd.s32 %s168, 1
      %p172 = scmp.eq.s32.totalorder %s24, 1
      %p173 = scmp.ne.s32.totalorder %s168, %s170
      %p174 = scmp.eq.s32.totalorder %s24, 0
      %p175 = por %p173, %p174
      %p176 = scmp.ne.s32.totalorder %s168, %s170
      %p177 = scmp.eq.s32.totalorder %s29, 1
      %p178 = por %p176, %p177
      %p179 = scmp.ne.s32.totalorder %s170, %s171
      %p180 = scmp.eq.s32.totalorder %s29, 0
      %p181 = por %p179, %p180
      %p182 = scmp.ne.s32.totalorder %s170, %s171
      %p183 = scmp.eq.s32.totalorder %s30, 1
      %p184 = por %p182, %p183
      %p186 = scmp.ne.s32.totalorder %s171, %s185
      %p187 = scmp.eq.s32.totalorder %s30, 0
      %p188 = por %p186, %p187
      %s189 = ssub.s32 %s24, %s31
      %p190 = scmp.eq.s32.totalorder %s189, 0
      %s192 = sadd.s32 %s191, 1
      %s193 = scalar_select %p190, %s191, %s192
      %p196 = pneg %p190
      %p197 = scmp.eq.s32.totalorder %s24, 1
      %p198 = por %p196, %p197
      %p199 = scmp.ne.s32.totalorder %s191, %s194
      %p200 = scmp.eq.s32.totalorder %s24, 0
      %p201 = por %p199, %p200
      %p202 = scmp.ne.s32.totalorder %s191, %s194
      %p203 = scmp.eq.s32.totalorder %s29, 1
      %p204 = por %p202, %p203
      %p205 = scmp.ne.s32.totalorder %s194, %s195
      %p206 = scmp.eq.s32.totalorder %s29, 0
      %p207 = por %p205, %p206
      %p208 = scmp.ne.s32.totalorder %s194, %s195
      %p209 = scmp.eq.s32.totalorder %s30, 1
      %p210 = por %p208, %p209
      %p212 = scmp.ne.s32.totalorder %s195, %s211
      %p213 = scmp.eq.s32.totalorder %s30, 0
      %p214 = por %p212, %p213
      %p215 = scmp.le.s32.totalorder 1, %s24
      %p216 = scmp.lt.s32.totalorder %s24, 3
      %p217 = pnand %p215, %p216
      %p218 = pneg %p217
      // Predicated region
      $region9: #{tpu_custom_call.1} parent=5 // pred_check
        _
      $region10: #{tpu_custom_call.1} parent=5 // pred_check_branch
        %220 = sbr.rel (%p217) target = $region12
      $region11: #{tpu_custom_call.1} parent=5 // pred_region
        %s221 = ssub.s32 %s24, 1
        // Predicated region
        $region13: #{tpu_custom_call.1} parent=11 // pred_check
          %p222 = pneg %p97
        $region14: #{tpu_custom_call.1} parent=11 // pred_check_branch
          %224 = sbr.rel (%p222) target = $region16
        $region15: #{tpu_custom_call.1} parent=11 // pred_region
          %s226 = ssub.s32 49152, 49152
          %227 = vsyncadd [#allocation6], %s226
          %s228 = sshll.u32 [#allocation7], 4
          %s229 = int_to_ptr.vmem [resolvable:$true] %s228
          %234 = dma.hbm_to_vmem [thread:$0]  %s2, 49152, %s229, [#allocation6], 768, 768, 48
        $region16: #{tpu_custom_call.1} parent=11 // pred_fallthru
          _
        // Predicated region
        $region17: #{tpu_custom_call.1} parent=11 // pred_check
          %p235 = pneg %p118
        $region18: #{tpu_custom_call.1} parent=11 // pred_check_branch
          %237 = sbr.rel (%p235) target = $region20
        $region19: #{tpu_custom_call.1} parent=11 // pred_region
          %s239 = ssub.s32 16384, 16384
          %240 = vsyncadd [#allocation9], %s239
          %s241 = sshll.u32 [#allocation8], 4
          %s242 = int_to_ptr.vmem [resolvable:$true] %s241
          %247 = dma.hbm_to_vmem [thread:$0]  %s3, 16384, %s242, [#allocation9], 256, 256, 16
        $region20: #{tpu_custom_call.1} parent=11 // pred_fallthru
          _
        // Predicated region
        $region21: #{tpu_custom_call.1} parent=11 // pred_check
          %p248 = pneg %p139
        $region22: #{tpu_custom_call.1} parent=11 // pred_check_branch
          %250 = sbr.rel (%p248) target = $region24
        $region23: #{tpu_custom_call.1} parent=11 // pred_region
          %s252 = ssub.s32 32768, 32768
          %253 = vsyncadd [#allocation9], %s252
          %s254 = sshll.u32 [#allocation10], 4
          %s255 = int_to_ptr.vmem [resolvable:$true] %s254
          %260 = dma.hbm_to_vmem [thread:$0]  %s4, 32768, %s255, [#allocation9], 512, 512, 32
        $region24: #{tpu_custom_call.1} parent=11 // pred_fallthru
          _
        // Predicated region
        $region25: #{tpu_custom_call.1} parent=11 // pred_check
          %p261 = pneg %p160
        $region26: #{tpu_custom_call.1} parent=11 // pred_check_branch
          %263 = sbr.rel (%p261) target = $region28
        $region27: #{tpu_custom_call.1} parent=11 // pred_region
          %s265 = ssub.s32 32768, 32768
          %266 = vsyncadd [#allocation12], %s265
          %s267 = sshll.u32 [#allocation11], 4
          %s268 = int_to_ptr.vmem [resolvable:$true] %s267
          %273 = dma.hbm_to_vmem [thread:$0]  %s5, 32768, %s268, [#allocation12], 256, 256, 16
        $region28: #{tpu_custom_call.1} parent=11 // pred_fallthru
          _
        // Predicated region
        $region29: #{tpu_custom_call.1} parent=11 // pred_check
          %p274 = pneg %p181
        $region30: #{tpu_custom_call.1} parent=11 // pred_check_branch
          %276 = sbr.rel (%p274) target = $region32
        $region31: #{tpu_custom_call.1} parent=11 // pred_region
          %s278 = ssub.s32 1536, 1536
          %279 = vsyncadd [#allocation12], %s278
          %s281 = sshll.u32 [#allocation13], 4
          %s282 = int_to_ptr.vmem [resolvable:$true] %s281
          %284 = dma.hbm_to_vmem [thread:$0]  %s6, 1536, %s282, [#allocation12]
        $region32: #{tpu_custom_call.1} parent=11 // pred_fallthru
          _
      $region12: #{tpu_custom_call.1} parent=5 // pred_fallthru
        _
      %p285 = scmp.lt.s32.totalorder %s24, 2
      // Predicated region
      $region33: #{tpu_custom_call.1} parent=5 // pred_check
        %p286 = pneg %p285
      $region34: #{tpu_custom_call.1} parent=5 // pred_check_branch
        %288 = sbr.rel (%p286) target = $region36
      $region35: #{tpu_custom_call.1} parent=5 // pred_region
        // Predicated region
        $region37: #{tpu_custom_call.1} parent=35 // pred_check
          %p289 = pneg %p44
        $region38: #{tpu_custom_call.1} parent=35 // pred_check_branch
          %291 = sbr.rel (%p289) target = $region40
        $region39: #{tpu_custom_call.1} parent=35 // pred_region
          %s292 = sand.u32 %s34, 1
          %s293 = scalar_lea.sflag [#allocation3], %s292
          %s294 = sand.u32 %s34, 1
          %s295 = smul.addr %s294, 128
          %s296 = scalar_lea.vmem [#allocation2], %s295
          %s297 = smul.u32 2, %s24
          %s299 = ssub.s32 2048, 2048
          %300 = vsyncadd %s293, %s299
          %s301 = smul.addr %s297, 8
          %s302 = smul.addr %s301, 128
          %s303 = scalar_lea.hbm %s0, %s302
          %s304 = sshll.u32 %s296, 4
          %s305 = int_to_ptr.vmem [resolvable:$true] %s304
          %310 = dma.hbm_to_vmem [thread:$0]  %s303, 2048, %s305, %s293, 512, 512, 32
        $region40: #{tpu_custom_call.1} parent=35 // pred_fallthru
          _
        // Predicated region
        $region41: #{tpu_custom_call.1} parent=35 // pred_check
          %p311 = pneg %p70
        $region42: #{tpu_custom_call.1} parent=35 // pred_check_branch
          %313 = sbr.rel (%p311) target = $region44
        $region43: #{tpu_custom_call.1} parent=35 // pred_region
          %s314 = sand.u32 %s24, 1
          %s315 = scalar_lea.sflag [#allocation6], %s314
          %s316 = sand.u32 %s60, 1
          %s317 = smul.addr %s316, 2
          %s318 = scalar_lea.vmem [#allocation5], %s317
          %s319 = smul.u32 2, %s24
          %s321 = ssub.s32 32, 32
          %322 = vsyncadd %s315, %s321
          %s323 = smul.addr %s319, 16
          %s324 = scalar_lea.hbm %s1, %s323
          %s325 = sshll.u32 %s318, 4
          %s326 = int_to_ptr.vmem [resolvable:$true] %s325
          %331 = dma.hbm_to_vmem [thread:$0]  %s324, 32, %s326, %s315, 16, 16, 1
        $region44: #{tpu_custom_call.1} parent=35 // pred_fallthru
          _
      $region36: #{tpu_custom_call.1} parent=5 // pred_fallthru
        _
      %p332 = scmp.le.s32.totalorder 1, %s24
      %p333 = scmp.lt.s32.totalorder %s24, 3
      %p334 = pnand %p332, %p333
      %p335 = pneg %p334
      // Predicated region
      $region45: #{tpu_custom_call.1} parent=5 // pred_check
        _
      $region46: #{tpu_custom_call.1} parent=5 // pred_check_branch
        %337 = sbr.rel (%p334) target = $region48
      $region47: #{tpu_custom_call.1} parent=5 // pred_region
        %s338 = ssub.s32 %s24, 1
        %s339 = sand.u32 %s37, 1
        %s340 = scalar_lea.sflag [#allocation3], %s339
        %s341 = sand.u32 %s37, 1
        %s342 = smul.addr %s341, 128
        %s343 = scalar_lea.vmem [#allocation2], %s342
        // Predicated region
        $region49: #{tpu_custom_call.1} parent=47 // pred_check
          %p344 = pneg %p50
        $region50: #{tpu_custom_call.1} parent=47 // pred_check_branch
          %346 = sbr.rel (%p344) target = $region52
        $region51: #{tpu_custom_call.1} parent=47 // pred_region
          %347 = dma.done %s340, 2048
        $region52: #{tpu_custom_call.1} parent=47 // pred_fallthru
          _
        %s348 = sand.u32 %s29, 1
        %s349 = scalar_lea.sflag [#allocation6], %s348
        %s350 = sand.u32 %s63, 1
        %s351 = smul.addr %s350, 2
        %s352 = scalar_lea.vmem [#allocation5], %s351
        // Predicated region
        $region53: #{tpu_custom_call.1} parent=47 // pred_check
          %p353 = pneg %p76
        $region54: #{tpu_custom_call.1} parent=47 // pred_check_branch
          %355 = sbr.rel (%p353) target = $region56
        $region55: #{tpu_custom_call.1} parent=47 // pred_region
          %356 = dma.done %s349, 32
        $region56: #{tpu_custom_call.1} parent=47 // pred_fallthru
          _
        // Predicated region
        $region57: #{tpu_custom_call.1} parent=47 // pred_check
          %p357 = pneg %p97
        $region58: #{tpu_custom_call.1} parent=47 // pred_check_branch
          %359 = sbr.rel (%p357) target = $region60
        $region59: #{tpu_custom_call.1} parent=47 // pred_region
          %360 = dma.done [#allocation6], 49152
        $region60: #{tpu_custom_call.1} parent=47 // pred_fallthru
          _
        // Predicated region
        $region61: #{tpu_custom_call.1} parent=47 // pred_check
          %p361 = pneg %p118
        $region62: #{tpu_custom_call.1} parent=47 // pred_check_branch
          %363 = sbr.rel (%p361) target = $region64
        $region63: #{tpu_custom_call.1} parent=47 // pred_region
          %364 = dma.done [#allocation9], 16384
        $region64: #{tpu_custom_call.1} parent=47 // pred_fallthru
          _
        // Predicated region
        $region65: #{tpu_custom_call.1} parent=47 // pred_check
          %p365 = pneg %p139
        $region66: #{tpu_custom_call.1} parent=47 // pred_check_branch
          %367 = sbr.rel (%p365) target = $region68
        $region67: #{tpu_custom_call.1} parent=47 // pred_region
          %368 = dma.done [#allocation9], 32768
        $region68: #{tpu_custom_call.1} parent=47 // pred_fallthru
          _
        // Predicated region
        $region69: #{tpu_custom_call.1} parent=47 // pred_check
          %p369 = pneg %p160
        $region70: #{tpu_custom_call.1} parent=47 // pred_check_branch
          %371 = sbr.rel (%p369) target = $region72
        $region71: #{tpu_custom_call.1} parent=47 // pred_region
          %372 = dma.done [#allocation12], 32768
        $region72: #{tpu_custom_call.1} parent=47 // pred_fallthru
          _
        // Predicated region
        $region73: #{tpu_custom_call.1} parent=47 // pred_check
          %p373 = pneg %p181
        $region74: #{tpu_custom_call.1} parent=47 // pred_check_branch
          %375 = sbr.rel (%p373) target = $region76
        $region75: #{tpu_custom_call.1} parent=47 // pred_region
          %376 = dma.done [#allocation12], 1536
        $region76: #{tpu_custom_call.1} parent=47 // pred_fallthru
          _
        %s377 = sand.u32 %s37, 1
        %s378 = scalar_lea.sflag [#allocation3], %s377
        %s379 = sand.u32 %s37, 1
        %s380 = smul.addr %s379, 128
        %s381 = scalar_lea.vmem [#allocation2], %s380
        %p382 = pneg %p50
        %p383 = pneg %p47
        %s384 = sand.u32 %s29, 1
        %s385 = scalar_lea.sflag [#allocation6], %s384
        %s386 = sand.u32 %s63, 1
        %s387 = smul.addr %s386, 2
        %s388 = scalar_lea.vmem [#allocation5], %s387
        %p389 = pneg %p76
        %p390 = pneg %p73
        %p391 = pneg %p97
        %p392 = pneg %p94
        %p393 = pneg %p118
        %p394 = pneg %p115
        %p395 = pneg %p139
        %p396 = pneg %p136
        %p397 = pneg %p160
        %p398 = pneg %p157
        %p399 = pneg %p181
        %p400 = pneg %p178
        %p401 = pneg %p207
        %p402 = pneg %p204
        %s403 = sand.u32 %s194, 1
        %s404 = scalar_lea.sflag [#allocation4], %s403
        %s405 = sand.u32 %s194, 1
        %s406 = smul.addr %s405, 128
        %s407 = scalar_lea.vmem [#allocation14], %s406
        %s408 = smul.u32 2, %s29
        %s409 = smul.u32 2, %s29
        %s410 = smul.u32 2, %s29
        %v412 = vld [vmem:[%s343] sm:$0xff]
        %v413 = vld [vmem:[%s343 + $0x8] sm:$0xff]
        %v414 = vld [vmem:[%s343 + $0x10] sm:$0xff]
        %v415 = vld [vmem:[%s343 + $0x18] sm:$0xff]
        %v416 = vld [vmem:[%s343 + $0x20] sm:$0xff]
        %v417 = vld [vmem:[%s343 + $0x28] sm:$0xff]
        %v418 = vld [vmem:[%s343 + $0x30] sm:$0xff]
        %v419 = vld [vmem:[%s343 + $0x38] sm:$0xff]
        %v420 = vld [vmem:[%s343 + $0x40] sm:$0xff]
        %v421 = vld [vmem:[%s343 + $0x48] sm:$0xff]
        %v422 = vld [vmem:[%s343 + $0x50] sm:$0xff]
        %v423 = vld [vmem:[%s343 + $0x58] sm:$0xff]
        %v424 = vld [vmem:[%s343 + $0x60] sm:$0xff]
        %v425 = vld [vmem:[%s343 + $0x68] sm:$0xff]
        %v426 = vld [vmem:[%s343 + $0x70] sm:$0xff]
        %v427 = vld [vmem:[%s343 + $0x78] sm:$0xff]
        %v428 = vld [vmem:[#allocation13] sm:$0xff]
        %v429 = vld [vmem:[#allocation13 + $0x8] sm:$0xff]
        %v430 = vld [vmem:[#allocation13 + $0x10] sm:$0xff]
        %v431 = vld [vmem:[#allocation13 + $0x18] sm:$0xff]
        %v432 = vld [vmem:[#allocation13 + $0x20] sm:$0xff]
        %v433 = vld [vmem:[#allocation13 + $0x28] sm:$0xff]
        %v434 = vld [vmem:[#allocation13 + $0x30] sm:$0xff]
        %v435 = vld [vmem:[#allocation13 + $0x38] sm:$0xff]
        %v436 = vld [vmem:[#allocation13 + $0x40] sm:$0xff]
        %v437 = vld [vmem:[#allocation13 + $0x48] sm:$0xff]
        %v438 = vld [vmem:[#allocation13 + $0x50] sm:$0xff]
        %v439 = vld [vmem:[#allocation13 + $0x58] sm:$0xff]
        %v440 = vpack.c.bf16 %v416, %v412
        %v441 = vpack.c.bf16 %v417, %v413
        %v442 = vpack.c.bf16 %v418, %v414
        %v443 = vpack.c.bf16 %v419, %v415
        %v444 = vpack.c.bf16 %v424, %v420
        %v445 = vpack.c.bf16 %v425, %v421
        %v446 = vpack.c.bf16 %v426, %v422
        %v447 = vpack.c.bf16 %v427, %v423
        %v448 = vld [vmem:[#allocation7] sm:$0xff]
        %v449 = vld [vmem:[#allocation7 + $0x8] sm:$0xff]
        %v450 = vld [vmem:[#allocation7 + $0x10] sm:$0xff]
        %v451 = vld [vmem:[#allocation7 + $0x18] sm:$0xff]
        %v452 = vld [vmem:[#allocation7 + $0x20] sm:$0xff]
        %v453 = vld [vmem:[#allocation7 + $0x28] sm:$0xff]
        %v454 = vld [vmem:[#allocation7 + $0x30] sm:$0xff]
        %v455 = vld [vmem:[#allocation7 + $0x38] sm:$0xff]
        %v456 = vld [vmem:[#allocation7 + $0x40] sm:$0xff]
        %v457 = vld [vmem:[#allocation7 + $0x48] sm:$0xff]
        %v458 = vld [vmem:[#allocation7 + $0x50] sm:$0xff]
        %v459 = vld [vmem:[#allocation7 + $0x58] sm:$0xff]
        %v460 = vld [vmem:[#allocation7 + $0x60] sm:$0xff]
        %v461 = vld [vmem:[#allocation7 + $0x68] sm:$0xff]
        %v462 = vld [vmem:[#allocation7 + $0x70] sm:$0xff]
        %v463 = vld [vmem:[#allocation7 + $0x78] sm:$0xff]
        %v464 = vld [vmem:[#allocation7 + $0x80] sm:$0xff]
        %v465 = vld [vmem:[#allocation7 + $0x88] sm:$0xff]
        %v466 = vld [vmem:[#allocation7 + $0x90] sm:$0xff]
        %v467 = vld [vmem:[#allocation7 + $0x98] sm:$0xff]
        %v468 = vld [vmem:[#allocation7 + $0xa0] sm:$0xff]
        %v469 = vld [vmem:[#allocation7 + $0xa8] sm:$0xff]
        %v470 = vld [vmem:[#allocation7 + $0xb0] sm:$0xff]
        %v471 = vld [vmem:[#allocation7 + $0xb8] sm:$0xff]
        %v472 = vld [vmem:[#allocation7 + $0xc0] sm:$0xff]
        %v473 = vld [vmem:[#allocation7 + $0xc8] sm:$0xff]
        %v474 = vld [vmem:[#allocation7 + $0xd0] sm:$0xff]
        %v475 = vld [vmem:[#allocation7 + $0xd8] sm:$0xff]
        %v476 = vld [vmem:[#allocation7 + $0xe0] sm:$0xff]
        %v477 = vld [vmem:[#allocation7 + $0xe8] sm:$0xff]
        %v478 = vld [vmem:[#allocation7 + $0xf0] sm:$0xff]
        %v479 = vld [vmem:[#allocation7 + $0xf8] sm:$0xff]
        %v480 = vld [vmem:[#allocation7 + $0x100] sm:$0xff]
        %v481 = vld [vmem:[#allocation7 + $0x108] sm:$0xff]
        %v482 = vld [vmem:[#allocation7 + $0x110] sm:$0xff]
        %v483 = vld [vmem:[#allocation7 + $0x118] sm:$0xff]
        %v484 = vld [vmem:[#allocation7 + $0x120] sm:$0xff]
        %v485 = vld [vmem:[#allocation7 + $0x128] sm:$0xff]
        %v486 = vld [vmem:[#allocation7 + $0x130] sm:$0xff]
        %v487 = vld [vmem:[#allocation7 + $0x138] sm:$0xff]
        %v488 = vld [vmem:[#allocation7 + $0x140] sm:$0xff]
        %v489 = vld [vmem:[#allocation7 + $0x148] sm:$0xff]
        %v490 = vld [vmem:[#allocation7 + $0x150] sm:$0xff]
        %v491 = vld [vmem:[#allocation7 + $0x158] sm:$0xff]
        %v492 = vld [vmem:[#allocation7 + $0x160] sm:$0xff]
        %v493 = vld [vmem:[#allocation7 + $0x168] sm:$0xff]
        %v494 = vld [vmem:[#allocation7 + $0x170] sm:$0xff]
        %v495 = vld [vmem:[#allocation7 + $0x178] sm:$0xff]
        %v496 = vld [vmem:[#allocation7 + $0x180] sm:$0xff]
        %v497 = vld [vmem:[#allocation7 + $0x188] sm:$0xff]
        %v498 = vld [vmem:[#allocation7 + $0x190] sm:$0xff]
        %v499 = vld [vmem:[#allocation7 + $0x198] sm:$0xff]
        %v500 = vld [vmem:[#allocation7 + $0x1a0] sm:$0xff]
        %v501 = vld [vmem:[#allocation7 + $0x1a8] sm:$0xff]
        %v502 = vld [vmem:[#allocation7 + $0x1b0] sm:$0xff]
        %v503 = vld [vmem:[#allocation7 + $0x1b8] sm:$0xff]
        %v504 = vld [vmem:[#allocation7 + $0x1c0] sm:$0xff]
        %v505 = vld [vmem:[#allocation7 + $0x1c8] sm:$0xff]
        %v506 = vld [vmem:[#allocation7 + $0x1d0] sm:$0xff]
        %v507 = vld [vmem:[#allocation7 + $0x1d8] sm:$0xff]
        %v508 = vld [vmem:[#allocation7 + $0x1e0] sm:$0xff]
        %v509 = vld [vmem:[#allocation7 + $0x1e8] sm:$0xff]
        %v510 = vld [vmem:[#allocation7 + $0x1f0] sm:$0xff]
        %v511 = vld [vmem:[#allocation7 + $0x1f8] sm:$0xff]
        %v512 = vld [vmem:[#allocation7 + $0x200] sm:$0xff]
        %v513 = vld [vmem:[#allocation7 + $0x208] sm:$0xff]
        %v514 = vld [vmem:[#allocation7 + $0x210] sm:$0xff]
        %v515 = vld [vmem:[#allocation7 + $0x218] sm:$0xff]
        %v516 = vld [vmem:[#allocation7 + $0x220] sm:$0xff]
        %v517 = vld [vmem:[#allocation7 + $0x228] sm:$0xff]
        %v518 = vld [vmem:[#allocation7 + $0x230] sm:$0xff]
        %v519 = vld [vmem:[#allocation7 + $0x238] sm:$0xff]
        %v520 = vld [vmem:[#allocation7 + $0x240] sm:$0xff]
        %v521 = vld [vmem:[#allocation7 + $0x248] sm:$0xff]
        %v522 = vld [vmem:[#allocation7 + $0x250] sm:$0xff]
        %v523 = vld [vmem:[#allocation7 + $0x258] sm:$0xff]
        %v524 = vld [vmem:[#allocation7 + $0x260] sm:$0xff]
        %v525 = vld [vmem:[#allocation7 + $0x268] sm:$0xff]
        %v526 = vld [vmem:[#allocation7 + $0x270] sm:$0xff]
        %v527 = vld [vmem:[#allocation7 + $0x278] sm:$0xff]
        %v528 = vld [vmem:[#allocation7 + $0x280] sm:$0xff]
        %v529 = vld [vmem:[#allocation7 + $0x288] sm:$0xff]
        %v530 = vld [vmem:[#allocation7 + $0x290] sm:$0xff]
        %v531 = vld [vmem:[#allocation7 + $0x298] sm:$0xff]
        %v532 = vld [vmem:[#allocation7 + $0x2a0] sm:$0xff]
        %v533 = vld [vmem:[#allocation7 + $0x2a8] sm:$0xff]
        %v534 = vld [vmem:[#allocation7 + $0x2b0] sm:$0xff]
        %v535 = vld [vmem:[#allocation7 + $0x2b8] sm:$0xff]
        %v536 = vld [vmem:[#allocation7 + $0x2c0] sm:$0xff]
        %v537 = vld [vmem:[#allocation7 + $0x2c8] sm:$0xff]
        %v538 = vld [vmem:[#allocation7 + $0x2d0] sm:$0xff]
        %v539 = vld [vmem:[#allocation7 + $0x2d8] sm:$0xff]
        %v540 = vld [vmem:[#allocation7 + $0x2e0] sm:$0xff]
        %v541 = vld [vmem:[#allocation7 + $0x2e8] sm:$0xff]
        %v542 = vld [vmem:[#allocation7 + $0x2f0] sm:$0xff]
        %v543 = vld [vmem:[#allocation7 + $0x2f8] sm:$0xff]
        %v544 = vld [vmem:[#allocation7 + $0x300] sm:$0xff]
        %v545 = vld [vmem:[#allocation7 + $0x308] sm:$0xff]
        %v546 = vld [vmem:[#allocation7 + $0x310] sm:$0xff]
        %v547 = vld [vmem:[#allocation7 + $0x318] sm:$0xff]
        %v548 = vld [vmem:[#allocation7 + $0x320] sm:$0xff]
        %v549 = vld [vmem:[#allocation7 + $0x328] sm:$0xff]
        %v550 = vld [vmem:[#allocation7 + $0x330] sm:$0xff]
        %v551 = vld [vmem:[#allocation7 + $0x338] sm:$0xff]
        %v552 = vld [vmem:[#allocation7 + $0x340] sm:$0xff]
        %v553 = vld [vmem:[#allocation7 + $0x348] sm:$0xff]
        %v554 = vld [vmem:[#allocation7 + $0x350] sm:$0xff]
        %v555 = vld [vmem:[#allocation7 + $0x358] sm:$0xff]
        %v556 = vld [vmem:[#allocation7 + $0x360] sm:$0xff]
        %v557 = vld [vmem:[#allocation7 + $0x368] sm:$0xff]
        %v558 = vld [vmem:[#allocation7 + $0x370] sm:$0xff]
        %v559 = vld [vmem:[#allocation7 + $0x378] sm:$0xff]
        %v560 = vld [vmem:[#allocation7 + $0x380] sm:$0xff]
        %v561 = vld [vmem:[#allocation7 + $0x388] sm:$0xff]
        %v562 = vld [vmem:[#allocation7 + $0x390] sm:$0xff]
        %v563 = vld [vmem:[#allocation7 + $0x398] sm:$0xff]
        %v564 = vld [vmem:[#allocation7 + $0x3a0] sm:$0xff]
        %v565 = vld [vmem:[#allocation7 + $0x3a8] sm:$0xff]
        %v566 = vld [vmem:[#allocation7 + $0x3b0] sm:$0xff]
        %v567 = vld [vmem:[#allocation7 + $0x3b8] sm:$0xff]
        %v568 = vld [vmem:[#allocation7 + $0x3c0] sm:$0xff]
        %v569 = vld [vmem:[#allocation7 + $0x3c8] sm:$0xff]
        %v570 = vld [vmem:[#allocation7 + $0x3d0] sm:$0xff]
        %v571 = vld [vmem:[#allocation7 + $0x3d8] sm:$0xff]
        %v572 = vld [vmem:[#allocation7 + $0x3e0] sm:$0xff]
        %v573 = vld [vmem:[#allocation7 + $0x3e8] sm:$0xff]
        %v574 = vld [vmem:[#allocation7 + $0x3f0] sm:$0xff]
        %v575 = vld [vmem:[#allocation7 + $0x3f8] sm:$0xff]
        %v576 = vld [vmem:[#allocation7 + $0x400] sm:$0xff]
        %v577 = vld [vmem:[#allocation7 + $0x408] sm:$0xff]
        %v578 = vld [vmem:[#allocation7 + $0x410] sm:$0xff]
        %v579 = vld [vmem:[#allocation7 + $0x418] sm:$0xff]
        %v580 = vld [vmem:[#allocation7 + $0x420] sm:$0xff]
        %v581 = vld [vmem:[#allocation7 + $0x428] sm:$0xff]
        %v582 = vld [vmem:[#allocation7 + $0x430] sm:$0xff]
        %v583 = vld [vmem:[#allocation7 + $0x438] sm:$0xff]
        %v584 = vld [vmem:[#allocation7 + $0x440] sm:$0xff]
        %v585 = vld [vmem:[#allocation7 + $0x448] sm:$0xff]
        %v586 = vld [vmem:[#allocation7 + $0x450] sm:$0xff]
        %v587 = vld [vmem:[#allocation7 + $0x458] sm:$0xff]
        %v588 = vld [vmem:[#allocation7 + $0x460] sm:$0xff]
        %v589 = vld [vmem:[#allocation7 + $0x468] sm:$0xff]
        %v590 = vld [vmem:[#allocation7 + $0x470] sm:$0xff]
        %v591 = vld [vmem:[#allocation7 + $0x478] sm:$0xff]
        %v592 = vld [vmem:[#allocation7 + $0x480] sm:$0xff]
        %v593 = vld [vmem:[#allocation7 + $0x488] sm:$0xff]
        %v594 = vld [vmem:[#allocation7 + $0x490] sm:$0xff]
        %v595 = vld [vmem:[#allocation7 + $0x498] sm:$0xff]
        %v596 = vld [vmem:[#allocation7 + $0x4a0] sm:$0xff]
        %v597 = vld [vmem:[#allocation7 + $0x4a8] sm:$0xff]
        %v598 = vld [vmem:[#allocation7 + $0x4b0] sm:$0xff]
        %v599 = vld [vmem:[#allocation7 + $0x4b8] sm:$0xff]
        %v600 = vld [vmem:[#allocation7 + $0x4c0] sm:$0xff]
        %v601 = vld [vmem:[#allocation7 + $0x4c8] sm:$0xff]
        %v602 = vld [vmem:[#allocation7 + $0x4d0] sm:$0xff]
        %v603 = vld [vmem:[#allocation7 + $0x4d8] sm:$0xff]
        %v604 = vld [vmem:[#allocation7 + $0x4e0] sm:$0xff]
        %v605 = vld [vmem:[#allocation7 + $0x4e8] sm:$0xff]
        %v606 = vld [vmem:[#allocation7 + $0x4f0] sm:$0xff]
        %v607 = vld [vmem:[#allocation7 + $0x4f8] sm:$0xff]
        %v608 = vld [vmem:[#allocation7 + $0x500] sm:$0xff]
        %v609 = vld [vmem:[#allocation7 + $0x508] sm:$0xff]
        %v610 = vld [vmem:[#allocation7 + $0x510] sm:$0xff]
        %v611 = vld [vmem:[#allocation7 + $0x518] sm:$0xff]
        %v612 = vld [vmem:[#allocation7 + $0x520] sm:$0xff]
        %v613 = vld [vmem:[#allocation7 + $0x528] sm:$0xff]
        %v614 = vld [vmem:[#allocation7 + $0x530] sm:$0xff]
        %v615 = vld [vmem:[#allocation7 + $0x538] sm:$0xff]
        %v616 = vld [vmem:[#allocation7 + $0x540] sm:$0xff]
        %v617 = vld [vmem:[#allocation7 + $0x548] sm:$0xff]
        %v618 = vld [vmem:[#allocation7 + $0x550] sm:$0xff]
        %v619 = vld [vmem:[#allocation7 + $0x558] sm:$0xff]
        %v620 = vld [vmem:[#allocation7 + $0x560] sm:$0xff]
        %v621 = vld [vmem:[#allocation7 + $0x568] sm:$0xff]
        %v622 = vld [vmem:[#allocation7 + $0x570] sm:$0xff]
        %v623 = vld [vmem:[#allocation7 + $0x578] sm:$0xff]
        %v624 = vld [vmem:[#allocation7 + $0x580] sm:$0xff]
        %v625 = vld [vmem:[#allocation7 + $0x588] sm:$0xff]
        %v626 = vld [vmem:[#allocation7 + $0x590] sm:$0xff]
        %v627 = vld [vmem:[#allocation7 + $0x598] sm:$0xff]
        %v628 = vld [vmem:[#allocation7 + $0x5a0] sm:$0xff]
        %v629 = vld [vmem:[#allocation7 + $0x5a8] sm:$0xff]
        %v630 = vld [vmem:[#allocation7 + $0x5b0] sm:$0xff]
        %v631 = vld [vmem:[#allocation7 + $0x5b8] sm:$0xff]
        %v632 = vld [vmem:[#allocation7 + $0x5c0] sm:$0xff]
        %v633 = vld [vmem:[#allocation7 + $0x5c8] sm:$0xff]
        %v634 = vld [vmem:[#allocation7 + $0x5d0] sm:$0xff]
        %v635 = vld [vmem:[#allocation7 + $0x5d8] sm:$0xff]
        %v636 = vld [vmem:[#allocation7 + $0x5e0] sm:$0xff]
        %v637 = vld [vmem:[#allocation7 + $0x5e8] sm:$0xff]
        %v638 = vld [vmem:[#allocation7 + $0x5f0] sm:$0xff]
        %v639 = vld [vmem:[#allocation7 + $0x5f8] sm:$0xff]
        %v640 = vld [vmem:[#allocation7 + $0x600] sm:$0xff]
        %v641 = vld [vmem:[#allocation7 + $0x608] sm:$0xff]
        %v642 = vld [vmem:[#allocation7 + $0x610] sm:$0xff]
        %v643 = vld [vmem:[#allocation7 + $0x618] sm:$0xff]
        %v644 = vld [vmem:[#allocation7 + $0x620] sm:$0xff]
        %v645 = vld [vmem:[#allocation7 + $0x628] sm:$0xff]
        %v646 = vld [vmem:[#allocation7 + $0x630] sm:$0xff]
        %v647 = vld [vmem:[#allocation7 + $0x638] sm:$0xff]
        %v648 = vld [vmem:[#allocation7 + $0x640] sm:$0xff]
        %v649 = vld [vmem:[#allocation7 + $0x648] sm:$0xff]
        %v650 = vld [vmem:[#allocation7 + $0x650] sm:$0xff]
        %v651 = vld [vmem:[#allocation7 + $0x658] sm:$0xff]
        %v652 = vld [vmem:[#allocation7 + $0x660] sm:$0xff]
        %v653 = vld [vmem:[#allocation7 + $0x668] sm:$0xff]
        %v654 = vld [vmem:[#allocation7 + $0x670] sm:$0xff]
        %v655 = vld [vmem:[#allocation7 + $0x678] sm:$0xff]
        %v656 = vld [vmem:[#allocation7 + $0x680] sm:$0xff]
        %v657 = vld [vmem:[#allocation7 + $0x688] sm:$0xff]
        %v658 = vld [vmem:[#allocation7 + $0x690] sm:$0xff]
        %v659 = vld [vmem:[#allocation7 + $0x698] sm:$0xff]
        %v660 = vld [vmem:[#allocation7 + $0x6a0] sm:$0xff]
        %v661 = vld [vmem:[#allocation7 + $0x6a8] sm:$0xff]
        %v662 = vld [vmem:[#allocation7 + $0x6b0] sm:$0xff]
        %v663 = vld [vmem:[#allocation7 + $0x6b8] sm:$0xff]
        %v664 = vld [vmem:[#allocation7 + $0x6c0] sm:$0xff]
        %v665 = vld [vmem:[#allocation7 + $0x6c8] sm:$0xff]
        %v666 = vld [vmem:[#allocation7 + $0x6d0] sm:$0xff]
        %v667 = vld [vmem:[#allocation7 + $0x6d8] sm:$0xff]
        %v668 = vld [vmem:[#allocation7 + $0x6e0] sm:$0xff]
        %v669 = vld [vmem:[#allocation7 + $0x6e8] sm:$0xff]
        %v670 = vld [vmem:[#allocation7 + $0x6f0] sm:$0xff]
        %v671 = vld [vmem:[#allocation7 + $0x6f8] sm:$0xff]
        %v672 = vld [vmem:[#allocation7 + $0x700] sm:$0xff]
        %v673 = vld [vmem:[#allocation7 + $0x708] sm:$0xff]
        %v674 = vld [vmem:[#allocation7 + $0x710] sm:$0xff]
        %v675 = vld [vmem:[#allocation7 + $0x718] sm:$0xff]
        %v676 = vld [vmem:[#allocation7 + $0x720] sm:$0xff]
        %v677 = vld [vmem:[#allocation7 + $0x728] sm:$0xff]
        %v678 = vld [vmem:[#allocation7 + $0x730] sm:$0xff]
        %v679 = vld [vmem:[#allocation7 + $0x738] sm:$0xff]
        %v680 = vld [vmem:[#allocation7 + $0x740] sm:$0xff]
        %v681 = vld [vmem:[#allocation7 + $0x748] sm:$0xff]
        %v682 = vld [vmem:[#allocation7 + $0x750] sm:$0xff]
        %v683 = vld [vmem:[#allocation7 + $0x758] sm:$0xff]
        %v684 = vld [vmem:[#allocation7 + $0x760] sm:$0xff]
        %v685 = vld [vmem:[#allocation7 + $0x768] sm:$0xff]
        %v686 = vld [vmem:[#allocation7 + $0x770] sm:$0xff]
        %v687 = vld [vmem:[#allocation7 + $0x778] sm:$0xff]
        %v688 = vld [vmem:[#allocation7 + $0x780] sm:$0xff]
        %v689 = vld [vmem:[#allocation7 + $0x788] sm:$0xff]
        %v690 = vld [vmem:[#allocation7 + $0x790] sm:$0xff]
        %v691 = vld [vmem:[#allocation7 + $0x798] sm:$0xff]
        %v692 = vld [vmem:[#allocation7 + $0x7a0] sm:$0xff]
        %v693 = vld [vmem:[#allocation7 + $0x7a8] sm:$0xff]
        %v694 = vld [vmem:[#allocation7 + $0x7b0] sm:$0xff]
        %v695 = vld [vmem:[#allocation7 + $0x7b8] sm:$0xff]
        %v696 = vld [vmem:[#allocation7 + $0x7c0] sm:$0xff]
        %v697 = vld [vmem:[#allocation7 + $0x7c8] sm:$0xff]
        %v698 = vld [vmem:[#allocation7 + $0x7d0] sm:$0xff]
        %v699 = vld [vmem:[#allocation7 + $0x7d8] sm:$0xff]
        %v700 = vld [vmem:[#allocation7 + $0x7e0] sm:$0xff]
        %v701 = vld [vmem:[#allocation7 + $0x7e8] sm:$0xff]
        %v702 = vld [vmem:[#allocation7 + $0x7f0] sm:$0xff]
        %v703 = vld [vmem:[#allocation7 + $0x7f8] sm:$0xff]
        %v704 = vld [vmem:[#allocation7 + $0x800] sm:$0xff]
        %v705 = vld [vmem:[#allocation7 + $0x808] sm:$0xff]
        %v706 = vld [vmem:[#allocation7 + $0x810] sm:$0xff]
        %v707 = vld [vmem:[#allocation7 + $0x818] sm:$0xff]
        %v708 = vld [vmem:[#allocation7 + $0x820] sm:$0xff]
        %v709 = vld [vmem:[#allocation7 + $0x828] sm:$0xff]
        %v710 = vld [vmem:[#allocation7 + $0x830] sm:$0xff]
        %v711 = vld [vmem:[#allocation7 + $0x838] sm:$0xff]
        %v712 = vld [vmem:[#allocation7 + $0x840] sm:$0xff]
        %v713 = vld [vmem:[#allocation7 + $0x848] sm:$0xff]
        %v714 = vld [vmem:[#allocation7 + $0x850] sm:$0xff]
        %v715 = vld [vmem:[#allocation7 + $0x858] sm:$0xff]
        %v716 = vld [vmem:[#allocation7 + $0x860] sm:$0xff]
        %v717 = vld [vmem:[#allocation7 + $0x868] sm:$0xff]
        %v718 = vld [vmem:[#allocation7 + $0x870] sm:$0xff]
        %v719 = vld [vmem:[#allocation7 + $0x878] sm:$0xff]
        %v720 = vld [vmem:[#allocation7 + $0x880] sm:$0xff]
        %v721 = vld [vmem:[#allocation7 + $0x888] sm:$0xff]
        %v722 = vld [vmem:[#allocation7 + $0x890] sm:$0xff]
        %v723 = vld [vmem:[#allocation7 + $0x898] sm:$0xff]
        %v724 = vld [vmem:[#allocation7 + $0x8a0] sm:$0xff]
        %v725 = vld [vmem:[#allocation7 + $0x8a8] sm:$0xff]
        %v726 = vld [vmem:[#allocation7 + $0x8b0] sm:$0xff]
        %v727 = vld [vmem:[#allocation7 + $0x8b8] sm:$0xff]
        %v728 = vld [vmem:[#allocation7 + $0x8c0] sm:$0xff]
        %v729 = vld [vmem:[#allocation7 + $0x8c8] sm:$0xff]
        %v730 = vld [vmem:[#allocation7 + $0x8d0] sm:$0xff]
        %v731 = vld [vmem:[#allocation7 + $0x8d8] sm:$0xff]
        %v732 = vld [vmem:[#allocation7 + $0x8e0] sm:$0xff]
        %v733 = vld [vmem:[#allocation7 + $0x8e8] sm:$0xff]
        %v734 = vld [vmem:[#allocation7 + $0x8f0] sm:$0xff]
        %v735 = vld [vmem:[#allocation7 + $0x8f8] sm:$0xff]
        %v736 = vld [vmem:[#allocation7 + $0x900] sm:$0xff]
        %v737 = vld [vmem:[#allocation7 + $0x908] sm:$0xff]
        %v738 = vld [vmem:[#allocation7 + $0x910] sm:$0xff]
        %v739 = vld [vmem:[#allocation7 + $0x918] sm:$0xff]
        %v740 = vld [vmem:[#allocation7 + $0x920] sm:$0xff]
        %v741 = vld [vmem:[#allocation7 + $0x928] sm:$0xff]
        %v742 = vld [vmem:[#allocation7 + $0x930] sm:$0xff]
        %v743 = vld [vmem:[#allocation7 + $0x938] sm:$0xff]
        %v744 = vld [vmem:[#allocation7 + $0x940] sm:$0xff]
        %v745 = vld [vmem:[#allocation7 + $0x948] sm:$0xff]
        %v746 = vld [vmem:[#allocation7 + $0x950] sm:$0xff]
        %v747 = vld [vmem:[#allocation7 + $0x958] sm:$0xff]
        %v748 = vld [vmem:[#allocation7 + $0x960] sm:$0xff]
        %v749 = vld [vmem:[#allocation7 + $0x968] sm:$0xff]
        %v750 = vld [vmem:[#allocation7 + $0x970] sm:$0xff]
        %v751 = vld [vmem:[#allocation7 + $0x978] sm:$0xff]
        %v752 = vld [vmem:[#allocation7 + $0x980] sm:$0xff]
        %v753 = vld [vmem:[#allocation7 + $0x988] sm:$0xff]
        %v754 = vld [vmem:[#allocation7 + $0x990] sm:$0xff]
        %v755 = vld [vmem:[#allocation7 + $0x998] sm:$0xff]
        %v756 = vld [vmem:[#allocation7 + $0x9a0] sm:$0xff]
        %v757 = vld [vmem:[#allocation7 + $0x9a8] sm:$0xff]
        %v758 = vld [vmem:[#allocation7 + $0x9b0] sm:$0xff]
        %v759 = vld [vmem:[#allocation7 + $0x9b8] sm:$0xff]
        %v760 = vld [vmem:[#allocation7 + $0x9c0] sm:$0xff]
        %v761 = vld [vmem:[#allocation7 + $0x9c8] sm:$0xff]
        %v762 = vld [vmem:[#allocation7 + $0x9d0] sm:$0xff]
        %v763 = vld [vmem:[#allocation7 + $0x9d8] sm:$0xff]
        %v764 = vld [vmem:[#allocation7 + $0x9e0] sm:$0xff]
        %v765 = vld [vmem:[#allocation7 + $0x9e8] sm:$0xff]
        %v766 = vld [vmem:[#allocation7 + $0x9f0] sm:$0xff]
        %v767 = vld [vmem:[#allocation7 + $0x9f8] sm:$0xff]
        %v768 = vld [vmem:[#allocation7 + $0xa00] sm:$0xff]
        %v769 = vld [vmem:[#allocation7 + $0xa08] sm:$0xff]
        %v770 = vld [vmem:[#allocation7 + $0xa10] sm:$0xff]
        %v771 = vld [vmem:[#allocation7 + $0xa18] sm:$0xff]
        %v772 = vld [vmem:[#allocation7 + $0xa20] sm:$0xff]
        %v773 = vld [vmem:[#allocation7 + $0xa28] sm:$0xff]
        %v774 = vld [vmem:[#allocation7 + $0xa30] sm:$0xff]
        %v775 = vld [vmem:[#allocation7 + $0xa38] sm:$0xff]
        %v776 = vld [vmem:[#allocation7 + $0xa40] sm:$0xff]
        %v777 = vld [vmem:[#allocation7 + $0xa48] sm:$0xff]
        %v778 = vld [vmem:[#allocation7 + $0xa50] sm:$0xff]
        %v779 = vld [vmem:[#allocation7 + $0xa58] sm:$0xff]
        %v780 = vld [vmem:[#allocation7 + $0xa60] sm:$0xff]
        %v781 = vld [vmem:[#allocation7 + $0xa68] sm:$0xff]
        %v782 = vld [vmem:[#allocation7 + $0xa70] sm:$0xff]
        %v783 = vld [vmem:[#allocation7 + $0xa78] sm:$0xff]
        %v784 = vld [vmem:[#allocation7 + $0xa80] sm:$0xff]
        %v785 = vld [vmem:[#allocation7 + $0xa88] sm:$0xff]
        %v786 = vld [vmem:[#allocation7 + $0xa90] sm:$0xff]
        %v787 = vld [vmem:[#allocation7 + $0xa98] sm:$0xff]
        %v788 = vld [vmem:[#allocation7 + $0xaa0] sm:$0xff]
        %v789 = vld [vmem:[#allocation7 + $0xaa8] sm:$0xff]
        %v790 = vld [vmem:[#allocation7 + $0xab0] sm:$0xff]
        %v791 = vld [vmem:[#allocation7 + $0xab8] sm:$0xff]
        %v792 = vld [vmem:[#allocation7 + $0xac0] sm:$0xff]
        %v793 = vld [vmem:[#allocation7 + $0xac8] sm:$0xff]
        %v794 = vld [vmem:[#allocation7 + $0xad0] sm:$0xff]
        %v795 = vld [vmem:[#allocation7 + $0xad8] sm:$0xff]
        %v796 = vld [vmem:[#allocation7 + $0xae0] sm:$0xff]
        %v797 = vld [vmem:[#allocation7 + $0xae8] sm:$0xff]
        %v798 = vld [vmem:[#allocation7 + $0xaf0] sm:$0xff]
        %v799 = vld [vmem:[#allocation7 + $0xaf8] sm:$0xff]
        %v800 = vld [vmem:[#allocation7 + $0xb00] sm:$0xff]
        %v801 = vld [vmem:[#allocation7 + $0xb08] sm:$0xff]
        %v802 = vld [vmem:[#allocation7 + $0xb10] sm:$0xff]
        %v803 = vld [vmem:[#allocation7 + $0xb18] sm:$0xff]
        %v804 = vld [vmem:[#allocation7 + $0xb20] sm:$0xff]
        %v805 = vld [vmem:[#allocation7 + $0xb28] sm:$0xff]
        %v806 = vld [vmem:[#allocation7 + $0xb30] sm:$0xff]
        %v807 = vld [vmem:[#allocation7 + $0xb38] sm:$0xff]
        %v808 = vld [vmem:[#allocation7 + $0xb40] sm:$0xff]
        %v809 = vld [vmem:[#allocation7 + $0xb48] sm:$0xff]
        %v810 = vld [vmem:[#allocation7 + $0xb50] sm:$0xff]
        %v811 = vld [vmem:[#allocation7 + $0xb58] sm:$0xff]
        %v812 = vld [vmem:[#allocation7 + $0xb60] sm:$0xff]
        %v813 = vld [vmem:[#allocation7 + $0xb68] sm:$0xff]
        %v814 = vld [vmem:[#allocation7 + $0xb70] sm:$0xff]
        %v815 = vld [vmem:[#allocation7 + $0xb78] sm:$0xff]
        %v816 = vld [vmem:[#allocation7 + $0xb80] sm:$0xff]
        %v817 = vld [vmem:[#allocation7 + $0xb88] sm:$0xff]
        %v818 = vld [vmem:[#allocation7 + $0xb90] sm:$0xff]
        %v819 = vld [vmem:[#allocation7 + $0xb98] sm:$0xff]
        %v820 = vld [vmem:[#allocation7 + $0xba0] sm:$0xff]
        %v821 = vld [vmem:[#allocation7 + $0xba8] sm:$0xff]
        %v822 = vld [vmem:[#allocation7 + $0xbb0] sm:$0xff]
        %v823 = vld [vmem:[#allocation7 + $0xbb8] sm:$0xff]
        %v824 = vld [vmem:[#allocation7 + $0xbc0] sm:$0xff]
        %v825 = vld [vmem:[#allocation7 + $0xbc8] sm:$0xff]
        %v826 = vld [vmem:[#allocation7 + $0xbd0] sm:$0xff]
        %v827 = vld [vmem:[#allocation7 + $0xbd8] sm:$0xff]
        %v828 = vld [vmem:[#allocation7 + $0xbe0] sm:$0xff]
        %v829 = vld [vmem:[#allocation7 + $0xbe8] sm:$0xff]
        %v830 = vld [vmem:[#allocation7 + $0xbf0] sm:$0xff]
        %v831 = vld [vmem:[#allocation7 + $0xbf8] sm:$0xff]
        %v832 = vlaneseq
        %v833 = vshrl.u32 %v832, 7
        %v834 = vsub.s32 0, %v833
        %v835 = vrot.slane %v428, %v834
        %v836 = vlaneseq
        %v837 = vshrl.u32 %v836, 7
        %v838 = vsub.s32 0, %v837
        %v839 = vrot.slane %v429, %v838
        %v840 = vlaneseq
        %v841 = vshrl.u32 %v840, 7
        %v842 = vsub.s32 0, %v841
        %v843 = vrot.slane %v430, %v842
        %v844 = vlaneseq
        %v845 = vshrl.u32 %v844, 7
        %v846 = vsub.s32 0, %v845
        %v847 = vrot.slane %v431, %v846
        %v848 = vlaneseq
        %v849 = vshrl.u32 %v848, 7
        %v850 = vsub.s32 0, %v849
        %v851 = vrot.slane %v432, %v850
        %v852 = vlaneseq
        %v853 = vshrl.u32 %v852, 7
        %v854 = vsub.s32 0, %v853
        %v855 = vrot.slane %v433, %v854
        %v856 = vlaneseq
        %v857 = vshrl.u32 %v856, 7
        %v858 = vsub.s32 0, %v857
        %v859 = vrot.slane %v434, %v858
        %v860 = vlaneseq
        %v861 = vshrl.u32 %v860, 7
        %v862 = vsub.s32 0, %v861
        %v863 = vrot.slane %v435, %v862
        %v864 = vlaneseq
        %v865 = vshrl.u32 %v864, 7
        %v866 = vsub.s32 0, %v865
        %v867 = vrot.slane %v436, %v866
        %v868 = vlaneseq
        %v869 = vshrl.u32 %v868, 7
        %v870 = vsub.s32 0, %v869
        %v871 = vrot.slane %v437, %v870
        %v872 = vlaneseq
        %v873 = vshrl.u32 %v872, 7
        %v874 = vsub.s32 0, %v873
        %v875 = vrot.slane %v438, %v874
        %v876 = vlaneseq
        %v877 = vshrl.u32 %v876, 7
        %v878 = vsub.s32 0, %v877
        %v879 = vrot.slane %v439, %v878
        %v1264 = vunpack.c.l.b16 %v448
        %v1265 = vunpack.c.h.b16 %v448
        %v1266 = vunpack.c.l.b16 %v449
        %v1267 = vunpack.c.h.b16 %v449
        %v1268 = vunpack.c.l.b16 %v450
        %v1269 = vunpack.c.h.b16 %v450
        %v1270 = vunpack.c.l.b16 %v451
        %v1271 = vunpack.c.h.b16 %v451
        %v1272 = vunpack.c.l.b16 %v452
        %v1273 = vunpack.c.h.b16 %v452
        %v1274 = vunpack.c.l.b16 %v453
        %v1275 = vunpack.c.h.b16 %v453
        %v1276 = vunpack.c.l.b16 %v454
        %v1277 = vunpack.c.h.b16 %v454
        %v1278 = vunpack.c.l.b16 %v455
        %v1279 = vunpack.c.h.b16 %v455
        %v1280 = vunpack.c.l.b16 %v456
        %v1281 = vunpack.c.h.b16 %v456
        %v1282 = vunpack.c.l.b16 %v457
        %v1283 = vunpack.c.h.b16 %v457
        %v1284 = vunpack.c.l.b16 %v458
        %v1285 = vunpack.c.h.b16 %v458
        %v1286 = vunpack.c.l.b16 %v459
        %v1287 = vunpack.c.h.b16 %v459
        %v1288 = vunpack.c.l.b16 %v460
        %v1289 = vunpack.c.h.b16 %v460
        %v1290 = vunpack.c.l.b16 %v461
        %v1291 = vunpack.c.h.b16 %v461
        %v1292 = vunpack.c.l.b16 %v462
        %v1293 = vunpack.c.h.b16 %v462
        %v1294 = vunpack.c.l.b16 %v463
        %v1295 = vunpack.c.h.b16 %v463
        %v1296 = vunpack.c.l.b16 %v464
        %v1297 = vunpack.c.h.b16 %v464
        %v1298 = vunpack.c.l.b16 %v465
        %v1299 = vunpack.c.h.b16 %v465
        %v1300 = vunpack.c.l.b16 %v466
        %v1301 = vunpack.c.h.b16 %v466
        %v1302 = vunpack.c.l.b16 %v467
        %v1303 = vunpack.c.h.b16 %v467
        %v1304 = vunpack.c.l.b16 %v468
        %v1305 = vunpack.c.h.b16 %v468
        %v1306 = vunpack.c.l.b16 %v469
        %v1307 = vunpack.c.h.b16 %v469
        %v1308 = vunpack.c.l.b16 %v470
        %v1309 = vunpack.c.h.b16 %v470
        %v1310 = vunpack.c.l.b16 %v471
        %v1311 = vunpack.c.h.b16 %v471
        %v1312 = vunpack.c.l.b16 %v472
        %v1313 = vunpack.c.h.b16 %v472
        %v1314 = vunpack.c.l.b16 %v473
        %v1315 = vunpack.c.h.b16 %v473
        %v1316 = vunpack.c.l.b16 %v474
        %v1317 = vunpack.c.h.b16 %v474
        %v1318 = vunpack.c.l.b16 %v475
        %v1319 = vunpack.c.h.b16 %v475
        %v1320 = vunpack.c.l.b16 %v476
        %v1321 = vunpack.c.h.b16 %v476
        %v1322 = vunpack.c.l.b16 %v477
        %v1323 = vunpack.c.h.b16 %v477
        %v1324 = vunpack.c.l.b16 %v478
        %v1325 = vunpack.c.h.b16 %v478
        %v1326 = vunpack.c.l.b16 %v479
        %v1327 = vunpack.c.h.b16 %v479
        %v1328 = vunpack.c.l.b16 %v480
        %v1329 = vunpack.c.h.b16 %v480
        %v1330 = vunpack.c.l.b16 %v481
        %v1331 = vunpack.c.h.b16 %v481
        %v1332 = vunpack.c.l.b16 %v482
        %v1333 = vunpack.c.h.b16 %v482
        %v1334 = vunpack.c.l.b16 %v483
        %v1335 = vunpack.c.h.b16 %v483
        %v1336 = vunpack.c.l.b16 %v484
        %v1337 = vunpack.c.h.b16 %v484
        %v1338 = vunpack.c.l.b16 %v485
        %v1339 = vunpack.c.h.b16 %v485
        %v1340 = vunpack.c.l.b16 %v486
        %v1341 = vunpack.c.h.b16 %v486
        %v1342 = vunpack.c.l.b16 %v487
        %v1343 = vunpack.c.h.b16 %v487
        %v1344 = vunpack.c.l.b16 %v488
        %v1345 = vunpack.c.h.b16 %v488
        %v1346 = vunpack.c.l.b16 %v489
        %v1347 = vunpack.c.h.b16 %v489
        %v1348 = vunpack.c.l.b16 %v490
        %v1349 = vunpack.c.h.b16 %v490
        %v1350 = vunpack.c.l.b16 %v491
        %v1351 = vunpack.c.h.b16 %v491
        %v1352 = vunpack.c.l.b16 %v492
        %v1353 = vunpack.c.h.b16 %v492
        %v1354 = vunpack.c.l.b16 %v493
        %v1355 = vunpack.c.h.b16 %v493
        %v1356 = vunpack.c.l.b16 %v494
        %v1357 = vunpack.c.h.b16 %v494
        %v1358 = vunpack.c.l.b16 %v495
        %v1359 = vunpack.c.h.b16 %v495
        %v1360 = vunpack.c.l.b16 %v496
        %v1361 = vunpack.c.h.b16 %v496
        %v1362 = vunpack.c.l.b16 %v497
        %v1363 = vunpack.c.h.b16 %v497
        %v1364 = vunpack.c.l.b16 %v498
        %v1365 = vunpack.c.h.b16 %v498
        %v1366 = vunpack.c.l.b16 %v499
        %v1367 = vunpack.c.h.b16 %v499
        %v1368 = vunpack.c.l.b16 %v500
        %v1369 = vunpack.c.h.b16 %v500
        %v1370 = vunpack.c.l.b16 %v501
        %v1371 = vunpack.c.h.b16 %v501
        %v1372 = vunpack.c.l.b16 %v502
        %v1373 = vunpack.c.h.b16 %v502
        %v1374 = vunpack.c.l.b16 %v503
        %v1375 = vunpack.c.h.b16 %v503
        %v1376 = vunpack.c.l.b16 %v504
        %v1377 = vunpack.c.h.b16 %v504
        %v1378 = vunpack.c.l.b16 %v505
        %v1379 = vunpack.c.h.b16 %v505
        %v1380 = vunpack.c.l.b16 %v506
        %v1381 = vunpack.c.h.b16 %v506
        %v1382 = vunpack.c.l.b16 %v507
        %v1383 = vunpack.c.h.b16 %v507
        %v1384 = vunpack.c.l.b16 %v508
        %v1385 = vunpack.c.h.b16 %v508
        %v1386 = vunpack.c.l.b16 %v509
        %v1387 = vunpack.c.h.b16 %v509
        %v1388 = vunpack.c.l.b16 %v510
        %v1389 = vunpack.c.h.b16 %v510
        %v1390 = vunpack.c.l.b16 %v511
        %v1391 = vunpack.c.h.b16 %v511
        %v1392 = vunpack.c.l.b16 %v512
        %v1393 = vunpack.c.h.b16 %v512
        %v1394 = vunpack.c.l.b16 %v513
        %v1395 = vunpack.c.h.b16 %v513
        %v1396 = vunpack.c.l.b16 %v514
        %v1397 = vunpack.c.h.b16 %v514
        %v1398 = vunpack.c.l.b16 %v515
        %v1399 = vunpack.c.h.b16 %v515
        %v1400 = vunpack.c.l.b16 %v516
        %v1401 = vunpack.c.h.b16 %v516
        %v1402 = vunpack.c.l.b16 %v517
        %v1403 = vunpack.c.h.b16 %v517
        %v1404 = vunpack.c.l.b16 %v518
        %v1405 = vunpack.c.h.b16 %v518
        %v1406 = vunpack.c.l.b16 %v519
        %v1407 = vunpack.c.h.b16 %v519
        %v1408 = vunpack.c.l.b16 %v520
        %v1409 = vunpack.c.h.b16 %v520
        %v1410 = vunpack.c.l.b16 %v521
        %v1411 = vunpack.c.h.b16 %v521
        %v1412 = vunpack.c.l.b16 %v522
        %v1413 = vunpack.c.h.b16 %v522
        %v1414 = vunpack.c.l.b16 %v523
        %v1415 = vunpack.c.h.b16 %v523
        %v1416 = vunpack.c.l.b16 %v524
        %v1417 = vunpack.c.h.b16 %v524
        %v1418 = vunpack.c.l.b16 %v525
        %v1419 = vunpack.c.h.b16 %v525
        %v1420 = vunpack.c.l.b16 %v526
        %v1421 = vunpack.c.h.b16 %v526
        %v1422 = vunpack.c.l.b16 %v527
        %v1423 = vunpack.c.h.b16 %v527
        %v1424 = vunpack.c.l.b16 %v528
        %v1425 = vunpack.c.h.b16 %v528
        %v1426 = vunpack.c.l.b16 %v529
        %v1427 = vunpack.c.h.b16 %v529
        %v1428 = vunpack.c.l.b16 %v530
        %v1429 = vunpack.c.h.b16 %v530
        %v1430 = vunpack.c.l.b16 %v531
        %v1431 = vunpack.c.h.b16 %v531
        %v1432 = vunpack.c.l.b16 %v532
        %v1433 = vunpack.c.h.b16 %v532
        %v1434 = vunpack.c.l.b16 %v533
        %v1435 = vunpack.c.h.b16 %v533
        %v1436 = vunpack.c.l.b16 %v534
        %v1437 = vunpack.c.h.b16 %v534
        %v1438 = vunpack.c.l.b16 %v535
        %v1439 = vunpack.c.h.b16 %v535
        %v1440 = vunpack.c.l.b16 %v536
        %v1441 = vunpack.c.h.b16 %v536
        %v1442 = vunpack.c.l.b16 %v537
        %v1443 = vunpack.c.h.b16 %v537
        %v1444 = vunpack.c.l.b16 %v538
        %v1445 = vunpack.c.h.b16 %v538
        %v1446 = vunpack.c.l.b16 %v539
        %v1447 = vunpack.c.h.b16 %v539
        %v1448 = vunpack.c.l.b16 %v540
        %v1449 = vunpack.c.h.b16 %v540
        %v1450 = vunpack.c.l.b16 %v541
        %v1451 = vunpack.c.h.b16 %v541
        %v1452 = vunpack.c.l.b16 %v542
        %v1453 = vunpack.c.h.b16 %v542
        %v1454 = vunpack.c.l.b16 %v543
        %v1455 = vunpack.c.h.b16 %v543
        %v1456 = vunpack.c.l.b16 %v544
        %v1457 = vunpack.c.h.b16 %v544
        %v1458 = vunpack.c.l.b16 %v545
        %v1459 = vunpack.c.h.b16 %v545
        %v1460 = vunpack.c.l.b16 %v546
        %v1461 = vunpack.c.h.b16 %v546
        %v1462 = vunpack.c.l.b16 %v547
        %v1463 = vunpack.c.h.b16 %v547
        %v1464 = vunpack.c.l.b16 %v548
        %v1465 = vunpack.c.h.b16 %v548
        %v1466 = vunpack.c.l.b16 %v549
        %v1467 = vunpack.c.h.b16 %v549
        %v1468 = vunpack.c.l.b16 %v550
        %v1469 = vunpack.c.h.b16 %v550
        %v1470 = vunpack.c.l.b16 %v551
        %v1471 = vunpack.c.h.b16 %v551
        %v1472 = vunpack.c.l.b16 %v552
        %v1473 = vunpack.c.h.b16 %v552
        %v1474 = vunpack.c.l.b16 %v553
        %v1475 = vunpack.c.h.b16 %v553
        %v1476 = vunpack.c.l.b16 %v554
        %v1477 = vunpack.c.h.b16 %v554
        %v1478 = vunpack.c.l.b16 %v555
        %v1479 = vunpack.c.h.b16 %v555
        %v1480 = vunpack.c.l.b16 %v556
        %v1481 = vunpack.c.h.b16 %v556
        %v1482 = vunpack.c.l.b16 %v557
        %v1483 = vunpack.c.h.b16 %v557
        %v1484 = vunpack.c.l.b16 %v558
        %v1485 = vunpack.c.h.b16 %v558
        %v1486 = vunpack.c.l.b16 %v559
        %v1487 = vunpack.c.h.b16 %v559
        %v1488 = vunpack.c.l.b16 %v560
        %v1489 = vunpack.c.h.b16 %v560
        %v1490 = vunpack.c.l.b16 %v561
        %v1491 = vunpack.c.h.b16 %v561
        %v1492 = vunpack.c.l.b16 %v562
        %v1493 = vunpack.c.h.b16 %v562
        %v1494 = vunpack.c.l.b16 %v563
        %v1495 = vunpack.c.h.b16 %v563
        %v1496 = vunpack.c.l.b16 %v564
        %v1497 = vunpack.c.h.b16 %v564
        %v1498 = vunpack.c.l.b16 %v565
        %v1499 = vunpack.c.h.b16 %v565
        %v1500 = vunpack.c.l.b16 %v566
        %v1501 = vunpack.c.h.b16 %v566
        %v1502 = vunpack.c.l.b16 %v567
        %v1503 = vunpack.c.h.b16 %v567
        %v1504 = vunpack.c.l.b16 %v568
        %v1505 = vunpack.c.h.b16 %v568
        %v1506 = vunpack.c.l.b16 %v569
        %v1507 = vunpack.c.h.b16 %v569
        %v1508 = vunpack.c.l.b16 %v570
        %v1509 = vunpack.c.h.b16 %v570
        %v1510 = vunpack.c.l.b16 %v571
        %v1511 = vunpack.c.h.b16 %v571
        %v1512 = vunpack.c.l.b16 %v572
        %v1513 = vunpack.c.h.b16 %v572
        %v1514 = vunpack.c.l.b16 %v573
        %v1515 = vunpack.c.h.b16 %v573
        %v1516 = vunpack.c.l.b16 %v574
        %v1517 = vunpack.c.h.b16 %v574
        %v1518 = vunpack.c.l.b16 %v575
        %v1519 = vunpack.c.h.b16 %v575
        %v1520 = vunpack.c.l.b16 %v576
        %v1521 = vunpack.c.h.b16 %v576
        %v1522 = vunpack.c.l.b16 %v577
        %v1523 = vunpack.c.h.b16 %v577
        %v1524 = vunpack.c.l.b16 %v578
        %v1525 = vunpack.c.h.b16 %v578
        %v1526 = vunpack.c.l.b16 %v579
        %v1527 = vunpack.c.h.b16 %v579
        %v1528 = vunpack.c.l.b16 %v580
        %v1529 = vunpack.c.h.b16 %v580
        %v1530 = vunpack.c.l.b16 %v581
        %v1531 = vunpack.c.h.b16 %v581
        %v1532 = vunpack.c.l.b16 %v582
        %v1533 = vunpack.c.h.b16 %v582
        %v1534 = vunpack.c.l.b16 %v583
        %v1535 = vunpack.c.h.b16 %v583
        %v1536 = vunpack.c.l.b16 %v584
        %v1537 = vunpack.c.h.b16 %v584
        %v1538 = vunpack.c.l.b16 %v585
        %v1539 = vunpack.c.h.b16 %v585
        %v1540 = vunpack.c.l.b16 %v586
        %v1541 = vunpack.c.h.b16 %v586
        %v1542 = vunpack.c.l.b16 %v587
        %v1543 = vunpack.c.h.b16 %v587
        %v1544 = vunpack.c.l.b16 %v588
        %v1545 = vunpack.c.h.b16 %v588
        %v1546 = vunpack.c.l.b16 %v589
        %v1547 = vunpack.c.h.b16 %v589
        %v1548 = vunpack.c.l.b16 %v590
        %v1549 = vunpack.c.h.b16 %v590
        %v1550 = vunpack.c.l.b16 %v591
        %v1551 = vunpack.c.h.b16 %v591
        %v1552 = vunpack.c.l.b16 %v592
        %v1553 = vunpack.c.h.b16 %v592
        %v1554 = vunpack.c.l.b16 %v593
        %v1555 = vunpack.c.h.b16 %v593
        %v1556 = vunpack.c.l.b16 %v594
        %v1557 = vunpack.c.h.b16 %v594
        %v1558 = vunpack.c.l.b16 %v595
        %v1559 = vunpack.c.h.b16 %v595
        %v1560 = vunpack.c.l.b16 %v596
        %v1561 = vunpack.c.h.b16 %v596
        %v1562 = vunpack.c.l.b16 %v597
        %v1563 = vunpack.c.h.b16 %v597
        %v1564 = vunpack.c.l.b16 %v598
        %v1565 = vunpack.c.h.b16 %v598
        %v1566 = vunpack.c.l.b16 %v599
        %v1567 = vunpack.c.h.b16 %v599
        %v1568 = vunpack.c.l.b16 %v600
        %v1569 = vunpack.c.h.b16 %v600
        %v1570 = vunpack.c.l.b16 %v601
        %v1571 = vunpack.c.h.b16 %v601
        %v1572 = vunpack.c.l.b16 %v602
        %v1573 = vunpack.c.h.b16 %v602
        %v1574 = vunpack.c.l.b16 %v603
        %v1575 = vunpack.c.h.b16 %v603
        %v1576 = vunpack.c.l.b16 %v604
        %v1577 = vunpack.c.h.b16 %v604
        %v1578 = vunpack.c.l.b16 %v605
        %v1579 = vunpack.c.h.b16 %v605
        %v1580 = vunpack.c.l.b16 %v606
        %v1581 = vunpack.c.h.b16 %v606
        %v1582 = vunpack.c.l.b16 %v607
        %v1583 = vunpack.c.h.b16 %v607
        %v1584 = vunpack.c.l.b16 %v608
        %v1585 = vunpack.c.h.b16 %v608
        %v1586 = vunpack.c.l.b16 %v609
        %v1587 = vunpack.c.h.b16 %v609
        %v1588 = vunpack.c.l.b16 %v610
        %v1589 = vunpack.c.h.b16 %v610
        %v1590 = vunpack.c.l.b16 %v611
        %v1591 = vunpack.c.h.b16 %v611
        %v1592 = vunpack.c.l.b16 %v612
        %v1593 = vunpack.c.h.b16 %v612
        %v1594 = vunpack.c.l.b16 %v613
        %v1595 = vunpack.c.h.b16 %v613
        %v1596 = vunpack.c.l.b16 %v614
        %v1597 = vunpack.c.h.b16 %v614
        %v1598 = vunpack.c.l.b16 %v615
        %v1599 = vunpack.c.h.b16 %v615
        %v1600 = vunpack.c.l.b16 %v616
        %v1601 = vunpack.c.h.b16 %v616
        %v1602 = vunpack.c.l.b16 %v617
        %v1603 = vunpack.c.h.b16 %v617
        %v1604 = vunpack.c.l.b16 %v618
        %v1605 = vunpack.c.h.b16 %v618
        %v1606 = vunpack.c.l.b16 %v619
        %v1607 = vunpack.c.h.b16 %v619
        %v1608 = vunpack.c.l.b16 %v620
        %v1609 = vunpack.c.h.b16 %v620
        %v1610 = vunpack.c.l.b16 %v621
        %v1611 = vunpack.c.h.b16 %v621
        %v1612 = vunpack.c.l.b16 %v622
        %v1613 = vunpack.c.h.b16 %v622
        %v1614 = vunpack.c.l.b16 %v623
        %v1615 = vunpack.c.h.b16 %v623
        %v1616 = vunpack.c.l.b16 %v624
        %v1617 = vunpack.c.h.b16 %v624
        %v1618 = vunpack.c.l.b16 %v625
        %v1619 = vunpack.c.h.b16 %v625
        %v1620 = vunpack.c.l.b16 %v626
        %v1621 = vunpack.c.h.b16 %v626
        %v1622 = vunpack.c.l.b16 %v627
        %v1623 = vunpack.c.h.b16 %v627
        %v1624 = vunpack.c.l.b16 %v628
        %v1625 = vunpack.c.h.b16 %v628
        %v1626 = vunpack.c.l.b16 %v629
        %v1627 = vunpack.c.h.b16 %v629
        %v1628 = vunpack.c.l.b16 %v630
        %v1629 = vunpack.c.h.b16 %v630
        %v1630 = vunpack.c.l.b16 %v631
        %v1631 = vunpack.c.h.b16 %v631
        %v1632 = vunpack.c.l.b16 %v632
        %v1633 = vunpack.c.h.b16 %v632
        %v1634 = vunpack.c.l.b16 %v633
        %v1635 = vunpack.c.h.b16 %v633
        %v1636 = vunpack.c.l.b16 %v634
        %v1637 = vunpack.c.h.b16 %v634
        %v1638 = vunpack.c.l.b16 %v635
        %v1639 = vunpack.c.h.b16 %v635
        %v1640 = vunpack.c.l.b16 %v636
        %v1641 = vunpack.c.h.b16 %v636
        %v1642 = vunpack.c.l.b16 %v637
        %v1643 = vunpack.c.h.b16 %v637
        %v1644 = vunpack.c.l.b16 %v638
        %v1645 = vunpack.c.h.b16 %v638
        %v1646 = vunpack.c.l.b16 %v639
        %v1647 = vunpack.c.h.b16 %v639
        %v1648 = vunpack.c.l.b16 %v640
        %v1649 = vunpack.c.h.b16 %v640
        %v1650 = vunpack.c.l.b16 %v641
        %v1651 = vunpack.c.h.b16 %v641
        %v1652 = vunpack.c.l.b16 %v642
        %v1653 = vunpack.c.h.b16 %v642
        %v1654 = vunpack.c.l.b16 %v643
        %v1655 = vunpack.c.h.b16 %v643
        %v1656 = vunpack.c.l.b16 %v644
        %v1657 = vunpack.c.h.b16 %v644
        %v1658 = vunpack.c.l.b16 %v645
        %v1659 = vunpack.c.h.b16 %v645
        %v1660 = vunpack.c.l.b16 %v646
        %v1661 = vunpack.c.h.b16 %v646
        %v1662 = vunpack.c.l.b16 %v647
        %v1663 = vunpack.c.h.b16 %v647
        %v1664 = vunpack.c.l.b16 %v648
        %v1665 = vunpack.c.h.b16 %v648
        %v1666 = vunpack.c.l.b16 %v649
        %v1667 = vunpack.c.h.b16 %v649
        %v1668 = vunpack.c.l.b16 %v650
        %v1669 = vunpack.c.h.b16 %v650
        %v1670 = vunpack.c.l.b16 %v651
        %v1671 = vunpack.c.h.b16 %v651
        %v1672 = vunpack.c.l.b16 %v652
        %v1673 = vunpack.c.h.b16 %v652
        %v1674 = vunpack.c.l.b16 %v653
        %v1675 = vunpack.c.h.b16 %v653
        %v1676 = vunpack.c.l.b16 %v654
        %v1677 = vunpack.c.h.b16 %v654
        %v1678 = vunpack.c.l.b16 %v655
        %v1679 = vunpack.c.h.b16 %v655
        %v1680 = vunpack.c.l.b16 %v656
        %v1681 = vunpack.c.h.b16 %v656
        %v1682 = vunpack.c.l.b16 %v657
        %v1683 = vunpack.c.h.b16 %v657
        %v1684 = vunpack.c.l.b16 %v658
        %v1685 = vunpack.c.h.b16 %v658
        %v1686 = vunpack.c.l.b16 %v659
        %v1687 = vunpack.c.h.b16 %v659
        %v1688 = vunpack.c.l.b16 %v660
        %v1689 = vunpack.c.h.b16 %v660
        %v1690 = vunpack.c.l.b16 %v661
        %v1691 = vunpack.c.h.b16 %v661
        %v1692 = vunpack.c.l.b16 %v662
        %v1693 = vunpack.c.h.b16 %v662
        %v1694 = vunpack.c.l.b16 %v663
        %v1695 = vunpack.c.h.b16 %v663
        %v1696 = vunpack.c.l.b16 %v664
        %v1697 = vunpack.c.h.b16 %v664
        %v1698 = vunpack.c.l.b16 %v665
        %v1699 = vunpack.c.h.b16 %v665
        %v1700 = vunpack.c.l.b16 %v666
        %v1701 = vunpack.c.h.b16 %v666
        %v1702 = vunpack.c.l.b16 %v667
        %v1703 = vunpack.c.h.b16 %v667
        %v1704 = vunpack.c.l.b16 %v668
        %v1705 = vunpack.c.h.b16 %v668
        %v1706 = vunpack.c.l.b16 %v669
        %v1707 = vunpack.c.h.b16 %v669
        %v1708 = vunpack.c.l.b16 %v670
        %v1709 = vunpack.c.h.b16 %v670
        %v1710 = vunpack.c.l.b16 %v671
        %v1711 = vunpack.c.h.b16 %v671
        %v1712 = vunpack.c.l.b16 %v672
        %v1713 = vunpack.c.h.b16 %v672
        %v1714 = vunpack.c.l.b16 %v673
        %v1715 = vunpack.c.h.b16 %v673
        %v1716 = vunpack.c.l.b16 %v674
        %v1717 = vunpack.c.h.b16 %v674
        %v1718 = vunpack.c.l.b16 %v675
        %v1719 = vunpack.c.h.b16 %v675
        %v1720 = vunpack.c.l.b16 %v676
        %v1721 = vunpack.c.h.b16 %v676
        %v1722 = vunpack.c.l.b16 %v677
        %v1723 = vunpack.c.h.b16 %v677
        %v1724 = vunpack.c.l.b16 %v678
        %v1725 = vunpack.c.h.b16 %v678
        %v1726 = vunpack.c.l.b16 %v679
        %v1727 = vunpack.c.h.b16 %v679
        %v1728 = vunpack.c.l.b16 %v680
        %v1729 = vunpack.c.h.b16 %v680
        %v1730 = vunpack.c.l.b16 %v681
        %v1731 = vunpack.c.h.b16 %v681
        %v1732 = vunpack.c.l.b16 %v682
        %v1733 = vunpack.c.h.b16 %v682
        %v1734 = vunpack.c.l.b16 %v683
        %v1735 = vunpack.c.h.b16 %v683
        %v1736 = vunpack.c.l.b16 %v684
        %v1737 = vunpack.c.h.b16 %v684
        %v1738 = vunpack.c.l.b16 %v685
        %v1739 = vunpack.c.h.b16 %v685
        %v1740 = vunpack.c.l.b16 %v686
        %v1741 = vunpack.c.h.b16 %v686
        %v1742 = vunpack.c.l.b16 %v687
        %v1743 = vunpack.c.h.b16 %v687
        %v1744 = vunpack.c.l.b16 %v688
        %v1745 = vunpack.c.h.b16 %v688
        %v1746 = vunpack.c.l.b16 %v689
        %v1747 = vunpack.c.h.b16 %v689
        %v1748 = vunpack.c.l.b16 %v690
        %v1749 = vunpack.c.h.b16 %v690
        %v1750 = vunpack.c.l.b16 %v691
        %v1751 = vunpack.c.h.b16 %v691
        %v1752 = vunpack.c.l.b16 %v692
        %v1753 = vunpack.c.h.b16 %v692
        %v1754 = vunpack.c.l.b16 %v693
        %v1755 = vunpack.c.h.b16 %v693
        %v1756 = vunpack.c.l.b16 %v694
        %v1757 = vunpack.c.h.b16 %v694
        %v1758 = vunpack.c.l.b16 %v695
        %v1759 = vunpack.c.h.b16 %v695
        %v1760 = vunpack.c.l.b16 %v696
        %v1761 = vunpack.c.h.b16 %v696
        %v1762 = vunpack.c.l.b16 %v697
        %v1763 = vunpack.c.h.b16 %v697
        %v1764 = vunpack.c.l.b16 %v698
        %v1765 = vunpack.c.h.b16 %v698
        %v1766 = vunpack.c.l.b16 %v699
        %v1767 = vunpack.c.h.b16 %v699
        %v1768 = vunpack.c.l.b16 %v700
        %v1769 = vunpack.c.h.b16 %v700
        %v1770 = vunpack.c.l.b16 %v701
        %v1771 = vunpack.c.h.b16 %v701
        %v1772 = vunpack.c.l.b16 %v702
        %v1773 = vunpack.c.h.b16 %v702
        %v1774 = vunpack.c.l.b16 %v703
        %v1775 = vunpack.c.h.b16 %v703
        %v1776 = vunpack.c.l.b16 %v704
        %v1777 = vunpack.c.h.b16 %v704
        %v1778 = vunpack.c.l.b16 %v705
        %v1779 = vunpack.c.h.b16 %v705
        %v1780 = vunpack.c.l.b16 %v706
        %v1781 = vunpack.c.h.b16 %v706
        %v1782 = vunpack.c.l.b16 %v707
        %v1783 = vunpack.c.h.b16 %v707
        %v1784 = vunpack.c.l.b16 %v708
        %v1785 = vunpack.c.h.b16 %v708
        %v1786 = vunpack.c.l.b16 %v709
        %v1787 = vunpack.c.h.b16 %v709
        %v1788 = vunpack.c.l.b16 %v710
        %v1789 = vunpack.c.h.b16 %v710
        %v1790 = vunpack.c.l.b16 %v711
        %v1791 = vunpack.c.h.b16 %v711
        %v1792 = vunpack.c.l.b16 %v712
        %v1793 = vunpack.c.h.b16 %v712
        %v1794 = vunpack.c.l.b16 %v713
        %v1795 = vunpack.c.h.b16 %v713
        %v1796 = vunpack.c.l.b16 %v714
        %v1797 = vunpack.c.h.b16 %v714
        %v1798 = vunpack.c.l.b16 %v715
        %v1799 = vunpack.c.h.b16 %v715
        %v1800 = vunpack.c.l.b16 %v716
        %v1801 = vunpack.c.h.b16 %v716
        %v1802 = vunpack.c.l.b16 %v717
        %v1803 = vunpack.c.h.b16 %v717
        %v1804 = vunpack.c.l.b16 %v718
        %v1805 = vunpack.c.h.b16 %v718
        %v1806 = vunpack.c.l.b16 %v719
        %v1807 = vunpack.c.h.b16 %v719
        %v1808 = vunpack.c.l.b16 %v720
        %v1809 = vunpack.c.h.b16 %v720
        %v1810 = vunpack.c.l.b16 %v721
        %v1811 = vunpack.c.h.b16 %v721
        %v1812 = vunpack.c.l.b16 %v722
        %v1813 = vunpack.c.h.b16 %v722
        %v1814 = vunpack.c.l.b16 %v723
        %v1815 = vunpack.c.h.b16 %v723
        %v1816 = vunpack.c.l.b16 %v724
        %v1817 = vunpack.c.h.b16 %v724
        %v1818 = vunpack.c.l.b16 %v725
        %v1819 = vunpack.c.h.b16 %v725
        %v1820 = vunpack.c.l.b16 %v726
        %v1821 = vunpack.c.h.b16 %v726
        %v1822 = vunpack.c.l.b16 %v727
        %v1823 = vunpack.c.h.b16 %v727
        %v1824 = vunpack.c.l.b16 %v728
        %v1825 = vunpack.c.h.b16 %v728
        %v1826 = vunpack.c.l.b16 %v729
        %v1827 = vunpack.c.h.b16 %v729
        %v1828 = vunpack.c.l.b16 %v730
        %v1829 = vunpack.c.h.b16 %v730
        %v1830 = vunpack.c.l.b16 %v731
        %v1831 = vunpack.c.h.b16 %v731
        %v1832 = vunpack.c.l.b16 %v732
        %v1833 = vunpack.c.h.b16 %v732
        %v1834 = vunpack.c.l.b16 %v733
        %v1835 = vunpack.c.h.b16 %v733
        %v1836 = vunpack.c.l.b16 %v734
        %v1837 = vunpack.c.h.b16 %v734
        %v1838 = vunpack.c.l.b16 %v735
        %v1839 = vunpack.c.h.b16 %v735
        %v1840 = vunpack.c.l.b16 %v736
        %v1841 = vunpack.c.h.b16 %v736
        %v1842 = vunpack.c.l.b16 %v737
        %v1843 = vunpack.c.h.b16 %v737
        %v1844 = vunpack.c.l.b16 %v738
        %v1845 = vunpack.c.h.b16 %v738
        %v1846 = vunpack.c.l.b16 %v739
        %v1847 = vunpack.c.h.b16 %v739
        %v1848 = vunpack.c.l.b16 %v740
        %v1849 = vunpack.c.h.b16 %v740
        %v1850 = vunpack.c.l.b16 %v741
        %v1851 = vunpack.c.h.b16 %v741
        %v1852 = vunpack.c.l.b16 %v742
        %v1853 = vunpack.c.h.b16 %v742
        %v1854 = vunpack.c.l.b16 %v743
        %v1855 = vunpack.c.h.b16 %v743
        %v1856 = vunpack.c.l.b16 %v744
        %v1857 = vunpack.c.h.b16 %v744
        %v1858 = vunpack.c.l.b16 %v745
        %v1859 = vunpack.c.h.b16 %v745
        %v1860 = vunpack.c.l.b16 %v746
        %v1861 = vunpack.c.h.b16 %v746
        %v1862 = vunpack.c.l.b16 %v747
        %v1863 = vunpack.c.h.b16 %v747
        %v1864 = vunpack.c.l.b16 %v748
        %v1865 = vunpack.c.h.b16 %v748
        %v1866 = vunpack.c.l.b16 %v749
        %v1867 = vunpack.c.h.b16 %v749
        %v1868 = vunpack.c.l.b16 %v750
        %v1869 = vunpack.c.h.b16 %v750
        %v1870 = vunpack.c.l.b16 %v751
        %v1871 = vunpack.c.h.b16 %v751
        %v1872 = vunpack.c.l.b16 %v752
        %v1873 = vunpack.c.h.b16 %v752
        %v1874 = vunpack.c.l.b16 %v753
        %v1875 = vunpack.c.h.b16 %v753
        %v1876 = vunpack.c.l.b16 %v754
        %v1877 = vunpack.c.h.b16 %v754
        %v1878 = vunpack.c.l.b16 %v755
        %v1879 = vunpack.c.h.b16 %v755
        %v1880 = vunpack.c.l.b16 %v756
        %v1881 = vunpack.c.h.b16 %v756
        %v1882 = vunpack.c.l.b16 %v757
        %v1883 = vunpack.c.h.b16 %v757
        %v1884 = vunpack.c.l.b16 %v758
        %v1885 = vunpack.c.h.b16 %v758
        %v1886 = vunpack.c.l.b16 %v759
        %v1887 = vunpack.c.h.b16 %v759
        %v1888 = vunpack.c.l.b16 %v760
        %v1889 = vunpack.c.h.b16 %v760
        %v1890 = vunpack.c.l.b16 %v761
        %v1891 = vunpack.c.h.b16 %v761
        %v1892 = vunpack.c.l.b16 %v762
        %v1893 = vunpack.c.h.b16 %v762
        %v1894 = vunpack.c.l.b16 %v763
        %v1895 = vunpack.c.h.b16 %v763
        %v1896 = vunpack.c.l.b16 %v764
        %v1897 = vunpack.c.h.b16 %v764
        %v1898 = vunpack.c.l.b16 %v765
        %v1899 = vunpack.c.h.b16 %v765
        %v1900 = vunpack.c.l.b16 %v766
        %v1901 = vunpack.c.h.b16 %v766
        %v1902 = vunpack.c.l.b16 %v767
        %v1903 = vunpack.c.h.b16 %v767
        %v1904 = vunpack.c.l.b16 %v768
        %v1905 = vunpack.c.h.b16 %v768
        %v1906 = vunpack.c.l.b16 %v769
        %v1907 = vunpack.c.h.b16 %v769
        %v1908 = vunpack.c.l.b16 %v770
        %v1909 = vunpack.c.h.b16 %v770
        %v1910 = vunpack.c.l.b16 %v771
        %v1911 = vunpack.c.h.b16 %v771
        %v1912 = vunpack.c.l.b16 %v772
        %v1913 = vunpack.c.h.b16 %v772
        %v1914 = vunpack.c.l.b16 %v773
        %v1915 = vunpack.c.h.b16 %v773
        %v1916 = vunpack.c.l.b16 %v774
        %v1917 = vunpack.c.h.b16 %v774
        %v1918 = vunpack.c.l.b16 %v775
        %v1919 = vunpack.c.h.b16 %v775
        %v1920 = vunpack.c.l.b16 %v776
        %v1921 = vunpack.c.h.b16 %v776
        %v1922 = vunpack.c.l.b16 %v777
        %v1923 = vunpack.c.h.b16 %v777
        %v1924 = vunpack.c.l.b16 %v778
        %v1925 = vunpack.c.h.b16 %v778
        %v1926 = vunpack.c.l.b16 %v779
        %v1927 = vunpack.c.h.b16 %v779
        %v1928 = vunpack.c.l.b16 %v780
        %v1929 = vunpack.c.h.b16 %v780
        %v1930 = vunpack.c.l.b16 %v781
        %v1931 = vunpack.c.h.b16 %v781
        %v1932 = vunpack.c.l.b16 %v782
        %v1933 = vunpack.c.h.b16 %v782
        %v1934 = vunpack.c.l.b16 %v783
        %v1935 = vunpack.c.h.b16 %v783
        %v1936 = vunpack.c.l.b16 %v784
        %v1937 = vunpack.c.h.b16 %v784
        %v1938 = vunpack.c.l.b16 %v785
        %v1939 = vunpack.c.h.b16 %v785
        %v1940 = vunpack.c.l.b16 %v786
        %v1941 = vunpack.c.h.b16 %v786
        %v1942 = vunpack.c.l.b16 %v787
        %v1943 = vunpack.c.h.b16 %v787
        %v1944 = vunpack.c.l.b16 %v788
        %v1945 = vunpack.c.h.b16 %v788
        %v1946 = vunpack.c.l.b16 %v789
        %v1947 = vunpack.c.h.b16 %v789
        %v1948 = vunpack.c.l.b16 %v790
        %v1949 = vunpack.c.h.b16 %v790
        %v1950 = vunpack.c.l.b16 %v791
        %v1951 = vunpack.c.h.b16 %v791
        %v1952 = vunpack.c.l.b16 %v792
        %v1953 = vunpack.c.h.b16 %v792
        %v1954 = vunpack.c.l.b16 %v793
        %v1955 = vunpack.c.h.b16 %v793
        %v1956 = vunpack.c.l.b16 %v794
        %v1957 = vunpack.c.h.b16 %v794
        %v1958 = vunpack.c.l.b16 %v795
        %v1959 = vunpack.c.h.b16 %v795
        %v1960 = vunpack.c.l.b16 %v796
        %v1961 = vunpack.c.h.b16 %v796
        %v1962 = vunpack.c.l.b16 %v797
        %v1963 = vunpack.c.h.b16 %v797
        %v1964 = vunpack.c.l.b16 %v798
        %v1965 = vunpack.c.h.b16 %v798
        %v1966 = vunpack.c.l.b16 %v799
        %v1967 = vunpack.c.h.b16 %v799
        %v1968 = vunpack.c.l.b16 %v800
        %v1969 = vunpack.c.h.b16 %v800
        %v1970 = vunpack.c.l.b16 %v801
        %v1971 = vunpack.c.h.b16 %v801
        %v1972 = vunpack.c.l.b16 %v802
        %v1973 = vunpack.c.h.b16 %v802
        %v1974 = vunpack.c.l.b16 %v803
        %v1975 = vunpack.c.h.b16 %v803
        %v1976 = vunpack.c.l.b16 %v804
        %v1977 = vunpack.c.h.b16 %v804
        %v1978 = vunpack.c.l.b16 %v805
        %v1979 = vunpack.c.h.b16 %v805
        %v1980 = vunpack.c.l.b16 %v806
        %v1981 = vunpack.c.h.b16 %v806
        %v1982 = vunpack.c.l.b16 %v807
        %v1983 = vunpack.c.h.b16 %v807
        %v1984 = vunpack.c.l.b16 %v808
        %v1985 = vunpack.c.h.b16 %v808
        %v1986 = vunpack.c.l.b16 %v809
        %v1987 = vunpack.c.h.b16 %v809
        %v1988 = vunpack.c.l.b16 %v810
        %v1989 = vunpack.c.h.b16 %v810
        %v1990 = vunpack.c.l.b16 %v811
        %v1991 = vunpack.c.h.b16 %v811
        %v1992 = vunpack.c.l.b16 %v812
        %v1993 = vunpack.c.h.b16 %v812
        %v1994 = vunpack.c.l.b16 %v813
        %v1995 = vunpack.c.h.b16 %v813
        %v1996 = vunpack.c.l.b16 %v814
        %v1997 = vunpack.c.h.b16 %v814
        %v1998 = vunpack.c.l.b16 %v815
        %v1999 = vunpack.c.h.b16 %v815
        %v2000 = vunpack.c.l.b16 %v816
        %v2001 = vunpack.c.h.b16 %v816
        %v2002 = vunpack.c.l.b16 %v817
        %v2003 = vunpack.c.h.b16 %v817
        %v2004 = vunpack.c.l.b16 %v818
        %v2005 = vunpack.c.h.b16 %v818
        %v2006 = vunpack.c.l.b16 %v819
        %v2007 = vunpack.c.h.b16 %v819
        %v2008 = vunpack.c.l.b16 %v820
        %v2009 = vunpack.c.h.b16 %v820
        %v2010 = vunpack.c.l.b16 %v821
        %v2011 = vunpack.c.h.b16 %v821
        %v2012 = vunpack.c.l.b16 %v822
        %v2013 = vunpack.c.h.b16 %v822
        %v2014 = vunpack.c.l.b16 %v823
        %v2015 = vunpack.c.h.b16 %v823
        %v2016 = vunpack.c.l.b16 %v824
        %v2017 = vunpack.c.h.b16 %v824
        %v2018 = vunpack.c.l.b16 %v825
        %v2019 = vunpack.c.h.b16 %v825
        %v2020 = vunpack.c.l.b16 %v826
        %v2021 = vunpack.c.h.b16 %v826
        %v2022 = vunpack.c.l.b16 %v827
        %v2023 = vunpack.c.h.b16 %v827
        %v2024 = vunpack.c.l.b16 %v828
        %v2025 = vunpack.c.h.b16 %v828
        %v2026 = vunpack.c.l.b16 %v829
        %v2027 = vunpack.c.h.b16 %v829
        %v2028 = vunpack.c.l.b16 %v830
        %v2029 = vunpack.c.h.b16 %v830
        %v2030 = vunpack.c.l.b16 %v831
        %v2031 = vunpack.c.h.b16 %v831
        %v2032 = vpack.c.b16 %v1276, %v1264
        %v2033 = vpack.c.b16 %v1277, %v1265
        %v2034 = vpack.c.b16 %v1278, %v1266
        %v2035 = vpack.c.b16 %v1279, %v1267
        %v2036 = vpack.c.b16 %v1280, %v1268
        %v2037 = vpack.c.b16 %v1281, %v1269
        %v2038 = vpack.c.b16 %v1282, %v1270
        %v2039 = vpack.c.b16 %v1283, %v1271
        %v2040 = vpack.c.b16 %v1284, %v1272
        %v2041 = vpack.c.b16 %v1285, %v1273
        %v2042 = vpack.c.b16 %v1286, %v1274
        %v2043 = vpack.c.b16 %v1287, %v1275
        %v2044 = vpack.c.b16 %v1300, %v1288
        %v2045 = vpack.c.b16 %v1301, %v1289
        %v2046 = vpack.c.b16 %v1302, %v1290
        %v2047 = vpack.c.b16 %v1303, %v1291
        %v2048 = vpack.c.b16 %v1304, %v1292
        %v2049 = vpack.c.b16 %v1305, %v1293
        %v2050 = vpack.c.b16 %v1306, %v1294
        %v2051 = vpack.c.b16 %v1307, %v1295
        %v2052 = vpack.c.b16 %v1308, %v1296
        %v2053 = vpack.c.b16 %v1309, %v1297
        %v2054 = vpack.c.b16 %v1310, %v1298
        %v2055 = vpack.c.b16 %v1311, %v1299
        %v2056 = vpack.c.b16 %v1324, %v1312
        %v2057 = vpack.c.b16 %v1325, %v1313
        %v2058 = vpack.c.b16 %v1326, %v1314
        %v2059 = vpack.c.b16 %v1327, %v1315
        %v2060 = vpack.c.b16 %v1328, %v1316
        %v2061 = vpack.c.b16 %v1329, %v1317
        %v2062 = vpack.c.b16 %v1330, %v1318
        %v2063 = vpack.c.b16 %v1331, %v1319
        %v2064 = vpack.c.b16 %v1332, %v1320
        %v2065 = vpack.c.b16 %v1333, %v1321
        %v2066 = vpack.c.b16 %v1334, %v1322
        %v2067 = vpack.c.b16 %v1335, %v1323
        %v2068 = vpack.c.b16 %v1348, %v1336
        %v2069 = vpack.c.b16 %v1349, %v1337
        %v2070 = vpack.c.b16 %v1350, %v1338
        %v2071 = vpack.c.b16 %v1351, %v1339
        %v2072 = vpack.c.b16 %v1352, %v1340
        %v2073 = vpack.c.b16 %v1353, %v1341
        %v2074 = vpack.c.b16 %v1354, %v1342
        %v2075 = vpack.c.b16 %v1355, %v1343
        %v2076 = vpack.c.b16 %v1356, %v1344
        %v2077 = vpack.c.b16 %v1357, %v1345
        %v2078 = vpack.c.b16 %v1358, %v1346
        %v2079 = vpack.c.b16 %v1359, %v1347
        %v2080 = vpack.c.b16 %v1372, %v1360
        %v2081 = vpack.c.b16 %v1373, %v1361
        %v2082 = vpack.c.b16 %v1374, %v1362
        %v2083 = vpack.c.b16 %v1375, %v1363
        %v2084 = vpack.c.b16 %v1376, %v1364
        %v2085 = vpack.c.b16 %v1377, %v1365
        %v2086 = vpack.c.b16 %v1378, %v1366
        %v2087 = vpack.c.b16 %v1379, %v1367
        %v2088 = vpack.c.b16 %v1380, %v1368
        %v2089 = vpack.c.b16 %v1381, %v1369
        %v2090 = vpack.c.b16 %v1382, %v1370
        %v2091 = vpack.c.b16 %v1383, %v1371
        %v2092 = vpack.c.b16 %v1396, %v1384
        %v2093 = vpack.c.b16 %v1397, %v1385
        %v2094 = vpack.c.b16 %v1398, %v1386
        %v2095 = vpack.c.b16 %v1399, %v1387
        %v2096 = vpack.c.b16 %v1400, %v1388
        %v2097 = vpack.c.b16 %v1401, %v1389
        %v2098 = vpack.c.b16 %v1402, %v1390
        %v2099 = vpack.c.b16 %v1403, %v1391
        %v2100 = vpack.c.b16 %v1404, %v1392
        %v2101 = vpack.c.b16 %v1405, %v1393
        %v2102 = vpack.c.b16 %v1406, %v1394
        %v2103 = vpack.c.b16 %v1407, %v1395
        %v2104 = vpack.c.b16 %v1420, %v1408
        %v2105 = vpack.c.b16 %v1421, %v1409
        %v2106 = vpack.c.b16 %v1422, %v1410
        %v2107 = vpack.c.b16 %v1423, %v1411
        %v2108 = vpack.c.b16 %v1424, %v1412
        %v2109 = vpack.c.b16 %v1425, %v1413
        %v2110 = vpack.c.b16 %v1426, %v1414
        %v2111 = vpack.c.b16 %v1427, %v1415
        %v2112 = vpack.c.b16 %v1428, %v1416
        %v2113 = vpack.c.b16 %v1429, %v1417
        %v2114 = vpack.c.b16 %v1430, %v1418
        %v2115 = vpack.c.b16 %v1431, %v1419
        %v2116 = vpack.c.b16 %v1444, %v1432
        %v2117 = vpack.c.b16 %v1445, %v1433
        %v2118 = vpack.c.b16 %v1446, %v1434
        %v2119 = vpack.c.b16 %v1447, %v1435
        %v2120 = vpack.c.b16 %v1448, %v1436
        %v2121 = vpack.c.b16 %v1449, %v1437
        %v2122 = vpack.c.b16 %v1450, %v1438
        %v2123 = vpack.c.b16 %v1451, %v1439
        %v2124 = vpack.c.b16 %v1452, %v1440
        %v2125 = vpack.c.b16 %v1453, %v1441
        %v2126 = vpack.c.b16 %v1454, %v1442
        %v2127 = vpack.c.b16 %v1455, %v1443
        %v2128 = vpack.c.b16 %v1468, %v1456
        %v2129 = vpack.c.b16 %v1469, %v1457
        %v2130 = vpack.c.b16 %v1470, %v1458
        %v2131 = vpack.c.b16 %v1471, %v1459
        %v2132 = vpack.c.b16 %v1472, %v1460
        %v2133 = vpack.c.b16 %v1473, %v1461
        %v2134 = vpack.c.b16 %v1474, %v1462
        %v2135 = vpack.c.b16 %v1475, %v1463
        %v2136 = vpack.c.b16 %v1476, %v1464
        %v2137 = vpack.c.b16 %v1477, %v1465
        %v2138 = vpack.c.b16 %v1478, %v1466
        %v2139 = vpack.c.b16 %v1479, %v1467
        %v2140 = vpack.c.b16 %v1492, %v1480
        %v2141 = vpack.c.b16 %v1493, %v1481
        %v2142 = vpack.c.b16 %v1494, %v1482
        %v2143 = vpack.c.b16 %v1495, %v1483
        %v2144 = vpack.c.b16 %v1496, %v1484
        %v2145 = vpack.c.b16 %v1497, %v1485
        %v2146 = vpack.c.b16 %v1498, %v1486
        %v2147 = vpack.c.b16 %v1499, %v1487
        %v2148 = vpack.c.b16 %v1500, %v1488
        %v2149 = vpack.c.b16 %v1501, %v1489
        %v2150 = vpack.c.b16 %v1502, %v1490
        %v2151 = vpack.c.b16 %v1503, %v1491
        %v2152 = vpack.c.b16 %v1516, %v1504
        %v2153 = vpack.c.b16 %v1517, %v1505
        %v2154 = vpack.c.b16 %v1518, %v1506
        %v2155 = vpack.c.b16 %v1519, %v1507
        %v2156 = vpack.c.b16 %v1520, %v1508
        %v2157 = vpack.c.b16 %v1521, %v1509
        %v2158 = vpack.c.b16 %v1522, %v1510
        %v2159 = vpack.c.b16 %v1523, %v1511
        %v2160 = vpack.c.b16 %v1524, %v1512
        %v2161 = vpack.c.b16 %v1525, %v1513
        %v2162 = vpack.c.b16 %v1526, %v1514
        %v2163 = vpack.c.b16 %v1527, %v1515
        %v2164 = vpack.c.b16 %v1540, %v1528
        %v2165 = vpack.c.b16 %v1541, %v1529
        %v2166 = vpack.c.b16 %v1542, %v1530
        %v2167 = vpack.c.b16 %v1543, %v1531
        %v2168 = vpack.c.b16 %v1544, %v1532
        %v2169 = vpack.c.b16 %v1545, %v1533
        %v2170 = vpack.c.b16 %v1546, %v1534
        %v2171 = vpack.c.b16 %v1547, %v1535
        %v2172 = vpack.c.b16 %v1548, %v1536
        %v2173 = vpack.c.b16 %v1549, %v1537
        %v2174 = vpack.c.b16 %v1550, %v1538
        %v2175 = vpack.c.b16 %v1551, %v1539
        %v2176 = vpack.c.b16 %v1564, %v1552
        %v2177 = vpack.c.b16 %v1565, %v1553
        %v2178 = vpack.c.b16 %v1566, %v1554
        %v2179 = vpack.c.b16 %v1567, %v1555
        %v2180 = vpack.c.b16 %v1568, %v1556
        %v2181 = vpack.c.b16 %v1569, %v1557
        %v2182 = vpack.c.b16 %v1570, %v1558
        %v2183 = vpack.c.b16 %v1571, %v1559
        %v2184 = vpack.c.b16 %v1572, %v1560
        %v2185 = vpack.c.b16 %v1573, %v1561
        %v2186 = vpack.c.b16 %v1574, %v1562
        %v2187 = vpack.c.b16 %v1575, %v1563
        %v2188 = vpack.c.b16 %v1588, %v1576
        %v2189 = vpack.c.b16 %v1589, %v1577
        %v2190 = vpack.c.b16 %v1590, %v1578
        %v2191 = vpack.c.b16 %v1591, %v1579
        %v2192 = vpack.c.b16 %v1592, %v1580
        %v2193 = vpack.c.b16 %v1593, %v1581
        %v2194 = vpack.c.b16 %v1594, %v1582
        %v2195 = vpack.c.b16 %v1595, %v1583
        %v2196 = vpack.c.b16 %v1596, %v1584
        %v2197 = vpack.c.b16 %v1597, %v1585
        %v2198 = vpack.c.b16 %v1598, %v1586
        %v2199 = vpack.c.b16 %v1599, %v1587
        %v2200 = vpack.c.b16 %v1612, %v1600
        %v2201 = vpack.c.b16 %v1613, %v1601
        %v2202 = vpack.c.b16 %v1614, %v1602
        %v2203 = vpack.c.b16 %v1615, %v1603
        %v2204 = vpack.c.b16 %v1616, %v1604
        %v2205 = vpack.c.b16 %v1617, %v1605
        %v2206 = vpack.c.b16 %v1618, %v1606
        %v2207 = vpack.c.b16 %v1619, %v1607
        %v2208 = vpack.c.b16 %v1620, %v1608
        %v2209 = vpack.c.b16 %v1621, %v1609
        %v2210 = vpack.c.b16 %v1622, %v1610
        %v2211 = vpack.c.b16 %v1623, %v1611
        %v2212 = vpack.c.b16 %v1636, %v1624
        %v2213 = vpack.c.b16 %v1637, %v1625
        %v2214 = vpack.c.b16 %v1638, %v1626
        %v2215 = vpack.c.b16 %v1639, %v1627
        %v2216 = vpack.c.b16 %v1640, %v1628
        %v2217 = vpack.c.b16 %v1641, %v1629
        %v2218 = vpack.c.b16 %v1642, %v1630
        %v2219 = vpack.c.b16 %v1643, %v1631
        %v2220 = vpack.c.b16 %v1644, %v1632
        %v2221 = vpack.c.b16 %v1645, %v1633
        %v2222 = vpack.c.b16 %v1646, %v1634
        %v2223 = vpack.c.b16 %v1647, %v1635
        %v2224 = vpack.c.b16 %v1660, %v1648
        %v2225 = vpack.c.b16 %v1661, %v1649
        %v2226 = vpack.c.b16 %v1662, %v1650
        %v2227 = vpack.c.b16 %v1663, %v1651
        %v2228 = vpack.c.b16 %v1664, %v1652
        %v2229 = vpack.c.b16 %v1665, %v1653
        %v2230 = vpack.c.b16 %v1666, %v1654
        %v2231 = vpack.c.b16 %v1667, %v1655
        %v2232 = vpack.c.b16 %v1668, %v1656
        %v2233 = vpack.c.b16 %v1669, %v1657
        %v2234 = vpack.c.b16 %v1670, %v1658
        %v2235 = vpack.c.b16 %v1671, %v1659
        %v2236 = vpack.c.b16 %v1684, %v1672
        %v2237 = vpack.c.b16 %v1685, %v1673
        %v2238 = vpack.c.b16 %v1686, %v1674
        %v2239 = vpack.c.b16 %v1687, %v1675
        %v2240 = vpack.c.b16 %v1688, %v1676
        %v2241 = vpack.c.b16 %v1689, %v1677
        %v2242 = vpack.c.b16 %v1690, %v1678
        %v2243 = vpack.c.b16 %v1691, %v1679
        %v2244 = vpack.c.b16 %v1692, %v1680
        %v2245 = vpack.c.b16 %v1693, %v1681
        %v2246 = vpack.c.b16 %v1694, %v1682
        %v2247 = vpack.c.b16 %v1695, %v1683
        %v2248 = vpack.c.b16 %v1708, %v1696
        %v2249 = vpack.c.b16 %v1709, %v1697
        %v2250 = vpack.c.b16 %v1710, %v1698
        %v2251 = vpack.c.b16 %v1711, %v1699
        %v2252 = vpack.c.b16 %v1712, %v1700
        %v2253 = vpack.c.b16 %v1713, %v1701
        %v2254 = vpack.c.b16 %v1714, %v1702
        %v2255 = vpack.c.b16 %v1715, %v1703
        %v2256 = vpack.c.b16 %v1716, %v1704
        %v2257 = vpack.c.b16 %v1717, %v1705
        %v2258 = vpack.c.b16 %v1718, %v1706
        %v2259 = vpack.c.b16 %v1719, %v1707
        %v2260 = vpack.c.b16 %v1732, %v1720
        %v2261 = vpack.c.b16 %v1733, %v1721
        %v2262 = vpack.c.b16 %v1734, %v1722
        %v2263 = vpack.c.b16 %v1735, %v1723
        %v2264 = vpack.c.b16 %v1736, %v1724
        %v2265 = vpack.c.b16 %v1737, %v1725
        %v2266 = vpack.c.b16 %v1738, %v1726
        %v2267 = vpack.c.b16 %v1739, %v1727
        %v2268 = vpack.c.b16 %v1740, %v1728
        %v2269 = vpack.c.b16 %v1741, %v1729
        %v2270 = vpack.c.b16 %v1742, %v1730
        %v2271 = vpack.c.b16 %v1743, %v1731
        %v2272 = vpack.c.b16 %v1756, %v1744
        %v2273 = vpack.c.b16 %v1757, %v1745
        %v2274 = vpack.c.b16 %v1758, %v1746
        %v2275 = vpack.c.b16 %v1759, %v1747
        %v2276 = vpack.c.b16 %v1760, %v1748
        %v2277 = vpack.c.b16 %v1761, %v1749
        %v2278 = vpack.c.b16 %v1762, %v1750
        %v2279 = vpack.c.b16 %v1763, %v1751
        %v2280 = vpack.c.b16 %v1764, %v1752
        %v2281 = vpack.c.b16 %v1765, %v1753
        %v2282 = vpack.c.b16 %v1766, %v1754
        %v2283 = vpack.c.b16 %v1767, %v1755
        %v2284 = vpack.c.b16 %v1780, %v1768
        %v2285 = vpack.c.b16 %v1781, %v1769
        %v2286 = vpack.c.b16 %v1782, %v1770
        %v2287 = vpack.c.b16 %v1783, %v1771
        %v2288 = vpack.c.b16 %v1784, %v1772
        %v2289 = vpack.c.b16 %v1785, %v1773
        %v2290 = vpack.c.b16 %v1786, %v1774
        %v2291 = vpack.c.b16 %v1787, %v1775
        %v2292 = vpack.c.b16 %v1788, %v1776
        %v2293 = vpack.c.b16 %v1789, %v1777
        %v2294 = vpack.c.b16 %v1790, %v1778
        %v2295 = vpack.c.b16 %v1791, %v1779
        %v2296 = vpack.c.b16 %v1804, %v1792
        %v2297 = vpack.c.b16 %v1805, %v1793
        %v2298 = vpack.c.b16 %v1806, %v1794
        %v2299 = vpack.c.b16 %v1807, %v1795
        %v2300 = vpack.c.b16 %v1808, %v1796
        %v2301 = vpack.c.b16 %v1809, %v1797
        %v2302 = vpack.c.b16 %v1810, %v1798
        %v2303 = vpack.c.b16 %v1811, %v1799
        %v2304 = vpack.c.b16 %v1812, %v1800
        %v2305 = vpack.c.b16 %v1813, %v1801
        %v2306 = vpack.c.b16 %v1814, %v1802
        %v2307 = vpack.c.b16 %v1815, %v1803
        %v2308 = vpack.c.b16 %v1828, %v1816
        %v2309 = vpack.c.b16 %v1829, %v1817
        %v2310 = vpack.c.b16 %v1830, %v1818
        %v2311 = vpack.c.b16 %v1831, %v1819
        %v2312 = vpack.c.b16 %v1832, %v1820
        %v2313 = vpack.c.b16 %v1833, %v1821
        %v2314 = vpack.c.b16 %v1834, %v1822
        %v2315 = vpack.c.b16 %v1835, %v1823
        %v2316 = vpack.c.b16 %v1836, %v1824
        %v2317 = vpack.c.b16 %v1837, %v1825
        %v2318 = vpack.c.b16 %v1838, %v1826
        %v2319 = vpack.c.b16 %v1839, %v1827
        %v2320 = vpack.c.b16 %v1852, %v1840
        %v2321 = vpack.c.b16 %v1853, %v1841
        %v2322 = vpack.c.b16 %v1854, %v1842
        %v2323 = vpack.c.b16 %v1855, %v1843
        %v2324 = vpack.c.b16 %v1856, %v1844
        %v2325 = vpack.c.b16 %v1857, %v1845
        %v2326 = vpack.c.b16 %v1858, %v1846
        %v2327 = vpack.c.b16 %v1859, %v1847
        %v2328 = vpack.c.b16 %v1860, %v1848
        %v2329 = vpack.c.b16 %v1861, %v1849
        %v2330 = vpack.c.b16 %v1862, %v1850
        %v2331 = vpack.c.b16 %v1863, %v1851
        %v2332 = vpack.c.b16 %v1876, %v1864
        %v2333 = vpack.c.b16 %v1877, %v1865
        %v2334 = vpack.c.b16 %v1878, %v1866
        %v2335 = vpack.c.b16 %v1879, %v1867
        %v2336 = vpack.c.b16 %v1880, %v1868
        %v2337 = vpack.c.b16 %v1881, %v1869
        %v2338 = vpack.c.b16 %v1882, %v1870
        %v2339 = vpack.c.b16 %v1883, %v1871
        %v2340 = vpack.c.b16 %v1884, %v1872
        %v2341 = vpack.c.b16 %v1885, %v1873
        %v2342 = vpack.c.b16 %v1886, %v1874
        %v2343 = vpack.c.b16 %v1887, %v1875
        %v2344 = vpack.c.b16 %v1900, %v1888
        %v2345 = vpack.c.b16 %v1901, %v1889
        %v2346 = vpack.c.b16 %v1902, %v1890
        %v2347 = vpack.c.b16 %v1903, %v1891
        %v2348 = vpack.c.b16 %v1904, %v1892
        %v2349 = vpack.c.b16 %v1905, %v1893
        %v2350 = vpack.c.b16 %v1906, %v1894
        %v2351 = vpack.c.b16 %v1907, %v1895
        %v2352 = vpack.c.b16 %v1908, %v1896
        %v2353 = vpack.c.b16 %v1909, %v1897
        %v2354 = vpack.c.b16 %v1910, %v1898
        %v2355 = vpack.c.b16 %v1911, %v1899
        %v2356 = vpack.c.b16 %v1924, %v1912
        %v2357 = vpack.c.b16 %v1925, %v1913
        %v2358 = vpack.c.b16 %v1926, %v1914
        %v2359 = vpack.c.b16 %v1927, %v1915
        %v2360 = vpack.c.b16 %v1928, %v1916
        %v2361 = vpack.c.b16 %v1929, %v1917
        %v2362 = vpack.c.b16 %v1930, %v1918
        %v2363 = vpack.c.b16 %v1931, %v1919
        %v2364 = vpack.c.b16 %v1932, %v1920
        %v2365 = vpack.c.b16 %v1933, %v1921
        %v2366 = vpack.c.b16 %v1934, %v1922
        %v2367 = vpack.c.b16 %v1935, %v1923
        %v2368 = vpack.c.b16 %v1948, %v1936
        %v2369 = vpack.c.b16 %v1949, %v1937
        %v2370 = vpack.c.b16 %v1950, %v1938
        %v2371 = vpack.c.b16 %v1951, %v1939
        %v2372 = vpack.c.b16 %v1952, %v1940
        %v2373 = vpack.c.b16 %v1953, %v1941
        %v2374 = vpack.c.b16 %v1954, %v1942
        %v2375 = vpack.c.b16 %v1955, %v1943
        %v2376 = vpack.c.b16 %v1956, %v1944
        %v2377 = vpack.c.b16 %v1957, %v1945
        %v2378 = vpack.c.b16 %v1958, %v1946
        %v2379 = vpack.c.b16 %v1959, %v1947
        %v2380 = vpack.c.b16 %v1972, %v1960
        %v2381 = vpack.c.b16 %v1973, %v1961
        %v2382 = vpack.c.b16 %v1974, %v1962
        %v2383 = vpack.c.b16 %v1975, %v1963
        %v2384 = vpack.c.b16 %v1976, %v1964
        %v2385 = vpack.c.b16 %v1977, %v1965
        %v2386 = vpack.c.b16 %v1978, %v1966
        %v2387 = vpack.c.b16 %v1979, %v1967
        %v2388 = vpack.c.b16 %v1980, %v1968
        %v2389 = vpack.c.b16 %v1981, %v1969
        %v2390 = vpack.c.b16 %v1982, %v1970
        %v2391 = vpack.c.b16 %v1983, %v1971
        %v2392 = vpack.c.b16 %v1996, %v1984
        %v2393 = vpack.c.b16 %v1997, %v1985
        %v2394 = vpack.c.b16 %v1998, %v1986
        %v2395 = vpack.c.b16 %v1999, %v1987
        %v2396 = vpack.c.b16 %v2000, %v1988
        %v2397 = vpack.c.b16 %v2001, %v1989
        %v2398 = vpack.c.b16 %v2002, %v1990
        %v2399 = vpack.c.b16 %v2003, %v1991
        %v2400 = vpack.c.b16 %v2004, %v1992
        %v2401 = vpack.c.b16 %v2005, %v1993
        %v2402 = vpack.c.b16 %v2006, %v1994
        %v2403 = vpack.c.b16 %v2007, %v1995
        %v2404 = vpack.c.b16 %v2020, %v2008
        %v2405 = vpack.c.b16 %v2021, %v2009
        %v2406 = vpack.c.b16 %v2022, %v2010
        %v2407 = vpack.c.b16 %v2023, %v2011
        %v2408 = vpack.c.b16 %v2024, %v2012
        %v2409 = vpack.c.b16 %v2025, %v2013
        %v2410 = vpack.c.b16 %v2026, %v2014
        %v2411 = vpack.c.b16 %v2027, %v2015
        %v2412 = vpack.c.b16 %v2028, %v2016
        %v2413 = vpack.c.b16 %v2029, %v2017
        %v2414 = vpack.c.b16 %v2030, %v2018
        %v2415 = vpack.c.b16 %v2031, %v2019
        %2800 = vmatprep.subr.bf16.mxu0 %v2117
        %2801 = vmatpush1.bf16.msra.mxu0 %v2116
        %2802 = vmatprep.subr.bf16.mxu0 %v2105
        %2803 = vmatpush1.bf16.msra.mxu0 %v2104
        %2804 = vmatprep.subr.bf16.mxu0 %v2093
        %2805 = vmatpush1.bf16.msra.mxu0 %v2092
        %2806 = vmatprep.subr.bf16.mxu0 %v2081
        %2807 = vmatpush1.bf16.msra.mxu0 %v2080
        %2808 = vmatprep.subr.bf16.mxu0 %v2069
        %2809 = vmatpush1.bf16.msra.mxu0 %v2068
        %2810 = vmatprep.subr.bf16.mxu0 %v2057
        %2811 = vmatpush1.bf16.msra.mxu0 %v2056
        %2812 = vmatprep.subr.bf16.mxu0 %v2045
        %2813 = vmatpush1.bf16.msra.mxu0 %v2044
        %2814 = vmatprep.subr.bf16.mxu0 %v2033
        %2815 = vmatpush1.bf16.msra.mxu0 %v2032
        %2816 = vmatprep.subr.bf16.mxu0 %v2213
        %2817 = vmatpush2.bf16.msra.mxu0 %v2212
        %2818 = vmatprep.subr.bf16.mxu0 %v2201
        %2819 = vmatpush2.bf16.msra.mxu0 %v2200
        %2820 = vmatprep.subr.bf16.mxu0 %v2189
        %2821 = vmatpush2.bf16.msra.mxu0 %v2188
        %2822 = vmatprep.subr.bf16.mxu0 %v2177
        %2823 = vmatpush2.bf16.msra.mxu0 %v2176
        %2824 = vmatprep.subr.bf16.mxu0 %v2165
        %2825 = vmatpush2.bf16.msra.mxu0 %v2164
        %2826 = vmatprep.subr.bf16.mxu0 %v2153
        %2827 = vmatpush2.bf16.msra.mxu0 %v2152
        %2828 = vmatprep.subr.bf16.mxu0 %v2141
        %2829 = vmatpush2.bf16.msra.mxu0 %v2140
        %2830 = vmatprep.subr.bf16.mxu0 %v2129
        %2831 = vmatpush2.bf16.msra.mxu0 %v2128
        %2832 = vmatprep.mubr.bf16.mxu0 %v441
        %2833 = vmatmul.mubr.bf16.gmra.mxu0 %v440
        %v2834 = vpop.f32.mrf.mxu0
        %v2835 = vadd.f32 %v835, %v2834
        %v2836 = vpop.f32.mrf.mxu0
        %v2837 = vadd.f32 %v839, %v2836
        %v2838 = vpop.f32.mrf.mxu0
        %v2839 = vadd.f32 %v835, %v2838
        %v2840 = vpop.f32.mrf.mxu0
        %v2841 = vadd.f32 %v839, %v2840
        %2842 = vmatprep.mubr.bf16.mxu0 %v445
        %2843 = vmatmul.mubr.bf16.gmra.mxu0 %v444
        %v2844 = vpop.f32.mrf.mxu0
        %v2845 = vadd.f32 %v835, %v2844
        %v2846 = vpop.f32.mrf.mxu0
        %v2847 = vadd.f32 %v839, %v2846
        %v2848 = vpop.f32.mrf.mxu0
        %v2849 = vadd.f32 %v835, %v2848
        %v2850 = vpop.f32.mrf.mxu0
        %v2851 = vadd.f32 %v839, %v2850
        %2852 = vdwg.mxu0
        %2853 = vmatprep.subr.bf16.mxu0 %v2309
        %2854 = vmatpush1.bf16.msra.mxu0 %v2308
        %2855 = vmatprep.subr.bf16.mxu0 %v2297
        %2856 = vmatpush1.bf16.msra.mxu0 %v2296
        %2857 = vmatprep.subr.bf16.mxu0 %v2285
        %2858 = vmatpush1.bf16.msra.mxu0 %v2284
        %2859 = vmatprep.subr.bf16.mxu0 %v2273
        %2860 = vmatpush1.bf16.msra.mxu0 %v2272
        %2861 = vmatprep.subr.bf16.mxu0 %v2261
        %2862 = vmatpush1.bf16.msra.mxu0 %v2260
        %2863 = vmatprep.subr.bf16.mxu0 %v2249
        %2864 = vmatpush1.bf16.msra.mxu0 %v2248
        %2865 = vmatprep.subr.bf16.mxu0 %v2237
        %2866 = vmatpush1.bf16.msra.mxu0 %v2236
        %2867 = vmatprep.subr.bf16.mxu0 %v2225
        %2868 = vmatpush1.bf16.msra.mxu0 %v2224
        %2869 = vmatprep.subr.bf16.mxu0 %v2405
        %2870 = vmatpush2.bf16.msra.mxu0 %v2404
        %2871 = vmatprep.subr.bf16.mxu0 %v2393
        %2872 = vmatpush2.bf16.msra.mxu0 %v2392
        %2873 = vmatprep.subr.bf16.mxu0 %v2381
        %2874 = vmatpush2.bf16.msra.mxu0 %v2380
        %2875 = vmatprep.subr.bf16.mxu0 %v2369
        %2876 = vmatpush2.bf16.msra.mxu0 %v2368
        %2877 = vmatprep.subr.bf16.mxu0 %v2357
        %2878 = vmatpush2.bf16.msra.mxu0 %v2356
        %2879 = vmatprep.subr.bf16.mxu0 %v2345
        %2880 = vmatpush2.bf16.msra.mxu0 %v2344
        %2881 = vmatprep.subr.bf16.mxu0 %v2333
        %2882 = vmatpush2.bf16.msra.mxu0 %v2332
        %2883 = vmatprep.subr.bf16.mxu0 %v2321
        %2884 = vmatpush2.bf16.msra.mxu0 %v2320
        %2885 = vmatprep.mubr.bf16.mxu0 %v443
        %2886 = vmatmul.mubr.bf16.gmra.mxu0 %v442
        %v2887 = vpop.f32.mrf.mxu0
        %v2888 = vadd.f32 %v2835, %v2887
        %v2889 = vpop.f32.mrf.mxu0
        %v2890 = vadd.f32 %v2837, %v2889
        %v2891 = vpop.f32.mrf.mxu0
        %v2892 = vadd.f32 %v2839, %v2891
        %v2893 = vpop.f32.mrf.mxu0
        %v2894 = vadd.f32 %v2841, %v2893
        %2895 = vmatprep.mubr.bf16.mxu0 %v447
        %2896 = vmatmul.mubr.bf16.gmra.mxu0 %v446
        %v2897 = vpop.f32.mrf.mxu0
        %v2898 = vadd.f32 %v2845, %v2897
        %v2899 = vpop.f32.mrf.mxu0
        %v2900 = vadd.f32 %v2847, %v2899
        %v2901 = vpop.f32.mrf.mxu0
        %v2902 = vadd.f32 %v2849, %v2901
        %v2903 = vpop.f32.mrf.mxu0
        %v2904 = vadd.f32 %v2851, %v2903
        %2905 = vdwg.mxu0
        %2906 = vmatprep.subr.bf16.mxu0 %v2119
        %2907 = vmatpush1.bf16.msra.mxu0 %v2118
        %2908 = vmatprep.subr.bf16.mxu0 %v2107
        %2909 = vmatpush1.bf16.msra.mxu0 %v2106
        %2910 = vmatprep.subr.bf16.mxu0 %v2095
        %2911 = vmatpush1.bf16.msra.mxu0 %v2094
        %2912 = vmatprep.subr.bf16.mxu0 %v2083
        %2913 = vmatpush1.bf16.msra.mxu0 %v2082
        %2914 = vmatprep.subr.bf16.mxu0 %v2071
        %2915 = vmatpush1.bf16.msra.mxu0 %v2070
        %2916 = vmatprep.subr.bf16.mxu0 %v2059
        %2917 = vmatpush1.bf16.msra.mxu0 %v2058
        %2918 = vmatprep.subr.bf16.mxu0 %v2047
        %2919 = vmatpush1.bf16.msra.mxu0 %v2046
        %2920 = vmatprep.subr.bf16.mxu0 %v2035
        %2921 = vmatpush1.bf16.msra.mxu0 %v2034
        %2922 = vmatprep.subr.bf16.mxu0 %v2215
        %2923 = vmatpush2.bf16.msra.mxu0 %v2214
        %2924 = vmatprep.subr.bf16.mxu0 %v2203
        %2925 = vmatpush2.bf16.msra.mxu0 %v2202
        %2926 = vmatprep.subr.bf16.mxu0 %v2191
        %2927 = vmatpush2.bf16.msra.mxu0 %v2190
        %2928 = vmatprep.subr.bf16.mxu0 %v2179
        %2929 = vmatpush2.bf16.msra.mxu0 %v2178
        %2930 = vmatprep.subr.bf16.mxu0 %v2167
        %2931 = vmatpush2.bf16.msra.mxu0 %v2166
        %2932 = vmatprep.subr.bf16.mxu0 %v2155
        %2933 = vmatpush2.bf16.msra.mxu0 %v2154
        %2934 = vmatprep.subr.bf16.mxu0 %v2143
        %2935 = vmatpush2.bf16.msra.mxu0 %v2142
        %2936 = vmatprep.subr.bf16.mxu0 %v2131
        %2937 = vmatpush2.bf16.msra.mxu0 %v2130
        %2938 = vmatprep.mubr.bf16.mxu0 %v441
        %2939 = vmatmul.mubr.bf16.gmra.mxu0 %v440
        %v2940 = vpop.f32.mrf.mxu0
        %v2941 = vadd.f32 %v843, %v2940
        %v2942 = vpop.f32.mrf.mxu0
        %v2943 = vadd.f32 %v847, %v2942
        %v2944 = vpop.f32.mrf.mxu0
        %v2945 = vadd.f32 %v843, %v2944
        %v2946 = vpop.f32.mrf.mxu0
        %v2947 = vadd.f32 %v847, %v2946
        %2948 = vmatprep.mubr.bf16.mxu0 %v445
        %2949 = vmatmul.mubr.bf16.gmra.mxu0 %v444
        %v2950 = vpop.f32.mrf.mxu0
        %v2951 = vadd.f32 %v843, %v2950
        %v2952 = vpop.f32.mrf.mxu0
        %v2953 = vadd.f32 %v847, %v2952
        %v2954 = vpop.f32.mrf.mxu0
        %v2955 = vadd.f32 %v843, %v2954
        %v2956 = vpop.f32.mrf.mxu0
        %v2957 = vadd.f32 %v847, %v2956
        %2958 = vdwg.mxu0
        %2959 = vmatprep.subr.bf16.mxu0 %v2311
        %2960 = vmatpush1.bf16.msra.mxu0 %v2310
        %2961 = vmatprep.subr.bf16.mxu0 %v2299
        %2962 = vmatpush1.bf16.msra.mxu0 %v2298
        %2963 = vmatprep.subr.bf16.mxu0 %v2287
        %2964 = vmatpush1.bf16.msra.mxu0 %v2286
        %2965 = vmatprep.subr.bf16.mxu0 %v2275
        %2966 = vmatpush1.bf16.msra.mxu0 %v2274
        %2967 = vmatprep.subr.bf16.mxu0 %v2263
        %2968 = vmatpush1.bf16.msra.mxu0 %v2262
        %2969 = vmatprep.subr.bf16.mxu0 %v2251
        %2970 = vmatpush1.bf16.msra.mxu0 %v2250
        %2971 = vmatprep.subr.bf16.mxu0 %v2239
        %2972 = vmatpush1.bf16.msra.mxu0 %v2238
        %2973 = vmatprep.subr.bf16.mxu0 %v2227
        %2974 = vmatpush1.bf16.msra.mxu0 %v2226
        %2975 = vmatprep.subr.bf16.mxu0 %v2407
        %2976 = vmatpush2.bf16.msra.mxu0 %v2406
        %2977 = vmatprep.subr.bf16.mxu0 %v2395
        %2978 = vmatpush2.bf16.msra.mxu0 %v2394
        %2979 = vmatprep.subr.bf16.mxu0 %v2383
        %2980 = vmatpush2.bf16.msra.mxu0 %v2382
        %2981 = vmatprep.subr.bf16.mxu0 %v2371
        %2982 = vmatpush2.bf16.msra.mxu0 %v2370
        %2983 = vmatprep.subr.bf16.mxu0 %v2359
        %2984 = vmatpush2.bf16.msra.mxu0 %v2358
        %2985 = vmatprep.subr.bf16.mxu0 %v2347
        %2986 = vmatpush2.bf16.msra.mxu0 %v2346
        %2987 = vmatprep.subr.bf16.mxu0 %v2335
        %2988 = vmatpush2.bf16.msra.mxu0 %v2334
        %2989 = vmatprep.subr.bf16.mxu0 %v2323
        %2990 = vmatpush2.bf16.msra.mxu0 %v2322
        %2991 = vmatprep.mubr.bf16.mxu0 %v443
        %2992 = vmatmul.mubr.bf16.gmra.mxu0 %v442
        %v2993 = vpop.f32.mrf.mxu0
        %v2994 = vadd.f32 %v2941, %v2993
        %v2995 = vpop.f32.mrf.mxu0
        %v2996 = vadd.f32 %v2943, %v2995
        %v2997 = vpop.f32.mrf.mxu0
        %v2998 = vadd.f32 %v2945, %v2997
        %v2999 = vpop.f32.mrf.mxu0
        %v3000 = vadd.f32 %v2947, %v2999
        %3001 = vmatprep.mubr.bf16.mxu0 %v447
        %3002 = vmatmul.mubr.bf16.gmra.mxu0 %v446
        %v3003 = vpop.f32.mrf.mxu0
        %v3004 = vadd.f32 %v2951, %v3003
        %v3005 = vpop.f32.mrf.mxu0
        %v3006 = vadd.f32 %v2953, %v3005
        %v3007 = vpop.f32.mrf.mxu0
        %v3008 = vadd.f32 %v2955, %v3007
        %v3009 = vpop.f32.mrf.mxu0
        %v3010 = vadd.f32 %v2957, %v3009
        %3011 = vdwg.mxu0
        %3012 = vmatprep.subr.bf16.mxu0 %v2121
        %3013 = vmatpush1.bf16.msra.mxu0 %v2120
        %3014 = vmatprep.subr.bf16.mxu0 %v2109
        %3015 = vmatpush1.bf16.msra.mxu0 %v2108
        %3016 = vmatprep.subr.bf16.mxu0 %v2097
        %3017 = vmatpush1.bf16.msra.mxu0 %v2096
        %3018 = vmatprep.subr.bf16.mxu0 %v2085
        %3019 = vmatpush1.bf16.msra.mxu0 %v2084
        %3020 = vmatprep.subr.bf16.mxu0 %v2073
        %3021 = vmatpush1.bf16.msra.mxu0 %v2072
        %3022 = vmatprep.subr.bf16.mxu0 %v2061
        %3023 = vmatpush1.bf16.msra.mxu0 %v2060
        %3024 = vmatprep.subr.bf16.mxu0 %v2049
        %3025 = vmatpush1.bf16.msra.mxu0 %v2048
        %3026 = vmatprep.subr.bf16.mxu0 %v2037
        %3027 = vmatpush1.bf16.msra.mxu0 %v2036
        %3028 = vmatprep.subr.bf16.mxu0 %v2217
        %3029 = vmatpush2.bf16.msra.mxu0 %v2216
        %3030 = vmatprep.subr.bf16.mxu0 %v2205
        %3031 = vmatpush2.bf16.msra.mxu0 %v2204
        %3032 = vmatprep.subr.bf16.mxu0 %v2193
        %3033 = vmatpush2.bf16.msra.mxu0 %v2192
        %3034 = vmatprep.subr.bf16.mxu0 %v2181
        %3035 = vmatpush2.bf16.msra.mxu0 %v2180
        %3036 = vmatprep.subr.bf16.mxu0 %v2169
        %3037 = vmatpush2.bf16.msra.mxu0 %v2168
        %3038 = vmatprep.subr.bf16.mxu0 %v2157
        %3039 = vmatpush2.bf16.msra.mxu0 %v2156
        %3040 = vmatprep.subr.bf16.mxu0 %v2145
        %3041 = vmatpush2.bf16.msra.mxu0 %v2144
        %3042 = vmatprep.subr.bf16.mxu0 %v2133
        %3043 = vmatpush2.bf16.msra.mxu0 %v2132
        %3044 = vmatprep.mubr.bf16.mxu0 %v441
        %3045 = vmatmul.mubr.bf16.gmra.mxu0 %v440
        %v3046 = vpop.f32.mrf.mxu0
        %v3047 = vadd.f32 %v851, %v3046
        %v3048 = vpop.f32.mrf.mxu0
        %v3049 = vadd.f32 %v855, %v3048
        %v3050 = vpop.f32.mrf.mxu0
        %v3051 = vadd.f32 %v851, %v3050
        %v3052 = vpop.f32.mrf.mxu0
        %v3053 = vadd.f32 %v855, %v3052
        %3054 = vmatprep.mubr.bf16.mxu0 %v445
        %3055 = vmatmul.mubr.bf16.gmra.mxu0 %v444
        %v3056 = vpop.f32.mrf.mxu0
        %v3057 = vadd.f32 %v851, %v3056
        %v3058 = vpop.f32.mrf.mxu0
        %v3059 = vadd.f32 %v855, %v3058
        %v3060 = vpop.f32.mrf.mxu0
        %v3061 = vadd.f32 %v851, %v3060
        %v3062 = vpop.f32.mrf.mxu0
        %v3063 = vadd.f32 %v855, %v3062
        %3064 = vdwg.mxu0
        %3065 = vmatprep.subr.bf16.mxu0 %v2313
        %3066 = vmatpush1.bf16.msra.mxu0 %v2312
        %3067 = vmatprep.subr.bf16.mxu0 %v2301
        %3068 = vmatpush1.bf16.msra.mxu0 %v2300
        %3069 = vmatprep.subr.bf16.mxu0 %v2289
        %3070 = vmatpush1.bf16.msra.mxu0 %v2288
        %3071 = vmatprep.subr.bf16.mxu0 %v2277
        %3072 = vmatpush1.bf16.msra.mxu0 %v2276
        %3073 = vmatprep.subr.bf16.mxu0 %v2265
        %3074 = vmatpush1.bf16.msra.mxu0 %v2264
        %3075 = vmatprep.subr.bf16.mxu0 %v2253
        %3076 = vmatpush1.bf16.msra.mxu0 %v2252
        %3077 = vmatprep.subr.bf16.mxu0 %v2241
        %3078 = vmatpush1.bf16.msra.mxu0 %v2240
        %3079 = vmatprep.subr.bf16.mxu0 %v2229
        %3080 = vmatpush1.bf16.msra.mxu0 %v2228
        %3081 = vmatprep.subr.bf16.mxu0 %v2409
        %3082 = vmatpush2.bf16.msra.mxu0 %v2408
        %3083 = vmatprep.subr.bf16.mxu0 %v2397
        %3084 = vmatpush2.bf16.msra.mxu0 %v2396
        %3085 = vmatprep.subr.bf16.mxu0 %v2385
        %3086 = vmatpush2.bf16.msra.mxu0 %v2384
        %3087 = vmatprep.subr.bf16.mxu0 %v2373
        %3088 = vmatpush2.bf16.msra.mxu0 %v2372
        %3089 = vmatprep.subr.bf16.mxu0 %v2361
        %3090 = vmatpush2.bf16.msra.mxu0 %v2360
        %3091 = vmatprep.subr.bf16.mxu0 %v2349
        %3092 = vmatpush2.bf16.msra.mxu0 %v2348
        %3093 = vmatprep.subr.bf16.mxu0 %v2337
        %3094 = vmatpush2.bf16.msra.mxu0 %v2336
        %3095 = vmatprep.subr.bf16.mxu0 %v2325
        %3096 = vmatpush2.bf16.msra.mxu0 %v2324
        %3097 = vmatprep.mubr.bf16.mxu0 %v443
        %3098 = vmatmul.mubr.bf16.gmra.mxu0 %v442
        %v3099 = vpop.f32.mrf.mxu0
        %v3100 = vadd.f32 %v3047, %v3099
        %v3101 = vpop.f32.mrf.mxu0
        %v3102 = vadd.f32 %v3049, %v3101
        %v3103 = vpop.f32.mrf.mxu0
        %v3104 = vadd.f32 %v3051, %v3103
        %v3105 = vpop.f32.mrf.mxu0
        %v3106 = vadd.f32 %v3053, %v3105
        %3107 = vmatprep.mubr.bf16.mxu0 %v447
        %3108 = vmatmul.mubr.bf16.gmra.mxu0 %v446
        %v3109 = vpop.f32.mrf.mxu0
        %v3110 = vadd.f32 %v3057, %v3109
        %v3111 = vpop.f32.mrf.mxu0
        %v3112 = vadd.f32 %v3059, %v3111
        %v3113 = vpop.f32.mrf.mxu0
        %v3114 = vadd.f32 %v3061, %v3113
        %v3115 = vpop.f32.mrf.mxu0
        %v3116 = vadd.f32 %v3063, %v3115
        %3117 = vdwg.mxu0
        %3118 = vmatprep.subr.bf16.mxu0 %v2123
        %3119 = vmatpush1.bf16.msra.mxu0 %v2122
        %3120 = vmatprep.subr.bf16.mxu0 %v2111
        %3121 = vmatpush1.bf16.msra.mxu0 %v2110
        %3122 = vmatprep.subr.bf16.mxu0 %v2099
        %3123 = vmatpush1.bf16.msra.mxu0 %v2098
        %3124 = vmatprep.subr.bf16.mxu0 %v2087
        %3125 = vmatpush1.bf16.msra.mxu0 %v2086
        %3126 = vmatprep.subr.bf16.mxu0 %v2075
        %3127 = vmatpush1.bf16.msra.mxu0 %v2074
        %3128 = vmatprep.subr.bf16.mxu0 %v2063
        %3129 = vmatpush1.bf16.msra.mxu0 %v2062
        %3130 = vmatprep.subr.bf16.mxu0 %v2051
        %3131 = vmatpush1.bf16.msra.mxu0 %v2050
        %3132 = vmatprep.subr.bf16.mxu0 %v2039
        %3133 = vmatpush1.bf16.msra.mxu0 %v2038
        %3134 = vmatprep.subr.bf16.mxu0 %v2219
        %3135 = vmatpush2.bf16.msra.mxu0 %v2218
        %3136 = vmatprep.subr.bf16.mxu0 %v2207
        %3137 = vmatpush2.bf16.msra.mxu0 %v2206
        %3138 = vmatprep.subr.bf16.mxu0 %v2195
        %3139 = vmatpush2.bf16.msra.mxu0 %v2194
        %3140 = vmatprep.subr.bf16.mxu0 %v2183
        %3141 = vmatpush2.bf16.msra.mxu0 %v2182
        %3142 = vmatprep.subr.bf16.mxu0 %v2171
        %3143 = vmatpush2.bf16.msra.mxu0 %v2170
        %3144 = vmatprep.subr.bf16.mxu0 %v2159
        %3145 = vmatpush2.bf16.msra.mxu0 %v2158
        %3146 = vmatprep.subr.bf16.mxu0 %v2147
        %3147 = vmatpush2.bf16.msra.mxu0 %v2146
        %3148 = vmatprep.subr.bf16.mxu0 %v2135
        %3149 = vmatpush2.bf16.msra.mxu0 %v2134
        %3150 = vmatprep.mubr.bf16.mxu0 %v441
        %3151 = vmatmul.mubr.bf16.gmra.mxu0 %v440
        %v3152 = vpop.f32.mrf.mxu0
        %v3153 = vadd.f32 %v859, %v3152
        %v3154 = vpop.f32.mrf.mxu0
        %v3155 = vadd.f32 %v863, %v3154
        %v3156 = vpop.f32.mrf.mxu0
        %v3157 = vadd.f32 %v859, %v3156
        %v3158 = vpop.f32.mrf.mxu0
        %v3159 = vadd.f32 %v863, %v3158
        %3160 = vmatprep.mubr.bf16.mxu0 %v445
        %3161 = vmatmul.mubr.bf16.gmra.mxu0 %v444
        %v3162 = vpop.f32.mrf.mxu0
        %v3163 = vadd.f32 %v859, %v3162
        %v3164 = vpop.f32.mrf.mxu0
        %v3165 = vadd.f32 %v863, %v3164
        %v3166 = vpop.f32.mrf.mxu0
        %v3167 = vadd.f32 %v859, %v3166
        %v3168 = vpop.f32.mrf.mxu0
        %v3169 = vadd.f32 %v863, %v3168
        %3170 = vdwg.mxu0
        %3171 = vmatprep.subr.bf16.mxu0 %v2315
        %3172 = vmatpush1.bf16.msra.mxu0 %v2314
        %3173 = vmatprep.subr.bf16.mxu0 %v2303
        %3174 = vmatpush1.bf16.msra.mxu0 %v2302
        %3175 = vmatprep.subr.bf16.mxu0 %v2291
        %3176 = vmatpush1.bf16.msra.mxu0 %v2290
        %3177 = vmatprep.subr.bf16.mxu0 %v2279
        %3178 = vmatpush1.bf16.msra.mxu0 %v2278
        %3179 = vmatprep.subr.bf16.mxu0 %v2267
        %3180 = vmatpush1.bf16.msra.mxu0 %v2266
        %3181 = vmatprep.subr.bf16.mxu0 %v2255
        %3182 = vmatpush1.bf16.msra.mxu0 %v2254
        %3183 = vmatprep.subr.bf16.mxu0 %v2243
        %3184 = vmatpush1.bf16.msra.mxu0 %v2242
        %3185 = vmatprep.subr.bf16.mxu0 %v2231
        %3186 = vmatpush1.bf16.msra.mxu0 %v2230
        %3187 = vmatprep.subr.bf16.mxu0 %v2411
        %3188 = vmatpush2.bf16.msra.mxu0 %v2410
        %3189 = vmatprep.subr.bf16.mxu0 %v2399
        %3190 = vmatpush2.bf16.msra.mxu0 %v2398
        %3191 = vmatprep.subr.bf16.mxu0 %v2387
        %3192 = vmatpush2.bf16.msra.mxu0 %v2386
        %3193 = vmatprep.subr.bf16.mxu0 %v2375
        %3194 = vmatpush2.bf16.msra.mxu0 %v2374
        %3195 = vmatprep.subr.bf16.mxu0 %v2363
        %3196 = vmatpush2.bf16.msra.mxu0 %v2362
        %3197 = vmatprep.subr.bf16.mxu0 %v2351
        %3198 = vmatpush2.bf16.msra.mxu0 %v2350
        %3199 = vmatprep.subr.bf16.mxu0 %v2339
        %3200 = vmatpush2.bf16.msra.mxu0 %v2338
        %3201 = vmatprep.subr.bf16.mxu0 %v2327
        %3202 = vmatpush2.bf16.msra.mxu0 %v2326
        %3203 = vmatprep.mubr.bf16.mxu0 %v443
        %3204 = vmatmul.mubr.bf16.gmra.mxu0 %v442
        %v3205 = vpop.f32.mrf.mxu0
        %v3206 = vadd.f32 %v3153, %v3205
        %v3207 = vpop.f32.mrf.mxu0
        %v3208 = vadd.f32 %v3155, %v3207
        %v3209 = vpop.f32.mrf.mxu0
        %v3210 = vadd.f32 %v3157, %v3209
        %v3211 = vpop.f32.mrf.mxu0
        %v3212 = vadd.f32 %v3159, %v3211
        %3213 = vmatprep.mubr.bf16.mxu0 %v447
        %3214 = vmatmul.mubr.bf16.gmra.mxu0 %v446
        %v3215 = vpop.f32.mrf.mxu0
        %v3216 = vadd.f32 %v3163, %v3215
        %v3217 = vpop.f32.mrf.mxu0
        %v3218 = vadd.f32 %v3165, %v3217
        %v3219 = vpop.f32.mrf.mxu0
        %v3220 = vadd.f32 %v3167, %v3219
        %v3221 = vpop.f32.mrf.mxu0
        %v3222 = vadd.f32 %v3169, %v3221
        %3223 = vdwg.mxu0
        %3224 = vmatprep.subr.bf16.mxu0 %v2125
        %3225 = vmatpush1.bf16.msra.mxu0 %v2124
        %3226 = vmatprep.subr.bf16.mxu0 %v2113
        %3227 = vmatpush1.bf16.msra.mxu0 %v2112
        %3228 = vmatprep.subr.bf16.mxu0 %v2101
        %3229 = vmatpush1.bf16.msra.mxu0 %v2100
        %3230 = vmatprep.subr.bf16.mxu0 %v2089
        %3231 = vmatpush1.bf16.msra.mxu0 %v2088
        %3232 = vmatprep.subr.bf16.mxu0 %v2077
        %3233 = vmatpush1.bf16.msra.mxu0 %v2076
        %3234 = vmatprep.subr.bf16.mxu0 %v2065
        %3235 = vmatpush1.bf16.msra.mxu0 %v2064
        %3236 = vmatprep.subr.bf16.mxu0 %v2053
        %3237 = vmatpush1.bf16.msra.mxu0 %v2052
        %3238 = vmatprep.subr.bf16.mxu0 %v2041
        %3239 = vmatpush1.bf16.msra.mxu0 %v2040
        %3240 = vmatprep.subr.bf16.mxu0 %v2221
        %3241 = vmatpush2.bf16.msra.mxu0 %v2220
        %3242 = vmatprep.subr.bf16.mxu0 %v2209
        %3243 = vmatpush2.bf16.msra.mxu0 %v2208
        %3244 = vmatprep.subr.bf16.mxu0 %v2197
        %3245 = vmatpush2.bf16.msra.mxu0 %v2196
        %3246 = vmatprep.subr.bf16.mxu0 %v2185
        %3247 = vmatpush2.bf16.msra.mxu0 %v2184
        %3248 = vmatprep.subr.bf16.mxu0 %v2173
        %3249 = vmatpush2.bf16.msra.mxu0 %v2172
        %3250 = vmatprep.subr.bf16.mxu0 %v2161
        %3251 = vmatpush2.bf16.msra.mxu0 %v2160
        %3252 = vmatprep.subr.bf16.mxu0 %v2149
        %3253 = vmatpush2.bf16.msra.mxu0 %v2148
        %3254 = vmatprep.subr.bf16.mxu0 %v2137
        %3255 = vmatpush2.bf16.msra.mxu0 %v2136
        %3256 = vmatprep.mubr.bf16.mxu0 %v441
        %3257 = vmatmul.mubr.bf16.gmra.mxu0 %v440
        %v3258 = vpop.f32.mrf.mxu0
        %v3259 = vadd.f32 %v867, %v3258
        %v3260 = vpop.f32.mrf.mxu0
        %v3261 = vadd.f32 %v871, %v3260
        %v3262 = vpop.f32.mrf.mxu0
        %v3263 = vadd.f32 %v867, %v3262
        %v3264 = vpop.f32.mrf.mxu0
        %v3265 = vadd.f32 %v871, %v3264
        %3266 = vmatprep.mubr.bf16.mxu0 %v445
        %3267 = vmatmul.mubr.bf16.gmra.mxu0 %v444
        %v3268 = vpop.f32.mrf.mxu0
        %v3269 = vadd.f32 %v867, %v3268
        %v3270 = vpop.f32.mrf.mxu0
        %v3271 = vadd.f32 %v871, %v3270
        %v3272 = vpop.f32.mrf.mxu0
        %v3273 = vadd.f32 %v867, %v3272
        %v3274 = vpop.f32.mrf.mxu0
        %v3275 = vadd.f32 %v871, %v3274
        %3276 = vdwg.mxu0
        %3277 = vmatprep.subr.bf16.mxu0 %v2317
        %3278 = vmatpush1.bf16.msra.mxu0 %v2316
        %3279 = vmatprep.subr.bf16.mxu0 %v2305
        %3280 = vmatpush1.bf16.msra.mxu0 %v2304
        %3281 = vmatprep.subr.bf16.mxu0 %v2293
        %3282 = vmatpush1.bf16.msra.mxu0 %v2292
        %3283 = vmatprep.subr.bf16.mxu0 %v2281
        %3284 = vmatpush1.bf16.msra.mxu0 %v2280
        %3285 = vmatprep.subr.bf16.mxu0 %v2269
        %3286 = vmatpush1.bf16.msra.mxu0 %v2268
        %3287 = vmatprep.subr.bf16.mxu0 %v2257
        %3288 = vmatpush1.bf16.msra.mxu0 %v2256
        %3289 = vmatprep.subr.bf16.mxu0 %v2245
        %3290 = vmatpush1.bf16.msra.mxu0 %v2244
        %3291 = vmatprep.subr.bf16.mxu0 %v2233
        %3292 = vmatpush1.bf16.msra.mxu0 %v2232
        %3293 = vmatprep.subr.bf16.mxu0 %v2413
        %3294 = vmatpush2.bf16.msra.mxu0 %v2412
        %3295 = vmatprep.subr.bf16.mxu0 %v2401
        %3296 = vmatpush2.bf16.msra.mxu0 %v2400
        %3297 = vmatprep.subr.bf16.mxu0 %v2389
        %3298 = vmatpush2.bf16.msra.mxu0 %v2388
        %3299 = vmatprep.subr.bf16.mxu0 %v2377
        %3300 = vmatpush2.bf16.msra.mxu0 %v2376
        %3301 = vmatprep.subr.bf16.mxu0 %v2365
        %3302 = vmatpush2.bf16.msra.mxu0 %v2364
        %3303 = vmatprep.subr.bf16.mxu0 %v2353
        %3304 = vmatpush2.bf16.msra.mxu0 %v2352
        %3305 = vmatprep.subr.bf16.mxu0 %v2341
        %3306 = vmatpush2.bf16.msra.mxu0 %v2340
        %3307 = vmatprep.subr.bf16.mxu0 %v2329
        %3308 = vmatpush2.bf16.msra.mxu0 %v2328
        %3309 = vmatprep.mubr.bf16.mxu0 %v443
        %3310 = vmatmul.mubr.bf16.gmra.mxu0 %v442
        %v3311 = vpop.f32.mrf.mxu0
        %v3312 = vadd.f32 %v3259, %v3311
        %v3313 = vpop.f32.mrf.mxu0
        %v3314 = vadd.f32 %v3261, %v3313
        %v3315 = vpop.f32.mrf.mxu0
        %v3316 = vadd.f32 %v3263, %v3315
        %v3317 = vpop.f32.mrf.mxu0
        %v3318 = vadd.f32 %v3265, %v3317
        %3319 = vmatprep.mubr.bf16.mxu0 %v447
        %3320 = vmatmul.mubr.bf16.gmra.mxu0 %v446
        %v3321 = vpop.f32.mrf.mxu0
        %v3322 = vadd.f32 %v3269, %v3321
        %v3323 = vpop.f32.mrf.mxu0
        %v3324 = vadd.f32 %v3271, %v3323
        %v3325 = vpop.f32.mrf.mxu0
        %v3326 = vadd.f32 %v3273, %v3325
        %v3327 = vpop.f32.mrf.mxu0
        %v3328 = vadd.f32 %v3275, %v3327
        %3329 = vdwg.mxu0
        %3330 = vmatprep.subr.bf16.mxu0 %v2127
        %3331 = vmatpush1.bf16.msra.mxu0 %v2126
        %3332 = vmatprep.subr.bf16.mxu0 %v2115
        %3333 = vmatpush1.bf16.msra.mxu0 %v2114
        %3334 = vmatprep.subr.bf16.mxu0 %v2103
        %3335 = vmatpush1.bf16.msra.mxu0 %v2102
        %3336 = vmatprep.subr.bf16.mxu0 %v2091
        %3337 = vmatpush1.bf16.msra.mxu0 %v2090
        %3338 = vmatprep.subr.bf16.mxu0 %v2079
        %3339 = vmatpush1.bf16.msra.mxu0 %v2078
        %3340 = vmatprep.subr.bf16.mxu0 %v2067
        %3341 = vmatpush1.bf16.msra.mxu0 %v2066
        %3342 = vmatprep.subr.bf16.mxu0 %v2055
        %3343 = vmatpush1.bf16.msra.mxu0 %v2054
        %3344 = vmatprep.subr.bf16.mxu0 %v2043
        %3345 = vmatpush1.bf16.msra.mxu0 %v2042
        %3346 = vmatprep.subr.bf16.mxu0 %v2223
        %3347 = vmatpush2.bf16.msra.mxu0 %v2222
        %3348 = vmatprep.subr.bf16.mxu0 %v2211
        %3349 = vmatpush2.bf16.msra.mxu0 %v2210
        %3350 = vmatprep.subr.bf16.mxu0 %v2199
        %3351 = vmatpush2.bf16.msra.mxu0 %v2198
        %3352 = vmatprep.subr.bf16.mxu0 %v2187
        %3353 = vmatpush2.bf16.msra.mxu0 %v2186
        %3354 = vmatprep.subr.bf16.mxu0 %v2175
        %3355 = vmatpush2.bf16.msra.mxu0 %v2174
        %3356 = vmatprep.subr.bf16.mxu0 %v2163
        %3357 = vmatpush2.bf16.msra.mxu0 %v2162
        %3358 = vmatprep.subr.bf16.mxu0 %v2151
        %3359 = vmatpush2.bf16.msra.mxu0 %v2150
        %3360 = vmatprep.subr.bf16.mxu0 %v2139
        %3361 = vmatpush2.bf16.msra.mxu0 %v2138
        %3362 = vmatprep.mubr.bf16.mxu0 %v441
        %3363 = vmatmul.mubr.bf16.gmra.mxu0 %v440
        %v3364 = vpop.f32.mrf.mxu0
        %v3365 = vadd.f32 %v875, %v3364
        %v3366 = vpop.f32.mrf.mxu0
        %v3367 = vadd.f32 %v879, %v3366
        %v3368 = vpop.f32.mrf.mxu0
        %v3369 = vadd.f32 %v875, %v3368
        %v3370 = vpop.f32.mrf.mxu0
        %v3371 = vadd.f32 %v879, %v3370
        %3372 = vmatprep.mubr.bf16.mxu0 %v445
        %3373 = vmatmul.mubr.bf16.gmra.mxu0 %v444
        %v3374 = vpop.f32.mrf.mxu0
        %v3375 = vadd.f32 %v875, %v3374
        %v3376 = vpop.f32.mrf.mxu0
        %v3377 = vadd.f32 %v879, %v3376
        %v3378 = vpop.f32.mrf.mxu0
        %v3379 = vadd.f32 %v875, %v3378
        %v3380 = vpop.f32.mrf.mxu0
        %v3381 = vadd.f32 %v879, %v3380
        %3382 = vdwg.mxu0
        %3383 = vmatprep.subr.bf16.mxu0 %v2319
        %3384 = vmatpush1.bf16.msra.mxu0 %v2318
        %3385 = vmatprep.subr.bf16.mxu0 %v2307
        %3386 = vmatpush1.bf16.msra.mxu0 %v2306
        %3387 = vmatprep.subr.bf16.mxu0 %v2295
        %3388 = vmatpush1.bf16.msra.mxu0 %v2294
        %3389 = vmatprep.subr.bf16.mxu0 %v2283
        %3390 = vmatpush1.bf16.msra.mxu0 %v2282
        %3391 = vmatprep.subr.bf16.mxu0 %v2271
        %3392 = vmatpush1.bf16.msra.mxu0 %v2270
        %3393 = vmatprep.subr.bf16.mxu0 %v2259
        %3394 = vmatpush1.bf16.msra.mxu0 %v2258
        %3395 = vmatprep.subr.bf16.mxu0 %v2247
        %3396 = vmatpush1.bf16.msra.mxu0 %v2246
        %3397 = vmatprep.subr.bf16.mxu0 %v2235
        %3398 = vmatpush1.bf16.msra.mxu0 %v2234
        %3399 = vmatprep.subr.bf16.mxu0 %v2415
        %3400 = vmatpush2.bf16.msra.mxu0 %v2414
        %3401 = vmatprep.subr.bf16.mxu0 %v2403
        %3402 = vmatpush2.bf16.msra.mxu0 %v2402
        %3403 = vmatprep.subr.bf16.mxu0 %v2391
        %3404 = vmatpush2.bf16.msra.mxu0 %v2390
        %3405 = vmatprep.subr.bf16.mxu0 %v2379
        %3406 = vmatpush2.bf16.msra.mxu0 %v2378
        %3407 = vmatprep.subr.bf16.mxu0 %v2367
        %3408 = vmatpush2.bf16.msra.mxu0 %v2366
        %3409 = vmatprep.subr.bf16.mxu0 %v2355
        %3410 = vmatpush2.bf16.msra.mxu0 %v2354
        %3411 = vmatprep.subr.bf16.mxu0 %v2343
        %3412 = vmatpush2.bf16.msra.mxu0 %v2342
        %3413 = vmatprep.subr.bf16.mxu0 %v2331
        %3414 = vmatpush2.bf16.msra.mxu0 %v2330
        %3415 = vmatprep.mubr.bf16.mxu0 %v443
        %3416 = vmatmul.mubr.bf16.gmra.mxu0 %v442
        %v3417 = vpop.f32.mrf.mxu0
        %v3418 = vadd.f32 %v3365, %v3417
        %v3419 = vpop.f32.mrf.mxu0
        %v3420 = vadd.f32 %v3367, %v3419
        %v3421 = vpop.f32.mrf.mxu0
        %v3422 = vadd.f32 %v3369, %v3421
        %v3423 = vpop.f32.mrf.mxu0
        %v3424 = vadd.f32 %v3371, %v3423
        %3425 = vmatprep.mubr.bf16.mxu0 %v447
        %3426 = vmatmul.mubr.bf16.gmra.mxu0 %v446
        %v3427 = vpop.f32.mrf.mxu0
        %v3428 = vadd.f32 %v3375, %v3427
        %v3429 = vpop.f32.mrf.mxu0
        %v3430 = vadd.f32 %v3377, %v3429
        %v3431 = vpop.f32.mrf.mxu0
        %v3432 = vadd.f32 %v3379, %v3431
        %v3433 = vpop.f32.mrf.mxu0
        %v3434 = vadd.f32 %v3381, %v3433
        %3435 = vdwg.mxu0
        %v3436 = vmul.f32 %v2888, 0.088388346
        %v3437 = vmul.f32 %v2890, 0.088388346
        %v3438 = vmul.f32 %v2994, 0.088388346
        %v3439 = vmul.f32 %v2996, 0.088388346
        %v3440 = vmul.f32 %v2892, 0.088388346
        %v3441 = vmul.f32 %v2894, 0.088388346
        %v3442 = vmul.f32 %v2998, 0.088388346
        %v3443 = vmul.f32 %v3000, 0.088388346
        %v3444 = vmul.f32 %v2898, 0.088388346
        %v3445 = vmul.f32 %v2900, 0.088388346
        %v3446 = vmul.f32 %v3004, 0.088388346
        %v3447 = vmul.f32 %v3006, 0.088388346
        %v3448 = vmul.f32 %v2902, 0.088388346
        %v3449 = vmul.f32 %v2904, 0.088388346
        %v3450 = vmul.f32 %v3008, 0.088388346
        %v3451 = vmul.f32 %v3010, 0.088388346
        %v3452 = vpack.c.bf16 %v3440, %v3436
        %v3453 = vpack.c.bf16 %v3441, %v3437
        %v3454 = vpack.c.bf16 %v3442, %v3438
        %v3455 = vpack.c.bf16 %v3443, %v3439
        %v3456 = vpack.c.bf16 %v3448, %v3444
        %v3457 = vpack.c.bf16 %v3449, %v3445
        %v3458 = vpack.c.bf16 %v3450, %v3446
        %v3459 = vpack.c.bf16 %v3451, %v3447
        %v3460 = vpack.c.bf16 %v3104, %v3100
        %v3461 = vpack.c.bf16 %v3106, %v3102
        %v3462 = vpack.c.bf16 %v3210, %v3206
        %v3463 = vpack.c.bf16 %v3212, %v3208
        %v3464 = vpack.c.bf16 %v3114, %v3110
        %v3465 = vpack.c.bf16 %v3116, %v3112
        %v3466 = vpack.c.bf16 %v3220, %v3216
        %v3467 = vpack.c.bf16 %v3222, %v3218
        %v3468 = vpack.c.bf16 %v3316, %v3312
        %v3469 = vpack.c.bf16 %v3318, %v3314
        %v3470 = vpack.c.bf16 %v3422, %v3418
        %v3471 = vpack.c.bf16 %v3424, %v3420
        %v3472 = vpack.c.bf16 %v3326, %v3322
        %v3473 = vpack.c.bf16 %v3328, %v3324
        %v3474 = vpack.c.bf16 %v3432, %v3428
        %v3475 = vpack.c.bf16 %v3434, %v3430
        %v3476 = vld [vmem:[%s352] sm:$0x1]
        %v3477 = vld [vmem:[%s352 + $0x1] sm:$0x1]
        %3478 = vmatprep.subr.bf16.mxu0 0
        %3479 = vmatpush1.bf16.xpose.msra.mxu0 0
        %3480 = vmatprep.subr.bf16.mxu0 0
        %3481 = vmatpush1.bf16.xpose.msra.mxu0 0
        %3482 = vmatprep.subr.bf16.mxu0 0
        %3483 = vmatpush1.bf16.xpose.msra.mxu0 0
        %3484 = vmatprep.subr.bf16.mxu0 0
        %3485 = vmatpush1.bf16.xpose.msra.mxu0 0
        %3486 = vmatprep.subr.bf16.mxu0 0
        %3487 = vmatpush1.bf16.xpose.msra.mxu0 0
        %3488 = vmatprep.subr.bf16.mxu0 0
        %3489 = vmatpush1.bf16.xpose.msra.mxu0 0
        %3490 = vmatprep.subr.bf16.mxu0 0
        %3491 = vmatpush1.bf16.xpose.msra.mxu0 0
        %3492 = vmatprep.subr.bf16.mxu0 0
        %3493 = vmatpush1.bf16.xpose.msra.mxu0 %v3460
        %3494 = vmatprep.subr.bf16.mxu0 0
        %3495 = vmatpush2.bf16.xpose.msra.mxu0 0
        %3496 = vmatprep.subr.bf16.mxu0 0
        %3497 = vmatpush2.bf16.xpose.msra.mxu0 0
        %3498 = vmatprep.subr.bf16.mxu0 0
        %3499 = vmatpush2.bf16.xpose.msra.mxu0 0
        %3500 = vmatprep.subr.bf16.mxu0 0
        %3501 = vmatpush2.bf16.xpose.msra.mxu0 0
        %3502 = vmatprep.subr.bf16.mxu0 0
        %3503 = vmatpush2.bf16.xpose.msra.mxu0 0
        %3504 = vmatprep.subr.bf16.mxu0 0
        %3505 = vmatpush2.bf16.xpose.msra.mxu0 0
        %3506 = vmatprep.subr.bf16.mxu0 0
        %3507 = vmatpush2.bf16.xpose.msra.mxu0 0
        %3508 = vmatprep.subr.bf16.mxu0 0
        %3509 = vmatpush2.bf16.xpose.msra.mxu0 0
        %3510 = vmatprep.mubr.bf16.mxu0 0
        %3511 = vmatmul.mubr.bf16.gmra.mxu0 %v3452
        %v3512 = vpop.f32.mrf.mxu0
        %v3513 = vadd.f32 0.0, %v3512
        %v3514 = vpop.f32.mrf.mxu0
        %v3515 = vpop.f32.mrf.mxu0
        %v3516 = vadd.f32 0.0, %v3515
        %v3517 = vpop.f32.mrf.mxu0
        %3518 = vdwg.mxu0
        %3519 = vmatprep.subr.bf16.mxu0 0
        %3520 = vmatpush1.bf16.xpose.msra.mxu0 0
        %3521 = vmatprep.subr.bf16.mxu0 0
        %3522 = vmatpush1.bf16.xpose.msra.mxu0 0
        %3523 = vmatprep.subr.bf16.mxu0 0
        %3524 = vmatpush1.bf16.xpose.msra.mxu0 0
        %3525 = vmatprep.subr.bf16.mxu0 0
        %3526 = vmatpush1.bf16.xpose.msra.mxu0 0
        %3527 = vmatprep.subr.bf16.mxu0 0
        %3528 = vmatpush1.bf16.xpose.msra.mxu0 0
        %3529 = vmatprep.subr.bf16.mxu0 0
        %3530 = vmatpush1.bf16.xpose.msra.mxu0 0
        %3531 = vmatprep.subr.bf16.mxu0 0
        %3532 = vmatpush1.bf16.xpose.msra.mxu0 0
        %3533 = vmatprep.subr.bf16.mxu0 0
        %3534 = vmatpush1.bf16.xpose.msra.mxu0 %v3461
        %3535 = vmatprep.subr.bf16.mxu0 0
        %3536 = vmatpush2.bf16.xpose.msra.mxu0 0
        %3537 = vmatprep.subr.bf16.mxu0 0
        %3538 = vmatpush2.bf16.xpose.msra.mxu0 0
        %3539 = vmatprep.subr.bf16.mxu0 0
        %3540 = vmatpush2.bf16.xpose.msra.mxu0 0
        %3541 = vmatprep.subr.bf16.mxu0 0
        %3542 = vmatpush2.bf16.xpose.msra.mxu0 0
        %3543 = vmatprep.subr.bf16.mxu0 0
        %3544 = vmatpush2.bf16.xpose.msra.mxu0 0
        %3545 = vmatprep.subr.bf16.mxu0 0
        %3546 = vmatpush2.bf16.xpose.msra.mxu0 0
        %3547 = vmatprep.subr.bf16.mxu0 0
        %3548 = vmatpush2.bf16.xpose.msra.mxu0 0
        %3549 = vmatprep.subr.bf16.mxu0 0
        %3550 = vmatpush2.bf16.xpose.msra.mxu0 0
        %3551 = vmatprep.mubr.bf16.mxu0 0
        %3552 = vmatmul.mubr.bf16.gmra.mxu0 %v3453
        %v3553 = vpop.f32.mrf.mxu0
        %v3554 = vadd.f32 0.0, %v3553
        %v3555 = vpop.f32.mrf.mxu0
        %v3556 = vpop.f32.mrf.mxu0
        %v3557 = vadd.f32 0.0, %v3556
        %v3558 = vpop.f32.mrf.mxu0
        %3559 = vdwg.mxu0
        %3560 = vmatprep.subr.bf16.mxu0 0
        %3561 = vmatpush1.bf16.xpose.msra.mxu0 0
        %3562 = vmatprep.subr.bf16.mxu0 0
        %3563 = vmatpush1.bf16.xpose.msra.mxu0 0
        %3564 = vmatprep.subr.bf16.mxu0 0
        %3565 = vmatpush1.bf16.xpose.msra.mxu0 0
        %3566 = vmatprep.subr.bf16.mxu0 0
        %3567 = vmatpush1.bf16.xpose.msra.mxu0 0
        %3568 = vmatprep.subr.bf16.mxu0 0
        %3569 = vmatpush1.bf16.xpose.msra.mxu0 0
        %3570 = vmatprep.subr.bf16.mxu0 0
        %3571 = vmatpush1.bf16.xpose.msra.mxu0 0
        %3572 = vmatprep.subr.bf16.mxu0 0
        %3573 = vmatpush1.bf16.xpose.msra.mxu0 0
        %3574 = vmatprep.subr.bf16.mxu0 0
        %3575 = vmatpush1.bf16.xpose.msra.mxu0 %v3462
        %3576 = vmatprep.subr.bf16.mxu0 0
        %3577 = vmatpush2.bf16.xpose.msra.mxu0 0
        %3578 = vmatprep.subr.bf16.mxu0 0
        %3579 = vmatpush2.bf16.xpose.msra.mxu0 0
        %3580 = vmatprep.subr.bf16.mxu0 0
        %3581 = vmatpush2.bf16.xpose.msra.mxu0 0
        %3582 = vmatprep.subr.bf16.mxu0 0
        %3583 = vmatpush2.bf16.xpose.msra.mxu0 0
        %3584 = vmatprep.subr.bf16.mxu0 0
        %3585 = vmatpush2.bf16.xpose.msra.mxu0 0
        %3586 = vmatprep.subr.bf16.mxu0 0
        %3587 = vmatpush2.bf16.xpose.msra.mxu0 0
        %3588 = vmatprep.subr.bf16.mxu0 0
        %3589 = vmatpush2.bf16.xpose.msra.mxu0 0
        %3590 = vmatprep.subr.bf16.mxu0 0
        %3591 = vmatpush2.bf16.xpose.msra.mxu0 0
        %3592 = vmatprep.mubr.bf16.mxu0 0
        %3593 = vmatmul.mubr.bf16.gmra.mxu0 %v3454
        %v3594 = vpop.f32.mrf.mxu0
        %v3595 = vadd.f32 0.0, %v3594
        %v3596 = vpop.f32.mrf.mxu0
        %v3597 = vpop.f32.mrf.mxu0
        %v3598 = vadd.f32 0.0, %v3597
        %v3599 = vpop.f32.mrf.mxu0
        %3600 = vdwg.mxu0
        %3601 = vmatprep.subr.bf16.mxu0 0
        %3602 = vmatpush1.bf16.xpose.msra.mxu0 0
        %3603 = vmatprep.subr.bf16.mxu0 0
        %3604 = vmatpush1.bf16.xpose.msra.mxu0 0
        %3605 = vmatprep.subr.bf16.mxu0 0
        %3606 = vmatpush1.bf16.xpose.msra.mxu0 0
        %3607 = vmatprep.subr.bf16.mxu0 0
        %3608 = vmatpush1.bf16.xpose.msra.mxu0 0
        %3609 = vmatprep.subr.bf16.mxu0 0
        %3610 = vmatpush1.bf16.xpose.msra.mxu0 0
        %3611 = vmatprep.subr.bf16.mxu0 0
        %3612 = vmatpush1.bf16.xpose.msra.mxu0 0
        %3613 = vmatprep.subr.bf16.mxu0 0
        %3614 = vmatpush1.bf16.xpose.msra.mxu0 0
        %3615 = vmatprep.subr.bf16.mxu0 0
        %3616 = vmatpush1.bf16.xpose.msra.mxu0 %v3463
        %3617 = vmatprep.subr.bf16.mxu0 0
        %3618 = vmatpush2.bf16.xpose.msra.mxu0 0
        %3619 = vmatprep.subr.bf16.mxu0 0
        %3620 = vmatpush2.bf16.xpose.msra.mxu0 0
        %3621 = vmatprep.subr.bf16.mxu0 0
        %3622 = vmatpush2.bf16.xpose.msra.mxu0 0
        %3623 = vmatprep.subr.bf16.mxu0 0
        %3624 = vmatpush2.bf16.xpose.msra.mxu0 0
        %3625 = vmatprep.subr.bf16.mxu0 0
        %3626 = vmatpush2.bf16.xpose.msra.mxu0 0
        %3627 = vmatprep.subr.bf16.mxu0 0
        %3628 = vmatpush2.bf16.xpose.msra.mxu0 0
        %3629 = vmatprep.subr.bf16.mxu0 0
        %3630 = vmatpush2.bf16.xpose.msra.mxu0 0
        %3631 = vmatprep.subr.bf16.mxu0 0
        %3632 = vmatpush2.bf16.xpose.msra.mxu0 0
        %3633 = vmatprep.mubr.bf16.mxu0 0
        %3634 = vmatmul.mubr.bf16.gmra.mxu0 %v3455
        %v3635 = vpop.f32.mrf.mxu0
        %v3636 = vadd.f32 0.0, %v3635
        %v3637 = vpop.f32.mrf.mxu0
        %v3638 = vpop.f32.mrf.mxu0
        %v3639 = vadd.f32 0.0, %v3638
        %v3640 = vpop.f32.mrf.mxu0
        %3641 = vdwg.mxu0
        %3642 = vmatprep.subr.bf16.mxu0 0
        %3643 = vmatpush1.bf16.xpose.msra.mxu0 0
        %3644 = vmatprep.subr.bf16.mxu0 0
        %3645 = vmatpush1.bf16.xpose.msra.mxu0 0
        %3646 = vmatprep.subr.bf16.mxu0 0
        %3647 = vmatpush1.bf16.xpose.msra.mxu0 0
        %3648 = vmatprep.subr.bf16.mxu0 0
        %3649 = vmatpush1.bf16.xpose.msra.mxu0 0
        %3650 = vmatprep.subr.bf16.mxu0 0
        %3651 = vmatpush1.bf16.xpose.msra.mxu0 0
        %3652 = vmatprep.subr.bf16.mxu0 0
        %3653 = vmatpush1.bf16.xpose.msra.mxu0 0
        %3654 = vmatprep.subr.bf16.mxu0 0
        %3655 = vmatpush1.bf16.xpose.msra.mxu0 0
        %3656 = vmatprep.subr.bf16.mxu0 0
        %3657 = vmatpush1.bf16.xpose.msra.mxu0 %v3464
        %3658 = vmatprep.subr.bf16.mxu0 0
        %3659 = vmatpush2.bf16.xpose.msra.mxu0 0
        %3660 = vmatprep.subr.bf16.mxu0 0
        %3661 = vmatpush2.bf16.xpose.msra.mxu0 0
        %3662 = vmatprep.subr.bf16.mxu0 0
        %3663 = vmatpush2.bf16.xpose.msra.mxu0 0
        %3664 = vmatprep.subr.bf16.mxu0 0
        %3665 = vmatpush2.bf16.xpose.msra.mxu0 0
        %3666 = vmatprep.subr.bf16.mxu0 0
        %3667 = vmatpush2.bf16.xpose.msra.mxu0 0
        %3668 = vmatprep.subr.bf16.mxu0 0
        %3669 = vmatpush2.bf16.xpose.msra.mxu0 0
        %3670 = vmatprep.subr.bf16.mxu0 0
        %3671 = vmatpush2.bf16.xpose.msra.mxu0 0
        %3672 = vmatprep.subr.bf16.mxu0 0
        %3673 = vmatpush2.bf16.xpose.msra.mxu0 0
        %3674 = vmatprep.mubr.bf16.mxu0 0
        %3675 = vmatmul.mubr.bf16.gmra.mxu0 %v3456
        %v3676 = vpop.f32.mrf.mxu0
        %v3677 = vadd.f32 0.0, %v3676
        %v3678 = vpop.f32.mrf.mxu0
        %v3679 = vpop.f32.mrf.mxu0
        %v3680 = vadd.f32 0.0, %v3679
        %v3681 = vpop.f32.mrf.mxu0
        %3682 = vdwg.mxu0
        %3683 = vmatprep.subr.bf16.mxu0 0
        %3684 = vmatpush1.bf16.xpose.msra.mxu0 0
        %3685 = vmatprep.subr.bf16.mxu0 0
        %3686 = vmatpush1.bf16.xpose.msra.mxu0 0
        %3687 = vmatprep.subr.bf16.mxu0 0
        %3688 = vmatpush1.bf16.xpose.msra.mxu0 0
        %3689 = vmatprep.subr.bf16.mxu0 0
        %3690 = vmatpush1.bf16.xpose.msra.mxu0 0
        %3691 = vmatprep.subr.bf16.mxu0 0
        %3692 = vmatpush1.bf16.xpose.msra.mxu0 0
        %3693 = vmatprep.subr.bf16.mxu0 0
        %3694 = vmatpush1.bf16.xpose.msra.mxu0 0
        %3695 = vmatprep.subr.bf16.mxu0 0
        %3696 = vmatpush1.bf16.xpose.msra.mxu0 0
        %3697 = vmatprep.subr.bf16.mxu0 0
        %3698 = vmatpush1.bf16.xpose.msra.mxu0 %v3465
        %3699 = vmatprep.subr.bf16.mxu0 0
        %3700 = vmatpush2.bf16.xpose.msra.mxu0 0
        %3701 = vmatprep.subr.bf16.mxu0 0
        %3702 = vmatpush2.bf16.xpose.msra.mxu0 0
        %3703 = vmatprep.subr.bf16.mxu0 0
        %3704 = vmatpush2.bf16.xpose.msra.mxu0 0
        %3705 = vmatprep.subr.bf16.mxu0 0
        %3706 = vmatpush2.bf16.xpose.msra.mxu0 0
        %3707 = vmatprep.subr.bf16.mxu0 0
        %3708 = vmatpush2.bf16.xpose.msra.mxu0 0
        %3709 = vmatprep.subr.bf16.mxu0 0
        %3710 = vmatpush2.bf16.xpose.msra.mxu0 0
        %3711 = vmatprep.subr.bf16.mxu0 0
        %3712 = vmatpush2.bf16.xpose.msra.mxu0 0
        %3713 = vmatprep.subr.bf16.mxu0 0
        %3714 = vmatpush2.bf16.xpose.msra.mxu0 0
        %3715 = vmatprep.mubr.bf16.mxu0 0
        %3716 = vmatmul.mubr.bf16.gmra.mxu0 %v3457
        %v3717 = vpop.f32.mrf.mxu0
        %v3718 = vadd.f32 0.0, %v3717
        %v3719 = vpop.f32.mrf.mxu0
        %v3720 = vpop.f32.mrf.mxu0
        %v3721 = vadd.f32 0.0, %v3720
        %v3722 = vpop.f32.mrf.mxu0
        %3723 = vdwg.mxu0
        %3724 = vmatprep.subr.bf16.mxu0 0
        %3725 = vmatpush1.bf16.xpose.msra.mxu0 0
        %3726 = vmatprep.subr.bf16.mxu0 0
        %3727 = vmatpush1.bf16.xpose.msra.mxu0 0
        %3728 = vmatprep.subr.bf16.mxu0 0
        %3729 = vmatpush1.bf16.xpose.msra.mxu0 0
        %3730 = vmatprep.subr.bf16.mxu0 0
        %3731 = vmatpush1.bf16.xpose.msra.mxu0 0
        %3732 = vmatprep.subr.bf16.mxu0 0
        %3733 = vmatpush1.bf16.xpose.msra.mxu0 0
        %3734 = vmatprep.subr.bf16.mxu0 0
        %3735 = vmatpush1.bf16.xpose.msra.mxu0 0
        %3736 = vmatprep.subr.bf16.mxu0 0
        %3737 = vmatpush1.bf16.xpose.msra.mxu0 0
        %3738 = vmatprep.subr.bf16.mxu0 0
        %3739 = vmatpush1.bf16.xpose.msra.mxu0 %v3466
        %3740 = vmatprep.subr.bf16.mxu0 0
        %3741 = vmatpush2.bf16.xpose.msra.mxu0 0
        %3742 = vmatprep.subr.bf16.mxu0 0
        %3743 = vmatpush2.bf16.xpose.msra.mxu0 0
        %3744 = vmatprep.subr.bf16.mxu0 0
        %3745 = vmatpush2.bf16.xpose.msra.mxu0 0
        %3746 = vmatprep.subr.bf16.mxu0 0
        %3747 = vmatpush2.bf16.xpose.msra.mxu0 0
        %3748 = vmatprep.subr.bf16.mxu0 0
        %3749 = vmatpush2.bf16.xpose.msra.mxu0 0
        %3750 = vmatprep.subr.bf16.mxu0 0
        %3751 = vmatpush2.bf16.xpose.msra.mxu0 0
        %3752 = vmatprep.subr.bf16.mxu0 0
        %3753 = vmatpush2.bf16.xpose.msra.mxu0 0
        %3754 = vmatprep.subr.bf16.mxu0 0
        %3755 = vmatpush2.bf16.xpose.msra.mxu0 0
        %3756 = vmatprep.mubr.bf16.mxu0 0
        %3757 = vmatmul.mubr.bf16.gmra.mxu0 %v3458
        %v3758 = vpop.f32.mrf.mxu0
        %v3759 = vadd.f32 0.0, %v3758
        %v3760 = vpop.f32.mrf.mxu0
        %v3761 = vpop.f32.mrf.mxu0
        %v3762 = vadd.f32 0.0, %v3761
        %v3763 = vpop.f32.mrf.mxu0
        %3764 = vdwg.mxu0
        %3765 = vmatprep.subr.bf16.mxu0 0
        %3766 = vmatpush1.bf16.xpose.msra.mxu0 0
        %3767 = vmatprep.subr.bf16.mxu0 0
        %3768 = vmatpush1.bf16.xpose.msra.mxu0 0
        %3769 = vmatprep.subr.bf16.mxu0 0
        %3770 = vmatpush1.bf16.xpose.msra.mxu0 0
        %3771 = vmatprep.subr.bf16.mxu0 0
        %3772 = vmatpush1.bf16.xpose.msra.mxu0 0
        %3773 = vmatprep.subr.bf16.mxu0 0
        %3774 = vmatpush1.bf16.xpose.msra.mxu0 0
        %3775 = vmatprep.subr.bf16.mxu0 0
        %3776 = vmatpush1.bf16.xpose.msra.mxu0 0
        %3777 = vmatprep.subr.bf16.mxu0 0
        %3778 = vmatpush1.bf16.xpose.msra.mxu0 0
        %3779 = vmatprep.subr.bf16.mxu0 0
        %3780 = vmatpush1.bf16.xpose.msra.mxu0 %v3467
        %3781 = vmatprep.subr.bf16.mxu0 0
        %3782 = vmatpush2.bf16.xpose.msra.mxu0 0
        %3783 = vmatprep.subr.bf16.mxu0 0
        %3784 = vmatpush2.bf16.xpose.msra.mxu0 0
        %3785 = vmatprep.subr.bf16.mxu0 0
        %3786 = vmatpush2.bf16.xpose.msra.mxu0 0
        %3787 = vmatprep.subr.bf16.mxu0 0
        %3788 = vmatpush2.bf16.xpose.msra.mxu0 0
        %3789 = vmatprep.subr.bf16.mxu0 0
        %3790 = vmatpush2.bf16.xpose.msra.mxu0 0
        %3791 = vmatprep.subr.bf16.mxu0 0
        %3792 = vmatpush2.bf16.xpose.msra.mxu0 0
        %3793 = vmatprep.subr.bf16.mxu0 0
        %3794 = vmatpush2.bf16.xpose.msra.mxu0 0
        %3795 = vmatprep.subr.bf16.mxu0 0
        %3796 = vmatpush2.bf16.xpose.msra.mxu0 0
        %3797 = vmatprep.mubr.bf16.mxu0 0
        %3798 = vmatmul.mubr.bf16.gmra.mxu0 %v3459
        %v3799 = vpop.f32.mrf.mxu0
        %v3800 = vadd.f32 0.0, %v3799
        %v3801 = vpop.f32.mrf.mxu0
        %v3802 = vpop.f32.mrf.mxu0
        %v3803 = vadd.f32 0.0, %v3802
        %v3804 = vpop.f32.mrf.mxu0
        %3805 = vdwg.mxu0
        %vm3806 = vcmp.gt.f32.partialorder %v3476, 0.0
        %vm3807 = vcmp.gt.f32.partialorder %v3477, 0.0
        %v3808 = vsel %vm3806, 1, 0
        %v3809 = vsel %vm3807, 1, 0
        %v3810 = vlaneseq
        %v3811 = vshrl.u32 %v3810, 7
        %v3812 = vsub.s32 0, %v3811
        %v3813 = vrot.slane %v3808, %v3812
        %v3814 = vlaneseq
        %v3815 = vshrl.u32 %v3814, 7
        %v3816 = vsub.s32 0, %v3815
        %v3817 = vrot.slane %v3809, %v3816
        %vm3818 = vcmp.eq.s32.totalorder %v3813, 1
        %vm3819 = vcmp.eq.s32.totalorder %v3817, 1
        %v3820 = vsel %vm3818, -1e+18, %v3513
        %v3821 = vsel %vm3818, -1e+18, %v3516
        %v3822 = vsel %vm3818, -1e+18, %v3554
        %v3823 = vsel %vm3818, -1e+18, %v3557
        %v3824 = vsel %vm3818, -1e+18, %v3595
        %v3825 = vsel %vm3818, -1e+18, %v3598
        %v3826 = vsel %vm3818, -1e+18, %v3636
        %v3827 = vsel %vm3818, -1e+18, %v3639
        %v3828 = vsel %vm3819, -1e+18, %v3677
        %v3829 = vsel %vm3819, -1e+18, %v3680
        %v3830 = vsel %vm3819, -1e+18, %v3718
        %v3831 = vsel %vm3819, -1e+18, %v3721
        %v3832 = vsel %vm3819, -1e+18, %v3759
        %v3833 = vsel %vm3819, -1e+18, %v3762
        %v3834 = vsel %vm3819, -1e+18, %v3800
        %v3835 = vsel %vm3819, -1e+18, %v3803
        %vm3836 = vcmask 130048
        %v3837 = vsel %vm3836, %v3820, -inf
        %3838 = vmax.xlane.f32.xlu0 %v3837
        %v3839 = vpop.xlane.xlu0 %3838
        %v3840 = vsel %vm3836, %v3821, -inf
        %3841 = vmax.xlane.f32.xlu0 %v3840
        %v3842 = vpop.xlane.xlu0 %3841
        %v3843 = vsel %vm3836, %v3822, -inf
        %3844 = vmax.xlane.f32.xlu0 %v3843
        %v3845 = vpop.xlane.xlu0 %3844
        %v3846 = vsel %vm3836, %v3823, -inf
        %3847 = vmax.xlane.f32.xlu0 %v3846
        %v3848 = vpop.xlane.xlu0 %3847
        %v3849 = vsel %vm3836, %v3824, -inf
        %3850 = vmax.xlane.f32.xlu0 %v3849
        %v3851 = vpop.xlane.xlu0 %3850
        %v3852 = vsel %vm3836, %v3825, -inf
        %3853 = vmax.xlane.f32.xlu0 %v3852
        %v3854 = vpop.xlane.xlu0 %3853
        %v3855 = vsel %vm3836, %v3826, -inf
        %3856 = vmax.xlane.f32.xlu0 %v3855
        %v3857 = vpop.xlane.xlu0 %3856
        %v3858 = vsel %vm3836, %v3827, -inf
        %3859 = vmax.xlane.f32.xlu0 %v3858
        %v3860 = vpop.xlane.xlu0 %3859
        %v3861 = vsel %vm3836, %v3828, -inf
        %3862 = vmax.xlane.f32.xlu0 %v3861
        %v3863 = vpop.xlane.xlu0 %3862
        %v3864 = vsel %vm3836, %v3829, -inf
        %3865 = vmax.xlane.f32.xlu0 %v3864
        %v3866 = vpop.xlane.xlu0 %3865
        %v3867 = vsel %vm3836, %v3830, -inf
        %3868 = vmax.xlane.f32.xlu0 %v3867
        %v3869 = vpop.xlane.xlu0 %3868
        %v3870 = vsel %vm3836, %v3831, -inf
        %3871 = vmax.xlane.f32.xlu0 %v3870
        %v3872 = vpop.xlane.xlu0 %3871
        %v3873 = vsel %vm3836, %v3832, -inf
        %3874 = vmax.xlane.f32.xlu0 %v3873
        %v3875 = vpop.xlane.xlu0 %3874
        %v3876 = vsel %vm3836, %v3833, -inf
        %3877 = vmax.xlane.f32.xlu0 %v3876
        %v3878 = vpop.xlane.xlu0 %3877
        %v3879 = vsel %vm3836, %v3834, -inf
        %3880 = vmax.xlane.f32.xlu0 %v3879
        %v3881 = vpop.xlane.xlu0 %3880
        %v3882 = vsel %vm3836, %v3835, -inf
        %3883 = vmax.xlane.f32.xlu0 %v3882
        %v3884 = vpop.xlane.xlu0 %3883
        %v3885 = vsub.f32 %v3820, %v3839
        %v3886 = vsub.f32 %v3821, %v3842
        %v3887 = vsub.f32 %v3822, %v3845
        %v3888 = vsub.f32 %v3823, %v3848
        %v3889 = vsub.f32 %v3824, %v3851
        %v3890 = vsub.f32 %v3825, %v3854
        %v3891 = vsub.f32 %v3826, %v3857
        %v3892 = vsub.f32 %v3827, %v3860
        %v3893 = vsub.f32 %v3828, %v3863
        %v3894 = vsub.f32 %v3829, %v3866
        %v3895 = vsub.f32 %v3830, %v3869
        %v3896 = vsub.f32 %v3831, %v3872
        %v3897 = vsub.f32 %v3832, %v3875
        %v3898 = vsub.f32 %v3833, %v3878
        %v3899 = vsub.f32 %v3834, %v3881
        %v3900 = vsub.f32 %v3835, %v3884
        %v3901 = vmul.f32 %v3885, 1.442695
        %v3902 = vpow.pop %v3901
        %v3903 = vmul.f32 %v3886, 1.442695
        %v3904 = vpow.pop %v3903
        %v3905 = vmul.f32 %v3887, 1.442695
        %v3906 = vpow.pop %v3905
        %v3907 = vmul.f32 %v3888, 1.442695
        %v3908 = vpow.pop %v3907
        %v3909 = vmul.f32 %v3889, 1.442695
        %v3910 = vpow.pop %v3909
        %v3911 = vmul.f32 %v3890, 1.442695
        %v3912 = vpow.pop %v3911
        %v3913 = vmul.f32 %v3891, 1.442695
        %v3914 = vpow.pop %v3913
        %v3915 = vmul.f32 %v3892, 1.442695
        %v3916 = vpow.pop %v3915
        %v3917 = vmul.f32 %v3893, 1.442695
        %v3918 = vpow.pop %v3917
        %v3919 = vmul.f32 %v3894, 1.442695
        %v3920 = vpow.pop %v3919
        %v3921 = vmul.f32 %v3895, 1.442695
        %v3922 = vpow.pop %v3921
        %v3923 = vmul.f32 %v3896, 1.442695
        %v3924 = vpow.pop %v3923
        %v3925 = vmul.f32 %v3897, 1.442695
        %v3926 = vpow.pop %v3925
        %v3927 = vmul.f32 %v3898, 1.442695
        %v3928 = vpow.pop %v3927
        %v3929 = vmul.f32 %v3899, 1.442695
        %v3930 = vpow.pop %v3929
        %v3931 = vmul.f32 %v3900, 1.442695
        %v3932 = vpow.pop %v3931
        %v3933 = vsel %vm3836, %v3902, 0.0
        %3934 = vadd.xlane.f32.xlu0 %v3933
        %v3935 = vpop.xlane.xlu0 %3934
        %v3936 = vsel %vm3836, %v3904, 0.0
        %3937 = vadd.xlane.f32.xlu0 %v3936
        %v3938 = vpop.xlane.xlu0 %3937
        %v3939 = vsel %vm3836, %v3906, 0.0
        %3940 = vadd.xlane.f32.xlu0 %v3939
        %v3941 = vpop.xlane.xlu0 %3940
        %v3942 = vsel %vm3836, %v3908, 0.0
        %3943 = vadd.xlane.f32.xlu0 %v3942
        %v3944 = vpop.xlane.xlu0 %3943
        %v3945 = vsel %vm3836, %v3910, 0.0
        %3946 = vadd.xlane.f32.xlu0 %v3945
        %v3947 = vpop.xlane.xlu0 %3946
        %v3948 = vsel %vm3836, %v3912, 0.0
        %3949 = vadd.xlane.f32.xlu0 %v3948
        %v3950 = vpop.xlane.xlu0 %3949
        %v3951 = vsel %vm3836, %v3914, 0.0
        %3952 = vadd.xlane.f32.xlu0 %v3951
        %v3953 = vpop.xlane.xlu0 %3952
        %v3954 = vsel %vm3836, %v3916, 0.0
        %3955 = vadd.xlane.f32.xlu0 %v3954
        %v3956 = vpop.xlane.xlu0 %3955
        %v3957 = vsel %vm3836, %v3918, 0.0
        %3958 = vadd.xlane.f32.xlu0 %v3957
        %v3959 = vpop.xlane.xlu0 %3958
        %v3960 = vsel %vm3836, %v3920, 0.0
        %3961 = vadd.xlane.f32.xlu0 %v3960
        %v3962 = vpop.xlane.xlu0 %3961
        %v3963 = vsel %vm3836, %v3922, 0.0
        %3964 = vadd.xlane.f32.xlu0 %v3963
        %v3965 = vpop.xlane.xlu0 %3964
        %v3966 = vsel %vm3836, %v3924, 0.0
        %3967 = vadd.xlane.f32.xlu0 %v3966
        %v3968 = vpop.xlane.xlu0 %3967
        %v3969 = vsel %vm3836, %v3926, 0.0
        %3970 = vadd.xlane.f32.xlu0 %v3969
        %v3971 = vpop.xlane.xlu0 %3970
        %v3972 = vsel %vm3836, %v3928, 0.0
        %3973 = vadd.xlane.f32.xlu0 %v3972
        %v3974 = vpop.xlane.xlu0 %3973
        %v3975 = vsel %vm3836, %v3930, 0.0
        %3976 = vadd.xlane.f32.xlu0 %v3975
        %v3977 = vpop.xlane.xlu0 %3976
        %v3978 = vsel %vm3836, %v3932, 0.0
        %3979 = vadd.xlane.f32.xlu0 %v3978
        %v3980 = vpop.xlane.xlu0 %3979
        %v3981 = vrcp.pop %v3935
        %v3982 = vrcp.pop %v3938
        %v3983 = vrcp.pop %v3941
        %v3984 = vrcp.pop %v3944
        %v3985 = vrcp.pop %v3947
        %v3986 = vrcp.pop %v3950
        %v3987 = vrcp.pop %v3953
        %v3988 = vrcp.pop %v3956
        %v3989 = vrcp.pop %v3959
        %v3990 = vrcp.pop %v3962
        %v3991 = vrcp.pop %v3965
        %v3992 = vrcp.pop %v3968
        %v3993 = vrcp.pop %v3971
        %v3994 = vrcp.pop %v3974
        %v3995 = vrcp.pop %v3977
        %v3996 = vrcp.pop %v3980
        %v3997 = vmul.f32 %v3902, %v3981
        %v3998 = vmul.f32 %v3904, %v3982
        %v3999 = vmul.f32 %v3906, %v3983
        %v4000 = vmul.f32 %v3908, %v3984
        %v4001 = vmul.f32 %v3910, %v3985
        %v4002 = vmul.f32 %v3912, %v3986
        %v4003 = vmul.f32 %v3914, %v3987
        %v4004 = vmul.f32 %v3916, %v3988
        %v4005 = vmul.f32 %v3918, %v3989
        %v4006 = vmul.f32 %v3920, %v3990
        %v4007 = vmul.f32 %v3922, %v3991
        %v4008 = vmul.f32 %v3924, %v3992
        %v4009 = vmul.f32 %v3926, %v3993
        %v4010 = vmul.f32 %v3928, %v3994
        %v4011 = vmul.f32 %v3930, %v3995
        %v4012 = vmul.f32 %v3932, %v3996
        %v4013 = vpack.c.bf16 %v3998, %v3997
        %v4014 = vpack.c.bf16 %v4000, %v3999
        %v4015 = vpack.c.bf16 %v4002, %v4001
        %v4016 = vpack.c.bf16 %v4004, %v4003
        %v4017 = vpack.c.bf16 %v4006, %v4005
        %v4018 = vpack.c.bf16 %v4008, %v4007
        %v4019 = vpack.c.bf16 %v4010, %v4009
        %v4020 = vpack.c.bf16 %v4012, %v4011
        %v4022 = vsel %vm3836, %v4013, 0
        %4024 = vmatprep.subr.bf16.mxu0 0
        %4025 = vmatpush1.bf16.msra.mxu0 0
        %4026 = vmatprep.subr.bf16.mxu0 0
        %4027 = vmatpush1.bf16.msra.mxu0 0
        %4028 = vmatprep.subr.bf16.mxu0 0
        %4029 = vmatpush1.bf16.msra.mxu0 0
        %4030 = vmatprep.subr.bf16.mxu0 0
        %4031 = vmatpush1.bf16.msra.mxu0 0
        %4032 = vmatprep.subr.bf16.mxu0 0
        %4033 = vmatpush1.bf16.msra.mxu0 0
        %4034 = vmatprep.subr.bf16.mxu0 0
        %4035 = vmatpush1.bf16.msra.mxu0 0
        %4036 = vmatprep.subr.bf16.mxu0 0
        %4037 = vmatpush1.bf16.msra.mxu0 0
        %4038 = vmatprep.subr.bf16.mxu0 0
        %4039 = vmatpush1.bf16.msra.mxu0 %v3468
        %4040 = vmatprep.subr.bf16.mxu0 0
        %4041 = vmatpush2.bf16.msra.mxu0 0
        %4042 = vmatprep.subr.bf16.mxu0 0
        %4043 = vmatpush2.bf16.msra.mxu0 0
        %4044 = vmatprep.subr.bf16.mxu0 0
        %4045 = vmatpush2.bf16.msra.mxu0 0
        %4046 = vmatprep.subr.bf16.mxu0 0
        %4047 = vmatpush2.bf16.msra.mxu0 0
        %4048 = vmatprep.subr.bf16.mxu0 0
        %4049 = vmatpush2.bf16.msra.mxu0 0
        %4050 = vmatprep.subr.bf16.mxu0 0
        %4051 = vmatpush2.bf16.msra.mxu0 0
        %4052 = vmatprep.subr.bf16.mxu0 0
        %4053 = vmatpush2.bf16.msra.mxu0 0
        %4054 = vmatprep.subr.bf16.mxu0 0
        %4055 = vmatpush2.bf16.msra.mxu0 0
        %4056 = vmatprep.mubr.bf16.mxu0 0
        %4057 = vmatmul.mubr.bf16.gmra.mxu0 %v4022
        %v4058 = vpop.f32.mrf.mxu0
        %v4059 = vadd.f32 0.0, %v4058
        %v4060 = vpop.f32.mrf.mxu0
        %v4061 = vpop.f32.mrf.mxu0
        %v4062 = vadd.f32 0.0, %v4061
        %v4063 = vpop.f32.mrf.mxu0
        %4064 = vdwg.mxu0
        %v4066 = vsel %vm3836, %v4014, 0
        %4068 = vmatprep.subr.bf16.mxu0 0
        %4069 = vmatpush1.bf16.msra.mxu0 0
        %4070 = vmatprep.subr.bf16.mxu0 0
        %4071 = vmatpush1.bf16.msra.mxu0 0
        %4072 = vmatprep.subr.bf16.mxu0 0
        %4073 = vmatpush1.bf16.msra.mxu0 0
        %4074 = vmatprep.subr.bf16.mxu0 0
        %4075 = vmatpush1.bf16.msra.mxu0 0
        %4076 = vmatprep.subr.bf16.mxu0 0
        %4077 = vmatpush1.bf16.msra.mxu0 0
        %4078 = vmatprep.subr.bf16.mxu0 0
        %4079 = vmatpush1.bf16.msra.mxu0 0
        %4080 = vmatprep.subr.bf16.mxu0 0
        %4081 = vmatpush1.bf16.msra.mxu0 0
        %4082 = vmatprep.subr.bf16.mxu0 0
        %4083 = vmatpush1.bf16.msra.mxu0 %v3469
        %4084 = vmatprep.subr.bf16.mxu0 0
        %4085 = vmatpush2.bf16.msra.mxu0 0
        %4086 = vmatprep.subr.bf16.mxu0 0
        %4087 = vmatpush2.bf16.msra.mxu0 0
        %4088 = vmatprep.subr.bf16.mxu0 0
        %4089 = vmatpush2.bf16.msra.mxu0 0
        %4090 = vmatprep.subr.bf16.mxu0 0
        %4091 = vmatpush2.bf16.msra.mxu0 0
        %4092 = vmatprep.subr.bf16.mxu0 0
        %4093 = vmatpush2.bf16.msra.mxu0 0
        %4094 = vmatprep.subr.bf16.mxu0 0
        %4095 = vmatpush2.bf16.msra.mxu0 0
        %4096 = vmatprep.subr.bf16.mxu0 0
        %4097 = vmatpush2.bf16.msra.mxu0 0
        %4098 = vmatprep.subr.bf16.mxu0 0
        %4099 = vmatpush2.bf16.msra.mxu0 0
        %4100 = vmatprep.mubr.bf16.mxu0 0
        %4101 = vmatmul.mubr.bf16.gmra.mxu0 %v4066
        %v4102 = vpop.f32.mrf.mxu0
        %v4103 = vadd.f32 0.0, %v4102
        %v4104 = vpop.f32.mrf.mxu0
        %v4105 = vpop.f32.mrf.mxu0
        %v4106 = vadd.f32 0.0, %v4105
        %v4107 = vpop.f32.mrf.mxu0
        %4108 = vdwg.mxu0
        %v4110 = vsel %vm3836, %v4015, 0
        %4112 = vmatprep.subr.bf16.mxu0 0
        %4113 = vmatpush1.bf16.msra.mxu0 0
        %4114 = vmatprep.subr.bf16.mxu0 0
        %4115 = vmatpush1.bf16.msra.mxu0 0
        %4116 = vmatprep.subr.bf16.mxu0 0
        %4117 = vmatpush1.bf16.msra.mxu0 0
        %4118 = vmatprep.subr.bf16.mxu0 0
        %4119 = vmatpush1.bf16.msra.mxu0 0
        %4120 = vmatprep.subr.bf16.mxu0 0
        %4121 = vmatpush1.bf16.msra.mxu0 0
        %4122 = vmatprep.subr.bf16.mxu0 0
        %4123 = vmatpush1.bf16.msra.mxu0 0
        %4124 = vmatprep.subr.bf16.mxu0 0
        %4125 = vmatpush1.bf16.msra.mxu0 0
        %4126 = vmatprep.subr.bf16.mxu0 0
        %4127 = vmatpush1.bf16.msra.mxu0 %v3470
        %4128 = vmatprep.subr.bf16.mxu0 0
        %4129 = vmatpush2.bf16.msra.mxu0 0
        %4130 = vmatprep.subr.bf16.mxu0 0
        %4131 = vmatpush2.bf16.msra.mxu0 0
        %4132 = vmatprep.subr.bf16.mxu0 0
        %4133 = vmatpush2.bf16.msra.mxu0 0
        %4134 = vmatprep.subr.bf16.mxu0 0
        %4135 = vmatpush2.bf16.msra.mxu0 0
        %4136 = vmatprep.subr.bf16.mxu0 0
        %4137 = vmatpush2.bf16.msra.mxu0 0
        %4138 = vmatprep.subr.bf16.mxu0 0
        %4139 = vmatpush2.bf16.msra.mxu0 0
        %4140 = vmatprep.subr.bf16.mxu0 0
        %4141 = vmatpush2.bf16.msra.mxu0 0
        %4142 = vmatprep.subr.bf16.mxu0 0
        %4143 = vmatpush2.bf16.msra.mxu0 0
        %4144 = vmatprep.mubr.bf16.mxu0 0
        %4145 = vmatmul.mubr.bf16.gmra.mxu0 %v4110
        %v4146 = vpop.f32.mrf.mxu0
        %v4147 = vadd.f32 0.0, %v4146
        %v4148 = vpop.f32.mrf.mxu0
        %v4149 = vpop.f32.mrf.mxu0
        %v4150 = vadd.f32 0.0, %v4149
        %v4151 = vpop.f32.mrf.mxu0
        %4152 = vdwg.mxu0
        %v4154 = vsel %vm3836, %v4016, 0
        %4156 = vmatprep.subr.bf16.mxu0 0
        %4157 = vmatpush1.bf16.msra.mxu0 0
        %4158 = vmatprep.subr.bf16.mxu0 0
        %4159 = vmatpush1.bf16.msra.mxu0 0
        %4160 = vmatprep.subr.bf16.mxu0 0
        %4161 = vmatpush1.bf16.msra.mxu0 0
        %4162 = vmatprep.subr.bf16.mxu0 0
        %4163 = vmatpush1.bf16.msra.mxu0 0
        %4164 = vmatprep.subr.bf16.mxu0 0
        %4165 = vmatpush1.bf16.msra.mxu0 0
        %4166 = vmatprep.subr.bf16.mxu0 0
        %4167 = vmatpush1.bf16.msra.mxu0 0
        %4168 = vmatprep.subr.bf16.mxu0 0
        %4169 = vmatpush1.bf16.msra.mxu0 0
        %4170 = vmatprep.subr.bf16.mxu0 0
        %4171 = vmatpush1.bf16.msra.mxu0 %v3471
        %4172 = vmatprep.subr.bf16.mxu0 0
        %4173 = vmatpush2.bf16.msra.mxu0 0
        %4174 = vmatprep.subr.bf16.mxu0 0
        %4175 = vmatpush2.bf16.msra.mxu0 0
        %4176 = vmatprep.subr.bf16.mxu0 0
        %4177 = vmatpush2.bf16.msra.mxu0 0
        %4178 = vmatprep.subr.bf16.mxu0 0
        %4179 = vmatpush2.bf16.msra.mxu0 0
        %4180 = vmatprep.subr.bf16.mxu0 0
        %4181 = vmatpush2.bf16.msra.mxu0 0
        %4182 = vmatprep.subr.bf16.mxu0 0
        %4183 = vmatpush2.bf16.msra.mxu0 0
        %4184 = vmatprep.subr.bf16.mxu0 0
        %4185 = vmatpush2.bf16.msra.mxu0 0
        %4186 = vmatprep.subr.bf16.mxu0 0
        %4187 = vmatpush2.bf16.msra.mxu0 0
        %4188 = vmatprep.mubr.bf16.mxu0 0
        %4189 = vmatmul.mubr.bf16.gmra.mxu0 %v4154
        %v4190 = vpop.f32.mrf.mxu0
        %v4191 = vadd.f32 0.0, %v4190
        %v4192 = vpop.f32.mrf.mxu0
        %v4193 = vpop.f32.mrf.mxu0
        %v4194 = vadd.f32 0.0, %v4193
        %v4195 = vpop.f32.mrf.mxu0
        %4196 = vdwg.mxu0
        %v4198 = vsel %vm3836, %v4017, 0
        %4200 = vmatprep.subr.bf16.mxu0 0
        %4201 = vmatpush1.bf16.msra.mxu0 0
        %4202 = vmatprep.subr.bf16.mxu0 0
        %4203 = vmatpush1.bf16.msra.mxu0 0
        %4204 = vmatprep.subr.bf16.mxu0 0
        %4205 = vmatpush1.bf16.msra.mxu0 0
        %4206 = vmatprep.subr.bf16.mxu0 0
        %4207 = vmatpush1.bf16.msra.mxu0 0
        %4208 = vmatprep.subr.bf16.mxu0 0
        %4209 = vmatpush1.bf16.msra.mxu0 0
        %4210 = vmatprep.subr.bf16.mxu0 0
        %4211 = vmatpush1.bf16.msra.mxu0 0
        %4212 = vmatprep.subr.bf16.mxu0 0
        %4213 = vmatpush1.bf16.msra.mxu0 0
        %4214 = vmatprep.subr.bf16.mxu0 0
        %4215 = vmatpush1.bf16.msra.mxu0 %v3472
        %4216 = vmatprep.subr.bf16.mxu0 0
        %4217 = vmatpush2.bf16.msra.mxu0 0
        %4218 = vmatprep.subr.bf16.mxu0 0
        %4219 = vmatpush2.bf16.msra.mxu0 0
        %4220 = vmatprep.subr.bf16.mxu0 0
        %4221 = vmatpush2.bf16.msra.mxu0 0
        %4222 = vmatprep.subr.bf16.mxu0 0
        %4223 = vmatpush2.bf16.msra.mxu0 0
        %4224 = vmatprep.subr.bf16.mxu0 0
        %4225 = vmatpush2.bf16.msra.mxu0 0
        %4226 = vmatprep.subr.bf16.mxu0 0
        %4227 = vmatpush2.bf16.msra.mxu0 0
        %4228 = vmatprep.subr.bf16.mxu0 0
        %4229 = vmatpush2.bf16.msra.mxu0 0
        %4230 = vmatprep.subr.bf16.mxu0 0
        %4231 = vmatpush2.bf16.msra.mxu0 0
        %4232 = vmatprep.mubr.bf16.mxu0 0
        %4233 = vmatmul.mubr.bf16.gmra.mxu0 %v4198
        %v4234 = vpop.f32.mrf.mxu0
        %v4235 = vadd.f32 0.0, %v4234
        %v4236 = vpop.f32.mrf.mxu0
        %v4237 = vpop.f32.mrf.mxu0
        %v4238 = vadd.f32 0.0, %v4237
        %v4239 = vpop.f32.mrf.mxu0
        %4240 = vdwg.mxu0
        %v4242 = vsel %vm3836, %v4018, 0
        %4244 = vmatprep.subr.bf16.mxu0 0
        %4245 = vmatpush1.bf16.msra.mxu0 0
        %4246 = vmatprep.subr.bf16.mxu0 0
        %4247 = vmatpush1.bf16.msra.mxu0 0
        %4248 = vmatprep.subr.bf16.mxu0 0
        %4249 = vmatpush1.bf16.msra.mxu0 0
        %4250 = vmatprep.subr.bf16.mxu0 0
        %4251 = vmatpush1.bf16.msra.mxu0 0
        %4252 = vmatprep.subr.bf16.mxu0 0
        %4253 = vmatpush1.bf16.msra.mxu0 0
        %4254 = vmatprep.subr.bf16.mxu0 0
        %4255 = vmatpush1.bf16.msra.mxu0 0
        %4256 = vmatprep.subr.bf16.mxu0 0
        %4257 = vmatpush1.bf16.msra.mxu0 0
        %4258 = vmatprep.subr.bf16.mxu0 0
        %4259 = vmatpush1.bf16.msra.mxu0 %v3473
        %4260 = vmatprep.subr.bf16.mxu0 0
        %4261 = vmatpush2.bf16.msra.mxu0 0
        %4262 = vmatprep.subr.bf16.mxu0 0
        %4263 = vmatpush2.bf16.msra.mxu0 0
        %4264 = vmatprep.subr.bf16.mxu0 0
        %4265 = vmatpush2.bf16.msra.mxu0 0
        %4266 = vmatprep.subr.bf16.mxu0 0
        %4267 = vmatpush2.bf16.msra.mxu0 0
        %4268 = vmatprep.subr.bf16.mxu0 0
        %4269 = vmatpush2.bf16.msra.mxu0 0
        %4270 = vmatprep.subr.bf16.mxu0 0
        %4271 = vmatpush2.bf16.msra.mxu0 0
        %4272 = vmatprep.subr.bf16.mxu0 0
        %4273 = vmatpush2.bf16.msra.mxu0 0
        %4274 = vmatprep.subr.bf16.mxu0 0
        %4275 = vmatpush2.bf16.msra.mxu0 0
        %4276 = vmatprep.mubr.bf16.mxu0 0
        %4277 = vmatmul.mubr.bf16.gmra.mxu0 %v4242
        %v4278 = vpop.f32.mrf.mxu0
        %v4279 = vadd.f32 0.0, %v4278
        %v4280 = vpop.f32.mrf.mxu0
        %v4281 = vpop.f32.mrf.mxu0
        %v4282 = vadd.f32 0.0, %v4281
        %v4283 = vpop.f32.mrf.mxu0
        %4284 = vdwg.mxu0
        %v4286 = vsel %vm3836, %v4019, 0
        %4288 = vmatprep.subr.bf16.mxu0 0
        %4289 = vmatpush1.bf16.msra.mxu0 0
        %4290 = vmatprep.subr.bf16.mxu0 0
        %4291 = vmatpush1.bf16.msra.mxu0 0
        %4292 = vmatprep.subr.bf16.mxu0 0
        %4293 = vmatpush1.bf16.msra.mxu0 0
        %4294 = vmatprep.subr.bf16.mxu0 0
        %4295 = vmatpush1.bf16.msra.mxu0 0
        %4296 = vmatprep.subr.bf16.mxu0 0
        %4297 = vmatpush1.bf16.msra.mxu0 0
        %4298 = vmatprep.subr.bf16.mxu0 0
        %4299 = vmatpush1.bf16.msra.mxu0 0
        %4300 = vmatprep.subr.bf16.mxu0 0
        %4301 = vmatpush1.bf16.msra.mxu0 0
        %4302 = vmatprep.subr.bf16.mxu0 0
        %4303 = vmatpush1.bf16.msra.mxu0 %v3474
        %4304 = vmatprep.subr.bf16.mxu0 0
        %4305 = vmatpush2.bf16.msra.mxu0 0
        %4306 = vmatprep.subr.bf16.mxu0 0
        %4307 = vmatpush2.bf16.msra.mxu0 0
        %4308 = vmatprep.subr.bf16.mxu0 0
        %4309 = vmatpush2.bf16.msra.mxu0 0
        %4310 = vmatprep.subr.bf16.mxu0 0
        %4311 = vmatpush2.bf16.msra.mxu0 0
        %4312 = vmatprep.subr.bf16.mxu0 0
        %4313 = vmatpush2.bf16.msra.mxu0 0
        %4314 = vmatprep.subr.bf16.mxu0 0
        %4315 = vmatpush2.bf16.msra.mxu0 0
        %4316 = vmatprep.subr.bf16.mxu0 0
        %4317 = vmatpush2.bf16.msra.mxu0 0
        %4318 = vmatprep.subr.bf16.mxu0 0
        %4319 = vmatpush2.bf16.msra.mxu0 0
        %4320 = vmatprep.mubr.bf16.mxu0 0
        %4321 = vmatmul.mubr.bf16.gmra.mxu0 %v4286
        %v4322 = vpop.f32.mrf.mxu0
        %v4323 = vadd.f32 0.0, %v4322
        %v4324 = vpop.f32.mrf.mxu0
        %v4325 = vpop.f32.mrf.mxu0
        %v4326 = vadd.f32 0.0, %v4325
        %v4327 = vpop.f32.mrf.mxu0
        %4328 = vdwg.mxu0
        %v4330 = vsel %vm3836, %v4020, 0
        %4332 = vmatprep.subr.bf16.mxu0 0
        %4333 = vmatpush1.bf16.msra.mxu0 0
        %4334 = vmatprep.subr.bf16.mxu0 0
        %4335 = vmatpush1.bf16.msra.mxu0 0
        %4336 = vmatprep.subr.bf16.mxu0 0
        %4337 = vmatpush1.bf16.msra.mxu0 0
        %4338 = vmatprep.subr.bf16.mxu0 0
        %4339 = vmatpush1.bf16.msra.mxu0 0
        %4340 = vmatprep.subr.bf16.mxu0 0
        %4341 = vmatpush1.bf16.msra.mxu0 0
        %4342 = vmatprep.subr.bf16.mxu0 0
        %4343 = vmatpush1.bf16.msra.mxu0 0
        %4344 = vmatprep.subr.bf16.mxu0 0
        %4345 = vmatpush1.bf16.msra.mxu0 0
        %4346 = vmatprep.subr.bf16.mxu0 0
        %4347 = vmatpush1.bf16.msra.mxu0 %v3475
        %4348 = vmatprep.subr.bf16.mxu0 0
        %4349 = vmatpush2.bf16.msra.mxu0 0
        %4350 = vmatprep.subr.bf16.mxu0 0
        %4351 = vmatpush2.bf16.msra.mxu0 0
        %4352 = vmatprep.subr.bf16.mxu0 0
        %4353 = vmatpush2.bf16.msra.mxu0 0
        %4354 = vmatprep.subr.bf16.mxu0 0
        %4355 = vmatpush2.bf16.msra.mxu0 0
        %4356 = vmatprep.subr.bf16.mxu0 0
        %4357 = vmatpush2.bf16.msra.mxu0 0
        %4358 = vmatprep.subr.bf16.mxu0 0
        %4359 = vmatpush2.bf16.msra.mxu0 0
        %4360 = vmatprep.subr.bf16.mxu0 0
        %4361 = vmatpush2.bf16.msra.mxu0 0
        %4362 = vmatprep.subr.bf16.mxu0 0
        %4363 = vmatpush2.bf16.msra.mxu0 0
        %4364 = vmatprep.mubr.bf16.mxu0 0
        %4365 = vmatmul.mubr.bf16.gmra.mxu0 %v4330
        %v4366 = vpop.f32.mrf.mxu0
        %v4367 = vadd.f32 0.0, %v4366
        %v4368 = vpop.f32.mrf.mxu0
        %v4369 = vpop.f32.mrf.mxu0
        %v4370 = vadd.f32 0.0, %v4369
        %v4371 = vpop.f32.mrf.mxu0
        %4372 = vdwg.mxu0
        %v4373 = vpack.c.bf16 %v4062, %v4059
        %v4374 = vpack.c.bf16 %v4106, %v4103
        %v4375 = vpack.c.bf16 %v4150, %v4147
        %v4376 = vpack.c.bf16 %v4194, %v4191
        %v4377 = vpack.c.bf16 %v4238, %v4235
        %v4378 = vpack.c.bf16 %v4282, %v4279
        %v4379 = vpack.c.bf16 %v4326, %v4323
        %v4380 = vpack.c.bf16 %v4370, %v4367
        %v4381 = vld [vmem:[#allocation8] sm:$0xff]
        %v4382 = vld [vmem:[#allocation8 + $0x8] sm:$0xff]
        %v4383 = vld [vmem:[#allocation8 + $0x10] sm:$0xff]
        %v4384 = vld [vmem:[#allocation8 + $0x18] sm:$0xff]
        %v4385 = vld [vmem:[#allocation8 + $0x20] sm:$0xff]
        %v4386 = vld [vmem:[#allocation8 + $0x28] sm:$0xff]
        %v4387 = vld [vmem:[#allocation8 + $0x30] sm:$0xff]
        %v4388 = vld [vmem:[#allocation8 + $0x38] sm:$0xff]
        %v4389 = vld [vmem:[#allocation8 + $0x40] sm:$0xff]
        %v4390 = vld [vmem:[#allocation8 + $0x48] sm:$0xff]
        %v4391 = vld [vmem:[#allocation8 + $0x50] sm:$0xff]
        %v4392 = vld [vmem:[#allocation8 + $0x58] sm:$0xff]
        %v4393 = vld [vmem:[#allocation8 + $0x60] sm:$0xff]
        %v4394 = vld [vmem:[#allocation8 + $0x68] sm:$0xff]
        %v4395 = vld [vmem:[#allocation8 + $0x70] sm:$0xff]
        %v4396 = vld [vmem:[#allocation8 + $0x78] sm:$0xff]
        %v4397 = vld [vmem:[#allocation8 + $0x80] sm:$0xff]
        %v4398 = vld [vmem:[#allocation8 + $0x88] sm:$0xff]
        %v4399 = vld [vmem:[#allocation8 + $0x90] sm:$0xff]
        %v4400 = vld [vmem:[#allocation8 + $0x98] sm:$0xff]
        %v4401 = vld [vmem:[#allocation8 + $0xa0] sm:$0xff]
        %v4402 = vld [vmem:[#allocation8 + $0xa8] sm:$0xff]
        %v4403 = vld [vmem:[#allocation8 + $0xb0] sm:$0xff]
        %v4404 = vld [vmem:[#allocation8 + $0xb8] sm:$0xff]
        %v4405 = vld [vmem:[#allocation8 + $0xc0] sm:$0xff]
        %v4406 = vld [vmem:[#allocation8 + $0xc8] sm:$0xff]
        %v4407 = vld [vmem:[#allocation8 + $0xd0] sm:$0xff]
        %v4408 = vld [vmem:[#allocation8 + $0xd8] sm:$0xff]
        %v4409 = vld [vmem:[#allocation8 + $0xe0] sm:$0xff]
        %v4410 = vld [vmem:[#allocation8 + $0xe8] sm:$0xff]
        %v4411 = vld [vmem:[#allocation8 + $0xf0] sm:$0xff]
        %v4412 = vld [vmem:[#allocation8 + $0xf8] sm:$0xff]
        %v4413 = vld [vmem:[#allocation8 + $0x100] sm:$0xff]
        %v4414 = vld [vmem:[#allocation8 + $0x108] sm:$0xff]
        %v4415 = vld [vmem:[#allocation8 + $0x110] sm:$0xff]
        %v4416 = vld [vmem:[#allocation8 + $0x118] sm:$0xff]
        %v4417 = vld [vmem:[#allocation8 + $0x120] sm:$0xff]
        %v4418 = vld [vmem:[#allocation8 + $0x128] sm:$0xff]
        %v4419 = vld [vmem:[#allocation8 + $0x130] sm:$0xff]
        %v4420 = vld [vmem:[#allocation8 + $0x138] sm:$0xff]
        %v4421 = vld [vmem:[#allocation8 + $0x140] sm:$0xff]
        %v4422 = vld [vmem:[#allocation8 + $0x148] sm:$0xff]
        %v4423 = vld [vmem:[#allocation8 + $0x150] sm:$0xff]
        %v4424 = vld [vmem:[#allocation8 + $0x158] sm:$0xff]
        %v4425 = vld [vmem:[#allocation8 + $0x160] sm:$0xff]
        %v4426 = vld [vmem:[#allocation8 + $0x168] sm:$0xff]
        %v4427 = vld [vmem:[#allocation8 + $0x170] sm:$0xff]
        %v4428 = vld [vmem:[#allocation8 + $0x178] sm:$0xff]
        %v4429 = vld [vmem:[#allocation8 + $0x180] sm:$0xff]
        %v4430 = vld [vmem:[#allocation8 + $0x188] sm:$0xff]
        %v4431 = vld [vmem:[#allocation8 + $0x190] sm:$0xff]
        %v4432 = vld [vmem:[#allocation8 + $0x198] sm:$0xff]
        %v4433 = vld [vmem:[#allocation8 + $0x1a0] sm:$0xff]
        %v4434 = vld [vmem:[#allocation8 + $0x1a8] sm:$0xff]
        %v4435 = vld [vmem:[#allocation8 + $0x1b0] sm:$0xff]
        %v4436 = vld [vmem:[#allocation8 + $0x1b8] sm:$0xff]
        %v4437 = vld [vmem:[#allocation8 + $0x1c0] sm:$0xff]
        %v4438 = vld [vmem:[#allocation8 + $0x1c8] sm:$0xff]
        %v4439 = vld [vmem:[#allocation8 + $0x1d0] sm:$0xff]
        %v4440 = vld [vmem:[#allocation8 + $0x1d8] sm:$0xff]
        %v4441 = vld [vmem:[#allocation8 + $0x1e0] sm:$0xff]
        %v4442 = vld [vmem:[#allocation8 + $0x1e8] sm:$0xff]
        %v4443 = vld [vmem:[#allocation8 + $0x1f0] sm:$0xff]
        %v4444 = vld [vmem:[#allocation8 + $0x1f8] sm:$0xff]
        %v4445 = vld [vmem:[#allocation8 + $0x200] sm:$0xff]
        %v4446 = vld [vmem:[#allocation8 + $0x208] sm:$0xff]
        %v4447 = vld [vmem:[#allocation8 + $0x210] sm:$0xff]
        %v4448 = vld [vmem:[#allocation8 + $0x218] sm:$0xff]
        %v4449 = vld [vmem:[#allocation8 + $0x220] sm:$0xff]
        %v4450 = vld [vmem:[#allocation8 + $0x228] sm:$0xff]
        %v4451 = vld [vmem:[#allocation8 + $0x230] sm:$0xff]
        %v4452 = vld [vmem:[#allocation8 + $0x238] sm:$0xff]
        %v4453 = vld [vmem:[#allocation8 + $0x240] sm:$0xff]
        %v4454 = vld [vmem:[#allocation8 + $0x248] sm:$0xff]
        %v4455 = vld [vmem:[#allocation8 + $0x250] sm:$0xff]
        %v4456 = vld [vmem:[#allocation8 + $0x258] sm:$0xff]
        %v4457 = vld [vmem:[#allocation8 + $0x260] sm:$0xff]
        %v4458 = vld [vmem:[#allocation8 + $0x268] sm:$0xff]
        %v4459 = vld [vmem:[#allocation8 + $0x270] sm:$0xff]
        %v4460 = vld [vmem:[#allocation8 + $0x278] sm:$0xff]
        %v4461 = vld [vmem:[#allocation8 + $0x280] sm:$0xff]
        %v4462 = vld [vmem:[#allocation8 + $0x288] sm:$0xff]
        %v4463 = vld [vmem:[#allocation8 + $0x290] sm:$0xff]
        %v4464 = vld [vmem:[#allocation8 + $0x298] sm:$0xff]
        %v4465 = vld [vmem:[#allocation8 + $0x2a0] sm:$0xff]
        %v4466 = vld [vmem:[#allocation8 + $0x2a8] sm:$0xff]
        %v4467 = vld [vmem:[#allocation8 + $0x2b0] sm:$0xff]
        %v4468 = vld [vmem:[#allocation8 + $0x2b8] sm:$0xff]
        %v4469 = vld [vmem:[#allocation8 + $0x2c0] sm:$0xff]
        %v4470 = vld [vmem:[#allocation8 + $0x2c8] sm:$0xff]
        %v4471 = vld [vmem:[#allocation8 + $0x2d0] sm:$0xff]
        %v4472 = vld [vmem:[#allocation8 + $0x2d8] sm:$0xff]
        %v4473 = vld [vmem:[#allocation8 + $0x2e0] sm:$0xff]
        %v4474 = vld [vmem:[#allocation8 + $0x2e8] sm:$0xff]
        %v4475 = vld [vmem:[#allocation8 + $0x2f0] sm:$0xff]
        %v4476 = vld [vmem:[#allocation8 + $0x2f8] sm:$0xff]
        %v4477 = vld [vmem:[#allocation8 + $0x300] sm:$0xff]
        %v4478 = vld [vmem:[#allocation8 + $0x308] sm:$0xff]
        %v4479 = vld [vmem:[#allocation8 + $0x310] sm:$0xff]
        %v4480 = vld [vmem:[#allocation8 + $0x318] sm:$0xff]
        %v4481 = vld [vmem:[#allocation8 + $0x320] sm:$0xff]
        %v4482 = vld [vmem:[#allocation8 + $0x328] sm:$0xff]
        %v4483 = vld [vmem:[#allocation8 + $0x330] sm:$0xff]
        %v4484 = vld [vmem:[#allocation8 + $0x338] sm:$0xff]
        %v4485 = vld [vmem:[#allocation8 + $0x340] sm:$0xff]
        %v4486 = vld [vmem:[#allocation8 + $0x348] sm:$0xff]
        %v4487 = vld [vmem:[#allocation8 + $0x350] sm:$0xff]
        %v4488 = vld [vmem:[#allocation8 + $0x358] sm:$0xff]
        %v4489 = vld [vmem:[#allocation8 + $0x360] sm:$0xff]
        %v4490 = vld [vmem:[#allocation8 + $0x368] sm:$0xff]
        %v4491 = vld [vmem:[#allocation8 + $0x370] sm:$0xff]
        %v4492 = vld [vmem:[#allocation8 + $0x378] sm:$0xff]
        %v4493 = vld [vmem:[#allocation8 + $0x380] sm:$0xff]
        %v4494 = vld [vmem:[#allocation8 + $0x388] sm:$0xff]
        %v4495 = vld [vmem:[#allocation8 + $0x390] sm:$0xff]
        %v4496 = vld [vmem:[#allocation8 + $0x398] sm:$0xff]
        %v4497 = vld [vmem:[#allocation8 + $0x3a0] sm:$0xff]
        %v4498 = vld [vmem:[#allocation8 + $0x3a8] sm:$0xff]
        %v4499 = vld [vmem:[#allocation8 + $0x3b0] sm:$0xff]
        %v4500 = vld [vmem:[#allocation8 + $0x3b8] sm:$0xff]
        %v4501 = vld [vmem:[#allocation8 + $0x3c0] sm:$0xff]
        %v4502 = vld [vmem:[#allocation8 + $0x3c8] sm:$0xff]
        %v4503 = vld [vmem:[#allocation8 + $0x3d0] sm:$0xff]
        %v4504 = vld [vmem:[#allocation8 + $0x3d8] sm:$0xff]
        %v4505 = vld [vmem:[#allocation8 + $0x3e0] sm:$0xff]
        %v4506 = vld [vmem:[#allocation8 + $0x3e8] sm:$0xff]
        %v4507 = vld [vmem:[#allocation8 + $0x3f0] sm:$0xff]
        %v4508 = vld [vmem:[#allocation8 + $0x3f8] sm:$0xff]
        %v4509 = vlaneseq
        %v4510 = vshrl.u32 %v4509, 7
        %v4511 = vsub.s32 1, %v4510
        %v4512 = vrot.slane %v428, %v4511
        %v4513 = vlaneseq
        %v4514 = vshrl.u32 %v4513, 7
        %v4515 = vsub.s32 1, %v4514
        %v4516 = vrot.slane %v429, %v4515
        %v4517 = vlaneseq
        %v4518 = vshrl.u32 %v4517, 7
        %v4519 = vsub.s32 1, %v4518
        %v4520 = vrot.slane %v430, %v4519
        %v4521 = vlaneseq
        %v4522 = vshrl.u32 %v4521, 7
        %v4523 = vsub.s32 1, %v4522
        %v4524 = vrot.slane %v431, %v4523
        %v4653 = vunpack.c.l.b16 %v4381
        %v4654 = vunpack.c.h.b16 %v4381
        %v4655 = vunpack.c.l.b16 %v4382
        %v4656 = vunpack.c.h.b16 %v4382
        %v4657 = vunpack.c.l.b16 %v4383
        %v4658 = vunpack.c.h.b16 %v4383
        %v4659 = vunpack.c.l.b16 %v4384
        %v4660 = vunpack.c.h.b16 %v4384
        %v4661 = vunpack.c.l.b16 %v4385
        %v4662 = vunpack.c.h.b16 %v4385
        %v4663 = vunpack.c.l.b16 %v4386
        %v4664 = vunpack.c.h.b16 %v4386
        %v4665 = vunpack.c.l.b16 %v4387
        %v4666 = vunpack.c.h.b16 %v4387
        %v4667 = vunpack.c.l.b16 %v4388
        %v4668 = vunpack.c.h.b16 %v4388
        %v4669 = vunpack.c.l.b16 %v4389
        %v4670 = vunpack.c.h.b16 %v4389
        %v4671 = vunpack.c.l.b16 %v4390
        %v4672 = vunpack.c.h.b16 %v4390
        %v4673 = vunpack.c.l.b16 %v4391
        %v4674 = vunpack.c.h.b16 %v4391
        %v4675 = vunpack.c.l.b16 %v4392
        %v4676 = vunpack.c.h.b16 %v4392
        %v4677 = vunpack.c.l.b16 %v4393
        %v4678 = vunpack.c.h.b16 %v4393
        %v4679 = vunpack.c.l.b16 %v4394
        %v4680 = vunpack.c.h.b16 %v4394
        %v4681 = vunpack.c.l.b16 %v4395
        %v4682 = vunpack.c.h.b16 %v4395
        %v4683 = vunpack.c.l.b16 %v4396
        %v4684 = vunpack.c.h.b16 %v4396
        %v4685 = vunpack.c.l.b16 %v4397
        %v4686 = vunpack.c.h.b16 %v4397
        %v4687 = vunpack.c.l.b16 %v4398
        %v4688 = vunpack.c.h.b16 %v4398
        %v4689 = vunpack.c.l.b16 %v4399
        %v4690 = vunpack.c.h.b16 %v4399
        %v4691 = vunpack.c.l.b16 %v4400
        %v4692 = vunpack.c.h.b16 %v4400
        %v4693 = vunpack.c.l.b16 %v4401
        %v4694 = vunpack.c.h.b16 %v4401
        %v4695 = vunpack.c.l.b16 %v4402
        %v4696 = vunpack.c.h.b16 %v4402
        %v4697 = vunpack.c.l.b16 %v4403
        %v4698 = vunpack.c.h.b16 %v4403
        %v4699 = vunpack.c.l.b16 %v4404
        %v4700 = vunpack.c.h.b16 %v4404
        %v4701 = vunpack.c.l.b16 %v4405
        %v4702 = vunpack.c.h.b16 %v4405
        %v4703 = vunpack.c.l.b16 %v4406
        %v4704 = vunpack.c.h.b16 %v4406
        %v4705 = vunpack.c.l.b16 %v4407
        %v4706 = vunpack.c.h.b16 %v4407
        %v4707 = vunpack.c.l.b16 %v4408
        %v4708 = vunpack.c.h.b16 %v4408
        %v4709 = vunpack.c.l.b16 %v4409
        %v4710 = vunpack.c.h.b16 %v4409
        %v4711 = vunpack.c.l.b16 %v4410
        %v4712 = vunpack.c.h.b16 %v4410
        %v4713 = vunpack.c.l.b16 %v4411
        %v4714 = vunpack.c.h.b16 %v4411
        %v4715 = vunpack.c.l.b16 %v4412
        %v4716 = vunpack.c.h.b16 %v4412
        %v4717 = vunpack.c.l.b16 %v4413
        %v4718 = vunpack.c.h.b16 %v4413
        %v4719 = vunpack.c.l.b16 %v4414
        %v4720 = vunpack.c.h.b16 %v4414
        %v4721 = vunpack.c.l.b16 %v4415
        %v4722 = vunpack.c.h.b16 %v4415
        %v4723 = vunpack.c.l.b16 %v4416
        %v4724 = vunpack.c.h.b16 %v4416
        %v4725 = vunpack.c.l.b16 %v4417
        %v4726 = vunpack.c.h.b16 %v4417
        %v4727 = vunpack.c.l.b16 %v4418
        %v4728 = vunpack.c.h.b16 %v4418
        %v4729 = vunpack.c.l.b16 %v4419
        %v4730 = vunpack.c.h.b16 %v4419
        %v4731 = vunpack.c.l.b16 %v4420
        %v4732 = vunpack.c.h.b16 %v4420
        %v4733 = vunpack.c.l.b16 %v4421
        %v4734 = vunpack.c.h.b16 %v4421
        %v4735 = vunpack.c.l.b16 %v4422
        %v4736 = vunpack.c.h.b16 %v4422
        %v4737 = vunpack.c.l.b16 %v4423
        %v4738 = vunpack.c.h.b16 %v4423
        %v4739 = vunpack.c.l.b16 %v4424
        %v4740 = vunpack.c.h.b16 %v4424
        %v4741 = vunpack.c.l.b16 %v4425
        %v4742 = vunpack.c.h.b16 %v4425
        %v4743 = vunpack.c.l.b16 %v4426
        %v4744 = vunpack.c.h.b16 %v4426
        %v4745 = vunpack.c.l.b16 %v4427
        %v4746 = vunpack.c.h.b16 %v4427
        %v4747 = vunpack.c.l.b16 %v4428
        %v4748 = vunpack.c.h.b16 %v4428
        %v4749 = vunpack.c.l.b16 %v4429
        %v4750 = vunpack.c.h.b16 %v4429
        %v4751 = vunpack.c.l.b16 %v4430
        %v4752 = vunpack.c.h.b16 %v4430
        %v4753 = vunpack.c.l.b16 %v4431
        %v4754 = vunpack.c.h.b16 %v4431
        %v4755 = vunpack.c.l.b16 %v4432
        %v4756 = vunpack.c.h.b16 %v4432
        %v4757 = vunpack.c.l.b16 %v4433
        %v4758 = vunpack.c.h.b16 %v4433
        %v4759 = vunpack.c.l.b16 %v4434
        %v4760 = vunpack.c.h.b16 %v4434
        %v4761 = vunpack.c.l.b16 %v4435
        %v4762 = vunpack.c.h.b16 %v4435
        %v4763 = vunpack.c.l.b16 %v4436
        %v4764 = vunpack.c.h.b16 %v4436
        %v4765 = vunpack.c.l.b16 %v4437
        %v4766 = vunpack.c.h.b16 %v4437
        %v4767 = vunpack.c.l.b16 %v4438
        %v4768 = vunpack.c.h.b16 %v4438
        %v4769 = vunpack.c.l.b16 %v4439
        %v4770 = vunpack.c.h.b16 %v4439
        %v4771 = vunpack.c.l.b16 %v4440
        %v4772 = vunpack.c.h.b16 %v4440
        %v4773 = vunpack.c.l.b16 %v4441
        %v4774 = vunpack.c.h.b16 %v4441
        %v4775 = vunpack.c.l.b16 %v4442
        %v4776 = vunpack.c.h.b16 %v4442
        %v4777 = vunpack.c.l.b16 %v4443
        %v4778 = vunpack.c.h.b16 %v4443
        %v4779 = vunpack.c.l.b16 %v4444
        %v4780 = vunpack.c.h.b16 %v4444
        %v4781 = vunpack.c.l.b16 %v4445
        %v4782 = vunpack.c.h.b16 %v4445
        %v4783 = vunpack.c.l.b16 %v4446
        %v4784 = vunpack.c.h.b16 %v4446
        %v4785 = vunpack.c.l.b16 %v4447
        %v4786 = vunpack.c.h.b16 %v4447
        %v4787 = vunpack.c.l.b16 %v4448
        %v4788 = vunpack.c.h.b16 %v4448
        %v4789 = vunpack.c.l.b16 %v4449
        %v4790 = vunpack.c.h.b16 %v4449
        %v4791 = vunpack.c.l.b16 %v4450
        %v4792 = vunpack.c.h.b16 %v4450
        %v4793 = vunpack.c.l.b16 %v4451
        %v4794 = vunpack.c.h.b16 %v4451
        %v4795 = vunpack.c.l.b16 %v4452
        %v4796 = vunpack.c.h.b16 %v4452
        %v4797 = vunpack.c.l.b16 %v4453
        %v4798 = vunpack.c.h.b16 %v4453
        %v4799 = vunpack.c.l.b16 %v4454
        %v4800 = vunpack.c.h.b16 %v4454
        %v4801 = vunpack.c.l.b16 %v4455
        %v4802 = vunpack.c.h.b16 %v4455
        %v4803 = vunpack.c.l.b16 %v4456
        %v4804 = vunpack.c.h.b16 %v4456
        %v4805 = vunpack.c.l.b16 %v4457
        %v4806 = vunpack.c.h.b16 %v4457
        %v4807 = vunpack.c.l.b16 %v4458
        %v4808 = vunpack.c.h.b16 %v4458
        %v4809 = vunpack.c.l.b16 %v4459
        %v4810 = vunpack.c.h.b16 %v4459
        %v4811 = vunpack.c.l.b16 %v4460
        %v4812 = vunpack.c.h.b16 %v4460
        %v4813 = vunpack.c.l.b16 %v4461
        %v4814 = vunpack.c.h.b16 %v4461
        %v4815 = vunpack.c.l.b16 %v4462
        %v4816 = vunpack.c.h.b16 %v4462
        %v4817 = vunpack.c.l.b16 %v4463
        %v4818 = vunpack.c.h.b16 %v4463
        %v4819 = vunpack.c.l.b16 %v4464
        %v4820 = vunpack.c.h.b16 %v4464
        %v4821 = vunpack.c.l.b16 %v4465
        %v4822 = vunpack.c.h.b16 %v4465
        %v4823 = vunpack.c.l.b16 %v4466
        %v4824 = vunpack.c.h.b16 %v4466
        %v4825 = vunpack.c.l.b16 %v4467
        %v4826 = vunpack.c.h.b16 %v4467
        %v4827 = vunpack.c.l.b16 %v4468
        %v4828 = vunpack.c.h.b16 %v4468
        %v4829 = vunpack.c.l.b16 %v4469
        %v4830 = vunpack.c.h.b16 %v4469
        %v4831 = vunpack.c.l.b16 %v4470
        %v4832 = vunpack.c.h.b16 %v4470
        %v4833 = vunpack.c.l.b16 %v4471
        %v4834 = vunpack.c.h.b16 %v4471
        %v4835 = vunpack.c.l.b16 %v4472
        %v4836 = vunpack.c.h.b16 %v4472
        %v4837 = vunpack.c.l.b16 %v4473
        %v4838 = vunpack.c.h.b16 %v4473
        %v4839 = vunpack.c.l.b16 %v4474
        %v4840 = vunpack.c.h.b16 %v4474
        %v4841 = vunpack.c.l.b16 %v4475
        %v4842 = vunpack.c.h.b16 %v4475
        %v4843 = vunpack.c.l.b16 %v4476
        %v4844 = vunpack.c.h.b16 %v4476
        %v4845 = vunpack.c.l.b16 %v4477
        %v4846 = vunpack.c.h.b16 %v4477
        %v4847 = vunpack.c.l.b16 %v4478
        %v4848 = vunpack.c.h.b16 %v4478
        %v4849 = vunpack.c.l.b16 %v4479
        %v4850 = vunpack.c.h.b16 %v4479
        %v4851 = vunpack.c.l.b16 %v4480
        %v4852 = vunpack.c.h.b16 %v4480
        %v4853 = vunpack.c.l.b16 %v4481
        %v4854 = vunpack.c.h.b16 %v4481
        %v4855 = vunpack.c.l.b16 %v4482
        %v4856 = vunpack.c.h.b16 %v4482
        %v4857 = vunpack.c.l.b16 %v4483
        %v4858 = vunpack.c.h.b16 %v4483
        %v4859 = vunpack.c.l.b16 %v4484
        %v4860 = vunpack.c.h.b16 %v4484
        %v4861 = vunpack.c.l.b16 %v4485
        %v4862 = vunpack.c.h.b16 %v4485
        %v4863 = vunpack.c.l.b16 %v4486
        %v4864 = vunpack.c.h.b16 %v4486
        %v4865 = vunpack.c.l.b16 %v4487
        %v4866 = vunpack.c.h.b16 %v4487
        %v4867 = vunpack.c.l.b16 %v4488
        %v4868 = vunpack.c.h.b16 %v4488
        %v4869 = vunpack.c.l.b16 %v4489
        %v4870 = vunpack.c.h.b16 %v4489
        %v4871 = vunpack.c.l.b16 %v4490
        %v4872 = vunpack.c.h.b16 %v4490
        %v4873 = vunpack.c.l.b16 %v4491
        %v4874 = vunpack.c.h.b16 %v4491
        %v4875 = vunpack.c.l.b16 %v4492
        %v4876 = vunpack.c.h.b16 %v4492
        %v4877 = vunpack.c.l.b16 %v4493
        %v4878 = vunpack.c.h.b16 %v4493
        %v4879 = vunpack.c.l.b16 %v4494
        %v4880 = vunpack.c.h.b16 %v4494
        %v4881 = vunpack.c.l.b16 %v4495
        %v4882 = vunpack.c.h.b16 %v4495
        %v4883 = vunpack.c.l.b16 %v4496
        %v4884 = vunpack.c.h.b16 %v4496
        %v4885 = vunpack.c.l.b16 %v4497
        %v4886 = vunpack.c.h.b16 %v4497
        %v4887 = vunpack.c.l.b16 %v4498
        %v4888 = vunpack.c.h.b16 %v4498
        %v4889 = vunpack.c.l.b16 %v4499
        %v4890 = vunpack.c.h.b16 %v4499
        %v4891 = vunpack.c.l.b16 %v4500
        %v4892 = vunpack.c.h.b16 %v4500
        %v4893 = vunpack.c.l.b16 %v4501
        %v4894 = vunpack.c.h.b16 %v4501
        %v4895 = vunpack.c.l.b16 %v4502
        %v4896 = vunpack.c.h.b16 %v4502
        %v4897 = vunpack.c.l.b16 %v4503
        %v4898 = vunpack.c.h.b16 %v4503
        %v4899 = vunpack.c.l.b16 %v4504
        %v4900 = vunpack.c.h.b16 %v4504
        %v4901 = vunpack.c.l.b16 %v4505
        %v4902 = vunpack.c.h.b16 %v4505
        %v4903 = vunpack.c.l.b16 %v4506
        %v4904 = vunpack.c.h.b16 %v4506
        %v4905 = vunpack.c.l.b16 %v4507
        %v4906 = vunpack.c.h.b16 %v4507
        %v4907 = vunpack.c.l.b16 %v4508
        %v4908 = vunpack.c.h.b16 %v4508
        %v4909 = vpack.c.b16 %v4657, %v4653
        %v4910 = vpack.c.b16 %v4658, %v4654
        %v4911 = vpack.c.b16 %v4659, %v4655
        %v4912 = vpack.c.b16 %v4660, %v4656
        %v4913 = vpack.c.b16 %v4665, %v4661
        %v4914 = vpack.c.b16 %v4666, %v4662
        %v4915 = vpack.c.b16 %v4667, %v4663
        %v4916 = vpack.c.b16 %v4668, %v4664
        %v4917 = vpack.c.b16 %v4673, %v4669
        %v4918 = vpack.c.b16 %v4674, %v4670
        %v4919 = vpack.c.b16 %v4675, %v4671
        %v4920 = vpack.c.b16 %v4676, %v4672
        %v4921 = vpack.c.b16 %v4681, %v4677
        %v4922 = vpack.c.b16 %v4682, %v4678
        %v4923 = vpack.c.b16 %v4683, %v4679
        %v4924 = vpack.c.b16 %v4684, %v4680
        %v4925 = vpack.c.b16 %v4689, %v4685
        %v4926 = vpack.c.b16 %v4690, %v4686
        %v4927 = vpack.c.b16 %v4691, %v4687
        %v4928 = vpack.c.b16 %v4692, %v4688
        %v4929 = vpack.c.b16 %v4697, %v4693
        %v4930 = vpack.c.b16 %v4698, %v4694
        %v4931 = vpack.c.b16 %v4699, %v4695
        %v4932 = vpack.c.b16 %v4700, %v4696
        %v4933 = vpack.c.b16 %v4705, %v4701
        %v4934 = vpack.c.b16 %v4706, %v4702
        %v4935 = vpack.c.b16 %v4707, %v4703
        %v4936 = vpack.c.b16 %v4708, %v4704
        %v4937 = vpack.c.b16 %v4713, %v4709
        %v4938 = vpack.c.b16 %v4714, %v4710
        %v4939 = vpack.c.b16 %v4715, %v4711
        %v4940 = vpack.c.b16 %v4716, %v4712
        %v4941 = vpack.c.b16 %v4721, %v4717
        %v4942 = vpack.c.b16 %v4722, %v4718
        %v4943 = vpack.c.b16 %v4723, %v4719
        %v4944 = vpack.c.b16 %v4724, %v4720
        %v4945 = vpack.c.b16 %v4729, %v4725
        %v4946 = vpack.c.b16 %v4730, %v4726
        %v4947 = vpack.c.b16 %v4731, %v4727
        %v4948 = vpack.c.b16 %v4732, %v4728
        %v4949 = vpack.c.b16 %v4737, %v4733
        %v4950 = vpack.c.b16 %v4738, %v4734
        %v4951 = vpack.c.b16 %v4739, %v4735
        %v4952 = vpack.c.b16 %v4740, %v4736
        %v4953 = vpack.c.b16 %v4745, %v4741
        %v4954 = vpack.c.b16 %v4746, %v4742
        %v4955 = vpack.c.b16 %v4747, %v4743
        %v4956 = vpack.c.b16 %v4748, %v4744
        %v4957 = vpack.c.b16 %v4753, %v4749
        %v4958 = vpack.c.b16 %v4754, %v4750
        %v4959 = vpack.c.b16 %v4755, %v4751
        %v4960 = vpack.c.b16 %v4756, %v4752
        %v4961 = vpack.c.b16 %v4761, %v4757
        %v4962 = vpack.c.b16 %v4762, %v4758
        %v4963 = vpack.c.b16 %v4763, %v4759
        %v4964 = vpack.c.b16 %v4764, %v4760
        %v4965 = vpack.c.b16 %v4769, %v4765
        %v4966 = vpack.c.b16 %v4770, %v4766
        %v4967 = vpack.c.b16 %v4771, %v4767
        %v4968 = vpack.c.b16 %v4772, %v4768
        %v4969 = vpack.c.b16 %v4777, %v4773
        %v4970 = vpack.c.b16 %v4778, %v4774
        %v4971 = vpack.c.b16 %v4779, %v4775
        %v4972 = vpack.c.b16 %v4780, %v4776
        %v4973 = vpack.c.b16 %v4785, %v4781
        %v4974 = vpack.c.b16 %v4786, %v4782
        %v4975 = vpack.c.b16 %v4787, %v4783
        %v4976 = vpack.c.b16 %v4788, %v4784
        %v4977 = vpack.c.b16 %v4793, %v4789
        %v4978 = vpack.c.b16 %v4794, %v4790
        %v4979 = vpack.c.b16 %v4795, %v4791
        %v4980 = vpack.c.b16 %v4796, %v4792
        %v4981 = vpack.c.b16 %v4801, %v4797
        %v4982 = vpack.c.b16 %v4802, %v4798
        %v4983 = vpack.c.b16 %v4803, %v4799
        %v4984 = vpack.c.b16 %v4804, %v4800
        %v4985 = vpack.c.b16 %v4809, %v4805
        %v4986 = vpack.c.b16 %v4810, %v4806
        %v4987 = vpack.c.b16 %v4811, %v4807
        %v4988 = vpack.c.b16 %v4812, %v4808
        %v4989 = vpack.c.b16 %v4817, %v4813
        %v4990 = vpack.c.b16 %v4818, %v4814
        %v4991 = vpack.c.b16 %v4819, %v4815
        %v4992 = vpack.c.b16 %v4820, %v4816
        %v4993 = vpack.c.b16 %v4825, %v4821
        %v4994 = vpack.c.b16 %v4826, %v4822
        %v4995 = vpack.c.b16 %v4827, %v4823
        %v4996 = vpack.c.b16 %v4828, %v4824
        %v4997 = vpack.c.b16 %v4833, %v4829
        %v4998 = vpack.c.b16 %v4834, %v4830
        %v4999 = vpack.c.b16 %v4835, %v4831
        %v5000 = vpack.c.b16 %v4836, %v4832
        %v5001 = vpack.c.b16 %v4841, %v4837
        %v5002 = vpack.c.b16 %v4842, %v4838
        %v5003 = vpack.c.b16 %v4843, %v4839
        %v5004 = vpack.c.b16 %v4844, %v4840
        %v5005 = vpack.c.b16 %v4849, %v4845
        %v5006 = vpack.c.b16 %v4850, %v4846
        %v5007 = vpack.c.b16 %v4851, %v4847
        %v5008 = vpack.c.b16 %v4852, %v4848
        %v5009 = vpack.c.b16 %v4857, %v4853
        %v5010 = vpack.c.b16 %v4858, %v4854
        %v5011 = vpack.c.b16 %v4859, %v4855
        %v5012 = vpack.c.b16 %v4860, %v4856
        %v5013 = vpack.c.b16 %v4865, %v4861
        %v5014 = vpack.c.b16 %v4866, %v4862
        %v5015 = vpack.c.b16 %v4867, %v4863
        %v5016 = vpack.c.b16 %v4868, %v4864
        %v5017 = vpack.c.b16 %v4873, %v4869
        %v5018 = vpack.c.b16 %v4874, %v4870
        %v5019 = vpack.c.b16 %v4875, %v4871
        %v5020 = vpack.c.b16 %v4876, %v4872
        %v5021 = vpack.c.b16 %v4881, %v4877
        %v5022 = vpack.c.b16 %v4882, %v4878
        %v5023 = vpack.c.b16 %v4883, %v4879
        %v5024 = vpack.c.b16 %v4884, %v4880
        %v5025 = vpack.c.b16 %v4889, %v4885
        %v5026 = vpack.c.b16 %v4890, %v4886
        %v5027 = vpack.c.b16 %v4891, %v4887
        %v5028 = vpack.c.b16 %v4892, %v4888
        %v5029 = vpack.c.b16 %v4897, %v4893
        %v5030 = vpack.c.b16 %v4898, %v4894
        %v5031 = vpack.c.b16 %v4899, %v4895
        %v5032 = vpack.c.b16 %v4900, %v4896
        %v5033 = vpack.c.b16 %v4905, %v4901
        %v5034 = vpack.c.b16 %v4906, %v4902
        %v5035 = vpack.c.b16 %v4907, %v4903
        %v5036 = vpack.c.b16 %v4908, %v4904
        %5165 = vmatprep.subr.bf16.mxu0 %v4938
        %5166 = vmatpush1.bf16.msra.mxu0 %v4937
        %5167 = vmatprep.subr.bf16.mxu0 %v4934
        %5168 = vmatpush1.bf16.msra.mxu0 %v4933
        %5169 = vmatprep.subr.bf16.mxu0 %v4930
        %5170 = vmatpush1.bf16.msra.mxu0 %v4929
        %5171 = vmatprep.subr.bf16.mxu0 %v4926
        %5172 = vmatpush1.bf16.msra.mxu0 %v4925
        %5173 = vmatprep.subr.bf16.mxu0 %v4922
        %5174 = vmatpush1.bf16.msra.mxu0 %v4921
        %5175 = vmatprep.subr.bf16.mxu0 %v4918
        %5176 = vmatpush1.bf16.msra.mxu0 %v4917
        %5177 = vmatprep.subr.bf16.mxu0 %v4914
        %5178 = vmatpush1.bf16.msra.mxu0 %v4913
        %5179 = vmatprep.subr.bf16.mxu0 %v4910
        %5180 = vmatpush1.bf16.msra.mxu0 %v4909
        %5181 = vmatprep.subr.bf16.mxu0 %v4970
        %5182 = vmatpush2.bf16.msra.mxu0 %v4969
        %5183 = vmatprep.subr.bf16.mxu0 %v4966
        %5184 = vmatpush2.bf16.msra.mxu0 %v4965
        %5185 = vmatprep.subr.bf16.mxu0 %v4962
        %5186 = vmatpush2.bf16.msra.mxu0 %v4961
        %5187 = vmatprep.subr.bf16.mxu0 %v4958
        %5188 = vmatpush2.bf16.msra.mxu0 %v4957
        %5189 = vmatprep.subr.bf16.mxu0 %v4954
        %5190 = vmatpush2.bf16.msra.mxu0 %v4953
        %5191 = vmatprep.subr.bf16.mxu0 %v4950
        %5192 = vmatpush2.bf16.msra.mxu0 %v4949
        %5193 = vmatprep.subr.bf16.mxu0 %v4946
        %5194 = vmatpush2.bf16.msra.mxu0 %v4945
        %5195 = vmatprep.subr.bf16.mxu0 %v4942
        %5196 = vmatpush2.bf16.msra.mxu0 %v4941
        %5197 = vmatprep.mubr.bf16.mxu0 %v4374
        %5198 = vmatmul.mubr.bf16.gmra.mxu0 %v4373
        %v5199 = vpop.f32.mrf.mxu0
        %v5200 = vadd.f32 %v4512, %v5199
        %v5201 = vpop.f32.mrf.mxu0
        %v5202 = vadd.f32 %v4516, %v5201
        %v5203 = vpop.f32.mrf.mxu0
        %v5204 = vadd.f32 %v4512, %v5203
        %v5205 = vpop.f32.mrf.mxu0
        %v5206 = vadd.f32 %v4516, %v5205
        %5207 = vmatprep.mubr.bf16.mxu0 %v4378
        %5208 = vmatmul.mubr.bf16.gmra.mxu0 %v4377
        %v5209 = vpop.f32.mrf.mxu0
        %v5210 = vadd.f32 %v4512, %v5209
        %v5211 = vpop.f32.mrf.mxu0
        %v5212 = vadd.f32 %v4516, %v5211
        %v5213 = vpop.f32.mrf.mxu0
        %v5214 = vadd.f32 %v4512, %v5213
        %v5215 = vpop.f32.mrf.mxu0
        %v5216 = vadd.f32 %v4516, %v5215
        %5217 = vdwg.mxu0
        %5218 = vmatprep.subr.bf16.mxu0 %v5002
        %5219 = vmatpush1.bf16.msra.mxu0 %v5001
        %5220 = vmatprep.subr.bf16.mxu0 %v4998
        %5221 = vmatpush1.bf16.msra.mxu0 %v4997
        %5222 = vmatprep.subr.bf16.mxu0 %v4994
        %5223 = vmatpush1.bf16.msra.mxu0 %v4993
        %5224 = vmatprep.subr.bf16.mxu0 %v4990
        %5225 = vmatpush1.bf16.msra.mxu0 %v4989
        %5226 = vmatprep.subr.bf16.mxu0 %v4986
        %5227 = vmatpush1.bf16.msra.mxu0 %v4985
        %5228 = vmatprep.subr.bf16.mxu0 %v4982
        %5229 = vmatpush1.bf16.msra.mxu0 %v4981
        %5230 = vmatprep.subr.bf16.mxu0 %v4978
        %5231 = vmatpush1.bf16.msra.mxu0 %v4977
        %5232 = vmatprep.subr.bf16.mxu0 %v4974
        %5233 = vmatpush1.bf16.msra.mxu0 %v4973
        %5234 = vmatprep.subr.bf16.mxu0 %v5034
        %5235 = vmatpush2.bf16.msra.mxu0 %v5033
        %5236 = vmatprep.subr.bf16.mxu0 %v5030
        %5237 = vmatpush2.bf16.msra.mxu0 %v5029
        %5238 = vmatprep.subr.bf16.mxu0 %v5026
        %5239 = vmatpush2.bf16.msra.mxu0 %v5025
        %5240 = vmatprep.subr.bf16.mxu0 %v5022
        %5241 = vmatpush2.bf16.msra.mxu0 %v5021
        %5242 = vmatprep.subr.bf16.mxu0 %v5018
        %5243 = vmatpush2.bf16.msra.mxu0 %v5017
        %5244 = vmatprep.subr.bf16.mxu0 %v5014
        %5245 = vmatpush2.bf16.msra.mxu0 %v5013
        %5246 = vmatprep.subr.bf16.mxu0 %v5010
        %5247 = vmatpush2.bf16.msra.mxu0 %v5009
        %5248 = vmatprep.subr.bf16.mxu0 %v5006
        %5249 = vmatpush2.bf16.msra.mxu0 %v5005
        %5250 = vmatprep.mubr.bf16.mxu0 %v4376
        %5251 = vmatmul.mubr.bf16.gmra.mxu0 %v4375
        %v5252 = vpop.f32.mrf.mxu0
        %v5253 = vadd.f32 %v5200, %v5252
        %v5254 = vpop.f32.mrf.mxu0
        %v5255 = vadd.f32 %v5202, %v5254
        %v5256 = vpop.f32.mrf.mxu0
        %v5257 = vadd.f32 %v5204, %v5256
        %v5258 = vpop.f32.mrf.mxu0
        %v5259 = vadd.f32 %v5206, %v5258
        %5260 = vmatprep.mubr.bf16.mxu0 %v4380
        %5261 = vmatmul.mubr.bf16.gmra.mxu0 %v4379
        %v5262 = vpop.f32.mrf.mxu0
        %v5263 = vadd.f32 %v5210, %v5262
        %v5264 = vpop.f32.mrf.mxu0
        %v5265 = vadd.f32 %v5212, %v5264
        %v5266 = vpop.f32.mrf.mxu0
        %v5267 = vadd.f32 %v5214, %v5266
        %v5268 = vpop.f32.mrf.mxu0
        %v5269 = vadd.f32 %v5216, %v5268
        %5270 = vdwg.mxu0
        %5271 = vmatprep.subr.bf16.mxu0 %v4940
        %5272 = vmatpush1.bf16.msra.mxu0 %v4939
        %5273 = vmatprep.subr.bf16.mxu0 %v4936
        %5274 = vmatpush1.bf16.msra.mxu0 %v4935
        %5275 = vmatprep.subr.bf16.mxu0 %v4932
        %5276 = vmatpush1.bf16.msra.mxu0 %v4931
        %5277 = vmatprep.subr.bf16.mxu0 %v4928
        %5278 = vmatpush1.bf16.msra.mxu0 %v4927
        %5279 = vmatprep.subr.bf16.mxu0 %v4924
        %5280 = vmatpush1.bf16.msra.mxu0 %v4923
        %5281 = vmatprep.subr.bf16.mxu0 %v4920
        %5282 = vmatpush1.bf16.msra.mxu0 %v4919
        %5283 = vmatprep.subr.bf16.mxu0 %v4916
        %5284 = vmatpush1.bf16.msra.mxu0 %v4915
        %5285 = vmatprep.subr.bf16.mxu0 %v4912
        %5286 = vmatpush1.bf16.msra.mxu0 %v4911
        %5287 = vmatprep.subr.bf16.mxu0 %v4972
        %5288 = vmatpush2.bf16.msra.mxu0 %v4971
        %5289 = vmatprep.subr.bf16.mxu0 %v4968
        %5290 = vmatpush2.bf16.msra.mxu0 %v4967
        %5291 = vmatprep.subr.bf16.mxu0 %v4964
        %5292 = vmatpush2.bf16.msra.mxu0 %v4963
        %5293 = vmatprep.subr.bf16.mxu0 %v4960
        %5294 = vmatpush2.bf16.msra.mxu0 %v4959
        %5295 = vmatprep.subr.bf16.mxu0 %v4956
        %5296 = vmatpush2.bf16.msra.mxu0 %v4955
        %5297 = vmatprep.subr.bf16.mxu0 %v4952
        %5298 = vmatpush2.bf16.msra.mxu0 %v4951
        %5299 = vmatprep.subr.bf16.mxu0 %v4948
        %5300 = vmatpush2.bf16.msra.mxu0 %v4947
        %5301 = vmatprep.subr.bf16.mxu0 %v4944
        %5302 = vmatpush2.bf16.msra.mxu0 %v4943
        %5303 = vmatprep.mubr.bf16.mxu0 %v4374
        %5304 = vmatmul.mubr.bf16.gmra.mxu0 %v4373
        %v5305 = vpop.f32.mrf.mxu0
        %v5306 = vadd.f32 %v4520, %v5305
        %v5307 = vpop.f32.mrf.mxu0
        %v5308 = vadd.f32 %v4524, %v5307
        %v5309 = vpop.f32.mrf.mxu0
        %v5310 = vadd.f32 %v4520, %v5309
        %v5311 = vpop.f32.mrf.mxu0
        %v5312 = vadd.f32 %v4524, %v5311
        %5313 = vmatprep.mubr.bf16.mxu0 %v4378
        %5314 = vmatmul.mubr.bf16.gmra.mxu0 %v4377
        %v5315 = vpop.f32.mrf.mxu0
        %v5316 = vadd.f32 %v4520, %v5315
        %v5317 = vpop.f32.mrf.mxu0
        %v5318 = vadd.f32 %v4524, %v5317
        %v5319 = vpop.f32.mrf.mxu0
        %v5320 = vadd.f32 %v4520, %v5319
        %v5321 = vpop.f32.mrf.mxu0
        %v5322 = vadd.f32 %v4524, %v5321
        %5323 = vdwg.mxu0
        %5324 = vmatprep.subr.bf16.mxu0 %v5004
        %5325 = vmatpush1.bf16.msra.mxu0 %v5003
        %5326 = vmatprep.subr.bf16.mxu0 %v5000
        %5327 = vmatpush1.bf16.msra.mxu0 %v4999
        %5328 = vmatprep.subr.bf16.mxu0 %v4996
        %5329 = vmatpush1.bf16.msra.mxu0 %v4995
        %5330 = vmatprep.subr.bf16.mxu0 %v4992
        %5331 = vmatpush1.bf16.msra.mxu0 %v4991
        %5332 = vmatprep.subr.bf16.mxu0 %v4988
        %5333 = vmatpush1.bf16.msra.mxu0 %v4987
        %5334 = vmatprep.subr.bf16.mxu0 %v4984
        %5335 = vmatpush1.bf16.msra.mxu0 %v4983
        %5336 = vmatprep.subr.bf16.mxu0 %v4980
        %5337 = vmatpush1.bf16.msra.mxu0 %v4979
        %5338 = vmatprep.subr.bf16.mxu0 %v4976
        %5339 = vmatpush1.bf16.msra.mxu0 %v4975
        %5340 = vmatprep.subr.bf16.mxu0 %v5036
        %5341 = vmatpush2.bf16.msra.mxu0 %v5035
        %5342 = vmatprep.subr.bf16.mxu0 %v5032
        %5343 = vmatpush2.bf16.msra.mxu0 %v5031
        %5344 = vmatprep.subr.bf16.mxu0 %v5028
        %5345 = vmatpush2.bf16.msra.mxu0 %v5027
        %5346 = vmatprep.subr.bf16.mxu0 %v5024
        %5347 = vmatpush2.bf16.msra.mxu0 %v5023
        %5348 = vmatprep.subr.bf16.mxu0 %v5020
        %5349 = vmatpush2.bf16.msra.mxu0 %v5019
        %5350 = vmatprep.subr.bf16.mxu0 %v5016
        %5351 = vmatpush2.bf16.msra.mxu0 %v5015
        %5352 = vmatprep.subr.bf16.mxu0 %v5012
        %5353 = vmatpush2.bf16.msra.mxu0 %v5011
        %5354 = vmatprep.subr.bf16.mxu0 %v5008
        %5355 = vmatpush2.bf16.msra.mxu0 %v5007
        %5356 = vmatprep.mubr.bf16.mxu0 %v4376
        %5357 = vmatmul.mubr.bf16.gmra.mxu0 %v4375
        %v5358 = vpop.f32.mrf.mxu0
        %v5359 = vadd.f32 %v5306, %v5358
        %v5360 = vpop.f32.mrf.mxu0
        %v5361 = vadd.f32 %v5308, %v5360
        %v5362 = vpop.f32.mrf.mxu0
        %v5363 = vadd.f32 %v5310, %v5362
        %v5364 = vpop.f32.mrf.mxu0
        %v5365 = vadd.f32 %v5312, %v5364
        %5366 = vmatprep.mubr.bf16.mxu0 %v4380
        %5367 = vmatmul.mubr.bf16.gmra.mxu0 %v4379
        %v5368 = vpop.f32.mrf.mxu0
        %v5369 = vadd.f32 %v5316, %v5368
        %v5370 = vpop.f32.mrf.mxu0
        %v5371 = vadd.f32 %v5318, %v5370
        %v5372 = vpop.f32.mrf.mxu0
        %v5373 = vadd.f32 %v5320, %v5372
        %v5374 = vpop.f32.mrf.mxu0
        %v5375 = vadd.f32 %v5322, %v5374
        %5376 = vdwg.mxu0
        %v5377 = vadd.f32 %v5253, %v412
        %v5378 = vadd.f32 %v5255, %v413
        %v5379 = vadd.f32 %v5359, %v414
        %v5380 = vadd.f32 %v5361, %v415
        %v5381 = vadd.f32 %v5257, %v416
        %v5382 = vadd.f32 %v5259, %v417
        %v5383 = vadd.f32 %v5363, %v418
        %v5384 = vadd.f32 %v5365, %v419
        %v5385 = vadd.f32 %v5263, %v420
        %v5386 = vadd.f32 %v5265, %v421
        %v5387 = vadd.f32 %v5369, %v422
        %v5388 = vadd.f32 %v5371, %v423
        %v5389 = vadd.f32 %v5267, %v424
        %v5390 = vadd.f32 %v5269, %v425
        %v5391 = vadd.f32 %v5373, %v426
        %v5392 = vadd.f32 %v5375, %v427
        %v5393 = vadd.f32 %v5377, %v5378
        %v5394 = vadd.f32 %v5393, %v5379
        %v5395 = vadd.f32 %v5394, %v5380
        %5396 = vadd.xlane.f32.xlu0 %v5395
        %v5397 = vpop.xlane.xlu0 %5396
        %v5398 = vadd.f32 %v5381, %v5382
        %v5399 = vadd.f32 %v5398, %v5383
        %v5400 = vadd.f32 %v5399, %v5384
        %5401 = vadd.xlane.f32.xlu0 %v5400
        %v5402 = vpop.xlane.xlu0 %5401
        %v5403 = vadd.f32 %v5385, %v5386
        %v5404 = vadd.f32 %v5403, %v5387
        %v5405 = vadd.f32 %v5404, %v5388
        %5406 = vadd.xlane.f32.xlu0 %v5405
        %v5407 = vpop.xlane.xlu0 %5406
        %v5408 = vadd.f32 %v5389, %v5390
        %v5409 = vadd.f32 %v5408, %v5391
        %v5410 = vadd.f32 %v5409, %v5392
        %5411 = vadd.xlane.f32.xlu0 %v5410
        %v5412 = vpop.xlane.xlu0 %5411
        %v5413 = vrcp.pop 512.0
        %v5414 = vmul.f32 %v5397, %v5413
        %v5415 = vmul.f32 %v5402, %v5413
        %v5416 = vmul.f32 %v5407, %v5413
        %v5417 = vmul.f32 %v5412, %v5413
        %v5418 = vmul.f32 %v5377, %v5377
        %v5419 = vmul.f32 %v5378, %v5378
        %v5420 = vmul.f32 %v5379, %v5379
        %v5421 = vmul.f32 %v5380, %v5380
        %v5422 = vmul.f32 %v5381, %v5381
        %v5423 = vmul.f32 %v5382, %v5382
        %v5424 = vmul.f32 %v5383, %v5383
        %v5425 = vmul.f32 %v5384, %v5384
        %v5426 = vmul.f32 %v5385, %v5385
        %v5427 = vmul.f32 %v5386, %v5386
        %v5428 = vmul.f32 %v5387, %v5387
        %v5429 = vmul.f32 %v5388, %v5388
        %v5430 = vmul.f32 %v5389, %v5389
        %v5431 = vmul.f32 %v5390, %v5390
        %v5432 = vmul.f32 %v5391, %v5391
        %v5433 = vmul.f32 %v5392, %v5392
        %v5434 = vadd.f32 %v5418, %v5419
        %v5435 = vadd.f32 %v5434, %v5420
        %v5436 = vadd.f32 %v5435, %v5421
        %5437 = vadd.xlane.f32.xlu0 %v5436
        %v5438 = vpop.xlane.xlu0 %5437
        %v5439 = vadd.f32 %v5422, %v5423
        %v5440 = vadd.f32 %v5439, %v5424
        %v5441 = vadd.f32 %v5440, %v5425
        %5442 = vadd.xlane.f32.xlu0 %v5441
        %v5443 = vpop.xlane.xlu0 %5442
        %v5444 = vadd.f32 %v5426, %v5427
        %v5445 = vadd.f32 %v5444, %v5428
        %v5446 = vadd.f32 %v5445, %v5429
        %5447 = vadd.xlane.f32.xlu0 %v5446
        %v5448 = vpop.xlane.xlu0 %5447
        %v5449 = vadd.f32 %v5430, %v5431
        %v5450 = vadd.f32 %v5449, %v5432
        %v5451 = vadd.f32 %v5450, %v5433
        %5452 = vadd.xlane.f32.xlu0 %v5451
        %v5453 = vpop.xlane.xlu0 %5452
        %v5454 = vmul.f32 %v5438, %v5413
        %v5455 = vmul.f32 %v5443, %v5413
        %v5456 = vmul.f32 %v5448, %v5413
        %v5457 = vmul.f32 %v5453, %v5413
        %v5458 = vmul.f32 %v5414, %v5414
        %v5459 = vmul.f32 %v5415, %v5415
        %v5460 = vmul.f32 %v5416, %v5416
        %v5461 = vmul.f32 %v5417, %v5417
        %v5462 = vsub.f32 %v5454, %v5458
        %v5463 = vsub.f32 %v5455, %v5459
        %v5464 = vsub.f32 %v5456, %v5460
        %v5465 = vsub.f32 %v5457, %v5461
        %v5466 = vsub.f32 %v5377, %v5414
        %v5467 = vsub.f32 %v5378, %v5414
        %v5468 = vsub.f32 %v5379, %v5414
        %v5469 = vsub.f32 %v5380, %v5414
        %v5470 = vsub.f32 %v5381, %v5415
        %v5471 = vsub.f32 %v5382, %v5415
        %v5472 = vsub.f32 %v5383, %v5415
        %v5473 = vsub.f32 %v5384, %v5415
        %v5474 = vsub.f32 %v5385, %v5416
        %v5475 = vsub.f32 %v5386, %v5416
        %v5476 = vsub.f32 %v5387, %v5416
        %v5477 = vsub.f32 %v5388, %v5416
        %v5478 = vsub.f32 %v5389, %v5417
        %v5479 = vsub.f32 %v5390, %v5417
        %v5480 = vsub.f32 %v5391, %v5417
        %v5481 = vsub.f32 %v5392, %v5417
        %v5482 = vadd.f32 %v5462, 1e-06
        %v5483 = vadd.f32 %v5463, 1e-06
        %v5484 = vadd.f32 %v5464, 1e-06
        %v5485 = vadd.f32 %v5465, 1e-06
        %v5486 = vrsqrt.pop %v5482
        %v5487 = vrsqrt.pop %v5483
        %v5488 = vrsqrt.pop %v5484
        %v5489 = vrsqrt.pop %v5485
        %v5490 = vmul.f32 %v5466, %v5486
        %v5491 = vmul.f32 %v5467, %v5486
        %v5492 = vmul.f32 %v5468, %v5486
        %v5493 = vmul.f32 %v5469, %v5486
        %v5494 = vmul.f32 %v5470, %v5487
        %v5495 = vmul.f32 %v5471, %v5487
        %v5496 = vmul.f32 %v5472, %v5487
        %v5497 = vmul.f32 %v5473, %v5487
        %v5498 = vmul.f32 %v5474, %v5488
        %v5499 = vmul.f32 %v5475, %v5488
        %v5500 = vmul.f32 %v5476, %v5488
        %v5501 = vmul.f32 %v5477, %v5488
        %v5502 = vmul.f32 %v5478, %v5489
        %v5503 = vmul.f32 %v5479, %v5489
        %v5504 = vmul.f32 %v5480, %v5489
        %v5505 = vmul.f32 %v5481, %v5489
        %v5506 = vlaneseq
        %v5507 = vshrl.u32 %v5506, 7
        %v5508 = vsub.s32 3, %v5507
        %v5509 = vrot.slane %v428, %v5508
        %v5510 = vlaneseq
        %v5511 = vshrl.u32 %v5510, 7
        %v5512 = vsub.s32 3, %v5511
        %v5513 = vrot.slane %v429, %v5512
        %v5514 = vlaneseq
        %v5515 = vshrl.u32 %v5514, 7
        %v5516 = vsub.s32 3, %v5515
        %v5517 = vrot.slane %v430, %v5516
        %v5518 = vlaneseq
        %v5519 = vshrl.u32 %v5518, 7
        %v5520 = vsub.s32 3, %v5519
        %v5521 = vrot.slane %v431, %v5520
        %v5522 = vmul.f32 %v5490, %v5509
        %v5523 = vmul.f32 %v5491, %v5513
        %v5524 = vmul.f32 %v5492, %v5517
        %v5525 = vmul.f32 %v5493, %v5521
        %v5526 = vmul.f32 %v5494, %v5509
        %v5527 = vmul.f32 %v5495, %v5513
        %v5528 = vmul.f32 %v5496, %v5517
        %v5529 = vmul.f32 %v5497, %v5521
        %v5530 = vmul.f32 %v5498, %v5509
        %v5531 = vmul.f32 %v5499, %v5513
        %v5532 = vmul.f32 %v5500, %v5517
        %v5533 = vmul.f32 %v5501, %v5521
        %v5534 = vmul.f32 %v5502, %v5509
        %v5535 = vmul.f32 %v5503, %v5513
        %v5536 = vmul.f32 %v5504, %v5517
        %v5537 = vmul.f32 %v5505, %v5521
        %v5538 = vlaneseq
        %v5539 = vshrl.u32 %v5538, 7
        %v5540 = vsub.s32 3, %v5539
        %v5541 = vrot.slane %v432, %v5540
        %v5542 = vlaneseq
        %v5543 = vshrl.u32 %v5542, 7
        %v5544 = vsub.s32 3, %v5543
        %v5545 = vrot.slane %v433, %v5544
        %v5546 = vlaneseq
        %v5547 = vshrl.u32 %v5546, 7
        %v5548 = vsub.s32 3, %v5547
        %v5549 = vrot.slane %v434, %v5548
        %v5550 = vlaneseq
        %v5551 = vshrl.u32 %v5550, 7
        %v5552 = vsub.s32 3, %v5551
        %v5553 = vrot.slane %v435, %v5552
        %v5554 = vadd.f32 %v5522, %v5541
        %v5555 = vadd.f32 %v5523, %v5545
        %v5556 = vadd.f32 %v5524, %v5549
        %v5557 = vadd.f32 %v5525, %v5553
        %v5558 = vadd.f32 %v5526, %v5541
        %v5559 = vadd.f32 %v5527, %v5545
        %v5560 = vadd.f32 %v5528, %v5549
        %v5561 = vadd.f32 %v5529, %v5553
        %v5562 = vadd.f32 %v5530, %v5541
        %v5563 = vadd.f32 %v5531, %v5545
        %v5564 = vadd.f32 %v5532, %v5549
        %v5565 = vadd.f32 %v5533, %v5553
        %v5566 = vadd.f32 %v5534, %v5541
        %v5567 = vadd.f32 %v5535, %v5545
        %v5568 = vadd.f32 %v5536, %v5549
        %v5569 = vadd.f32 %v5537, %v5553
        %v5570 = vpack.c.bf16 %v5558, %v5554
        %v5571 = vpack.c.bf16 %v5559, %v5555
        %v5572 = vpack.c.bf16 %v5560, %v5556
        %v5573 = vpack.c.bf16 %v5561, %v5557
        %v5574 = vpack.c.bf16 %v5566, %v5562
        %v5575 = vpack.c.bf16 %v5567, %v5563
        %v5576 = vpack.c.bf16 %v5568, %v5564
        %v5577 = vpack.c.bf16 %v5569, %v5565
        %v5578 = vld [vmem:[#allocation10] sm:$0xff]
        %v5579 = vld [vmem:[#allocation10 + $0x8] sm:$0xff]
        %v5580 = vld [vmem:[#allocation10 + $0x10] sm:$0xff]
        %v5581 = vld [vmem:[#allocation10 + $0x18] sm:$0xff]
        %v5582 = vld [vmem:[#allocation10 + $0x20] sm:$0xff]
        %v5583 = vld [vmem:[#allocation10 + $0x28] sm:$0xff]
        %v5584 = vld [vmem:[#allocation10 + $0x30] sm:$0xff]
        %v5585 = vld [vmem:[#allocation10 + $0x38] sm:$0xff]
        %v5586 = vld [vmem:[#allocation10 + $0x40] sm:$0xff]
        %v5587 = vld [vmem:[#allocation10 + $0x48] sm:$0xff]
        %v5588 = vld [vmem:[#allocation10 + $0x50] sm:$0xff]
        %v5589 = vld [vmem:[#allocation10 + $0x58] sm:$0xff]
        %v5590 = vld [vmem:[#allocation10 + $0x60] sm:$0xff]
        %v5591 = vld [vmem:[#allocation10 + $0x68] sm:$0xff]
        %v5592 = vld [vmem:[#allocation10 + $0x70] sm:$0xff]
        %v5593 = vld [vmem:[#allocation10 + $0x78] sm:$0xff]
        %v5594 = vld [vmem:[#allocation10 + $0x80] sm:$0xff]
        %v5595 = vld [vmem:[#allocation10 + $0x88] sm:$0xff]
        %v5596 = vld [vmem:[#allocation10 + $0x90] sm:$0xff]
        %v5597 = vld [vmem:[#allocation10 + $0x98] sm:$0xff]
        %v5598 = vld [vmem:[#allocation10 + $0xa0] sm:$0xff]
        %v5599 = vld [vmem:[#allocation10 + $0xa8] sm:$0xff]
        %v5600 = vld [vmem:[#allocation10 + $0xb0] sm:$0xff]
        %v5601 = vld [vmem:[#allocation10 + $0xb8] sm:$0xff]
        %v5602 = vld [vmem:[#allocation10 + $0xc0] sm:$0xff]
        %v5603 = vld [vmem:[#allocation10 + $0xc8] sm:$0xff]
        %v5604 = vld [vmem:[#allocation10 + $0xd0] sm:$0xff]
        %v5605 = vld [vmem:[#allocation10 + $0xd8] sm:$0xff]
        %v5606 = vld [vmem:[#allocation10 + $0xe0] sm:$0xff]
        %v5607 = vld [vmem:[#allocation10 + $0xe8] sm:$0xff]
        %v5608 = vld [vmem:[#allocation10 + $0xf0] sm:$0xff]
        %v5609 = vld [vmem:[#allocation10 + $0xf8] sm:$0xff]
        %v5610 = vld [vmem:[#allocation10 + $0x100] sm:$0xff]
        %v5611 = vld [vmem:[#allocation10 + $0x108] sm:$0xff]
        %v5612 = vld [vmem:[#allocation10 + $0x110] sm:$0xff]
        %v5613 = vld [vmem:[#allocation10 + $0x118] sm:$0xff]
        %v5614 = vld [vmem:[#allocation10 + $0x120] sm:$0xff]
        %v5615 = vld [vmem:[#allocation10 + $0x128] sm:$0xff]
        %v5616 = vld [vmem:[#allocation10 + $0x130] sm:$0xff]
        %v5617 = vld [vmem:[#allocation10 + $0x138] sm:$0xff]
        %v5618 = vld [vmem:[#allocation10 + $0x140] sm:$0xff]
        %v5619 = vld [vmem:[#allocation10 + $0x148] sm:$0xff]
        %v5620 = vld [vmem:[#allocation10 + $0x150] sm:$0xff]
        %v5621 = vld [vmem:[#allocation10 + $0x158] sm:$0xff]
        %v5622 = vld [vmem:[#allocation10 + $0x160] sm:$0xff]
        %v5623 = vld [vmem:[#allocation10 + $0x168] sm:$0xff]
        %v5624 = vld [vmem:[#allocation10 + $0x170] sm:$0xff]
        %v5625 = vld [vmem:[#allocation10 + $0x178] sm:$0xff]
        %v5626 = vld [vmem:[#allocation10 + $0x180] sm:$0xff]
        %v5627 = vld [vmem:[#allocation10 + $0x188] sm:$0xff]
        %v5628 = vld [vmem:[#allocation10 + $0x190] sm:$0xff]
        %v5629 = vld [vmem:[#allocation10 + $0x198] sm:$0xff]
        %v5630 = vld [vmem:[#allocation10 + $0x1a0] sm:$0xff]
        %v5631 = vld [vmem:[#allocation10 + $0x1a8] sm:$0xff]
        %v5632 = vld [vmem:[#allocation10 + $0x1b0] sm:$0xff]
        %v5633 = vld [vmem:[#allocation10 + $0x1b8] sm:$0xff]
        %v5634 = vld [vmem:[#allocation10 + $0x1c0] sm:$0xff]
        %v5635 = vld [vmem:[#allocation10 + $0x1c8] sm:$0xff]
        %v5636 = vld [vmem:[#allocation10 + $0x1d0] sm:$0xff]
        %v5637 = vld [vmem:[#allocation10 + $0x1d8] sm:$0xff]
        %v5638 = vld [vmem:[#allocation10 + $0x1e0] sm:$0xff]
        %v5639 = vld [vmem:[#allocation10 + $0x1e8] sm:$0xff]
        %v5640 = vld [vmem:[#allocation10 + $0x1f0] sm:$0xff]
        %v5641 = vld [vmem:[#allocation10 + $0x1f8] sm:$0xff]
        %v5642 = vld [vmem:[#allocation10 + $0x200] sm:$0xff]
        %v5643 = vld [vmem:[#allocation10 + $0x208] sm:$0xff]
        %v5644 = vld [vmem:[#allocation10 + $0x210] sm:$0xff]
        %v5645 = vld [vmem:[#allocation10 + $0x218] sm:$0xff]
        %v5646 = vld [vmem:[#allocation10 + $0x220] sm:$0xff]
        %v5647 = vld [vmem:[#allocation10 + $0x228] sm:$0xff]
        %v5648 = vld [vmem:[#allocation10 + $0x230] sm:$0xff]
        %v5649 = vld [vmem:[#allocation10 + $0x238] sm:$0xff]
        %v5650 = vld [vmem:[#allocation10 + $0x240] sm:$0xff]
        %v5651 = vld [vmem:[#allocation10 + $0x248] sm:$0xff]
        %v5652 = vld [vmem:[#allocation10 + $0x250] sm:$0xff]
        %v5653 = vld [vmem:[#allocation10 + $0x258] sm:$0xff]
        %v5654 = vld [vmem:[#allocation10 + $0x260] sm:$0xff]
        %v5655 = vld [vmem:[#allocation10 + $0x268] sm:$0xff]
        %v5656 = vld [vmem:[#allocation10 + $0x270] sm:$0xff]
        %v5657 = vld [vmem:[#allocation10 + $0x278] sm:$0xff]
        %v5658 = vld [vmem:[#allocation10 + $0x280] sm:$0xff]
        %v5659 = vld [vmem:[#allocation10 + $0x288] sm:$0xff]
        %v5660 = vld [vmem:[#allocation10 + $0x290] sm:$0xff]
        %v5661 = vld [vmem:[#allocation10 + $0x298] sm:$0xff]
        %v5662 = vld [vmem:[#allocation10 + $0x2a0] sm:$0xff]
        %v5663 = vld [vmem:[#allocation10 + $0x2a8] sm:$0xff]
        %v5664 = vld [vmem:[#allocation10 + $0x2b0] sm:$0xff]
        %v5665 = vld [vmem:[#allocation10 + $0x2b8] sm:$0xff]
        %v5666 = vld [vmem:[#allocation10 + $0x2c0] sm:$0xff]
        %v5667 = vld [vmem:[#allocation10 + $0x2c8] sm:$0xff]
        %v5668 = vld [vmem:[#allocation10 + $0x2d0] sm:$0xff]
        %v5669 = vld [vmem:[#allocation10 + $0x2d8] sm:$0xff]
        %v5670 = vld [vmem:[#allocation10 + $0x2e0] sm:$0xff]
        %v5671 = vld [vmem:[#allocation10 + $0x2e8] sm:$0xff]
        %v5672 = vld [vmem:[#allocation10 + $0x2f0] sm:$0xff]
        %v5673 = vld [vmem:[#allocation10 + $0x2f8] sm:$0xff]
        %v5674 = vld [vmem:[#allocation10 + $0x300] sm:$0xff]
        %v5675 = vld [vmem:[#allocation10 + $0x308] sm:$0xff]
        %v5676 = vld [vmem:[#allocation10 + $0x310] sm:$0xff]
        %v5677 = vld [vmem:[#allocation10 + $0x318] sm:$0xff]
        %v5678 = vld [vmem:[#allocation10 + $0x320] sm:$0xff]
        %v5679 = vld [vmem:[#allocation10 + $0x328] sm:$0xff]
        %v5680 = vld [vmem:[#allocation10 + $0x330] sm:$0xff]
        %v5681 = vld [vmem:[#allocation10 + $0x338] sm:$0xff]
        %v5682 = vld [vmem:[#allocation10 + $0x340] sm:$0xff]
        %v5683 = vld [vmem:[#allocation10 + $0x348] sm:$0xff]
        %v5684 = vld [vmem:[#allocation10 + $0x350] sm:$0xff]
        %v5685 = vld [vmem:[#allocation10 + $0x358] sm:$0xff]
        %v5686 = vld [vmem:[#allocation10 + $0x360] sm:$0xff]
        %v5687 = vld [vmem:[#allocation10 + $0x368] sm:$0xff]
        %v5688 = vld [vmem:[#allocation10 + $0x370] sm:$0xff]
        %v5689 = vld [vmem:[#allocation10 + $0x378] sm:$0xff]
        %v5690 = vld [vmem:[#allocation10 + $0x380] sm:$0xff]
        %v5691 = vld [vmem:[#allocation10 + $0x388] sm:$0xff]
        %v5692 = vld [vmem:[#allocation10 + $0x390] sm:$0xff]
        %v5693 = vld [vmem:[#allocation10 + $0x398] sm:$0xff]
        %v5694 = vld [vmem:[#allocation10 + $0x3a0] sm:$0xff]
        %v5695 = vld [vmem:[#allocation10 + $0x3a8] sm:$0xff]
        %v5696 = vld [vmem:[#allocation10 + $0x3b0] sm:$0xff]
        %v5697 = vld [vmem:[#allocation10 + $0x3b8] sm:$0xff]
        %v5698 = vld [vmem:[#allocation10 + $0x3c0] sm:$0xff]
        %v5699 = vld [vmem:[#allocation10 + $0x3c8] sm:$0xff]
        %v5700 = vld [vmem:[#allocation10 + $0x3d0] sm:$0xff]
        %v5701 = vld [vmem:[#allocation10 + $0x3d8] sm:$0xff]
        %v5702 = vld [vmem:[#allocation10 + $0x3e0] sm:$0xff]
        %v5703 = vld [vmem:[#allocation10 + $0x3e8] sm:$0xff]
        %v5704 = vld [vmem:[#allocation10 + $0x3f0] sm:$0xff]
        %v5705 = vld [vmem:[#allocation10 + $0x3f8] sm:$0xff]
        %v5706 = vld [vmem:[#allocation10 + $0x400] sm:$0xff]
        %v5707 = vld [vmem:[#allocation10 + $0x408] sm:$0xff]
        %v5708 = vld [vmem:[#allocation10 + $0x410] sm:$0xff]
        %v5709 = vld [vmem:[#allocation10 + $0x418] sm:$0xff]
        %v5710 = vld [vmem:[#allocation10 + $0x420] sm:$0xff]
        %v5711 = vld [vmem:[#allocation10 + $0x428] sm:$0xff]
        %v5712 = vld [vmem:[#allocation10 + $0x430] sm:$0xff]
        %v5713 = vld [vmem:[#allocation10 + $0x438] sm:$0xff]
        %v5714 = vld [vmem:[#allocation10 + $0x440] sm:$0xff]
        %v5715 = vld [vmem:[#allocation10 + $0x448] sm:$0xff]
        %v5716 = vld [vmem:[#allocation10 + $0x450] sm:$0xff]
        %v5717 = vld [vmem:[#allocation10 + $0x458] sm:$0xff]
        %v5718 = vld [vmem:[#allocation10 + $0x460] sm:$0xff]
        %v5719 = vld [vmem:[#allocation10 + $0x468] sm:$0xff]
        %v5720 = vld [vmem:[#allocation10 + $0x470] sm:$0xff]
        %v5721 = vld [vmem:[#allocation10 + $0x478] sm:$0xff]
        %v5722 = vld [vmem:[#allocation10 + $0x480] sm:$0xff]
        %v5723 = vld [vmem:[#allocation10 + $0x488] sm:$0xff]
        %v5724 = vld [vmem:[#allocation10 + $0x490] sm:$0xff]
        %v5725 = vld [vmem:[#allocation10 + $0x498] sm:$0xff]
        %v5726 = vld [vmem:[#allocation10 + $0x4a0] sm:$0xff]
        %v5727 = vld [vmem:[#allocation10 + $0x4a8] sm:$0xff]
        %v5728 = vld [vmem:[#allocation10 + $0x4b0] sm:$0xff]
        %v5729 = vld [vmem:[#allocation10 + $0x4b8] sm:$0xff]
        %v5730 = vld [vmem:[#allocation10 + $0x4c0] sm:$0xff]
        %v5731 = vld [vmem:[#allocation10 + $0x4c8] sm:$0xff]
        %v5732 = vld [vmem:[#allocation10 + $0x4d0] sm:$0xff]
        %v5733 = vld [vmem:[#allocation10 + $0x4d8] sm:$0xff]
        %v5734 = vld [vmem:[#allocation10 + $0x4e0] sm:$0xff]
        %v5735 = vld [vmem:[#allocation10 + $0x4e8] sm:$0xff]
        %v5736 = vld [vmem:[#allocation10 + $0x4f0] sm:$0xff]
        %v5737 = vld [vmem:[#allocation10 + $0x4f8] sm:$0xff]
        %v5738 = vld [vmem:[#allocation10 + $0x500] sm:$0xff]
        %v5739 = vld [vmem:[#allocation10 + $0x508] sm:$0xff]
        %v5740 = vld [vmem:[#allocation10 + $0x510] sm:$0xff]
        %v5741 = vld [vmem:[#allocation10 + $0x518] sm:$0xff]
        %v5742 = vld [vmem:[#allocation10 + $0x520] sm:$0xff]
        %v5743 = vld [vmem:[#allocation10 + $0x528] sm:$0xff]
        %v5744 = vld [vmem:[#allocation10 + $0x530] sm:$0xff]
        %v5745 = vld [vmem:[#allocation10 + $0x538] sm:$0xff]
        %v5746 = vld [vmem:[#allocation10 + $0x540] sm:$0xff]
        %v5747 = vld [vmem:[#allocation10 + $0x548] sm:$0xff]
        %v5748 = vld [vmem:[#allocation10 + $0x550] sm:$0xff]
        %v5749 = vld [vmem:[#allocation10 + $0x558] sm:$0xff]
        %v5750 = vld [vmem:[#allocation10 + $0x560] sm:$0xff]
        %v5751 = vld [vmem:[#allocation10 + $0x568] sm:$0xff]
        %v5752 = vld [vmem:[#allocation10 + $0x570] sm:$0xff]
        %v5753 = vld [vmem:[#allocation10 + $0x578] sm:$0xff]
        %v5754 = vld [vmem:[#allocation10 + $0x580] sm:$0xff]
        %v5755 = vld [vmem:[#allocation10 + $0x588] sm:$0xff]
        %v5756 = vld [vmem:[#allocation10 + $0x590] sm:$0xff]
        %v5757 = vld [vmem:[#allocation10 + $0x598] sm:$0xff]
        %v5758 = vld [vmem:[#allocation10 + $0x5a0] sm:$0xff]
        %v5759 = vld [vmem:[#allocation10 + $0x5a8] sm:$0xff]
        %v5760 = vld [vmem:[#allocation10 + $0x5b0] sm:$0xff]
        %v5761 = vld [vmem:[#allocation10 + $0x5b8] sm:$0xff]
        %v5762 = vld [vmem:[#allocation10 + $0x5c0] sm:$0xff]
        %v5763 = vld [vmem:[#allocation10 + $0x5c8] sm:$0xff]
        %v5764 = vld [vmem:[#allocation10 + $0x5d0] sm:$0xff]
        %v5765 = vld [vmem:[#allocation10 + $0x5d8] sm:$0xff]
        %v5766 = vld [vmem:[#allocation10 + $0x5e0] sm:$0xff]
        %v5767 = vld [vmem:[#allocation10 + $0x5e8] sm:$0xff]
        %v5768 = vld [vmem:[#allocation10 + $0x5f0] sm:$0xff]
        %v5769 = vld [vmem:[#allocation10 + $0x5f8] sm:$0xff]
        %v5770 = vld [vmem:[#allocation10 + $0x600] sm:$0xff]
        %v5771 = vld [vmem:[#allocation10 + $0x608] sm:$0xff]
        %v5772 = vld [vmem:[#allocation10 + $0x610] sm:$0xff]
        %v5773 = vld [vmem:[#allocation10 + $0x618] sm:$0xff]
        %v5774 = vld [vmem:[#allocation10 + $0x620] sm:$0xff]
        %v5775 = vld [vmem:[#allocation10 + $0x628] sm:$0xff]
        %v5776 = vld [vmem:[#allocation10 + $0x630] sm:$0xff]
        %v5777 = vld [vmem:[#allocation10 + $0x638] sm:$0xff]
        %v5778 = vld [vmem:[#allocation10 + $0x640] sm:$0xff]
        %v5779 = vld [vmem:[#allocation10 + $0x648] sm:$0xff]
        %v5780 = vld [vmem:[#allocation10 + $0x650] sm:$0xff]
        %v5781 = vld [vmem:[#allocation10 + $0x658] sm:$0xff]
        %v5782 = vld [vmem:[#allocation10 + $0x660] sm:$0xff]
        %v5783 = vld [vmem:[#allocation10 + $0x668] sm:$0xff]
        %v5784 = vld [vmem:[#allocation10 + $0x670] sm:$0xff]
        %v5785 = vld [vmem:[#allocation10 + $0x678] sm:$0xff]
        %v5786 = vld [vmem:[#allocation10 + $0x680] sm:$0xff]
        %v5787 = vld [vmem:[#allocation10 + $0x688] sm:$0xff]
        %v5788 = vld [vmem:[#allocation10 + $0x690] sm:$0xff]
        %v5789 = vld [vmem:[#allocation10 + $0x698] sm:$0xff]
        %v5790 = vld [vmem:[#allocation10 + $0x6a0] sm:$0xff]
        %v5791 = vld [vmem:[#allocation10 + $0x6a8] sm:$0xff]
        %v5792 = vld [vmem:[#allocation10 + $0x6b0] sm:$0xff]
        %v5793 = vld [vmem:[#allocation10 + $0x6b8] sm:$0xff]
        %v5794 = vld [vmem:[#allocation10 + $0x6c0] sm:$0xff]
        %v5795 = vld [vmem:[#allocation10 + $0x6c8] sm:$0xff]
        %v5796 = vld [vmem:[#allocation10 + $0x6d0] sm:$0xff]
        %v5797 = vld [vmem:[#allocation10 + $0x6d8] sm:$0xff]
        %v5798 = vld [vmem:[#allocation10 + $0x6e0] sm:$0xff]
        %v5799 = vld [vmem:[#allocation10 + $0x6e8] sm:$0xff]
        %v5800 = vld [vmem:[#allocation10 + $0x6f0] sm:$0xff]
        %v5801 = vld [vmem:[#allocation10 + $0x6f8] sm:$0xff]
        %v5802 = vld [vmem:[#allocation10 + $0x700] sm:$0xff]
        %v5803 = vld [vmem:[#allocation10 + $0x708] sm:$0xff]
        %v5804 = vld [vmem:[#allocation10 + $0x710] sm:$0xff]
        %v5805 = vld [vmem:[#allocation10 + $0x718] sm:$0xff]
        %v5806 = vld [vmem:[#allocation10 + $0x720] sm:$0xff]
        %v5807 = vld [vmem:[#allocation10 + $0x728] sm:$0xff]
        %v5808 = vld [vmem:[#allocation10 + $0x730] sm:$0xff]
        %v5809 = vld [vmem:[#allocation10 + $0x738] sm:$0xff]
        %v5810 = vld [vmem:[#allocation10 + $0x740] sm:$0xff]
        %v5811 = vld [vmem:[#allocation10 + $0x748] sm:$0xff]
        %v5812 = vld [vmem:[#allocation10 + $0x750] sm:$0xff]
        %v5813 = vld [vmem:[#allocation10 + $0x758] sm:$0xff]
        %v5814 = vld [vmem:[#allocation10 + $0x760] sm:$0xff]
        %v5815 = vld [vmem:[#allocation10 + $0x768] sm:$0xff]
        %v5816 = vld [vmem:[#allocation10 + $0x770] sm:$0xff]
        %v5817 = vld [vmem:[#allocation10 + $0x778] sm:$0xff]
        %v5818 = vld [vmem:[#allocation10 + $0x780] sm:$0xff]
        %v5819 = vld [vmem:[#allocation10 + $0x788] sm:$0xff]
        %v5820 = vld [vmem:[#allocation10 + $0x790] sm:$0xff]
        %v5821 = vld [vmem:[#allocation10 + $0x798] sm:$0xff]
        %v5822 = vld [vmem:[#allocation10 + $0x7a0] sm:$0xff]
        %v5823 = vld [vmem:[#allocation10 + $0x7a8] sm:$0xff]
        %v5824 = vld [vmem:[#allocation10 + $0x7b0] sm:$0xff]
        %v5825 = vld [vmem:[#allocation10 + $0x7b8] sm:$0xff]
        %v5826 = vld [vmem:[#allocation10 + $0x7c0] sm:$0xff]
        %v5827 = vld [vmem:[#allocation10 + $0x7c8] sm:$0xff]
        %v5828 = vld [vmem:[#allocation10 + $0x7d0] sm:$0xff]
        %v5829 = vld [vmem:[#allocation10 + $0x7d8] sm:$0xff]
        %v5830 = vld [vmem:[#allocation10 + $0x7e0] sm:$0xff]
        %v5831 = vld [vmem:[#allocation10 + $0x7e8] sm:$0xff]
        %v5832 = vld [vmem:[#allocation10 + $0x7f0] sm:$0xff]
        %v5833 = vld [vmem:[#allocation10 + $0x7f8] sm:$0xff]
        %v5834 = vlaneseq
        %v5835 = vshrl.u32 %v5834, 7
        %v5836 = vsub.s32 4, %v5835
        %v5837 = vrot.slane %v428, %v5836
        %v5838 = vlaneseq
        %v5839 = vshrl.u32 %v5838, 7
        %v5840 = vsub.s32 4, %v5839
        %v5841 = vrot.slane %v429, %v5840
        %v5842 = vlaneseq
        %v5843 = vshrl.u32 %v5842, 7
        %v5844 = vsub.s32 4, %v5843
        %v5845 = vrot.slane %v430, %v5844
        %v5846 = vlaneseq
        %v5847 = vshrl.u32 %v5846, 7
        %v5848 = vsub.s32 4, %v5847
        %v5849 = vrot.slane %v431, %v5848
        %v5850 = vlaneseq
        %v5851 = vshrl.u32 %v5850, 7
        %v5852 = vsub.s32 4, %v5851
        %v5853 = vrot.slane %v432, %v5852
        %v5854 = vlaneseq
        %v5855 = vshrl.u32 %v5854, 7
        %v5856 = vsub.s32 4, %v5855
        %v5857 = vrot.slane %v433, %v5856
        %v5858 = vlaneseq
        %v5859 = vshrl.u32 %v5858, 7
        %v5860 = vsub.s32 4, %v5859
        %v5861 = vrot.slane %v434, %v5860
        %v5862 = vlaneseq
        %v5863 = vshrl.u32 %v5862, 7
        %v5864 = vsub.s32 4, %v5863
        %v5865 = vrot.slane %v435, %v5864
        %v6122 = vunpack.c.l.b16 %v5578
        %v6123 = vunpack.c.h.b16 %v5578
        %v6124 = vunpack.c.l.b16 %v5579
        %v6125 = vunpack.c.h.b16 %v5579
        %v6126 = vunpack.c.l.b16 %v5580
        %v6127 = vunpack.c.h.b16 %v5580
        %v6128 = vunpack.c.l.b16 %v5581
        %v6129 = vunpack.c.h.b16 %v5581
        %v6130 = vunpack.c.l.b16 %v5582
        %v6131 = vunpack.c.h.b16 %v5582
        %v6132 = vunpack.c.l.b16 %v5583
        %v6133 = vunpack.c.h.b16 %v5583
        %v6134 = vunpack.c.l.b16 %v5584
        %v6135 = vunpack.c.h.b16 %v5584
        %v6136 = vunpack.c.l.b16 %v5585
        %v6137 = vunpack.c.h.b16 %v5585
        %v6138 = vunpack.c.l.b16 %v5586
        %v6139 = vunpack.c.h.b16 %v5586
        %v6140 = vunpack.c.l.b16 %v5587
        %v6141 = vunpack.c.h.b16 %v5587
        %v6142 = vunpack.c.l.b16 %v5588
        %v6143 = vunpack.c.h.b16 %v5588
        %v6144 = vunpack.c.l.b16 %v5589
        %v6145 = vunpack.c.h.b16 %v5589
        %v6146 = vunpack.c.l.b16 %v5590
        %v6147 = vunpack.c.h.b16 %v5590
        %v6148 = vunpack.c.l.b16 %v5591
        %v6149 = vunpack.c.h.b16 %v5591
        %v6150 = vunpack.c.l.b16 %v5592
        %v6151 = vunpack.c.h.b16 %v5592
        %v6152 = vunpack.c.l.b16 %v5593
        %v6153 = vunpack.c.h.b16 %v5593
        %v6154 = vunpack.c.l.b16 %v5594
        %v6155 = vunpack.c.h.b16 %v5594
        %v6156 = vunpack.c.l.b16 %v5595
        %v6157 = vunpack.c.h.b16 %v5595
        %v6158 = vunpack.c.l.b16 %v5596
        %v6159 = vunpack.c.h.b16 %v5596
        %v6160 = vunpack.c.l.b16 %v5597
        %v6161 = vunpack.c.h.b16 %v5597
        %v6162 = vunpack.c.l.b16 %v5598
        %v6163 = vunpack.c.h.b16 %v5598
        %v6164 = vunpack.c.l.b16 %v5599
        %v6165 = vunpack.c.h.b16 %v5599
        %v6166 = vunpack.c.l.b16 %v5600
        %v6167 = vunpack.c.h.b16 %v5600
        %v6168 = vunpack.c.l.b16 %v5601
        %v6169 = vunpack.c.h.b16 %v5601
        %v6170 = vunpack.c.l.b16 %v5602
        %v6171 = vunpack.c.h.b16 %v5602
        %v6172 = vunpack.c.l.b16 %v5603
        %v6173 = vunpack.c.h.b16 %v5603
        %v6174 = vunpack.c.l.b16 %v5604
        %v6175 = vunpack.c.h.b16 %v5604
        %v6176 = vunpack.c.l.b16 %v5605
        %v6177 = vunpack.c.h.b16 %v5605
        %v6178 = vunpack.c.l.b16 %v5606
        %v6179 = vunpack.c.h.b16 %v5606
        %v6180 = vunpack.c.l.b16 %v5607
        %v6181 = vunpack.c.h.b16 %v5607
        %v6182 = vunpack.c.l.b16 %v5608
        %v6183 = vunpack.c.h.b16 %v5608
        %v6184 = vunpack.c.l.b16 %v5609
        %v6185 = vunpack.c.h.b16 %v5609
        %v6186 = vunpack.c.l.b16 %v5610
        %v6187 = vunpack.c.h.b16 %v5610
        %v6188 = vunpack.c.l.b16 %v5611
        %v6189 = vunpack.c.h.b16 %v5611
        %v6190 = vunpack.c.l.b16 %v5612
        %v6191 = vunpack.c.h.b16 %v5612
        %v6192 = vunpack.c.l.b16 %v5613
        %v6193 = vunpack.c.h.b16 %v5613
        %v6194 = vunpack.c.l.b16 %v5614
        %v6195 = vunpack.c.h.b16 %v5614
        %v6196 = vunpack.c.l.b16 %v5615
        %v6197 = vunpack.c.h.b16 %v5615
        %v6198 = vunpack.c.l.b16 %v5616
        %v6199 = vunpack.c.h.b16 %v5616
        %v6200 = vunpack.c.l.b16 %v5617
        %v6201 = vunpack.c.h.b16 %v5617
        %v6202 = vunpack.c.l.b16 %v5618
        %v6203 = vunpack.c.h.b16 %v5618
        %v6204 = vunpack.c.l.b16 %v5619
        %v6205 = vunpack.c.h.b16 %v5619
        %v6206 = vunpack.c.l.b16 %v5620
        %v6207 = vunpack.c.h.b16 %v5620
        %v6208 = vunpack.c.l.b16 %v5621
        %v6209 = vunpack.c.h.b16 %v5621
        %v6210 = vunpack.c.l.b16 %v5622
        %v6211 = vunpack.c.h.b16 %v5622
        %v6212 = vunpack.c.l.b16 %v5623
        %v6213 = vunpack.c.h.b16 %v5623
        %v6214 = vunpack.c.l.b16 %v5624
        %v6215 = vunpack.c.h.b16 %v5624
        %v6216 = vunpack.c.l.b16 %v5625
        %v6217 = vunpack.c.h.b16 %v5625
        %v6218 = vunpack.c.l.b16 %v5626
        %v6219 = vunpack.c.h.b16 %v5626
        %v6220 = vunpack.c.l.b16 %v5627
        %v6221 = vunpack.c.h.b16 %v5627
        %v6222 = vunpack.c.l.b16 %v5628
        %v6223 = vunpack.c.h.b16 %v5628
        %v6224 = vunpack.c.l.b16 %v5629
        %v6225 = vunpack.c.h.b16 %v5629
        %v6226 = vunpack.c.l.b16 %v5630
        %v6227 = vunpack.c.h.b16 %v5630
        %v6228 = vunpack.c.l.b16 %v5631
        %v6229 = vunpack.c.h.b16 %v5631
        %v6230 = vunpack.c.l.b16 %v5632
        %v6231 = vunpack.c.h.b16 %v5632
        %v6232 = vunpack.c.l.b16 %v5633
        %v6233 = vunpack.c.h.b16 %v5633
        %v6234 = vunpack.c.l.b16 %v5634
        %v6235 = vunpack.c.h.b16 %v5634
        %v6236 = vunpack.c.l.b16 %v5635
        %v6237 = vunpack.c.h.b16 %v5635
        %v6238 = vunpack.c.l.b16 %v5636
        %v6239 = vunpack.c.h.b16 %v5636
        %v6240 = vunpack.c.l.b16 %v5637
        %v6241 = vunpack.c.h.b16 %v5637
        %v6242 = vunpack.c.l.b16 %v5638
        %v6243 = vunpack.c.h.b16 %v5638
        %v6244 = vunpack.c.l.b16 %v5639
        %v6245 = vunpack.c.h.b16 %v5639
        %v6246 = vunpack.c.l.b16 %v5640
        %v6247 = vunpack.c.h.b16 %v5640
        %v6248 = vunpack.c.l.b16 %v5641
        %v6249 = vunpack.c.h.b16 %v5641
        %v6250 = vunpack.c.l.b16 %v5642
        %v6251 = vunpack.c.h.b16 %v5642
        %v6252 = vunpack.c.l.b16 %v5643
        %v6253 = vunpack.c.h.b16 %v5643
        %v6254 = vunpack.c.l.b16 %v5644
        %v6255 = vunpack.c.h.b16 %v5644
        %v6256 = vunpack.c.l.b16 %v5645
        %v6257 = vunpack.c.h.b16 %v5645
        %v6258 = vunpack.c.l.b16 %v5646
        %v6259 = vunpack.c.h.b16 %v5646
        %v6260 = vunpack.c.l.b16 %v5647
        %v6261 = vunpack.c.h.b16 %v5647
        %v6262 = vunpack.c.l.b16 %v5648
        %v6263 = vunpack.c.h.b16 %v5648
        %v6264 = vunpack.c.l.b16 %v5649
        %v6265 = vunpack.c.h.b16 %v5649
        %v6266 = vunpack.c.l.b16 %v5650
        %v6267 = vunpack.c.h.b16 %v5650
        %v6268 = vunpack.c.l.b16 %v5651
        %v6269 = vunpack.c.h.b16 %v5651
        %v6270 = vunpack.c.l.b16 %v5652
        %v6271 = vunpack.c.h.b16 %v5652
        %v6272 = vunpack.c.l.b16 %v5653
        %v6273 = vunpack.c.h.b16 %v5653
        %v6274 = vunpack.c.l.b16 %v5654
        %v6275 = vunpack.c.h.b16 %v5654
        %v6276 = vunpack.c.l.b16 %v5655
        %v6277 = vunpack.c.h.b16 %v5655
        %v6278 = vunpack.c.l.b16 %v5656
        %v6279 = vunpack.c.h.b16 %v5656
        %v6280 = vunpack.c.l.b16 %v5657
        %v6281 = vunpack.c.h.b16 %v5657
        %v6282 = vunpack.c.l.b16 %v5658
        %v6283 = vunpack.c.h.b16 %v5658
        %v6284 = vunpack.c.l.b16 %v5659
        %v6285 = vunpack.c.h.b16 %v5659
        %v6286 = vunpack.c.l.b16 %v5660
        %v6287 = vunpack.c.h.b16 %v5660
        %v6288 = vunpack.c.l.b16 %v5661
        %v6289 = vunpack.c.h.b16 %v5661
        %v6290 = vunpack.c.l.b16 %v5662
        %v6291 = vunpack.c.h.b16 %v5662
        %v6292 = vunpack.c.l.b16 %v5663
        %v6293 = vunpack.c.h.b16 %v5663
        %v6294 = vunpack.c.l.b16 %v5664
        %v6295 = vunpack.c.h.b16 %v5664
        %v6296 = vunpack.c.l.b16 %v5665
        %v6297 = vunpack.c.h.b16 %v5665
        %v6298 = vunpack.c.l.b16 %v5666
        %v6299 = vunpack.c.h.b16 %v5666
        %v6300 = vunpack.c.l.b16 %v5667
        %v6301 = vunpack.c.h.b16 %v5667
        %v6302 = vunpack.c.l.b16 %v5668
        %v6303 = vunpack.c.h.b16 %v5668
        %v6304 = vunpack.c.l.b16 %v5669
        %v6305 = vunpack.c.h.b16 %v5669
        %v6306 = vunpack.c.l.b16 %v5670
        %v6307 = vunpack.c.h.b16 %v5670
        %v6308 = vunpack.c.l.b16 %v5671
        %v6309 = vunpack.c.h.b16 %v5671
        %v6310 = vunpack.c.l.b16 %v5672
        %v6311 = vunpack.c.h.b16 %v5672
        %v6312 = vunpack.c.l.b16 %v5673
        %v6313 = vunpack.c.h.b16 %v5673
        %v6314 = vunpack.c.l.b16 %v5674
        %v6315 = vunpack.c.h.b16 %v5674
        %v6316 = vunpack.c.l.b16 %v5675
        %v6317 = vunpack.c.h.b16 %v5675
        %v6318 = vunpack.c.l.b16 %v5676
        %v6319 = vunpack.c.h.b16 %v5676
        %v6320 = vunpack.c.l.b16 %v5677
        %v6321 = vunpack.c.h.b16 %v5677
        %v6322 = vunpack.c.l.b16 %v5678
        %v6323 = vunpack.c.h.b16 %v5678
        %v6324 = vunpack.c.l.b16 %v5679
        %v6325 = vunpack.c.h.b16 %v5679
        %v6326 = vunpack.c.l.b16 %v5680
        %v6327 = vunpack.c.h.b16 %v5680
        %v6328 = vunpack.c.l.b16 %v5681
        %v6329 = vunpack.c.h.b16 %v5681
        %v6330 = vunpack.c.l.b16 %v5682
        %v6331 = vunpack.c.h.b16 %v5682
        %v6332 = vunpack.c.l.b16 %v5683
        %v6333 = vunpack.c.h.b16 %v5683
        %v6334 = vunpack.c.l.b16 %v5684
        %v6335 = vunpack.c.h.b16 %v5684
        %v6336 = vunpack.c.l.b16 %v5685
        %v6337 = vunpack.c.h.b16 %v5685
        %v6338 = vunpack.c.l.b16 %v5686
        %v6339 = vunpack.c.h.b16 %v5686
        %v6340 = vunpack.c.l.b16 %v5687
        %v6341 = vunpack.c.h.b16 %v5687
        %v6342 = vunpack.c.l.b16 %v5688
        %v6343 = vunpack.c.h.b16 %v5688
        %v6344 = vunpack.c.l.b16 %v5689
        %v6345 = vunpack.c.h.b16 %v5689
        %v6346 = vunpack.c.l.b16 %v5690
        %v6347 = vunpack.c.h.b16 %v5690
        %v6348 = vunpack.c.l.b16 %v5691
        %v6349 = vunpack.c.h.b16 %v5691
        %v6350 = vunpack.c.l.b16 %v5692
        %v6351 = vunpack.c.h.b16 %v5692
        %v6352 = vunpack.c.l.b16 %v5693
        %v6353 = vunpack.c.h.b16 %v5693
        %v6354 = vunpack.c.l.b16 %v5694
        %v6355 = vunpack.c.h.b16 %v5694
        %v6356 = vunpack.c.l.b16 %v5695
        %v6357 = vunpack.c.h.b16 %v5695
        %v6358 = vunpack.c.l.b16 %v5696
        %v6359 = vunpack.c.h.b16 %v5696
        %v6360 = vunpack.c.l.b16 %v5697
        %v6361 = vunpack.c.h.b16 %v5697
        %v6362 = vunpack.c.l.b16 %v5698
        %v6363 = vunpack.c.h.b16 %v5698
        %v6364 = vunpack.c.l.b16 %v5699
        %v6365 = vunpack.c.h.b16 %v5699
        %v6366 = vunpack.c.l.b16 %v5700
        %v6367 = vunpack.c.h.b16 %v5700
        %v6368 = vunpack.c.l.b16 %v5701
        %v6369 = vunpack.c.h.b16 %v5701
        %v6370 = vunpack.c.l.b16 %v5702
        %v6371 = vunpack.c.h.b16 %v5702
        %v6372 = vunpack.c.l.b16 %v5703
        %v6373 = vunpack.c.h.b16 %v5703
        %v6374 = vunpack.c.l.b16 %v5704
        %v6375 = vunpack.c.h.b16 %v5704
        %v6376 = vunpack.c.l.b16 %v5705
        %v6377 = vunpack.c.h.b16 %v5705
        %v6378 = vunpack.c.l.b16 %v5706
        %v6379 = vunpack.c.h.b16 %v5706
        %v6380 = vunpack.c.l.b16 %v5707
        %v6381 = vunpack.c.h.b16 %v5707
        %v6382 = vunpack.c.l.b16 %v5708
        %v6383 = vunpack.c.h.b16 %v5708
        %v6384 = vunpack.c.l.b16 %v5709
        %v6385 = vunpack.c.h.b16 %v5709
        %v6386 = vunpack.c.l.b16 %v5710
        %v6387 = vunpack.c.h.b16 %v5710
        %v6388 = vunpack.c.l.b16 %v5711
        %v6389 = vunpack.c.h.b16 %v5711
        %v6390 = vunpack.c.l.b16 %v5712
        %v6391 = vunpack.c.h.b16 %v5712
        %v6392 = vunpack.c.l.b16 %v5713
        %v6393 = vunpack.c.h.b16 %v5713
        %v6394 = vunpack.c.l.b16 %v5714
        %v6395 = vunpack.c.h.b16 %v5714
        %v6396 = vunpack.c.l.b16 %v5715
        %v6397 = vunpack.c.h.b16 %v5715
        %v6398 = vunpack.c.l.b16 %v5716
        %v6399 = vunpack.c.h.b16 %v5716
        %v6400 = vunpack.c.l.b16 %v5717
        %v6401 = vunpack.c.h.b16 %v5717
        %v6402 = vunpack.c.l.b16 %v5718
        %v6403 = vunpack.c.h.b16 %v5718
        %v6404 = vunpack.c.l.b16 %v5719
        %v6405 = vunpack.c.h.b16 %v5719
        %v6406 = vunpack.c.l.b16 %v5720
        %v6407 = vunpack.c.h.b16 %v5720
        %v6408 = vunpack.c.l.b16 %v5721
        %v6409 = vunpack.c.h.b16 %v5721
        %v6410 = vunpack.c.l.b16 %v5722
        %v6411 = vunpack.c.h.b16 %v5722
        %v6412 = vunpack.c.l.b16 %v5723
        %v6413 = vunpack.c.h.b16 %v5723
        %v6414 = vunpack.c.l.b16 %v5724
        %v6415 = vunpack.c.h.b16 %v5724
        %v6416 = vunpack.c.l.b16 %v5725
        %v6417 = vunpack.c.h.b16 %v5725
        %v6418 = vunpack.c.l.b16 %v5726
        %v6419 = vunpack.c.h.b16 %v5726
        %v6420 = vunpack.c.l.b16 %v5727
        %v6421 = vunpack.c.h.b16 %v5727
        %v6422 = vunpack.c.l.b16 %v5728
        %v6423 = vunpack.c.h.b16 %v5728
        %v6424 = vunpack.c.l.b16 %v5729
        %v6425 = vunpack.c.h.b16 %v5729
        %v6426 = vunpack.c.l.b16 %v5730
        %v6427 = vunpack.c.h.b16 %v5730
        %v6428 = vunpack.c.l.b16 %v5731
        %v6429 = vunpack.c.h.b16 %v5731
        %v6430 = vunpack.c.l.b16 %v5732
        %v6431 = vunpack.c.h.b16 %v5732
        %v6432 = vunpack.c.l.b16 %v5733
        %v6433 = vunpack.c.h.b16 %v5733
        %v6434 = vunpack.c.l.b16 %v5734
        %v6435 = vunpack.c.h.b16 %v5734
        %v6436 = vunpack.c.l.b16 %v5735
        %v6437 = vunpack.c.h.b16 %v5735
        %v6438 = vunpack.c.l.b16 %v5736
        %v6439 = vunpack.c.h.b16 %v5736
        %v6440 = vunpack.c.l.b16 %v5737
        %v6441 = vunpack.c.h.b16 %v5737
        %v6442 = vunpack.c.l.b16 %v5738
        %v6443 = vunpack.c.h.b16 %v5738
        %v6444 = vunpack.c.l.b16 %v5739
        %v6445 = vunpack.c.h.b16 %v5739
        %v6446 = vunpack.c.l.b16 %v5740
        %v6447 = vunpack.c.h.b16 %v5740
        %v6448 = vunpack.c.l.b16 %v5741
        %v6449 = vunpack.c.h.b16 %v5741
        %v6450 = vunpack.c.l.b16 %v5742
        %v6451 = vunpack.c.h.b16 %v5742
        %v6452 = vunpack.c.l.b16 %v5743
        %v6453 = vunpack.c.h.b16 %v5743
        %v6454 = vunpack.c.l.b16 %v5744
        %v6455 = vunpack.c.h.b16 %v5744
        %v6456 = vunpack.c.l.b16 %v5745
        %v6457 = vunpack.c.h.b16 %v5745
        %v6458 = vunpack.c.l.b16 %v5746
        %v6459 = vunpack.c.h.b16 %v5746
        %v6460 = vunpack.c.l.b16 %v5747
        %v6461 = vunpack.c.h.b16 %v5747
        %v6462 = vunpack.c.l.b16 %v5748
        %v6463 = vunpack.c.h.b16 %v5748
        %v6464 = vunpack.c.l.b16 %v5749
        %v6465 = vunpack.c.h.b16 %v5749
        %v6466 = vunpack.c.l.b16 %v5750
        %v6467 = vunpack.c.h.b16 %v5750
        %v6468 = vunpack.c.l.b16 %v5751
        %v6469 = vunpack.c.h.b16 %v5751
        %v6470 = vunpack.c.l.b16 %v5752
        %v6471 = vunpack.c.h.b16 %v5752
        %v6472 = vunpack.c.l.b16 %v5753
        %v6473 = vunpack.c.h.b16 %v5753
        %v6474 = vunpack.c.l.b16 %v5754
        %v6475 = vunpack.c.h.b16 %v5754
        %v6476 = vunpack.c.l.b16 %v5755
        %v6477 = vunpack.c.h.b16 %v5755
        %v6478 = vunpack.c.l.b16 %v5756
        %v6479 = vunpack.c.h.b16 %v5756
        %v6480 = vunpack.c.l.b16 %v5757
        %v6481 = vunpack.c.h.b16 %v5757
        %v6482 = vunpack.c.l.b16 %v5758
        %v6483 = vunpack.c.h.b16 %v5758
        %v6484 = vunpack.c.l.b16 %v5759
        %v6485 = vunpack.c.h.b16 %v5759
        %v6486 = vunpack.c.l.b16 %v5760
        %v6487 = vunpack.c.h.b16 %v5760
        %v6488 = vunpack.c.l.b16 %v5761
        %v6489 = vunpack.c.h.b16 %v5761
        %v6490 = vunpack.c.l.b16 %v5762
        %v6491 = vunpack.c.h.b16 %v5762
        %v6492 = vunpack.c.l.b16 %v5763
        %v6493 = vunpack.c.h.b16 %v5763
        %v6494 = vunpack.c.l.b16 %v5764
        %v6495 = vunpack.c.h.b16 %v5764
        %v6496 = vunpack.c.l.b16 %v5765
        %v6497 = vunpack.c.h.b16 %v5765
        %v6498 = vunpack.c.l.b16 %v5766
        %v6499 = vunpack.c.h.b16 %v5766
        %v6500 = vunpack.c.l.b16 %v5767
        %v6501 = vunpack.c.h.b16 %v5767
        %v6502 = vunpack.c.l.b16 %v5768
        %v6503 = vunpack.c.h.b16 %v5768
        %v6504 = vunpack.c.l.b16 %v5769
        %v6505 = vunpack.c.h.b16 %v5769
        %v6506 = vunpack.c.l.b16 %v5770
        %v6507 = vunpack.c.h.b16 %v5770
        %v6508 = vunpack.c.l.b16 %v5771
        %v6509 = vunpack.c.h.b16 %v5771
        %v6510 = vunpack.c.l.b16 %v5772
        %v6511 = vunpack.c.h.b16 %v5772
        %v6512 = vunpack.c.l.b16 %v5773
        %v6513 = vunpack.c.h.b16 %v5773
        %v6514 = vunpack.c.l.b16 %v5774
        %v6515 = vunpack.c.h.b16 %v5774
        %v6516 = vunpack.c.l.b16 %v5775
        %v6517 = vunpack.c.h.b16 %v5775
        %v6518 = vunpack.c.l.b16 %v5776
        %v6519 = vunpack.c.h.b16 %v5776
        %v6520 = vunpack.c.l.b16 %v5777
        %v6521 = vunpack.c.h.b16 %v5777
        %v6522 = vunpack.c.l.b16 %v5778
        %v6523 = vunpack.c.h.b16 %v5778
        %v6524 = vunpack.c.l.b16 %v5779
        %v6525 = vunpack.c.h.b16 %v5779
        %v6526 = vunpack.c.l.b16 %v5780
        %v6527 = vunpack.c.h.b16 %v5780
        %v6528 = vunpack.c.l.b16 %v5781
        %v6529 = vunpack.c.h.b16 %v5781
        %v6530 = vunpack.c.l.b16 %v5782
        %v6531 = vunpack.c.h.b16 %v5782
        %v6532 = vunpack.c.l.b16 %v5783
        %v6533 = vunpack.c.h.b16 %v5783
        %v6534 = vunpack.c.l.b16 %v5784
        %v6535 = vunpack.c.h.b16 %v5784
        %v6536 = vunpack.c.l.b16 %v5785
        %v6537 = vunpack.c.h.b16 %v5785
        %v6538 = vunpack.c.l.b16 %v5786
        %v6539 = vunpack.c.h.b16 %v5786
        %v6540 = vunpack.c.l.b16 %v5787
        %v6541 = vunpack.c.h.b16 %v5787
        %v6542 = vunpack.c.l.b16 %v5788
        %v6543 = vunpack.c.h.b16 %v5788
        %v6544 = vunpack.c.l.b16 %v5789
        %v6545 = vunpack.c.h.b16 %v5789
        %v6546 = vunpack.c.l.b16 %v5790
        %v6547 = vunpack.c.h.b16 %v5790
        %v6548 = vunpack.c.l.b16 %v5791
        %v6549 = vunpack.c.h.b16 %v5791
        %v6550 = vunpack.c.l.b16 %v5792
        %v6551 = vunpack.c.h.b16 %v5792
        %v6552 = vunpack.c.l.b16 %v5793
        %v6553 = vunpack.c.h.b16 %v5793
        %v6554 = vunpack.c.l.b16 %v5794
        %v6555 = vunpack.c.h.b16 %v5794
        %v6556 = vunpack.c.l.b16 %v5795
        %v6557 = vunpack.c.h.b16 %v5795
        %v6558 = vunpack.c.l.b16 %v5796
        %v6559 = vunpack.c.h.b16 %v5796
        %v6560 = vunpack.c.l.b16 %v5797
        %v6561 = vunpack.c.h.b16 %v5797
        %v6562 = vunpack.c.l.b16 %v5798
        %v6563 = vunpack.c.h.b16 %v5798
        %v6564 = vunpack.c.l.b16 %v5799
        %v6565 = vunpack.c.h.b16 %v5799
        %v6566 = vunpack.c.l.b16 %v5800
        %v6567 = vunpack.c.h.b16 %v5800
        %v6568 = vunpack.c.l.b16 %v5801
        %v6569 = vunpack.c.h.b16 %v5801
        %v6570 = vunpack.c.l.b16 %v5802
        %v6571 = vunpack.c.h.b16 %v5802
        %v6572 = vunpack.c.l.b16 %v5803
        %v6573 = vunpack.c.h.b16 %v5803
        %v6574 = vunpack.c.l.b16 %v5804
        %v6575 = vunpack.c.h.b16 %v5804
        %v6576 = vunpack.c.l.b16 %v5805
        %v6577 = vunpack.c.h.b16 %v5805
        %v6578 = vunpack.c.l.b16 %v5806
        %v6579 = vunpack.c.h.b16 %v5806
        %v6580 = vunpack.c.l.b16 %v5807
        %v6581 = vunpack.c.h.b16 %v5807
        %v6582 = vunpack.c.l.b16 %v5808
        %v6583 = vunpack.c.h.b16 %v5808
        %v6584 = vunpack.c.l.b16 %v5809
        %v6585 = vunpack.c.h.b16 %v5809
        %v6586 = vunpack.c.l.b16 %v5810
        %v6587 = vunpack.c.h.b16 %v5810
        %v6588 = vunpack.c.l.b16 %v5811
        %v6589 = vunpack.c.h.b16 %v5811
        %v6590 = vunpack.c.l.b16 %v5812
        %v6591 = vunpack.c.h.b16 %v5812
        %v6592 = vunpack.c.l.b16 %v5813
        %v6593 = vunpack.c.h.b16 %v5813
        %v6594 = vunpack.c.l.b16 %v5814
        %v6595 = vunpack.c.h.b16 %v5814
        %v6596 = vunpack.c.l.b16 %v5815
        %v6597 = vunpack.c.h.b16 %v5815
        %v6598 = vunpack.c.l.b16 %v5816
        %v6599 = vunpack.c.h.b16 %v5816
        %v6600 = vunpack.c.l.b16 %v5817
        %v6601 = vunpack.c.h.b16 %v5817
        %v6602 = vunpack.c.l.b16 %v5818
        %v6603 = vunpack.c.h.b16 %v5818
        %v6604 = vunpack.c.l.b16 %v5819
        %v6605 = vunpack.c.h.b16 %v5819
        %v6606 = vunpack.c.l.b16 %v5820
        %v6607 = vunpack.c.h.b16 %v5820
        %v6608 = vunpack.c.l.b16 %v5821
        %v6609 = vunpack.c.h.b16 %v5821
        %v6610 = vunpack.c.l.b16 %v5822
        %v6611 = vunpack.c.h.b16 %v5822
        %v6612 = vunpack.c.l.b16 %v5823
        %v6613 = vunpack.c.h.b16 %v5823
        %v6614 = vunpack.c.l.b16 %v5824
        %v6615 = vunpack.c.h.b16 %v5824
        %v6616 = vunpack.c.l.b16 %v5825
        %v6617 = vunpack.c.h.b16 %v5825
        %v6618 = vunpack.c.l.b16 %v5826
        %v6619 = vunpack.c.h.b16 %v5826
        %v6620 = vunpack.c.l.b16 %v5827
        %v6621 = vunpack.c.h.b16 %v5827
        %v6622 = vunpack.c.l.b16 %v5828
        %v6623 = vunpack.c.h.b16 %v5828
        %v6624 = vunpack.c.l.b16 %v5829
        %v6625 = vunpack.c.h.b16 %v5829
        %v6626 = vunpack.c.l.b16 %v5830
        %v6627 = vunpack.c.h.b16 %v5830
        %v6628 = vunpack.c.l.b16 %v5831
        %v6629 = vunpack.c.h.b16 %v5831
        %v6630 = vunpack.c.l.b16 %v5832
        %v6631 = vunpack.c.h.b16 %v5832
        %v6632 = vunpack.c.l.b16 %v5833
        %v6633 = vunpack.c.h.b16 %v5833
        %v6634 = vpack.c.b16 %v6130, %v6122
        %v6635 = vpack.c.b16 %v6131, %v6123
        %v6636 = vpack.c.b16 %v6132, %v6124
        %v6637 = vpack.c.b16 %v6133, %v6125
        %v6638 = vpack.c.b16 %v6134, %v6126
        %v6639 = vpack.c.b16 %v6135, %v6127
        %v6640 = vpack.c.b16 %v6136, %v6128
        %v6641 = vpack.c.b16 %v6137, %v6129
        %v6642 = vpack.c.b16 %v6146, %v6138
        %v6643 = vpack.c.b16 %v6147, %v6139
        %v6644 = vpack.c.b16 %v6148, %v6140
        %v6645 = vpack.c.b16 %v6149, %v6141
        %v6646 = vpack.c.b16 %v6150, %v6142
        %v6647 = vpack.c.b16 %v6151, %v6143
        %v6648 = vpack.c.b16 %v6152, %v6144
        %v6649 = vpack.c.b16 %v6153, %v6145
        %v6650 = vpack.c.b16 %v6162, %v6154
        %v6651 = vpack.c.b16 %v6163, %v6155
        %v6652 = vpack.c.b16 %v6164, %v6156
        %v6653 = vpack.c.b16 %v6165, %v6157
        %v6654 = vpack.c.b16 %v6166, %v6158
        %v6655 = vpack.c.b16 %v6167, %v6159
        %v6656 = vpack.c.b16 %v6168, %v6160
        %v6657 = vpack.c.b16 %v6169, %v6161
        %v6658 = vpack.c.b16 %v6178, %v6170
        %v6659 = vpack.c.b16 %v6179, %v6171
        %v6660 = vpack.c.b16 %v6180, %v6172
        %v6661 = vpack.c.b16 %v6181, %v6173
        %v6662 = vpack.c.b16 %v6182, %v6174
        %v6663 = vpack.c.b16 %v6183, %v6175
        %v6664 = vpack.c.b16 %v6184, %v6176
        %v6665 = vpack.c.b16 %v6185, %v6177
        %v6666 = vpack.c.b16 %v6194, %v6186
        %v6667 = vpack.c.b16 %v6195, %v6187
        %v6668 = vpack.c.b16 %v6196, %v6188
        %v6669 = vpack.c.b16 %v6197, %v6189
        %v6670 = vpack.c.b16 %v6198, %v6190
        %v6671 = vpack.c.b16 %v6199, %v6191
        %v6672 = vpack.c.b16 %v6200, %v6192
        %v6673 = vpack.c.b16 %v6201, %v6193
        %v6674 = vpack.c.b16 %v6210, %v6202
        %v6675 = vpack.c.b16 %v6211, %v6203
        %v6676 = vpack.c.b16 %v6212, %v6204
        %v6677 = vpack.c.b16 %v6213, %v6205
        %v6678 = vpack.c.b16 %v6214, %v6206
        %v6679 = vpack.c.b16 %v6215, %v6207
        %v6680 = vpack.c.b16 %v6216, %v6208
        %v6681 = vpack.c.b16 %v6217, %v6209
        %v6682 = vpack.c.b16 %v6226, %v6218
        %v6683 = vpack.c.b16 %v6227, %v6219
        %v6684 = vpack.c.b16 %v6228, %v6220
        %v6685 = vpack.c.b16 %v6229, %v6221
        %v6686 = vpack.c.b16 %v6230, %v6222
        %v6687 = vpack.c.b16 %v6231, %v6223
        %v6688 = vpack.c.b16 %v6232, %v6224
        %v6689 = vpack.c.b16 %v6233, %v6225
        %v6690 = vpack.c.b16 %v6242, %v6234
        %v6691 = vpack.c.b16 %v6243, %v6235
        %v6692 = vpack.c.b16 %v6244, %v6236
        %v6693 = vpack.c.b16 %v6245, %v6237
        %v6694 = vpack.c.b16 %v6246, %v6238
        %v6695 = vpack.c.b16 %v6247, %v6239
        %v6696 = vpack.c.b16 %v6248, %v6240
        %v6697 = vpack.c.b16 %v6249, %v6241
        %v6698 = vpack.c.b16 %v6258, %v6250
        %v6699 = vpack.c.b16 %v6259, %v6251
        %v6700 = vpack.c.b16 %v6260, %v6252
        %v6701 = vpack.c.b16 %v6261, %v6253
        %v6702 = vpack.c.b16 %v6262, %v6254
        %v6703 = vpack.c.b16 %v6263, %v6255
        %v6704 = vpack.c.b16 %v6264, %v6256
        %v6705 = vpack.c.b16 %v6265, %v6257
        %v6706 = vpack.c.b16 %v6274, %v6266
        %v6707 = vpack.c.b16 %v6275, %v6267
        %v6708 = vpack.c.b16 %v6276, %v6268
        %v6709 = vpack.c.b16 %v6277, %v6269
        %v6710 = vpack.c.b16 %v6278, %v6270
        %v6711 = vpack.c.b16 %v6279, %v6271
        %v6712 = vpack.c.b16 %v6280, %v6272
        %v6713 = vpack.c.b16 %v6281, %v6273
        %v6714 = vpack.c.b16 %v6290, %v6282
        %v6715 = vpack.c.b16 %v6291, %v6283
        %v6716 = vpack.c.b16 %v6292, %v6284
        %v6717 = vpack.c.b16 %v6293, %v6285
        %v6718 = vpack.c.b16 %v6294, %v6286
        %v6719 = vpack.c.b16 %v6295, %v6287
        %v6720 = vpack.c.b16 %v6296, %v6288
        %v6721 = vpack.c.b16 %v6297, %v6289
        %v6722 = vpack.c.b16 %v6306, %v6298
        %v6723 = vpack.c.b16 %v6307, %v6299
        %v6724 = vpack.c.b16 %v6308, %v6300
        %v6725 = vpack.c.b16 %v6309, %v6301
        %v6726 = vpack.c.b16 %v6310, %v6302
        %v6727 = vpack.c.b16 %v6311, %v6303
        %v6728 = vpack.c.b16 %v6312, %v6304
        %v6729 = vpack.c.b16 %v6313, %v6305
        %v6730 = vpack.c.b16 %v6322, %v6314
        %v6731 = vpack.c.b16 %v6323, %v6315
        %v6732 = vpack.c.b16 %v6324, %v6316
        %v6733 = vpack.c.b16 %v6325, %v6317
        %v6734 = vpack.c.b16 %v6326, %v6318
        %v6735 = vpack.c.b16 %v6327, %v6319
        %v6736 = vpack.c.b16 %v6328, %v6320
        %v6737 = vpack.c.b16 %v6329, %v6321
        %v6738 = vpack.c.b16 %v6338, %v6330
        %v6739 = vpack.c.b16 %v6339, %v6331
        %v6740 = vpack.c.b16 %v6340, %v6332
        %v6741 = vpack.c.b16 %v6341, %v6333
        %v6742 = vpack.c.b16 %v6342, %v6334
        %v6743 = vpack.c.b16 %v6343, %v6335
        %v6744 = vpack.c.b16 %v6344, %v6336
        %v6745 = vpack.c.b16 %v6345, %v6337
        %v6746 = vpack.c.b16 %v6354, %v6346
        %v6747 = vpack.c.b16 %v6355, %v6347
        %v6748 = vpack.c.b16 %v6356, %v6348
        %v6749 = vpack.c.b16 %v6357, %v6349
        %v6750 = vpack.c.b16 %v6358, %v6350
        %v6751 = vpack.c.b16 %v6359, %v6351
        %v6752 = vpack.c.b16 %v6360, %v6352
        %v6753 = vpack.c.b16 %v6361, %v6353
        %v6754 = vpack.c.b16 %v6370, %v6362
        %v6755 = vpack.c.b16 %v6371, %v6363
        %v6756 = vpack.c.b16 %v6372, %v6364
        %v6757 = vpack.c.b16 %v6373, %v6365
        %v6758 = vpack.c.b16 %v6374, %v6366
        %v6759 = vpack.c.b16 %v6375, %v6367
        %v6760 = vpack.c.b16 %v6376, %v6368
        %v6761 = vpack.c.b16 %v6377, %v6369
        %v6762 = vpack.c.b16 %v6386, %v6378
        %v6763 = vpack.c.b16 %v6387, %v6379
        %v6764 = vpack.c.b16 %v6388, %v6380
        %v6765 = vpack.c.b16 %v6389, %v6381
        %v6766 = vpack.c.b16 %v6390, %v6382
        %v6767 = vpack.c.b16 %v6391, %v6383
        %v6768 = vpack.c.b16 %v6392, %v6384
        %v6769 = vpack.c.b16 %v6393, %v6385
        %v6770 = vpack.c.b16 %v6402, %v6394
        %v6771 = vpack.c.b16 %v6403, %v6395
        %v6772 = vpack.c.b16 %v6404, %v6396
        %v6773 = vpack.c.b16 %v6405, %v6397
        %v6774 = vpack.c.b16 %v6406, %v6398
        %v6775 = vpack.c.b16 %v6407, %v6399
        %v6776 = vpack.c.b16 %v6408, %v6400
        %v6777 = vpack.c.b16 %v6409, %v6401
        %v6778 = vpack.c.b16 %v6418, %v6410
        %v6779 = vpack.c.b16 %v6419, %v6411
        %v6780 = vpack.c.b16 %v6420, %v6412
        %v6781 = vpack.c.b16 %v6421, %v6413
        %v6782 = vpack.c.b16 %v6422, %v6414
        %v6783 = vpack.c.b16 %v6423, %v6415
        %v6784 = vpack.c.b16 %v6424, %v6416
        %v6785 = vpack.c.b16 %v6425, %v6417
        %v6786 = vpack.c.b16 %v6434, %v6426
        %v6787 = vpack.c.b16 %v6435, %v6427
        %v6788 = vpack.c.b16 %v6436, %v6428
        %v6789 = vpack.c.b16 %v6437, %v6429
        %v6790 = vpack.c.b16 %v6438, %v6430
        %v6791 = vpack.c.b16 %v6439, %v6431
        %v6792 = vpack.c.b16 %v6440, %v6432
        %v6793 = vpack.c.b16 %v6441, %v6433
        %v6794 = vpack.c.b16 %v6450, %v6442
        %v6795 = vpack.c.b16 %v6451, %v6443
        %v6796 = vpack.c.b16 %v6452, %v6444
        %v6797 = vpack.c.b16 %v6453, %v6445
        %v6798 = vpack.c.b16 %v6454, %v6446
        %v6799 = vpack.c.b16 %v6455, %v6447
        %v6800 = vpack.c.b16 %v6456, %v6448
        %v6801 = vpack.c.b16 %v6457, %v6449
        %v6802 = vpack.c.b16 %v6466, %v6458
        %v6803 = vpack.c.b16 %v6467, %v6459
        %v6804 = vpack.c.b16 %v6468, %v6460
        %v6805 = vpack.c.b16 %v6469, %v6461
        %v6806 = vpack.c.b16 %v6470, %v6462
        %v6807 = vpack.c.b16 %v6471, %v6463
        %v6808 = vpack.c.b16 %v6472, %v6464
        %v6809 = vpack.c.b16 %v6473, %v6465
        %v6810 = vpack.c.b16 %v6482, %v6474
        %v6811 = vpack.c.b16 %v6483, %v6475
        %v6812 = vpack.c.b16 %v6484, %v6476
        %v6813 = vpack.c.b16 %v6485, %v6477
        %v6814 = vpack.c.b16 %v6486, %v6478
        %v6815 = vpack.c.b16 %v6487, %v6479
        %v6816 = vpack.c.b16 %v6488, %v6480
        %v6817 = vpack.c.b16 %v6489, %v6481
        %v6818 = vpack.c.b16 %v6498, %v6490
        %v6819 = vpack.c.b16 %v6499, %v6491
        %v6820 = vpack.c.b16 %v6500, %v6492
        %v6821 = vpack.c.b16 %v6501, %v6493
        %v6822 = vpack.c.b16 %v6502, %v6494
        %v6823 = vpack.c.b16 %v6503, %v6495
        %v6824 = vpack.c.b16 %v6504, %v6496
        %v6825 = vpack.c.b16 %v6505, %v6497
        %v6826 = vpack.c.b16 %v6514, %v6506
        %v6827 = vpack.c.b16 %v6515, %v6507
        %v6828 = vpack.c.b16 %v6516, %v6508
        %v6829 = vpack.c.b16 %v6517, %v6509
        %v6830 = vpack.c.b16 %v6518, %v6510
        %v6831 = vpack.c.b16 %v6519, %v6511
        %v6832 = vpack.c.b16 %v6520, %v6512
        %v6833 = vpack.c.b16 %v6521, %v6513
        %v6834 = vpack.c.b16 %v6530, %v6522
        %v6835 = vpack.c.b16 %v6531, %v6523
        %v6836 = vpack.c.b16 %v6532, %v6524
        %v6837 = vpack.c.b16 %v6533, %v6525
        %v6838 = vpack.c.b16 %v6534, %v6526
        %v6839 = vpack.c.b16 %v6535, %v6527
        %v6840 = vpack.c.b16 %v6536, %v6528
        %v6841 = vpack.c.b16 %v6537, %v6529
        %v6842 = vpack.c.b16 %v6546, %v6538
        %v6843 = vpack.c.b16 %v6547, %v6539
        %v6844 = vpack.c.b16 %v6548, %v6540
        %v6845 = vpack.c.b16 %v6549, %v6541
        %v6846 = vpack.c.b16 %v6550, %v6542
        %v6847 = vpack.c.b16 %v6551, %v6543
        %v6848 = vpack.c.b16 %v6552, %v6544
        %v6849 = vpack.c.b16 %v6553, %v6545
        %v6850 = vpack.c.b16 %v6562, %v6554
        %v6851 = vpack.c.b16 %v6563, %v6555
        %v6852 = vpack.c.b16 %v6564, %v6556
        %v6853 = vpack.c.b16 %v6565, %v6557
        %v6854 = vpack.c.b16 %v6566, %v6558
        %v6855 = vpack.c.b16 %v6567, %v6559
        %v6856 = vpack.c.b16 %v6568, %v6560
        %v6857 = vpack.c.b16 %v6569, %v6561
        %v6858 = vpack.c.b16 %v6578, %v6570
        %v6859 = vpack.c.b16 %v6579, %v6571
        %v6860 = vpack.c.b16 %v6580, %v6572
        %v6861 = vpack.c.b16 %v6581, %v6573
        %v6862 = vpack.c.b16 %v6582, %v6574
        %v6863 = vpack.c.b16 %v6583, %v6575
        %v6864 = vpack.c.b16 %v6584, %v6576
        %v6865 = vpack.c.b16 %v6585, %v6577
        %v6866 = vpack.c.b16 %v6594, %v6586
        %v6867 = vpack.c.b16 %v6595, %v6587
        %v6868 = vpack.c.b16 %v6596, %v6588
        %v6869 = vpack.c.b16 %v6597, %v6589
        %v6870 = vpack.c.b16 %v6598, %v6590
        %v6871 = vpack.c.b16 %v6599, %v6591
        %v6872 = vpack.c.b16 %v6600, %v6592
        %v6873 = vpack.c.b16 %v6601, %v6593
        %v6874 = vpack.c.b16 %v6610, %v6602
        %v6875 = vpack.c.b16 %v6611, %v6603
        %v6876 = vpack.c.b16 %v6612, %v6604
        %v6877 = vpack.c.b16 %v6613, %v6605
        %v6878 = vpack.c.b16 %v6614, %v6606
        %v6879 = vpack.c.b16 %v6615, %v6607
        %v6880 = vpack.c.b16 %v6616, %v6608
        %v6881 = vpack.c.b16 %v6617, %v6609
        %v6882 = vpack.c.b16 %v6626, %v6618
        %v6883 = vpack.c.b16 %v6627, %v6619
        %v6884 = vpack.c.b16 %v6628, %v6620
        %v6885 = vpack.c.b16 %v6629, %v6621
        %v6886 = vpack.c.b16 %v6630, %v6622
        %v6887 = vpack.c.b16 %v6631, %v6623
        %v6888 = vpack.c.b16 %v6632, %v6624
        %v6889 = vpack.c.b16 %v6633, %v6625
        %7146 = vmatprep.subr.bf16.mxu0 %v6691
        %7147 = vmatpush1.bf16.msra.mxu0 %v6690
        %7148 = vmatprep.subr.bf16.mxu0 %v6683
        %7149 = vmatpush1.bf16.msra.mxu0 %v6682
        %7150 = vmatprep.subr.bf16.mxu0 %v6675
        %7151 = vmatpush1.bf16.msra.mxu0 %v6674
        %7152 = vmatprep.subr.bf16.mxu0 %v6667
        %7153 = vmatpush1.bf16.msra.mxu0 %v6666
        %7154 = vmatprep.subr.bf16.mxu0 %v6659
        %7155 = vmatpush1.bf16.msra.mxu0 %v6658
        %7156 = vmatprep.subr.bf16.mxu0 %v6651
        %7157 = vmatpush1.bf16.msra.mxu0 %v6650
        %7158 = vmatprep.subr.bf16.mxu0 %v6643
        %7159 = vmatpush1.bf16.msra.mxu0 %v6642
        %7160 = vmatprep.subr.bf16.mxu0 %v6635
        %7161 = vmatpush1.bf16.msra.mxu0 %v6634
        %7162 = vmatprep.subr.bf16.mxu0 %v6755
        %7163 = vmatpush2.bf16.msra.mxu0 %v6754
        %7164 = vmatprep.subr.bf16.mxu0 %v6747
        %7165 = vmatpush2.bf16.msra.mxu0 %v6746
        %7166 = vmatprep.subr.bf16.mxu0 %v6739
        %7167 = vmatpush2.bf16.msra.mxu0 %v6738
        %7168 = vmatprep.subr.bf16.mxu0 %v6731
        %7169 = vmatpush2.bf16.msra.mxu0 %v6730
        %7170 = vmatprep.subr.bf16.mxu0 %v6723
        %7171 = vmatpush2.bf16.msra.mxu0 %v6722
        %7172 = vmatprep.subr.bf16.mxu0 %v6715
        %7173 = vmatpush2.bf16.msra.mxu0 %v6714
        %7174 = vmatprep.subr.bf16.mxu0 %v6707
        %7175 = vmatpush2.bf16.msra.mxu0 %v6706
        %7176 = vmatprep.subr.bf16.mxu0 %v6699
        %7177 = vmatpush2.bf16.msra.mxu0 %v6698
        %7178 = vmatprep.mubr.bf16.mxu0 %v5571
        %7179 = vmatmul.mubr.bf16.gmra.mxu0 %v5570
        %v7180 = vpop.f32.mrf.mxu0
        %v7181 = vadd.f32 %v5837, %v7180
        %v7182 = vpop.f32.mrf.mxu0
        %v7183 = vadd.f32 %v5841, %v7182
        %v7184 = vpop.f32.mrf.mxu0
        %v7185 = vadd.f32 %v5837, %v7184
        %v7186 = vpop.f32.mrf.mxu0
        %v7187 = vadd.f32 %v5841, %v7186
        %7188 = vmatprep.mubr.bf16.mxu0 %v5575
        %7189 = vmatmul.mubr.bf16.gmra.mxu0 %v5574
        %v7190 = vpop.f32.mrf.mxu0
        %v7191 = vadd.f32 %v5837, %v7190
        %v7192 = vpop.f32.mrf.mxu0
        %v7193 = vadd.f32 %v5841, %v7192
        %v7194 = vpop.f32.mrf.mxu0
        %v7195 = vadd.f32 %v5837, %v7194
        %v7196 = vpop.f32.mrf.mxu0
        %v7197 = vadd.f32 %v5841, %v7196
        %7198 = vdwg.mxu0
        %7199 = vmatprep.subr.bf16.mxu0 %v6819
        %7200 = vmatpush1.bf16.msra.mxu0 %v6818
        %7201 = vmatprep.subr.bf16.mxu0 %v6811
        %7202 = vmatpush1.bf16.msra.mxu0 %v6810
        %7203 = vmatprep.subr.bf16.mxu0 %v6803
        %7204 = vmatpush1.bf16.msra.mxu0 %v6802
        %7205 = vmatprep.subr.bf16.mxu0 %v6795
        %7206 = vmatpush1.bf16.msra.mxu0 %v6794
        %7207 = vmatprep.subr.bf16.mxu0 %v6787
        %7208 = vmatpush1.bf16.msra.mxu0 %v6786
        %7209 = vmatprep.subr.bf16.mxu0 %v6779
        %7210 = vmatpush1.bf16.msra.mxu0 %v6778
        %7211 = vmatprep.subr.bf16.mxu0 %v6771
        %7212 = vmatpush1.bf16.msra.mxu0 %v6770
        %7213 = vmatprep.subr.bf16.mxu0 %v6763
        %7214 = vmatpush1.bf16.msra.mxu0 %v6762
        %7215 = vmatprep.subr.bf16.mxu0 %v6883
        %7216 = vmatpush2.bf16.msra.mxu0 %v6882
        %7217 = vmatprep.subr.bf16.mxu0 %v6875
        %7218 = vmatpush2.bf16.msra.mxu0 %v6874
        %7219 = vmatprep.subr.bf16.mxu0 %v6867
        %7220 = vmatpush2.bf16.msra.mxu0 %v6866
        %7221 = vmatprep.subr.bf16.mxu0 %v6859
        %7222 = vmatpush2.bf16.msra.mxu0 %v6858
        %7223 = vmatprep.subr.bf16.mxu0 %v6851
        %7224 = vmatpush2.bf16.msra.mxu0 %v6850
        %7225 = vmatprep.subr.bf16.mxu0 %v6843
        %7226 = vmatpush2.bf16.msra.mxu0 %v6842
        %7227 = vmatprep.subr.bf16.mxu0 %v6835
        %7228 = vmatpush2.bf16.msra.mxu0 %v6834
        %7229 = vmatprep.subr.bf16.mxu0 %v6827
        %7230 = vmatpush2.bf16.msra.mxu0 %v6826
        %7231 = vmatprep.mubr.bf16.mxu0 %v5573
        %7232 = vmatmul.mubr.bf16.gmra.mxu0 %v5572
        %v7233 = vpop.f32.mrf.mxu0
        %v7234 = vadd.f32 %v7181, %v7233
        %v7235 = vpop.f32.mrf.mxu0
        %v7236 = vadd.f32 %v7183, %v7235
        %v7237 = vpop.f32.mrf.mxu0
        %v7238 = vadd.f32 %v7185, %v7237
        %v7239 = vpop.f32.mrf.mxu0
        %v7240 = vadd.f32 %v7187, %v7239
        %7241 = vmatprep.mubr.bf16.mxu0 %v5577
        %7242 = vmatmul.mubr.bf16.gmra.mxu0 %v5576
        %v7243 = vpop.f32.mrf.mxu0
        %v7244 = vadd.f32 %v7191, %v7243
        %v7245 = vpop.f32.mrf.mxu0
        %v7246 = vadd.f32 %v7193, %v7245
        %v7247 = vpop.f32.mrf.mxu0
        %v7248 = vadd.f32 %v7195, %v7247
        %v7249 = vpop.f32.mrf.mxu0
        %v7250 = vadd.f32 %v7197, %v7249
        %7251 = vdwg.mxu0
        %7252 = vmatprep.subr.bf16.mxu0 %v6693
        %7253 = vmatpush1.bf16.msra.mxu0 %v6692
        %7254 = vmatprep.subr.bf16.mxu0 %v6685
        %7255 = vmatpush1.bf16.msra.mxu0 %v6684
        %7256 = vmatprep.subr.bf16.mxu0 %v6677
        %7257 = vmatpush1.bf16.msra.mxu0 %v6676
        %7258 = vmatprep.subr.bf16.mxu0 %v6669
        %7259 = vmatpush1.bf16.msra.mxu0 %v6668
        %7260 = vmatprep.subr.bf16.mxu0 %v6661
        %7261 = vmatpush1.bf16.msra.mxu0 %v6660
        %7262 = vmatprep.subr.bf16.mxu0 %v6653
        %7263 = vmatpush1.bf16.msra.mxu0 %v6652
        %7264 = vmatprep.subr.bf16.mxu0 %v6645
        %7265 = vmatpush1.bf16.msra.mxu0 %v6644
        %7266 = vmatprep.subr.bf16.mxu0 %v6637
        %7267 = vmatpush1.bf16.msra.mxu0 %v6636
        %7268 = vmatprep.subr.bf16.mxu0 %v6757
        %7269 = vmatpush2.bf16.msra.mxu0 %v6756
        %7270 = vmatprep.subr.bf16.mxu0 %v6749
        %7271 = vmatpush2.bf16.msra.mxu0 %v6748
        %7272 = vmatprep.subr.bf16.mxu0 %v6741
        %7273 = vmatpush2.bf16.msra.mxu0 %v6740
        %7274 = vmatprep.subr.bf16.mxu0 %v6733
        %7275 = vmatpush2.bf16.msra.mxu0 %v6732
        %7276 = vmatprep.subr.bf16.mxu0 %v6725
        %7277 = vmatpush2.bf16.msra.mxu0 %v6724
        %7278 = vmatprep.subr.bf16.mxu0 %v6717
        %7279 = vmatpush2.bf16.msra.mxu0 %v6716
        %7280 = vmatprep.subr.bf16.mxu0 %v6709
        %7281 = vmatpush2.bf16.msra.mxu0 %v6708
        %7282 = vmatprep.subr.bf16.mxu0 %v6701
        %7283 = vmatpush2.bf16.msra.mxu0 %v6700
        %7284 = vmatprep.mubr.bf16.mxu0 %v5571
        %7285 = vmatmul.mubr.bf16.gmra.mxu0 %v5570
        %v7286 = vpop.f32.mrf.mxu0
        %v7287 = vadd.f32 %v5845, %v7286
        %v7288 = vpop.f32.mrf.mxu0
        %v7289 = vadd.f32 %v5849, %v7288
        %v7290 = vpop.f32.mrf.mxu0
        %v7291 = vadd.f32 %v5845, %v7290
        %v7292 = vpop.f32.mrf.mxu0
        %v7293 = vadd.f32 %v5849, %v7292
        %7294 = vmatprep.mubr.bf16.mxu0 %v5575
        %7295 = vmatmul.mubr.bf16.gmra.mxu0 %v5574
        %v7296 = vpop.f32.mrf.mxu0
        %v7297 = vadd.f32 %v5845, %v7296
        %v7298 = vpop.f32.mrf.mxu0
        %v7299 = vadd.f32 %v5849, %v7298
        %v7300 = vpop.f32.mrf.mxu0
        %v7301 = vadd.f32 %v5845, %v7300
        %v7302 = vpop.f32.mrf.mxu0
        %v7303 = vadd.f32 %v5849, %v7302
        %7304 = vdwg.mxu0
        %7305 = vmatprep.subr.bf16.mxu0 %v6821
        %7306 = vmatpush1.bf16.msra.mxu0 %v6820
        %7307 = vmatprep.subr.bf16.mxu0 %v6813
        %7308 = vmatpush1.bf16.msra.mxu0 %v6812
        %7309 = vmatprep.subr.bf16.mxu0 %v6805
        %7310 = vmatpush1.bf16.msra.mxu0 %v6804
        %7311 = vmatprep.subr.bf16.mxu0 %v6797
        %7312 = vmatpush1.bf16.msra.mxu0 %v6796
        %7313 = vmatprep.subr.bf16.mxu0 %v6789
        %7314 = vmatpush1.bf16.msra.mxu0 %v6788
        %7315 = vmatprep.subr.bf16.mxu0 %v6781
        %7316 = vmatpush1.bf16.msra.mxu0 %v6780
        %7317 = vmatprep.subr.bf16.mxu0 %v6773
        %7318 = vmatpush1.bf16.msra.mxu0 %v6772
        %7319 = vmatprep.subr.bf16.mxu0 %v6765
        %7320 = vmatpush1.bf16.msra.mxu0 %v6764
        %7321 = vmatprep.subr.bf16.mxu0 %v6885
        %7322 = vmatpush2.bf16.msra.mxu0 %v6884
        %7323 = vmatprep.subr.bf16.mxu0 %v6877
        %7324 = vmatpush2.bf16.msra.mxu0 %v6876
        %7325 = vmatprep.subr.bf16.mxu0 %v6869
        %7326 = vmatpush2.bf16.msra.mxu0 %v6868
        %7327 = vmatprep.subr.bf16.mxu0 %v6861
        %7328 = vmatpush2.bf16.msra.mxu0 %v6860
        %7329 = vmatprep.subr.bf16.mxu0 %v6853
        %7330 = vmatpush2.bf16.msra.mxu0 %v6852
        %7331 = vmatprep.subr.bf16.mxu0 %v6845
        %7332 = vmatpush2.bf16.msra.mxu0 %v6844
        %7333 = vmatprep.subr.bf16.mxu0 %v6837
        %7334 = vmatpush2.bf16.msra.mxu0 %v6836
        %7335 = vmatprep.subr.bf16.mxu0 %v6829
        %7336 = vmatpush2.bf16.msra.mxu0 %v6828
        %7337 = vmatprep.mubr.bf16.mxu0 %v5573
        %7338 = vmatmul.mubr.bf16.gmra.mxu0 %v5572
        %v7339 = vpop.f32.mrf.mxu0
        %v7340 = vadd.f32 %v7287, %v7339
        %v7341 = vpop.f32.mrf.mxu0
        %v7342 = vadd.f32 %v7289, %v7341
        %v7343 = vpop.f32.mrf.mxu0
        %v7344 = vadd.f32 %v7291, %v7343
        %v7345 = vpop.f32.mrf.mxu0
        %v7346 = vadd.f32 %v7293, %v7345
        %7347 = vmatprep.mubr.bf16.mxu0 %v5577
        %7348 = vmatmul.mubr.bf16.gmra.mxu0 %v5576
        %v7349 = vpop.f32.mrf.mxu0
        %v7350 = vadd.f32 %v7297, %v7349
        %v7351 = vpop.f32.mrf.mxu0
        %v7352 = vadd.f32 %v7299, %v7351
        %v7353 = vpop.f32.mrf.mxu0
        %v7354 = vadd.f32 %v7301, %v7353
        %v7355 = vpop.f32.mrf.mxu0
        %v7356 = vadd.f32 %v7303, %v7355
        %7357 = vdwg.mxu0
        %7358 = vmatprep.subr.bf16.mxu0 %v6695
        %7359 = vmatpush1.bf16.msra.mxu0 %v6694
        %7360 = vmatprep.subr.bf16.mxu0 %v6687
        %7361 = vmatpush1.bf16.msra.mxu0 %v6686
        %7362 = vmatprep.subr.bf16.mxu0 %v6679
        %7363 = vmatpush1.bf16.msra.mxu0 %v6678
        %7364 = vmatprep.subr.bf16.mxu0 %v6671
        %7365 = vmatpush1.bf16.msra.mxu0 %v6670
        %7366 = vmatprep.subr.bf16.mxu0 %v6663
        %7367 = vmatpush1.bf16.msra.mxu0 %v6662
        %7368 = vmatprep.subr.bf16.mxu0 %v6655
        %7369 = vmatpush1.bf16.msra.mxu0 %v6654
        %7370 = vmatprep.subr.bf16.mxu0 %v6647
        %7371 = vmatpush1.bf16.msra.mxu0 %v6646
        %7372 = vmatprep.subr.bf16.mxu0 %v6639
        %7373 = vmatpush1.bf16.msra.mxu0 %v6638
        %7374 = vmatprep.subr.bf16.mxu0 %v6759
        %7375 = vmatpush2.bf16.msra.mxu0 %v6758
        %7376 = vmatprep.subr.bf16.mxu0 %v6751
        %7377 = vmatpush2.bf16.msra.mxu0 %v6750
        %7378 = vmatprep.subr.bf16.mxu0 %v6743
        %7379 = vmatpush2.bf16.msra.mxu0 %v6742
        %7380 = vmatprep.subr.bf16.mxu0 %v6735
        %7381 = vmatpush2.bf16.msra.mxu0 %v6734
        %7382 = vmatprep.subr.bf16.mxu0 %v6727
        %7383 = vmatpush2.bf16.msra.mxu0 %v6726
        %7384 = vmatprep.subr.bf16.mxu0 %v6719
        %7385 = vmatpush2.bf16.msra.mxu0 %v6718
        %7386 = vmatprep.subr.bf16.mxu0 %v6711
        %7387 = vmatpush2.bf16.msra.mxu0 %v6710
        %7388 = vmatprep.subr.bf16.mxu0 %v6703
        %7389 = vmatpush2.bf16.msra.mxu0 %v6702
        %7390 = vmatprep.mubr.bf16.mxu0 %v5571
        %7391 = vmatmul.mubr.bf16.gmra.mxu0 %v5570
        %v7392 = vpop.f32.mrf.mxu0
        %v7393 = vadd.f32 %v5853, %v7392
        %v7394 = vpop.f32.mrf.mxu0
        %v7395 = vadd.f32 %v5857, %v7394
        %v7396 = vpop.f32.mrf.mxu0
        %v7397 = vadd.f32 %v5853, %v7396
        %v7398 = vpop.f32.mrf.mxu0
        %v7399 = vadd.f32 %v5857, %v7398
        %7400 = vmatprep.mubr.bf16.mxu0 %v5575
        %7401 = vmatmul.mubr.bf16.gmra.mxu0 %v5574
        %v7402 = vpop.f32.mrf.mxu0
        %v7403 = vadd.f32 %v5853, %v7402
        %v7404 = vpop.f32.mrf.mxu0
        %v7405 = vadd.f32 %v5857, %v7404
        %v7406 = vpop.f32.mrf.mxu0
        %v7407 = vadd.f32 %v5853, %v7406
        %v7408 = vpop.f32.mrf.mxu0
        %v7409 = vadd.f32 %v5857, %v7408
        %7410 = vdwg.mxu0
        %7411 = vmatprep.subr.bf16.mxu0 %v6823
        %7412 = vmatpush1.bf16.msra.mxu0 %v6822
        %7413 = vmatprep.subr.bf16.mxu0 %v6815
        %7414 = vmatpush1.bf16.msra.mxu0 %v6814
        %7415 = vmatprep.subr.bf16.mxu0 %v6807
        %7416 = vmatpush1.bf16.msra.mxu0 %v6806
        %7417 = vmatprep.subr.bf16.mxu0 %v6799
        %7418 = vmatpush1.bf16.msra.mxu0 %v6798
        %7419 = vmatprep.subr.bf16.mxu0 %v6791
        %7420 = vmatpush1.bf16.msra.mxu0 %v6790
        %7421 = vmatprep.subr.bf16.mxu0 %v6783
        %7422 = vmatpush1.bf16.msra.mxu0 %v6782
        %7423 = vmatprep.subr.bf16.mxu0 %v6775
        %7424 = vmatpush1.bf16.msra.mxu0 %v6774
        %7425 = vmatprep.subr.bf16.mxu0 %v6767
        %7426 = vmatpush1.bf16.msra.mxu0 %v6766
        %7427 = vmatprep.subr.bf16.mxu0 %v6887
        %7428 = vmatpush2.bf16.msra.mxu0 %v6886
        %7429 = vmatprep.subr.bf16.mxu0 %v6879
        %7430 = vmatpush2.bf16.msra.mxu0 %v6878
        %7431 = vmatprep.subr.bf16.mxu0 %v6871
        %7432 = vmatpush2.bf16.msra.mxu0 %v6870
        %7433 = vmatprep.subr.bf16.mxu0 %v6863
        %7434 = vmatpush2.bf16.msra.mxu0 %v6862
        %7435 = vmatprep.subr.bf16.mxu0 %v6855
        %7436 = vmatpush2.bf16.msra.mxu0 %v6854
        %7437 = vmatprep.subr.bf16.mxu0 %v6847
        %7438 = vmatpush2.bf16.msra.mxu0 %v6846
        %7439 = vmatprep.subr.bf16.mxu0 %v6839
        %7440 = vmatpush2.bf16.msra.mxu0 %v6838
        %7441 = vmatprep.subr.bf16.mxu0 %v6831
        %7442 = vmatpush2.bf16.msra.mxu0 %v6830
        %7443 = vmatprep.mubr.bf16.mxu0 %v5573
        %7444 = vmatmul.mubr.bf16.gmra.mxu0 %v5572
        %v7445 = vpop.f32.mrf.mxu0
        %v7446 = vadd.f32 %v7393, %v7445
        %v7447 = vpop.f32.mrf.mxu0
        %v7448 = vadd.f32 %v7395, %v7447
        %v7449 = vpop.f32.mrf.mxu0
        %v7450 = vadd.f32 %v7397, %v7449
        %v7451 = vpop.f32.mrf.mxu0
        %v7452 = vadd.f32 %v7399, %v7451
        %7453 = vmatprep.mubr.bf16.mxu0 %v5577
        %7454 = vmatmul.mubr.bf16.gmra.mxu0 %v5576
        %v7455 = vpop.f32.mrf.mxu0
        %v7456 = vadd.f32 %v7403, %v7455
        %v7457 = vpop.f32.mrf.mxu0
        %v7458 = vadd.f32 %v7405, %v7457
        %v7459 = vpop.f32.mrf.mxu0
        %v7460 = vadd.f32 %v7407, %v7459
        %v7461 = vpop.f32.mrf.mxu0
        %v7462 = vadd.f32 %v7409, %v7461
        %7463 = vdwg.mxu0
        %7464 = vmatprep.subr.bf16.mxu0 %v6697
        %7465 = vmatpush1.bf16.msra.mxu0 %v6696
        %7466 = vmatprep.subr.bf16.mxu0 %v6689
        %7467 = vmatpush1.bf16.msra.mxu0 %v6688
        %7468 = vmatprep.subr.bf16.mxu0 %v6681
        %7469 = vmatpush1.bf16.msra.mxu0 %v6680
        %7470 = vmatprep.subr.bf16.mxu0 %v6673
        %7471 = vmatpush1.bf16.msra.mxu0 %v6672
        %7472 = vmatprep.subr.bf16.mxu0 %v6665
        %7473 = vmatpush1.bf16.msra.mxu0 %v6664
        %7474 = vmatprep.subr.bf16.mxu0 %v6657
        %7475 = vmatpush1.bf16.msra.mxu0 %v6656
        %7476 = vmatprep.subr.bf16.mxu0 %v6649
        %7477 = vmatpush1.bf16.msra.mxu0 %v6648
        %7478 = vmatprep.subr.bf16.mxu0 %v6641
        %7479 = vmatpush1.bf16.msra.mxu0 %v6640
        %7480 = vmatprep.subr.bf16.mxu0 %v6761
        %7481 = vmatpush2.bf16.msra.mxu0 %v6760
        %7482 = vmatprep.subr.bf16.mxu0 %v6753
        %7483 = vmatpush2.bf16.msra.mxu0 %v6752
        %7484 = vmatprep.subr.bf16.mxu0 %v6745
        %7485 = vmatpush2.bf16.msra.mxu0 %v6744
        %7486 = vmatprep.subr.bf16.mxu0 %v6737
        %7487 = vmatpush2.bf16.msra.mxu0 %v6736
        %7488 = vmatprep.subr.bf16.mxu0 %v6729
        %7489 = vmatpush2.bf16.msra.mxu0 %v6728
        %7490 = vmatprep.subr.bf16.mxu0 %v6721
        %7491 = vmatpush2.bf16.msra.mxu0 %v6720
        %7492 = vmatprep.subr.bf16.mxu0 %v6713
        %7493 = vmatpush2.bf16.msra.mxu0 %v6712
        %7494 = vmatprep.subr.bf16.mxu0 %v6705
        %7495 = vmatpush2.bf16.msra.mxu0 %v6704
        %7496 = vmatprep.mubr.bf16.mxu0 %v5571
        %7497 = vmatmul.mubr.bf16.gmra.mxu0 %v5570
        %v7498 = vpop.f32.mrf.mxu0
        %v7499 = vadd.f32 %v5861, %v7498
        %v7500 = vpop.f32.mrf.mxu0
        %v7501 = vadd.f32 %v5865, %v7500
        %v7502 = vpop.f32.mrf.mxu0
        %v7503 = vadd.f32 %v5861, %v7502
        %v7504 = vpop.f32.mrf.mxu0
        %v7505 = vadd.f32 %v5865, %v7504
        %7506 = vmatprep.mubr.bf16.mxu0 %v5575
        %7507 = vmatmul.mubr.bf16.gmra.mxu0 %v5574
        %v7508 = vpop.f32.mrf.mxu0
        %v7509 = vadd.f32 %v5861, %v7508
        %v7510 = vpop.f32.mrf.mxu0
        %v7511 = vadd.f32 %v5865, %v7510
        %v7512 = vpop.f32.mrf.mxu0
        %v7513 = vadd.f32 %v5861, %v7512
        %v7514 = vpop.f32.mrf.mxu0
        %v7515 = vadd.f32 %v5865, %v7514
        %7516 = vdwg.mxu0
        %7517 = vmatprep.subr.bf16.mxu0 %v6825
        %7518 = vmatpush1.bf16.msra.mxu0 %v6824
        %7519 = vmatprep.subr.bf16.mxu0 %v6817
        %7520 = vmatpush1.bf16.msra.mxu0 %v6816
        %7521 = vmatprep.subr.bf16.mxu0 %v6809
        %7522 = vmatpush1.bf16.msra.mxu0 %v6808
        %7523 = vmatprep.subr.bf16.mxu0 %v6801
        %7524 = vmatpush1.bf16.msra.mxu0 %v6800
        %7525 = vmatprep.subr.bf16.mxu0 %v6793
        %7526 = vmatpush1.bf16.msra.mxu0 %v6792
        %7527 = vmatprep.subr.bf16.mxu0 %v6785
        %7528 = vmatpush1.bf16.msra.mxu0 %v6784
        %7529 = vmatprep.subr.bf16.mxu0 %v6777
        %7530 = vmatpush1.bf16.msra.mxu0 %v6776
        %7531 = vmatprep.subr.bf16.mxu0 %v6769
        %7532 = vmatpush1.bf16.msra.mxu0 %v6768
        %7533 = vmatprep.subr.bf16.mxu0 %v6889
        %7534 = vmatpush2.bf16.msra.mxu0 %v6888
        %7535 = vmatprep.subr.bf16.mxu0 %v6881
        %7536 = vmatpush2.bf16.msra.mxu0 %v6880
        %7537 = vmatprep.subr.bf16.mxu0 %v6873
        %7538 = vmatpush2.bf16.msra.mxu0 %v6872
        %7539 = vmatprep.subr.bf16.mxu0 %v6865
        %7540 = vmatpush2.bf16.msra.mxu0 %v6864
        %7541 = vmatprep.subr.bf16.mxu0 %v6857
        %7542 = vmatpush2.bf16.msra.mxu0 %v6856
        %7543 = vmatprep.subr.bf16.mxu0 %v6849
        %7544 = vmatpush2.bf16.msra.mxu0 %v6848
        %7545 = vmatprep.subr.bf16.mxu0 %v6841
        %7546 = vmatpush2.bf16.msra.mxu0 %v6840
        %7547 = vmatprep.subr.bf16.mxu0 %v6833
        %7548 = vmatpush2.bf16.msra.mxu0 %v6832
        %7549 = vmatprep.mubr.bf16.mxu0 %v5573
        %7550 = vmatmul.mubr.bf16.gmra.mxu0 %v5572
        %v7551 = vpop.f32.mrf.mxu0
        %v7552 = vadd.f32 %v7499, %v7551
        %v7553 = vpop.f32.mrf.mxu0
        %v7554 = vadd.f32 %v7501, %v7553
        %v7555 = vpop.f32.mrf.mxu0
        %v7556 = vadd.f32 %v7503, %v7555
        %v7557 = vpop.f32.mrf.mxu0
        %v7558 = vadd.f32 %v7505, %v7557
        %7559 = vmatprep.mubr.bf16.mxu0 %v5577
        %7560 = vmatmul.mubr.bf16.gmra.mxu0 %v5576
        %v7561 = vpop.f32.mrf.mxu0
        %v7562 = vadd.f32 %v7509, %v7561
        %v7563 = vpop.f32.mrf.mxu0
        %v7564 = vadd.f32 %v7511, %v7563
        %v7565 = vpop.f32.mrf.mxu0
        %v7566 = vadd.f32 %v7513, %v7565
        %v7567 = vpop.f32.mrf.mxu0
        %v7568 = vadd.f32 %v7515, %v7567
        %7569 = vdwg.mxu0
        %v7570 = vmul.f32 %v7234, 0.5
        %v7571 = vmul.f32 %v7236, 0.5
        %v7572 = vmul.f32 %v7340, 0.5
        %v7573 = vmul.f32 %v7342, 0.5
        %v7574 = vmul.f32 %v7446, 0.5
        %v7575 = vmul.f32 %v7448, 0.5
        %v7576 = vmul.f32 %v7552, 0.5
        %v7577 = vmul.f32 %v7554, 0.5
        %v7578 = vmul.f32 %v7238, 0.5
        %v7579 = vmul.f32 %v7240, 0.5
        %v7580 = vmul.f32 %v7344, 0.5
        %v7581 = vmul.f32 %v7346, 0.5
        %v7582 = vmul.f32 %v7450, 0.5
        %v7583 = vmul.f32 %v7452, 0.5
        %v7584 = vmul.f32 %v7556, 0.5
        %v7585 = vmul.f32 %v7558, 0.5
        %v7586 = vmul.f32 %v7244, 0.5
        %v7587 = vmul.f32 %v7246, 0.5
        %v7588 = vmul.f32 %v7350, 0.5
        %v7589 = vmul.f32 %v7352, 0.5
        %v7590 = vmul.f32 %v7456, 0.5
        %v7591 = vmul.f32 %v7458, 0.5
        %v7592 = vmul.f32 %v7562, 0.5
        %v7593 = vmul.f32 %v7564, 0.5
        %v7594 = vmul.f32 %v7248, 0.5
        %v7595 = vmul.f32 %v7250, 0.5
        %v7596 = vmul.f32 %v7354, 0.5
        %v7597 = vmul.f32 %v7356, 0.5
        %v7598 = vmul.f32 %v7460, 0.5
        %v7599 = vmul.f32 %v7462, 0.5
        %v7600 = vmul.f32 %v7566, 0.5
        %v7601 = vmul.f32 %v7568, 0.5
        %v7602 = vmul.f32 %v7234, 0.044715
        %v7603 = vmul.f32 %v7236, 0.044715
        %v7604 = vmul.f32 %v7340, 0.044715
        %v7605 = vmul.f32 %v7342, 0.044715
        %v7606 = vmul.f32 %v7446, 0.044715
        %v7607 = vmul.f32 %v7448, 0.044715
        %v7608 = vmul.f32 %v7552, 0.044715
        %v7609 = vmul.f32 %v7554, 0.044715
        %v7610 = vmul.f32 %v7238, 0.044715
        %v7611 = vmul.f32 %v7240, 0.044715
        %v7612 = vmul.f32 %v7344, 0.044715
        %v7613 = vmul.f32 %v7346, 0.044715
        %v7614 = vmul.f32 %v7450, 0.044715
        %v7615 = vmul.f32 %v7452, 0.044715
        %v7616 = vmul.f32 %v7556, 0.044715
        %v7617 = vmul.f32 %v7558, 0.044715
        %v7618 = vmul.f32 %v7244, 0.044715
        %v7619 = vmul.f32 %v7246, 0.044715
        %v7620 = vmul.f32 %v7350, 0.044715
        %v7621 = vmul.f32 %v7352, 0.044715
        %v7622 = vmul.f32 %v7456, 0.044715
        %v7623 = vmul.f32 %v7458, 0.044715
        %v7624 = vmul.f32 %v7562, 0.044715
        %v7625 = vmul.f32 %v7564, 0.044715
        %v7626 = vmul.f32 %v7248, 0.044715
        %v7627 = vmul.f32 %v7250, 0.044715
        %v7628 = vmul.f32 %v7354, 0.044715
        %v7629 = vmul.f32 %v7356, 0.044715
        %v7630 = vmul.f32 %v7460, 0.044715
        %v7631 = vmul.f32 %v7462, 0.044715
        %v7632 = vmul.f32 %v7566, 0.044715
        %v7633 = vmul.f32 %v7568, 0.044715
        %v7634 = vmul.f32 %v7602, %v7234
        %v7635 = vmul.f32 %v7603, %v7236
        %v7636 = vmul.f32 %v7604, %v7340
        %v7637 = vmul.f32 %v7605, %v7342
        %v7638 = vmul.f32 %v7606, %v7446
        %v7639 = vmul.f32 %v7607, %v7448
        %v7640 = vmul.f32 %v7608, %v7552
        %v7641 = vmul.f32 %v7609, %v7554
        %v7642 = vmul.f32 %v7610, %v7238
        %v7643 = vmul.f32 %v7611, %v7240
        %v7644 = vmul.f32 %v7612, %v7344
        %v7645 = vmul.f32 %v7613, %v7346
        %v7646 = vmul.f32 %v7614, %v7450
        %v7647 = vmul.f32 %v7615, %v7452
        %v7648 = vmul.f32 %v7616, %v7556
        %v7649 = vmul.f32 %v7617, %v7558
        %v7650 = vmul.f32 %v7618, %v7244
        %v7651 = vmul.f32 %v7619, %v7246
        %v7652 = vmul.f32 %v7620, %v7350
        %v7653 = vmul.f32 %v7621, %v7352
        %v7654 = vmul.f32 %v7622, %v7456
        %v7655 = vmul.f32 %v7623, %v7458
        %v7656 = vmul.f32 %v7624, %v7562
        %v7657 = vmul.f32 %v7625, %v7564
        %v7658 = vmul.f32 %v7626, %v7248
        %v7659 = vmul.f32 %v7627, %v7250
        %v7660 = vmul.f32 %v7628, %v7354
        %v7661 = vmul.f32 %v7629, %v7356
        %v7662 = vmul.f32 %v7630, %v7460
        %v7663 = vmul.f32 %v7631, %v7462
        %v7664 = vmul.f32 %v7632, %v7566
        %v7665 = vmul.f32 %v7633, %v7568
        %v7666 = vmul.f32 %v7634, %v7234
        %v7667 = vmul.f32 %v7635, %v7236
        %v7668 = vmul.f32 %v7636, %v7340
        %v7669 = vmul.f32 %v7637, %v7342
        %v7670 = vmul.f32 %v7638, %v7446
        %v7671 = vmul.f32 %v7639, %v7448
        %v7672 = vmul.f32 %v7640, %v7552
        %v7673 = vmul.f32 %v7641, %v7554
        %v7674 = vmul.f32 %v7642, %v7238
        %v7675 = vmul.f32 %v7643, %v7240
        %v7676 = vmul.f32 %v7644, %v7344
        %v7677 = vmul.f32 %v7645, %v7346
        %v7678 = vmul.f32 %v7646, %v7450
        %v7679 = vmul.f32 %v7647, %v7452
        %v7680 = vmul.f32 %v7648, %v7556
        %v7681 = vmul.f32 %v7649, %v7558
        %v7682 = vmul.f32 %v7650, %v7244
        %v7683 = vmul.f32 %v7651, %v7246
        %v7684 = vmul.f32 %v7652, %v7350
        %v7685 = vmul.f32 %v7653, %v7352
        %v7686 = vmul.f32 %v7654, %v7456
        %v7687 = vmul.f32 %v7655, %v7458
        %v7688 = vmul.f32 %v7656, %v7562
        %v7689 = vmul.f32 %v7657, %v7564
        %v7690 = vmul.f32 %v7658, %v7248
        %v7691 = vmul.f32 %v7659, %v7250
        %v7692 = vmul.f32 %v7660, %v7354
        %v7693 = vmul.f32 %v7661, %v7356
        %v7694 = vmul.f32 %v7662, %v7460
        %v7695 = vmul.f32 %v7663, %v7462
        %v7696 = vmul.f32 %v7664, %v7566
        %v7697 = vmul.f32 %v7665, %v7568
        %v7698 = vadd.f32 %v7234, %v7666
        %v7699 = vadd.f32 %v7236, %v7667
        %v7700 = vadd.f32 %v7340, %v7668
        %v7701 = vadd.f32 %v7342, %v7669
        %v7702 = vadd.f32 %v7446, %v7670
        %v7703 = vadd.f32 %v7448, %v7671
        %v7704 = vadd.f32 %v7552, %v7672
        %v7705 = vadd.f32 %v7554, %v7673
        %v7706 = vadd.f32 %v7238, %v7674
        %v7707 = vadd.f32 %v7240, %v7675
        %v7708 = vadd.f32 %v7344, %v7676
        %v7709 = vadd.f32 %v7346, %v7677
        %v7710 = vadd.f32 %v7450, %v7678
        %v7711 = vadd.f32 %v7452, %v7679
        %v7712 = vadd.f32 %v7556, %v7680
        %v7713 = vadd.f32 %v7558, %v7681
        %v7714 = vadd.f32 %v7244, %v7682
        %v7715 = vadd.f32 %v7246, %v7683
        %v7716 = vadd.f32 %v7350, %v7684
        %v7717 = vadd.f32 %v7352, %v7685
        %v7718 = vadd.f32 %v7456, %v7686
        %v7719 = vadd.f32 %v7458, %v7687
        %v7720 = vadd.f32 %v7562, %v7688
        %v7721 = vadd.f32 %v7564, %v7689
        %v7722 = vadd.f32 %v7248, %v7690
        %v7723 = vadd.f32 %v7250, %v7691
        %v7724 = vadd.f32 %v7354, %v7692
        %v7725 = vadd.f32 %v7356, %v7693
        %v7726 = vadd.f32 %v7460, %v7694
        %v7727 = vadd.f32 %v7462, %v7695
        %v7728 = vadd.f32 %v7566, %v7696
        %v7729 = vadd.f32 %v7568, %v7697
        %v7730 = vmul.f32 %v7698, 0.7978846
        %v7731 = vmul.f32 %v7699, 0.7978846
        %v7732 = vmul.f32 %v7700, 0.7978846
        %v7733 = vmul.f32 %v7701, 0.7978846
        %v7734 = vmul.f32 %v7702, 0.7978846
        %v7735 = vmul.f32 %v7703, 0.7978846
        %v7736 = vmul.f32 %v7704, 0.7978846
        %v7737 = vmul.f32 %v7705, 0.7978846
        %v7738 = vmul.f32 %v7706, 0.7978846
        %v7739 = vmul.f32 %v7707, 0.7978846
        %v7740 = vmul.f32 %v7708, 0.7978846
        %v7741 = vmul.f32 %v7709, 0.7978846
        %v7742 = vmul.f32 %v7710, 0.7978846
        %v7743 = vmul.f32 %v7711, 0.7978846
        %v7744 = vmul.f32 %v7712, 0.7978846
        %v7745 = vmul.f32 %v7713, 0.7978846
        %v7746 = vmul.f32 %v7714, 0.7978846
        %v7747 = vmul.f32 %v7715, 0.7978846
        %v7748 = vmul.f32 %v7716, 0.7978846
        %v7749 = vmul.f32 %v7717, 0.7978846
        %v7750 = vmul.f32 %v7718, 0.7978846
        %v7751 = vmul.f32 %v7719, 0.7978846
        %v7752 = vmul.f32 %v7720, 0.7978846
        %v7753 = vmul.f32 %v7721, 0.7978846
        %v7754 = vmul.f32 %v7722, 0.7978846
        %v7755 = vmul.f32 %v7723, 0.7978846
        %v7756 = vmul.f32 %v7724, 0.7978846
        %v7757 = vmul.f32 %v7725, 0.7978846
        %v7758 = vmul.f32 %v7726, 0.7978846
        %v7759 = vmul.f32 %v7727, 0.7978846
        %v7760 = vmul.f32 %v7728, 0.7978846
        %v7761 = vmul.f32 %v7729, 0.7978846
        %v7762 = vtanh.pop %v7730
        %v7763 = vtanh.pop %v7731
        %v7764 = vtanh.pop %v7732
        %v7765 = vtanh.pop %v7733
        %v7766 = vtanh.pop %v7734
        %v7767 = vtanh.pop %v7735
        %v7768 = vtanh.pop %v7736
        %v7769 = vtanh.pop %v7737
        %v7770 = vtanh.pop %v7738
        %v7771 = vtanh.pop %v7739
        %v7772 = vtanh.pop %v7740
        %v7773 = vtanh.pop %v7741
        %v7774 = vtanh.pop %v7742
        %v7775 = vtanh.pop %v7743
        %v7776 = vtanh.pop %v7744
        %v7777 = vtanh.pop %v7745
        %v7778 = vtanh.pop %v7746
        %v7779 = vtanh.pop %v7747
        %v7780 = vtanh.pop %v7748
        %v7781 = vtanh.pop %v7749
        %v7782 = vtanh.pop %v7750
        %v7783 = vtanh.pop %v7751
        %v7784 = vtanh.pop %v7752
        %v7785 = vtanh.pop %v7753
        %v7786 = vtanh.pop %v7754
        %v7787 = vtanh.pop %v7755
        %v7788 = vtanh.pop %v7756
        %v7789 = vtanh.pop %v7757
        %v7790 = vtanh.pop %v7758
        %v7791 = vtanh.pop %v7759
        %v7792 = vtanh.pop %v7760
        %v7793 = vtanh.pop %v7761
        %v7794 = vadd.f32 %v7762, 1.0
        %v7795 = vadd.f32 %v7763, 1.0
        %v7796 = vadd.f32 %v7764, 1.0
        %v7797 = vadd.f32 %v7765, 1.0
        %v7798 = vadd.f32 %v7766, 1.0
        %v7799 = vadd.f32 %v7767, 1.0
        %v7800 = vadd.f32 %v7768, 1.0
        %v7801 = vadd.f32 %v7769, 1.0
        %v7802 = vadd.f32 %v7770, 1.0
        %v7803 = vadd.f32 %v7771, 1.0
        %v7804 = vadd.f32 %v7772, 1.0
        %v7805 = vadd.f32 %v7773, 1.0
        %v7806 = vadd.f32 %v7774, 1.0
        %v7807 = vadd.f32 %v7775, 1.0
        %v7808 = vadd.f32 %v7776, 1.0
        %v7809 = vadd.f32 %v7777, 1.0
        %v7810 = vadd.f32 %v7778, 1.0
        %v7811 = vadd.f32 %v7779, 1.0
        %v7812 = vadd.f32 %v7780, 1.0
        %v7813 = vadd.f32 %v7781, 1.0
        %v7814 = vadd.f32 %v7782, 1.0
        %v7815 = vadd.f32 %v7783, 1.0
        %v7816 = vadd.f32 %v7784, 1.0
        %v7817 = vadd.f32 %v7785, 1.0
        %v7818 = vadd.f32 %v7786, 1.0
        %v7819 = vadd.f32 %v7787, 1.0
        %v7820 = vadd.f32 %v7788, 1.0
        %v7821 = vadd.f32 %v7789, 1.0
        %v7822 = vadd.f32 %v7790, 1.0
        %v7823 = vadd.f32 %v7791, 1.0
        %v7824 = vadd.f32 %v7792, 1.0
        %v7825 = vadd.f32 %v7793, 1.0
        %v7826 = vmul.f32 %v7570, %v7794
        %v7827 = vmul.f32 %v7571, %v7795
        %v7828 = vmul.f32 %v7572, %v7796
        %v7829 = vmul.f32 %v7573, %v7797
        %v7830 = vmul.f32 %v7574, %v7798
        %v7831 = vmul.f32 %v7575, %v7799
        %v7832 = vmul.f32 %v7576, %v7800
        %v7833 = vmul.f32 %v7577, %v7801
        %v7834 = vmul.f32 %v7578, %v7802
        %v7835 = vmul.f32 %v7579, %v7803
        %v7836 = vmul.f32 %v7580, %v7804
        %v7837 = vmul.f32 %v7581, %v7805
        %v7838 = vmul.f32 %v7582, %v7806
        %v7839 = vmul.f32 %v7583, %v7807
        %v7840 = vmul.f32 %v7584, %v7808
        %v7841 = vmul.f32 %v7585, %v7809
        %v7842 = vmul.f32 %v7586, %v7810
        %v7843 = vmul.f32 %v7587, %v7811
        %v7844 = vmul.f32 %v7588, %v7812
        %v7845 = vmul.f32 %v7589, %v7813
        %v7846 = vmul.f32 %v7590, %v7814
        %v7847 = vmul.f32 %v7591, %v7815
        %v7848 = vmul.f32 %v7592, %v7816
        %v7849 = vmul.f32 %v7593, %v7817
        %v7850 = vmul.f32 %v7594, %v7818
        %v7851 = vmul.f32 %v7595, %v7819
        %v7852 = vmul.f32 %v7596, %v7820
        %v7853 = vmul.f32 %v7597, %v7821
        %v7854 = vmul.f32 %v7598, %v7822
        %v7855 = vmul.f32 %v7599, %v7823
        %v7856 = vmul.f32 %v7600, %v7824
        %v7857 = vmul.f32 %v7601, %v7825
        %v7858 = vpack.c.bf16 %v7834, %v7826
        %v7859 = vpack.c.bf16 %v7835, %v7827
        %v7860 = vpack.c.bf16 %v7836, %v7828
        %v7861 = vpack.c.bf16 %v7837, %v7829
        %v7862 = vpack.c.bf16 %v7838, %v7830
        %v7863 = vpack.c.bf16 %v7839, %v7831
        %v7864 = vpack.c.bf16 %v7840, %v7832
        %v7865 = vpack.c.bf16 %v7841, %v7833
        %v7866 = vpack.c.bf16 %v7850, %v7842
        %v7867 = vpack.c.bf16 %v7851, %v7843
        %v7868 = vpack.c.bf16 %v7852, %v7844
        %v7869 = vpack.c.bf16 %v7853, %v7845
        %v7870 = vpack.c.bf16 %v7854, %v7846
        %v7871 = vpack.c.bf16 %v7855, %v7847
        %v7872 = vpack.c.bf16 %v7856, %v7848
        %v7873 = vpack.c.bf16 %v7857, %v7849
        %v7874 = vld [vmem:[#allocation11] sm:$0xff]
        %v7875 = vld [vmem:[#allocation11 + $0x8] sm:$0xff]
        %v7876 = vld [vmem:[#allocation11 + $0x10] sm:$0xff]
        %v7877 = vld [vmem:[#allocation11 + $0x18] sm:$0xff]
        %v7878 = vld [vmem:[#allocation11 + $0x20] sm:$0xff]
        %v7879 = vld [vmem:[#allocation11 + $0x28] sm:$0xff]
        %v7880 = vld [vmem:[#allocation11 + $0x30] sm:$0xff]
        %v7881 = vld [vmem:[#allocation11 + $0x38] sm:$0xff]
        %v7882 = vld [vmem:[#allocation11 + $0x40] sm:$0xff]
        %v7883 = vld [vmem:[#allocation11 + $0x48] sm:$0xff]
        %v7884 = vld [vmem:[#allocation11 + $0x50] sm:$0xff]
        %v7885 = vld [vmem:[#allocation11 + $0x58] sm:$0xff]
        %v7886 = vld [vmem:[#allocation11 + $0x60] sm:$0xff]
        %v7887 = vld [vmem:[#allocation11 + $0x68] sm:$0xff]
        %v7888 = vld [vmem:[#allocation11 + $0x70] sm:$0xff]
        %v7889 = vld [vmem:[#allocation11 + $0x78] sm:$0xff]
        %v7890 = vld [vmem:[#allocation11 + $0x80] sm:$0xff]
        %v7891 = vld [vmem:[#allocation11 + $0x88] sm:$0xff]
        %v7892 = vld [vmem:[#allocation11 + $0x90] sm:$0xff]
        %v7893 = vld [vmem:[#allocation11 + $0x98] sm:$0xff]
        %v7894 = vld [vmem:[#allocation11 + $0xa0] sm:$0xff]
        %v7895 = vld [vmem:[#allocation11 + $0xa8] sm:$0xff]
        %v7896 = vld [vmem:[#allocation11 + $0xb0] sm:$0xff]
        %v7897 = vld [vmem:[#allocation11 + $0xb8] sm:$0xff]
        %v7898 = vld [vmem:[#allocation11 + $0xc0] sm:$0xff]
        %v7899 = vld [vmem:[#allocation11 + $0xc8] sm:$0xff]
        %v7900 = vld [vmem:[#allocation11 + $0xd0] sm:$0xff]
        %v7901 = vld [vmem:[#allocation11 + $0xd8] sm:$0xff]
        %v7902 = vld [vmem:[#allocation11 + $0xe0] sm:$0xff]
        %v7903 = vld [vmem:[#allocation11 + $0xe8] sm:$0xff]
        %v7904 = vld [vmem:[#allocation11 + $0xf0] sm:$0xff]
        %v7905 = vld [vmem:[#allocation11 + $0xf8] sm:$0xff]
        %v7906 = vld [vmem:[#allocation11 + $0x100] sm:$0xff]
        %v7907 = vld [vmem:[#allocation11 + $0x108] sm:$0xff]
        %v7908 = vld [vmem:[#allocation11 + $0x110] sm:$0xff]
        %v7909 = vld [vmem:[#allocation11 + $0x118] sm:$0xff]
        %v7910 = vld [vmem:[#allocation11 + $0x120] sm:$0xff]
        %v7911 = vld [vmem:[#allocation11 + $0x128] sm:$0xff]
        %v7912 = vld [vmem:[#allocation11 + $0x130] sm:$0xff]
        %v7913 = vld [vmem:[#allocation11 + $0x138] sm:$0xff]
        %v7914 = vld [vmem:[#allocation11 + $0x140] sm:$0xff]
        %v7915 = vld [vmem:[#allocation11 + $0x148] sm:$0xff]
        %v7916 = vld [vmem:[#allocation11 + $0x150] sm:$0xff]
        %v7917 = vld [vmem:[#allocation11 + $0x158] sm:$0xff]
        %v7918 = vld [vmem:[#allocation11 + $0x160] sm:$0xff]
        %v7919 = vld [vmem:[#allocation11 + $0x168] sm:$0xff]
        %v7920 = vld [vmem:[#allocation11 + $0x170] sm:$0xff]
        %v7921 = vld [vmem:[#allocation11 + $0x178] sm:$0xff]
        %v7922 = vld [vmem:[#allocation11 + $0x180] sm:$0xff]
        %v7923 = vld [vmem:[#allocation11 + $0x188] sm:$0xff]
        %v7924 = vld [vmem:[#allocation11 + $0x190] sm:$0xff]
        %v7925 = vld [vmem:[#allocation11 + $0x198] sm:$0xff]
        %v7926 = vld [vmem:[#allocation11 + $0x1a0] sm:$0xff]
        %v7927 = vld [vmem:[#allocation11 + $0x1a8] sm:$0xff]
        %v7928 = vld [vmem:[#allocation11 + $0x1b0] sm:$0xff]
        %v7929 = vld [vmem:[#allocation11 + $0x1b8] sm:$0xff]
        %v7930 = vld [vmem:[#allocation11 + $0x1c0] sm:$0xff]
        %v7931 = vld [vmem:[#allocation11 + $0x1c8] sm:$0xff]
        %v7932 = vld [vmem:[#allocation11 + $0x1d0] sm:$0xff]
        %v7933 = vld [vmem:[#allocation11 + $0x1d8] sm:$0xff]
        %v7934 = vld [vmem:[#allocation11 + $0x1e0] sm:$0xff]
        %v7935 = vld [vmem:[#allocation11 + $0x1e8] sm:$0xff]
        %v7936 = vld [vmem:[#allocation11 + $0x1f0] sm:$0xff]
        %v7937 = vld [vmem:[#allocation11 + $0x1f8] sm:$0xff]
        %v7938 = vld [vmem:[#allocation11 + $0x200] sm:$0xff]
        %v7939 = vld [vmem:[#allocation11 + $0x208] sm:$0xff]
        %v7940 = vld [vmem:[#allocation11 + $0x210] sm:$0xff]
        %v7941 = vld [vmem:[#allocation11 + $0x218] sm:$0xff]
        %v7942 = vld [vmem:[#allocation11 + $0x220] sm:$0xff]
        %v7943 = vld [vmem:[#allocation11 + $0x228] sm:$0xff]
        %v7944 = vld [vmem:[#allocation11 + $0x230] sm:$0xff]
        %v7945 = vld [vmem:[#allocation11 + $0x238] sm:$0xff]
        %v7946 = vld [vmem:[#allocation11 + $0x240] sm:$0xff]
        %v7947 = vld [vmem:[#allocation11 + $0x248] sm:$0xff]
        %v7948 = vld [vmem:[#allocation11 + $0x250] sm:$0xff]
        %v7949 = vld [vmem:[#allocation11 + $0x258] sm:$0xff]
        %v7950 = vld [vmem:[#allocation11 + $0x260] sm:$0xff]
        %v7951 = vld [vmem:[#allocation11 + $0x268] sm:$0xff]
        %v7952 = vld [vmem:[#allocation11 + $0x270] sm:$0xff]
        %v7953 = vld [vmem:[#allocation11 + $0x278] sm:$0xff]
        %v7954 = vld [vmem:[#allocation11 + $0x280] sm:$0xff]
        %v7955 = vld [vmem:[#allocation11 + $0x288] sm:$0xff]
        %v7956 = vld [vmem:[#allocation11 + $0x290] sm:$0xff]
        %v7957 = vld [vmem:[#allocation11 + $0x298] sm:$0xff]
        %v7958 = vld [vmem:[#allocation11 + $0x2a0] sm:$0xff]
        %v7959 = vld [vmem:[#allocation11 + $0x2a8] sm:$0xff]
        %v7960 = vld [vmem:[#allocation11 + $0x2b0] sm:$0xff]
        %v7961 = vld [vmem:[#allocation11 + $0x2b8] sm:$0xff]
        %v7962 = vld [vmem:[#allocation11 + $0x2c0] sm:$0xff]
        %v7963 = vld [vmem:[#allocation11 + $0x2c8] sm:$0xff]
        %v7964 = vld [vmem:[#allocation11 + $0x2d0] sm:$0xff]
        %v7965 = vld [vmem:[#allocation11 + $0x2d8] sm:$0xff]
        %v7966 = vld [vmem:[#allocation11 + $0x2e0] sm:$0xff]
        %v7967 = vld [vmem:[#allocation11 + $0x2e8] sm:$0xff]
        %v7968 = vld [vmem:[#allocation11 + $0x2f0] sm:$0xff]
        %v7969 = vld [vmem:[#allocation11 + $0x2f8] sm:$0xff]
        %v7970 = vld [vmem:[#allocation11 + $0x300] sm:$0xff]
        %v7971 = vld [vmem:[#allocation11 + $0x308] sm:$0xff]
        %v7972 = vld [vmem:[#allocation11 + $0x310] sm:$0xff]
        %v7973 = vld [vmem:[#allocation11 + $0x318] sm:$0xff]
        %v7974 = vld [vmem:[#allocation11 + $0x320] sm:$0xff]
        %v7975 = vld [vmem:[#allocation11 + $0x328] sm:$0xff]
        %v7976 = vld [vmem:[#allocation11 + $0x330] sm:$0xff]
        %v7977 = vld [vmem:[#allocation11 + $0x338] sm:$0xff]
        %v7978 = vld [vmem:[#allocation11 + $0x340] sm:$0xff]
        %v7979 = vld [vmem:[#allocation11 + $0x348] sm:$0xff]
        %v7980 = vld [vmem:[#allocation11 + $0x350] sm:$0xff]
        %v7981 = vld [vmem:[#allocation11 + $0x358] sm:$0xff]
        %v7982 = vld [vmem:[#allocation11 + $0x360] sm:$0xff]
        %v7983 = vld [vmem:[#allocation11 + $0x368] sm:$0xff]
        %v7984 = vld [vmem:[#allocation11 + $0x370] sm:$0xff]
        %v7985 = vld [vmem:[#allocation11 + $0x378] sm:$0xff]
        %v7986 = vld [vmem:[#allocation11 + $0x380] sm:$0xff]
        %v7987 = vld [vmem:[#allocation11 + $0x388] sm:$0xff]
        %v7988 = vld [vmem:[#allocation11 + $0x390] sm:$0xff]
        %v7989 = vld [vmem:[#allocation11 + $0x398] sm:$0xff]
        %v7990 = vld [vmem:[#allocation11 + $0x3a0] sm:$0xff]
        %v7991 = vld [vmem:[#allocation11 + $0x3a8] sm:$0xff]
        %v7992 = vld [vmem:[#allocation11 + $0x3b0] sm:$0xff]
        %v7993 = vld [vmem:[#allocation11 + $0x3b8] sm:$0xff]
        %v7994 = vld [vmem:[#allocation11 + $0x3c0] sm:$0xff]
        %v7995 = vld [vmem:[#allocation11 + $0x3c8] sm:$0xff]
        %v7996 = vld [vmem:[#allocation11 + $0x3d0] sm:$0xff]
        %v7997 = vld [vmem:[#allocation11 + $0x3d8] sm:$0xff]
        %v7998 = vld [vmem:[#allocation11 + $0x3e0] sm:$0xff]
        %v7999 = vld [vmem:[#allocation11 + $0x3e8] sm:$0xff]
        %v8000 = vld [vmem:[#allocation11 + $0x3f0] sm:$0xff]
        %v8001 = vld [vmem:[#allocation11 + $0x3f8] sm:$0xff]
        %v8002 = vld [vmem:[#allocation11 + $0x400] sm:$0xff]
        %v8003 = vld [vmem:[#allocation11 + $0x408] sm:$0xff]
        %v8004 = vld [vmem:[#allocation11 + $0x410] sm:$0xff]
        %v8005 = vld [vmem:[#allocation11 + $0x418] sm:$0xff]
        %v8006 = vld [vmem:[#allocation11 + $0x420] sm:$0xff]
        %v8007 = vld [vmem:[#allocation11 + $0x428] sm:$0xff]
        %v8008 = vld [vmem:[#allocation11 + $0x430] sm:$0xff]
        %v8009 = vld [vmem:[#allocation11 + $0x438] sm:$0xff]
        %v8010 = vld [vmem:[#allocation11 + $0x440] sm:$0xff]
        %v8011 = vld [vmem:[#allocation11 + $0x448] sm:$0xff]
        %v8012 = vld [vmem:[#allocation11 + $0x450] sm:$0xff]
        %v8013 = vld [vmem:[#allocation11 + $0x458] sm:$0xff]
        %v8014 = vld [vmem:[#allocation11 + $0x460] sm:$0xff]
        %v8015 = vld [vmem:[#allocation11 + $0x468] sm:$0xff]
        %v8016 = vld [vmem:[#allocation11 + $0x470] sm:$0xff]
        %v8017 = vld [vmem:[#allocation11 + $0x478] sm:$0xff]
        %v8018 = vld [vmem:[#allocation11 + $0x480] sm:$0xff]
        %v8019 = vld [vmem:[#allocation11 + $0x488] sm:$0xff]
        %v8020 = vld [vmem:[#allocation11 + $0x490] sm:$0xff]
        %v8021 = vld [vmem:[#allocation11 + $0x498] sm:$0xff]
        %v8022 = vld [vmem:[#allocation11 + $0x4a0] sm:$0xff]
        %v8023 = vld [vmem:[#allocation11 + $0x4a8] sm:$0xff]
        %v8024 = vld [vmem:[#allocation11 + $0x4b0] sm:$0xff]
        %v8025 = vld [vmem:[#allocation11 + $0x4b8] sm:$0xff]
        %v8026 = vld [vmem:[#allocation11 + $0x4c0] sm:$0xff]
        %v8027 = vld [vmem:[#allocation11 + $0x4c8] sm:$0xff]
        %v8028 = vld [vmem:[#allocation11 + $0x4d0] sm:$0xff]
        %v8029 = vld [vmem:[#allocation11 + $0x4d8] sm:$0xff]
        %v8030 = vld [vmem:[#allocation11 + $0x4e0] sm:$0xff]
        %v8031 = vld [vmem:[#allocation11 + $0x4e8] sm:$0xff]
        %v8032 = vld [vmem:[#allocation11 + $0x4f0] sm:$0xff]
        %v8033 = vld [vmem:[#allocation11 + $0x4f8] sm:$0xff]
        %v8034 = vld [vmem:[#allocation11 + $0x500] sm:$0xff]
        %v8035 = vld [vmem:[#allocation11 + $0x508] sm:$0xff]
        %v8036 = vld [vmem:[#allocation11 + $0x510] sm:$0xff]
        %v8037 = vld [vmem:[#allocation11 + $0x518] sm:$0xff]
        %v8038 = vld [vmem:[#allocation11 + $0x520] sm:$0xff]
        %v8039 = vld [vmem:[#allocation11 + $0x528] sm:$0xff]
        %v8040 = vld [vmem:[#allocation11 + $0x530] sm:$0xff]
        %v8041 = vld [vmem:[#allocation11 + $0x538] sm:$0xff]
        %v8042 = vld [vmem:[#allocation11 + $0x540] sm:$0xff]
        %v8043 = vld [vmem:[#allocation11 + $0x548] sm:$0xff]
        %v8044 = vld [vmem:[#allocation11 + $0x550] sm:$0xff]
        %v8045 = vld [vmem:[#allocation11 + $0x558] sm:$0xff]
        %v8046 = vld [vmem:[#allocation11 + $0x560] sm:$0xff]
        %v8047 = vld [vmem:[#allocation11 + $0x568] sm:$0xff]
        %v8048 = vld [vmem:[#allocation11 + $0x570] sm:$0xff]
        %v8049 = vld [vmem:[#allocation11 + $0x578] sm:$0xff]
        %v8050 = vld [vmem:[#allocation11 + $0x580] sm:$0xff]
        %v8051 = vld [vmem:[#allocation11 + $0x588] sm:$0xff]
        %v8052 = vld [vmem:[#allocation11 + $0x590] sm:$0xff]
        %v8053 = vld [vmem:[#allocation11 + $0x598] sm:$0xff]
        %v8054 = vld [vmem:[#allocation11 + $0x5a0] sm:$0xff]
        %v8055 = vld [vmem:[#allocation11 + $0x5a8] sm:$0xff]
        %v8056 = vld [vmem:[#allocation11 + $0x5b0] sm:$0xff]
        %v8057 = vld [vmem:[#allocation11 + $0x5b8] sm:$0xff]
        %v8058 = vld [vmem:[#allocation11 + $0x5c0] sm:$0xff]
        %v8059 = vld [vmem:[#allocation11 + $0x5c8] sm:$0xff]
        %v8060 = vld [vmem:[#allocation11 + $0x5d0] sm:$0xff]
        %v8061 = vld [vmem:[#allocation11 + $0x5d8] sm:$0xff]
        %v8062 = vld [vmem:[#allocation11 + $0x5e0] sm:$0xff]
        %v8063 = vld [vmem:[#allocation11 + $0x5e8] sm:$0xff]
        %v8064 = vld [vmem:[#allocation11 + $0x5f0] sm:$0xff]
        %v8065 = vld [vmem:[#allocation11 + $0x5f8] sm:$0xff]
        %v8066 = vld [vmem:[#allocation11 + $0x600] sm:$0xff]
        %v8067 = vld [vmem:[#allocation11 + $0x608] sm:$0xff]
        %v8068 = vld [vmem:[#allocation11 + $0x610] sm:$0xff]
        %v8069 = vld [vmem:[#allocation11 + $0x618] sm:$0xff]
        %v8070 = vld [vmem:[#allocation11 + $0x620] sm:$0xff]
        %v8071 = vld [vmem:[#allocation11 + $0x628] sm:$0xff]
        %v8072 = vld [vmem:[#allocation11 + $0x630] sm:$0xff]
        %v8073 = vld [vmem:[#allocation11 + $0x638] sm:$0xff]
        %v8074 = vld [vmem:[#allocation11 + $0x640] sm:$0xff]
        %v8075 = vld [vmem:[#allocation11 + $0x648] sm:$0xff]
        %v8076 = vld [vmem:[#allocation11 + $0x650] sm:$0xff]
        %v8077 = vld [vmem:[#allocation11 + $0x658] sm:$0xff]
        %v8078 = vld [vmem:[#allocation11 + $0x660] sm:$0xff]
        %v8079 = vld [vmem:[#allocation11 + $0x668] sm:$0xff]
        %v8080 = vld [vmem:[#allocation11 + $0x670] sm:$0xff]
        %v8081 = vld [vmem:[#allocation11 + $0x678] sm:$0xff]
        %v8082 = vld [vmem:[#allocation11 + $0x680] sm:$0xff]
        %v8083 = vld [vmem:[#allocation11 + $0x688] sm:$0xff]
        %v8084 = vld [vmem:[#allocation11 + $0x690] sm:$0xff]
        %v8085 = vld [vmem:[#allocation11 + $0x698] sm:$0xff]
        %v8086 = vld [vmem:[#allocation11 + $0x6a0] sm:$0xff]
        %v8087 = vld [vmem:[#allocation11 + $0x6a8] sm:$0xff]
        %v8088 = vld [vmem:[#allocation11 + $0x6b0] sm:$0xff]
        %v8089 = vld [vmem:[#allocation11 + $0x6b8] sm:$0xff]
        %v8090 = vld [vmem:[#allocation11 + $0x6c0] sm:$0xff]
        %v8091 = vld [vmem:[#allocation11 + $0x6c8] sm:$0xff]
        %v8092 = vld [vmem:[#allocation11 + $0x6d0] sm:$0xff]
        %v8093 = vld [vmem:[#allocation11 + $0x6d8] sm:$0xff]
        %v8094 = vld [vmem:[#allocation11 + $0x6e0] sm:$0xff]
        %v8095 = vld [vmem:[#allocation11 + $0x6e8] sm:$0xff]
        %v8096 = vld [vmem:[#allocation11 + $0x6f0] sm:$0xff]
        %v8097 = vld [vmem:[#allocation11 + $0x6f8] sm:$0xff]
        %v8098 = vld [vmem:[#allocation11 + $0x700] sm:$0xff]
        %v8099 = vld [vmem:[#allocation11 + $0x708] sm:$0xff]
        %v8100 = vld [vmem:[#allocation11 + $0x710] sm:$0xff]
        %v8101 = vld [vmem:[#allocation11 + $0x718] sm:$0xff]
        %v8102 = vld [vmem:[#allocation11 + $0x720] sm:$0xff]
        %v8103 = vld [vmem:[#allocation11 + $0x728] sm:$0xff]
        %v8104 = vld [vmem:[#allocation11 + $0x730] sm:$0xff]
        %v8105 = vld [vmem:[#allocation11 + $0x738] sm:$0xff]
        %v8106 = vld [vmem:[#allocation11 + $0x740] sm:$0xff]
        %v8107 = vld [vmem:[#allocation11 + $0x748] sm:$0xff]
        %v8108 = vld [vmem:[#allocation11 + $0x750] sm:$0xff]
        %v8109 = vld [vmem:[#allocation11 + $0x758] sm:$0xff]
        %v8110 = vld [vmem:[#allocation11 + $0x760] sm:$0xff]
        %v8111 = vld [vmem:[#allocation11 + $0x768] sm:$0xff]
        %v8112 = vld [vmem:[#allocation11 + $0x770] sm:$0xff]
        %v8113 = vld [vmem:[#allocation11 + $0x778] sm:$0xff]
        %v8114 = vld [vmem:[#allocation11 + $0x780] sm:$0xff]
        %v8115 = vld [vmem:[#allocation11 + $0x788] sm:$0xff]
        %v8116 = vld [vmem:[#allocation11 + $0x790] sm:$0xff]
        %v8117 = vld [vmem:[#allocation11 + $0x798] sm:$0xff]
        %v8118 = vld [vmem:[#allocation11 + $0x7a0] sm:$0xff]
        %v8119 = vld [vmem:[#allocation11 + $0x7a8] sm:$0xff]
        %v8120 = vld [vmem:[#allocation11 + $0x7b0] sm:$0xff]
        %v8121 = vld [vmem:[#allocation11 + $0x7b8] sm:$0xff]
        %v8122 = vld [vmem:[#allocation11 + $0x7c0] sm:$0xff]
        %v8123 = vld [vmem:[#allocation11 + $0x7c8] sm:$0xff]
        %v8124 = vld [vmem:[#allocation11 + $0x7d0] sm:$0xff]
        %v8125 = vld [vmem:[#allocation11 + $0x7d8] sm:$0xff]
        %v8126 = vld [vmem:[#allocation11 + $0x7e0] sm:$0xff]
        %v8127 = vld [vmem:[#allocation11 + $0x7e8] sm:$0xff]
        %v8128 = vld [vmem:[#allocation11 + $0x7f0] sm:$0xff]
        %v8129 = vld [vmem:[#allocation11 + $0x7f8] sm:$0xff]
        %v8130 = vlaneseq
        %v8131 = vshrl.u32 %v8130, 7
        %v8132 = vsub.s32 1, %v8131
        %v8133 = vrot.slane %v432, %v8132
        %v8134 = vlaneseq
        %v8135 = vshrl.u32 %v8134, 7
        %v8136 = vsub.s32 1, %v8135
        %v8137 = vrot.slane %v433, %v8136
        %v8138 = vlaneseq
        %v8139 = vshrl.u32 %v8138, 7
        %v8140 = vsub.s32 1, %v8139
        %v8141 = vrot.slane %v434, %v8140
        %v8142 = vlaneseq
        %v8143 = vshrl.u32 %v8142, 7
        %v8144 = vsub.s32 1, %v8143
        %v8145 = vrot.slane %v435, %v8144
        %v8402 = vunpack.c.l.b16 %v7874
        %v8403 = vunpack.c.h.b16 %v7874
        %v8404 = vunpack.c.l.b16 %v7875
        %v8405 = vunpack.c.h.b16 %v7875
        %v8406 = vunpack.c.l.b16 %v7876
        %v8407 = vunpack.c.h.b16 %v7876
        %v8408 = vunpack.c.l.b16 %v7877
        %v8409 = vunpack.c.h.b16 %v7877
        %v8410 = vunpack.c.l.b16 %v7878
        %v8411 = vunpack.c.h.b16 %v7878
        %v8412 = vunpack.c.l.b16 %v7879
        %v8413 = vunpack.c.h.b16 %v7879
        %v8414 = vunpack.c.l.b16 %v7880
        %v8415 = vunpack.c.h.b16 %v7880
        %v8416 = vunpack.c.l.b16 %v7881
        %v8417 = vunpack.c.h.b16 %v7881
        %v8418 = vunpack.c.l.b16 %v7882
        %v8419 = vunpack.c.h.b16 %v7882
        %v8420 = vunpack.c.l.b16 %v7883
        %v8421 = vunpack.c.h.b16 %v7883
        %v8422 = vunpack.c.l.b16 %v7884
        %v8423 = vunpack.c.h.b16 %v7884
        %v8424 = vunpack.c.l.b16 %v7885
        %v8425 = vunpack.c.h.b16 %v7885
        %v8426 = vunpack.c.l.b16 %v7886
        %v8427 = vunpack.c.h.b16 %v7886
        %v8428 = vunpack.c.l.b16 %v7887
        %v8429 = vunpack.c.h.b16 %v7887
        %v8430 = vunpack.c.l.b16 %v7888
        %v8431 = vunpack.c.h.b16 %v7888
        %v8432 = vunpack.c.l.b16 %v7889
        %v8433 = vunpack.c.h.b16 %v7889
        %v8434 = vunpack.c.l.b16 %v7890
        %v8435 = vunpack.c.h.b16 %v7890
        %v8436 = vunpack.c.l.b16 %v7891
        %v8437 = vunpack.c.h.b16 %v7891
        %v8438 = vunpack.c.l.b16 %v7892
        %v8439 = vunpack.c.h.b16 %v7892
        %v8440 = vunpack.c.l.b16 %v7893
        %v8441 = vunpack.c.h.b16 %v7893
        %v8442 = vunpack.c.l.b16 %v7894
        %v8443 = vunpack.c.h.b16 %v7894
        %v8444 = vunpack.c.l.b16 %v7895
        %v8445 = vunpack.c.h.b16 %v7895
        %v8446 = vunpack.c.l.b16 %v7896
        %v8447 = vunpack.c.h.b16 %v7896
        %v8448 = vunpack.c.l.b16 %v7897
        %v8449 = vunpack.c.h.b16 %v7897
        %v8450 = vunpack.c.l.b16 %v7898
        %v8451 = vunpack.c.h.b16 %v7898
        %v8452 = vunpack.c.l.b16 %v7899
        %v8453 = vunpack.c.h.b16 %v7899
        %v8454 = vunpack.c.l.b16 %v7900
        %v8455 = vunpack.c.h.b16 %v7900
        %v8456 = vunpack.c.l.b16 %v7901
        %v8457 = vunpack.c.h.b16 %v7901
        %v8458 = vunpack.c.l.b16 %v7902
        %v8459 = vunpack.c.h.b16 %v7902
        %v8460 = vunpack.c.l.b16 %v7903
        %v8461 = vunpack.c.h.b16 %v7903
        %v8462 = vunpack.c.l.b16 %v7904
        %v8463 = vunpack.c.h.b16 %v7904
        %v8464 = vunpack.c.l.b16 %v7905
        %v8465 = vunpack.c.h.b16 %v7905
        %v8466 = vunpack.c.l.b16 %v7906
        %v8467 = vunpack.c.h.b16 %v7906
        %v8468 = vunpack.c.l.b16 %v7907
        %v8469 = vunpack.c.h.b16 %v7907
        %v8470 = vunpack.c.l.b16 %v7908
        %v8471 = vunpack.c.h.b16 %v7908
        %v8472 = vunpack.c.l.b16 %v7909
        %v8473 = vunpack.c.h.b16 %v7909
        %v8474 = vunpack.c.l.b16 %v7910
        %v8475 = vunpack.c.h.b16 %v7910
        %v8476 = vunpack.c.l.b16 %v7911
        %v8477 = vunpack.c.h.b16 %v7911
        %v8478 = vunpack.c.l.b16 %v7912
        %v8479 = vunpack.c.h.b16 %v7912
        %v8480 = vunpack.c.l.b16 %v7913
        %v8481 = vunpack.c.h.b16 %v7913
        %v8482 = vunpack.c.l.b16 %v7914
        %v8483 = vunpack.c.h.b16 %v7914
        %v8484 = vunpack.c.l.b16 %v7915
        %v8485 = vunpack.c.h.b16 %v7915
        %v8486 = vunpack.c.l.b16 %v7916
        %v8487 = vunpack.c.h.b16 %v7916
        %v8488 = vunpack.c.l.b16 %v7917
        %v8489 = vunpack.c.h.b16 %v7917
        %v8490 = vunpack.c.l.b16 %v7918
        %v8491 = vunpack.c.h.b16 %v7918
        %v8492 = vunpack.c.l.b16 %v7919
        %v8493 = vunpack.c.h.b16 %v7919
        %v8494 = vunpack.c.l.b16 %v7920
        %v8495 = vunpack.c.h.b16 %v7920
        %v8496 = vunpack.c.l.b16 %v7921
        %v8497 = vunpack.c.h.b16 %v7921
        %v8498 = vunpack.c.l.b16 %v7922
        %v8499 = vunpack.c.h.b16 %v7922
        %v8500 = vunpack.c.l.b16 %v7923
        %v8501 = vunpack.c.h.b16 %v7923
        %v8502 = vunpack.c.l.b16 %v7924
        %v8503 = vunpack.c.h.b16 %v7924
        %v8504 = vunpack.c.l.b16 %v7925
        %v8505 = vunpack.c.h.b16 %v7925
        %v8506 = vunpack.c.l.b16 %v7926
        %v8507 = vunpack.c.h.b16 %v7926
        %v8508 = vunpack.c.l.b16 %v7927
        %v8509 = vunpack.c.h.b16 %v7927
        %v8510 = vunpack.c.l.b16 %v7928
        %v8511 = vunpack.c.h.b16 %v7928
        %v8512 = vunpack.c.l.b16 %v7929
        %v8513 = vunpack.c.h.b16 %v7929
        %v8514 = vunpack.c.l.b16 %v7930
        %v8515 = vunpack.c.h.b16 %v7930
        %v8516 = vunpack.c.l.b16 %v7931
        %v8517 = vunpack.c.h.b16 %v7931
        %v8518 = vunpack.c.l.b16 %v7932
        %v8519 = vunpack.c.h.b16 %v7932
        %v8520 = vunpack.c.l.b16 %v7933
        %v8521 = vunpack.c.h.b16 %v7933
        %v8522 = vunpack.c.l.b16 %v7934
        %v8523 = vunpack.c.h.b16 %v7934
        %v8524 = vunpack.c.l.b16 %v7935
        %v8525 = vunpack.c.h.b16 %v7935
        %v8526 = vunpack.c.l.b16 %v7936
        %v8527 = vunpack.c.h.b16 %v7936
        %v8528 = vunpack.c.l.b16 %v7937
        %v8529 = vunpack.c.h.b16 %v7937
        %v8530 = vunpack.c.l.b16 %v7938
        %v8531 = vunpack.c.h.b16 %v7938
        %v8532 = vunpack.c.l.b16 %v7939
        %v8533 = vunpack.c.h.b16 %v7939
        %v8534 = vunpack.c.l.b16 %v7940
        %v8535 = vunpack.c.h.b16 %v7940
        %v8536 = vunpack.c.l.b16 %v7941
        %v8537 = vunpack.c.h.b16 %v7941
        %v8538 = vunpack.c.l.b16 %v7942
        %v8539 = vunpack.c.h.b16 %v7942
        %v8540 = vunpack.c.l.b16 %v7943
        %v8541 = vunpack.c.h.b16 %v7943
        %v8542 = vunpack.c.l.b16 %v7944
        %v8543 = vunpack.c.h.b16 %v7944
        %v8544 = vunpack.c.l.b16 %v7945
        %v8545 = vunpack.c.h.b16 %v7945
        %v8546 = vunpack.c.l.b16 %v7946
        %v8547 = vunpack.c.h.b16 %v7946
        %v8548 = vunpack.c.l.b16 %v7947
        %v8549 = vunpack.c.h.b16 %v7947
        %v8550 = vunpack.c.l.b16 %v7948
        %v8551 = vunpack.c.h.b16 %v7948
        %v8552 = vunpack.c.l.b16 %v7949
        %v8553 = vunpack.c.h.b16 %v7949
        %v8554 = vunpack.c.l.b16 %v7950
        %v8555 = vunpack.c.h.b16 %v7950
        %v8556 = vunpack.c.l.b16 %v7951
        %v8557 = vunpack.c.h.b16 %v7951
        %v8558 = vunpack.c.l.b16 %v7952
        %v8559 = vunpack.c.h.b16 %v7952
        %v8560 = vunpack.c.l.b16 %v7953
        %v8561 = vunpack.c.h.b16 %v7953
        %v8562 = vunpack.c.l.b16 %v7954
        %v8563 = vunpack.c.h.b16 %v7954
        %v8564 = vunpack.c.l.b16 %v7955
        %v8565 = vunpack.c.h.b16 %v7955
        %v8566 = vunpack.c.l.b16 %v7956
        %v8567 = vunpack.c.h.b16 %v7956
        %v8568 = vunpack.c.l.b16 %v7957
        %v8569 = vunpack.c.h.b16 %v7957
        %v8570 = vunpack.c.l.b16 %v7958
        %v8571 = vunpack.c.h.b16 %v7958
        %v8572 = vunpack.c.l.b16 %v7959
        %v8573 = vunpack.c.h.b16 %v7959
        %v8574 = vunpack.c.l.b16 %v7960
        %v8575 = vunpack.c.h.b16 %v7960
        %v8576 = vunpack.c.l.b16 %v7961
        %v8577 = vunpack.c.h.b16 %v7961
        %v8578 = vunpack.c.l.b16 %v7962
        %v8579 = vunpack.c.h.b16 %v7962
        %v8580 = vunpack.c.l.b16 %v7963
        %v8581 = vunpack.c.h.b16 %v7963
        %v8582 = vunpack.c.l.b16 %v7964
        %v8583 = vunpack.c.h.b16 %v7964
        %v8584 = vunpack.c.l.b16 %v7965
        %v8585 = vunpack.c.h.b16 %v7965
        %v8586 = vunpack.c.l.b16 %v7966
        %v8587 = vunpack.c.h.b16 %v7966
        %v8588 = vunpack.c.l.b16 %v7967
        %v8589 = vunpack.c.h.b16 %v7967
        %v8590 = vunpack.c.l.b16 %v7968
        %v8591 = vunpack.c.h.b16 %v7968
        %v8592 = vunpack.c.l.b16 %v7969
        %v8593 = vunpack.c.h.b16 %v7969
        %v8594 = vunpack.c.l.b16 %v7970
        %v8595 = vunpack.c.h.b16 %v7970
        %v8596 = vunpack.c.l.b16 %v7971
        %v8597 = vunpack.c.h.b16 %v7971
        %v8598 = vunpack.c.l.b16 %v7972
        %v8599 = vunpack.c.h.b16 %v7972
        %v8600 = vunpack.c.l.b16 %v7973
        %v8601 = vunpack.c.h.b16 %v7973
        %v8602 = vunpack.c.l.b16 %v7974
        %v8603 = vunpack.c.h.b16 %v7974
        %v8604 = vunpack.c.l.b16 %v7975
        %v8605 = vunpack.c.h.b16 %v7975
        %v8606 = vunpack.c.l.b16 %v7976
        %v8607 = vunpack.c.h.b16 %v7976
        %v8608 = vunpack.c.l.b16 %v7977
        %v8609 = vunpack.c.h.b16 %v7977
        %v8610 = vunpack.c.l.b16 %v7978
        %v8611 = vunpack.c.h.b16 %v7978
        %v8612 = vunpack.c.l.b16 %v7979
        %v8613 = vunpack.c.h.b16 %v7979
        %v8614 = vunpack.c.l.b16 %v7980
        %v8615 = vunpack.c.h.b16 %v7980
        %v8616 = vunpack.c.l.b16 %v7981
        %v8617 = vunpack.c.h.b16 %v7981
        %v8618 = vunpack.c.l.b16 %v7982
        %v8619 = vunpack.c.h.b16 %v7982
        %v8620 = vunpack.c.l.b16 %v7983
        %v8621 = vunpack.c.h.b16 %v7983
        %v8622 = vunpack.c.l.b16 %v7984
        %v8623 = vunpack.c.h.b16 %v7984
        %v8624 = vunpack.c.l.b16 %v7985
        %v8625 = vunpack.c.h.b16 %v7985
        %v8626 = vunpack.c.l.b16 %v7986
        %v8627 = vunpack.c.h.b16 %v7986
        %v8628 = vunpack.c.l.b16 %v7987
        %v8629 = vunpack.c.h.b16 %v7987
        %v8630 = vunpack.c.l.b16 %v7988
        %v8631 = vunpack.c.h.b16 %v7988
        %v8632 = vunpack.c.l.b16 %v7989
        %v8633 = vunpack.c.h.b16 %v7989
        %v8634 = vunpack.c.l.b16 %v7990
        %v8635 = vunpack.c.h.b16 %v7990
        %v8636 = vunpack.c.l.b16 %v7991
        %v8637 = vunpack.c.h.b16 %v7991
        %v8638 = vunpack.c.l.b16 %v7992
        %v8639 = vunpack.c.h.b16 %v7992
        %v8640 = vunpack.c.l.b16 %v7993
        %v8641 = vunpack.c.h.b16 %v7993
        %v8642 = vunpack.c.l.b16 %v7994
        %v8643 = vunpack.c.h.b16 %v7994
        %v8644 = vunpack.c.l.b16 %v7995
        %v8645 = vunpack.c.h.b16 %v7995
        %v8646 = vunpack.c.l.b16 %v7996
        %v8647 = vunpack.c.h.b16 %v7996
        %v8648 = vunpack.c.l.b16 %v7997
        %v8649 = vunpack.c.h.b16 %v7997
        %v8650 = vunpack.c.l.b16 %v7998
        %v8651 = vunpack.c.h.b16 %v7998
        %v8652 = vunpack.c.l.b16 %v7999
        %v8653 = vunpack.c.h.b16 %v7999
        %v8654 = vunpack.c.l.b16 %v8000
        %v8655 = vunpack.c.h.b16 %v8000
        %v8656 = vunpack.c.l.b16 %v8001
        %v8657 = vunpack.c.h.b16 %v8001
        %v8658 = vunpack.c.l.b16 %v8002
        %v8659 = vunpack.c.h.b16 %v8002
        %v8660 = vunpack.c.l.b16 %v8003
        %v8661 = vunpack.c.h.b16 %v8003
        %v8662 = vunpack.c.l.b16 %v8004
        %v8663 = vunpack.c.h.b16 %v8004
        %v8664 = vunpack.c.l.b16 %v8005
        %v8665 = vunpack.c.h.b16 %v8005
        %v8666 = vunpack.c.l.b16 %v8006
        %v8667 = vunpack.c.h.b16 %v8006
        %v8668 = vunpack.c.l.b16 %v8007
        %v8669 = vunpack.c.h.b16 %v8007
        %v8670 = vunpack.c.l.b16 %v8008
        %v8671 = vunpack.c.h.b16 %v8008
        %v8672 = vunpack.c.l.b16 %v8009
        %v8673 = vunpack.c.h.b16 %v8009
        %v8674 = vunpack.c.l.b16 %v8010
        %v8675 = vunpack.c.h.b16 %v8010
        %v8676 = vunpack.c.l.b16 %v8011
        %v8677 = vunpack.c.h.b16 %v8011
        %v8678 = vunpack.c.l.b16 %v8012
        %v8679 = vunpack.c.h.b16 %v8012
        %v8680 = vunpack.c.l.b16 %v8013
        %v8681 = vunpack.c.h.b16 %v8013
        %v8682 = vunpack.c.l.b16 %v8014
        %v8683 = vunpack.c.h.b16 %v8014
        %v8684 = vunpack.c.l.b16 %v8015
        %v8685 = vunpack.c.h.b16 %v8015
        %v8686 = vunpack.c.l.b16 %v8016
        %v8687 = vunpack.c.h.b16 %v8016
        %v8688 = vunpack.c.l.b16 %v8017
        %v8689 = vunpack.c.h.b16 %v8017
        %v8690 = vunpack.c.l.b16 %v8018
        %v8691 = vunpack.c.h.b16 %v8018
        %v8692 = vunpack.c.l.b16 %v8019
        %v8693 = vunpack.c.h.b16 %v8019
        %v8694 = vunpack.c.l.b16 %v8020
        %v8695 = vunpack.c.h.b16 %v8020
        %v8696 = vunpack.c.l.b16 %v8021
        %v8697 = vunpack.c.h.b16 %v8021
        %v8698 = vunpack.c.l.b16 %v8022
        %v8699 = vunpack.c.h.b16 %v8022
        %v8700 = vunpack.c.l.b16 %v8023
        %v8701 = vunpack.c.h.b16 %v8023
        %v8702 = vunpack.c.l.b16 %v8024
        %v8703 = vunpack.c.h.b16 %v8024
        %v8704 = vunpack.c.l.b16 %v8025
        %v8705 = vunpack.c.h.b16 %v8025
        %v8706 = vunpack.c.l.b16 %v8026
        %v8707 = vunpack.c.h.b16 %v8026
        %v8708 = vunpack.c.l.b16 %v8027
        %v8709 = vunpack.c.h.b16 %v8027
        %v8710 = vunpack.c.l.b16 %v8028
        %v8711 = vunpack.c.h.b16 %v8028
        %v8712 = vunpack.c.l.b16 %v8029
        %v8713 = vunpack.c.h.b16 %v8029
        %v8714 = vunpack.c.l.b16 %v8030
        %v8715 = vunpack.c.h.b16 %v8030
        %v8716 = vunpack.c.l.b16 %v8031
        %v8717 = vunpack.c.h.b16 %v8031
        %v8718 = vunpack.c.l.b16 %v8032
        %v8719 = vunpack.c.h.b16 %v8032
        %v8720 = vunpack.c.l.b16 %v8033
        %v8721 = vunpack.c.h.b16 %v8033
        %v8722 = vunpack.c.l.b16 %v8034
        %v8723 = vunpack.c.h.b16 %v8034
        %v8724 = vunpack.c.l.b16 %v8035
        %v8725 = vunpack.c.h.b16 %v8035
        %v8726 = vunpack.c.l.b16 %v8036
        %v8727 = vunpack.c.h.b16 %v8036
        %v8728 = vunpack.c.l.b16 %v8037
        %v8729 = vunpack.c.h.b16 %v8037
        %v8730 = vunpack.c.l.b16 %v8038
        %v8731 = vunpack.c.h.b16 %v8038
        %v8732 = vunpack.c.l.b16 %v8039
        %v8733 = vunpack.c.h.b16 %v8039
        %v8734 = vunpack.c.l.b16 %v8040
        %v8735 = vunpack.c.h.b16 %v8040
        %v8736 = vunpack.c.l.b16 %v8041
        %v8737 = vunpack.c.h.b16 %v8041
        %v8738 = vunpack.c.l.b16 %v8042
        %v8739 = vunpack.c.h.b16 %v8042
        %v8740 = vunpack.c.l.b16 %v8043
        %v8741 = vunpack.c.h.b16 %v8043
        %v8742 = vunpack.c.l.b16 %v8044
        %v8743 = vunpack.c.h.b16 %v8044
        %v8744 = vunpack.c.l.b16 %v8045
        %v8745 = vunpack.c.h.b16 %v8045
        %v8746 = vunpack.c.l.b16 %v8046
        %v8747 = vunpack.c.h.b16 %v8046
        %v8748 = vunpack.c.l.b16 %v8047
        %v8749 = vunpack.c.h.b16 %v8047
        %v8750 = vunpack.c.l.b16 %v8048
        %v8751 = vunpack.c.h.b16 %v8048
        %v8752 = vunpack.c.l.b16 %v8049
        %v8753 = vunpack.c.h.b16 %v8049
        %v8754 = vunpack.c.l.b16 %v8050
        %v8755 = vunpack.c.h.b16 %v8050
        %v8756 = vunpack.c.l.b16 %v8051
        %v8757 = vunpack.c.h.b16 %v8051
        %v8758 = vunpack.c.l.b16 %v8052
        %v8759 = vunpack.c.h.b16 %v8052
        %v8760 = vunpack.c.l.b16 %v8053
        %v8761 = vunpack.c.h.b16 %v8053
        %v8762 = vunpack.c.l.b16 %v8054
        %v8763 = vunpack.c.h.b16 %v8054
        %v8764 = vunpack.c.l.b16 %v8055
        %v8765 = vunpack.c.h.b16 %v8055
        %v8766 = vunpack.c.l.b16 %v8056
        %v8767 = vunpack.c.h.b16 %v8056
        %v8768 = vunpack.c.l.b16 %v8057
        %v8769 = vunpack.c.h.b16 %v8057
        %v8770 = vunpack.c.l.b16 %v8058
        %v8771 = vunpack.c.h.b16 %v8058
        %v8772 = vunpack.c.l.b16 %v8059
        %v8773 = vunpack.c.h.b16 %v8059
        %v8774 = vunpack.c.l.b16 %v8060
        %v8775 = vunpack.c.h.b16 %v8060
        %v8776 = vunpack.c.l.b16 %v8061
        %v8777 = vunpack.c.h.b16 %v8061
        %v8778 = vunpack.c.l.b16 %v8062
        %v8779 = vunpack.c.h.b16 %v8062
        %v8780 = vunpack.c.l.b16 %v8063
        %v8781 = vunpack.c.h.b16 %v8063
        %v8782 = vunpack.c.l.b16 %v8064
        %v8783 = vunpack.c.h.b16 %v8064
        %v8784 = vunpack.c.l.b16 %v8065
        %v8785 = vunpack.c.h.b16 %v8065
        %v8786 = vunpack.c.l.b16 %v8066
        %v8787 = vunpack.c.h.b16 %v8066
        %v8788 = vunpack.c.l.b16 %v8067
        %v8789 = vunpack.c.h.b16 %v8067
        %v8790 = vunpack.c.l.b16 %v8068
        %v8791 = vunpack.c.h.b16 %v8068
        %v8792 = vunpack.c.l.b16 %v8069
        %v8793 = vunpack.c.h.b16 %v8069
        %v8794 = vunpack.c.l.b16 %v8070
        %v8795 = vunpack.c.h.b16 %v8070
        %v8796 = vunpack.c.l.b16 %v8071
        %v8797 = vunpack.c.h.b16 %v8071
        %v8798 = vunpack.c.l.b16 %v8072
        %v8799 = vunpack.c.h.b16 %v8072
        %v8800 = vunpack.c.l.b16 %v8073
        %v8801 = vunpack.c.h.b16 %v8073
        %v8802 = vunpack.c.l.b16 %v8074
        %v8803 = vunpack.c.h.b16 %v8074
        %v8804 = vunpack.c.l.b16 %v8075
        %v8805 = vunpack.c.h.b16 %v8075
        %v8806 = vunpack.c.l.b16 %v8076
        %v8807 = vunpack.c.h.b16 %v8076
        %v8808 = vunpack.c.l.b16 %v8077
        %v8809 = vunpack.c.h.b16 %v8077
        %v8810 = vunpack.c.l.b16 %v8078
        %v8811 = vunpack.c.h.b16 %v8078
        %v8812 = vunpack.c.l.b16 %v8079
        %v8813 = vunpack.c.h.b16 %v8079
        %v8814 = vunpack.c.l.b16 %v8080
        %v8815 = vunpack.c.h.b16 %v8080
        %v8816 = vunpack.c.l.b16 %v8081
        %v8817 = vunpack.c.h.b16 %v8081
        %v8818 = vunpack.c.l.b16 %v8082
        %v8819 = vunpack.c.h.b16 %v8082
        %v8820 = vunpack.c.l.b16 %v8083
        %v8821 = vunpack.c.h.b16 %v8083
        %v8822 = vunpack.c.l.b16 %v8084
        %v8823 = vunpack.c.h.b16 %v8084
        %v8824 = vunpack.c.l.b16 %v8085
        %v8825 = vunpack.c.h.b16 %v8085
        %v8826 = vunpack.c.l.b16 %v8086
        %v8827 = vunpack.c.h.b16 %v8086
        %v8828 = vunpack.c.l.b16 %v8087
        %v8829 = vunpack.c.h.b16 %v8087
        %v8830 = vunpack.c.l.b16 %v8088
        %v8831 = vunpack.c.h.b16 %v8088
        %v8832 = vunpack.c.l.b16 %v8089
        %v8833 = vunpack.c.h.b16 %v8089
        %v8834 = vunpack.c.l.b16 %v8090
        %v8835 = vunpack.c.h.b16 %v8090
        %v8836 = vunpack.c.l.b16 %v8091
        %v8837 = vunpack.c.h.b16 %v8091
        %v8838 = vunpack.c.l.b16 %v8092
        %v8839 = vunpack.c.h.b16 %v8092
        %v8840 = vunpack.c.l.b16 %v8093
        %v8841 = vunpack.c.h.b16 %v8093
        %v8842 = vunpack.c.l.b16 %v8094
        %v8843 = vunpack.c.h.b16 %v8094
        %v8844 = vunpack.c.l.b16 %v8095
        %v8845 = vunpack.c.h.b16 %v8095
        %v8846 = vunpack.c.l.b16 %v8096
        %v8847 = vunpack.c.h.b16 %v8096
        %v8848 = vunpack.c.l.b16 %v8097
        %v8849 = vunpack.c.h.b16 %v8097
        %v8850 = vunpack.c.l.b16 %v8098
        %v8851 = vunpack.c.h.b16 %v8098
        %v8852 = vunpack.c.l.b16 %v8099
        %v8853 = vunpack.c.h.b16 %v8099
        %v8854 = vunpack.c.l.b16 %v8100
        %v8855 = vunpack.c.h.b16 %v8100
        %v8856 = vunpack.c.l.b16 %v8101
        %v8857 = vunpack.c.h.b16 %v8101
        %v8858 = vunpack.c.l.b16 %v8102
        %v8859 = vunpack.c.h.b16 %v8102
        %v8860 = vunpack.c.l.b16 %v8103
        %v8861 = vunpack.c.h.b16 %v8103
        %v8862 = vunpack.c.l.b16 %v8104
        %v8863 = vunpack.c.h.b16 %v8104
        %v8864 = vunpack.c.l.b16 %v8105
        %v8865 = vunpack.c.h.b16 %v8105
        %v8866 = vunpack.c.l.b16 %v8106
        %v8867 = vunpack.c.h.b16 %v8106
        %v8868 = vunpack.c.l.b16 %v8107
        %v8869 = vunpack.c.h.b16 %v8107
        %v8870 = vunpack.c.l.b16 %v8108
        %v8871 = vunpack.c.h.b16 %v8108
        %v8872 = vunpack.c.l.b16 %v8109
        %v8873 = vunpack.c.h.b16 %v8109
        %v8874 = vunpack.c.l.b16 %v8110
        %v8875 = vunpack.c.h.b16 %v8110
        %v8876 = vunpack.c.l.b16 %v8111
        %v8877 = vunpack.c.h.b16 %v8111
        %v8878 = vunpack.c.l.b16 %v8112
        %v8879 = vunpack.c.h.b16 %v8112
        %v8880 = vunpack.c.l.b16 %v8113
        %v8881 = vunpack.c.h.b16 %v8113
        %v8882 = vunpack.c.l.b16 %v8114
        %v8883 = vunpack.c.h.b16 %v8114
        %v8884 = vunpack.c.l.b16 %v8115
        %v8885 = vunpack.c.h.b16 %v8115
        %v8886 = vunpack.c.l.b16 %v8116
        %v8887 = vunpack.c.h.b16 %v8116
        %v8888 = vunpack.c.l.b16 %v8117
        %v8889 = vunpack.c.h.b16 %v8117
        %v8890 = vunpack.c.l.b16 %v8118
        %v8891 = vunpack.c.h.b16 %v8118
        %v8892 = vunpack.c.l.b16 %v8119
        %v8893 = vunpack.c.h.b16 %v8119
        %v8894 = vunpack.c.l.b16 %v8120
        %v8895 = vunpack.c.h.b16 %v8120
        %v8896 = vunpack.c.l.b16 %v8121
        %v8897 = vunpack.c.h.b16 %v8121
        %v8898 = vunpack.c.l.b16 %v8122
        %v8899 = vunpack.c.h.b16 %v8122
        %v8900 = vunpack.c.l.b16 %v8123
        %v8901 = vunpack.c.h.b16 %v8123
        %v8902 = vunpack.c.l.b16 %v8124
        %v8903 = vunpack.c.h.b16 %v8124
        %v8904 = vunpack.c.l.b16 %v8125
        %v8905 = vunpack.c.h.b16 %v8125
        %v8906 = vunpack.c.l.b16 %v8126
        %v8907 = vunpack.c.h.b16 %v8126
        %v8908 = vunpack.c.l.b16 %v8127
        %v8909 = vunpack.c.h.b16 %v8127
        %v8910 = vunpack.c.l.b16 %v8128
        %v8911 = vunpack.c.h.b16 %v8128
        %v8912 = vunpack.c.l.b16 %v8129
        %v8913 = vunpack.c.h.b16 %v8129
        %v8914 = vpack.c.b16 %v8406, %v8402
        %v8915 = vpack.c.b16 %v8407, %v8403
        %v8916 = vpack.c.b16 %v8408, %v8404
        %v8917 = vpack.c.b16 %v8409, %v8405
        %v8918 = vpack.c.b16 %v8414, %v8410
        %v8919 = vpack.c.b16 %v8415, %v8411
        %v8920 = vpack.c.b16 %v8416, %v8412
        %v8921 = vpack.c.b16 %v8417, %v8413
        %v8922 = vpack.c.b16 %v8422, %v8418
        %v8923 = vpack.c.b16 %v8423, %v8419
        %v8924 = vpack.c.b16 %v8424, %v8420
        %v8925 = vpack.c.b16 %v8425, %v8421
        %v8926 = vpack.c.b16 %v8430, %v8426
        %v8927 = vpack.c.b16 %v8431, %v8427
        %v8928 = vpack.c.b16 %v8432, %v8428
        %v8929 = vpack.c.b16 %v8433, %v8429
        %v8930 = vpack.c.b16 %v8438, %v8434
        %v8931 = vpack.c.b16 %v8439, %v8435
        %v8932 = vpack.c.b16 %v8440, %v8436
        %v8933 = vpack.c.b16 %v8441, %v8437
        %v8934 = vpack.c.b16 %v8446, %v8442
        %v8935 = vpack.c.b16 %v8447, %v8443
        %v8936 = vpack.c.b16 %v8448, %v8444
        %v8937 = vpack.c.b16 %v8449, %v8445
        %v8938 = vpack.c.b16 %v8454, %v8450
        %v8939 = vpack.c.b16 %v8455, %v8451
        %v8940 = vpack.c.b16 %v8456, %v8452
        %v8941 = vpack.c.b16 %v8457, %v8453
        %v8942 = vpack.c.b16 %v8462, %v8458
        %v8943 = vpack.c.b16 %v8463, %v8459
        %v8944 = vpack.c.b16 %v8464, %v8460
        %v8945 = vpack.c.b16 %v8465, %v8461
        %v8946 = vpack.c.b16 %v8470, %v8466
        %v8947 = vpack.c.b16 %v8471, %v8467
        %v8948 = vpack.c.b16 %v8472, %v8468
        %v8949 = vpack.c.b16 %v8473, %v8469
        %v8950 = vpack.c.b16 %v8478, %v8474
        %v8951 = vpack.c.b16 %v8479, %v8475
        %v8952 = vpack.c.b16 %v8480, %v8476
        %v8953 = vpack.c.b16 %v8481, %v8477
        %v8954 = vpack.c.b16 %v8486, %v8482
        %v8955 = vpack.c.b16 %v8487, %v8483
        %v8956 = vpack.c.b16 %v8488, %v8484
        %v8957 = vpack.c.b16 %v8489, %v8485
        %v8958 = vpack.c.b16 %v8494, %v8490
        %v8959 = vpack.c.b16 %v8495, %v8491
        %v8960 = vpack.c.b16 %v8496, %v8492
        %v8961 = vpack.c.b16 %v8497, %v8493
        %v8962 = vpack.c.b16 %v8502, %v8498
        %v8963 = vpack.c.b16 %v8503, %v8499
        %v8964 = vpack.c.b16 %v8504, %v8500
        %v8965 = vpack.c.b16 %v8505, %v8501
        %v8966 = vpack.c.b16 %v8510, %v8506
        %v8967 = vpack.c.b16 %v8511, %v8507
        %v8968 = vpack.c.b16 %v8512, %v8508
        %v8969 = vpack.c.b16 %v8513, %v8509
        %v8970 = vpack.c.b16 %v8518, %v8514
        %v8971 = vpack.c.b16 %v8519, %v8515
        %v8972 = vpack.c.b16 %v8520, %v8516
        %v8973 = vpack.c.b16 %v8521, %v8517
        %v8974 = vpack.c.b16 %v8526, %v8522
        %v8975 = vpack.c.b16 %v8527, %v8523
        %v8976 = vpack.c.b16 %v8528, %v8524
        %v8977 = vpack.c.b16 %v8529, %v8525
        %v8978 = vpack.c.b16 %v8534, %v8530
        %v8979 = vpack.c.b16 %v8535, %v8531
        %v8980 = vpack.c.b16 %v8536, %v8532
        %v8981 = vpack.c.b16 %v8537, %v8533
        %v8982 = vpack.c.b16 %v8542, %v8538
        %v8983 = vpack.c.b16 %v8543, %v8539
        %v8984 = vpack.c.b16 %v8544, %v8540
        %v8985 = vpack.c.b16 %v8545, %v8541
        %v8986 = vpack.c.b16 %v8550, %v8546
        %v8987 = vpack.c.b16 %v8551, %v8547
        %v8988 = vpack.c.b16 %v8552, %v8548
        %v8989 = vpack.c.b16 %v8553, %v8549
        %v8990 = vpack.c.b16 %v8558, %v8554
        %v8991 = vpack.c.b16 %v8559, %v8555
        %v8992 = vpack.c.b16 %v8560, %v8556
        %v8993 = vpack.c.b16 %v8561, %v8557
        %v8994 = vpack.c.b16 %v8566, %v8562
        %v8995 = vpack.c.b16 %v8567, %v8563
        %v8996 = vpack.c.b16 %v8568, %v8564
        %v8997 = vpack.c.b16 %v8569, %v8565
        %v8998 = vpack.c.b16 %v8574, %v8570
        %v8999 = vpack.c.b16 %v8575, %v8571
        %v9000 = vpack.c.b16 %v8576, %v8572
        %v9001 = vpack.c.b16 %v8577, %v8573
        %v9002 = vpack.c.b16 %v8582, %v8578
        %v9003 = vpack.c.b16 %v8583, %v8579
        %v9004 = vpack.c.b16 %v8584, %v8580
        %v9005 = vpack.c.b16 %v8585, %v8581
        %v9006 = vpack.c.b16 %v8590, %v8586
        %v9007 = vpack.c.b16 %v8591, %v8587
        %v9008 = vpack.c.b16 %v8592, %v8588
        %v9009 = vpack.c.b16 %v8593, %v8589
        %v9010 = vpack.c.b16 %v8598, %v8594
        %v9011 = vpack.c.b16 %v8599, %v8595
        %v9012 = vpack.c.b16 %v8600, %v8596
        %v9013 = vpack.c.b16 %v8601, %v8597
        %v9014 = vpack.c.b16 %v8606, %v8602
        %v9015 = vpack.c.b16 %v8607, %v8603
        %v9016 = vpack.c.b16 %v8608, %v8604
        %v9017 = vpack.c.b16 %v8609, %v8605
        %v9018 = vpack.c.b16 %v8614, %v8610
        %v9019 = vpack.c.b16 %v8615, %v8611
        %v9020 = vpack.c.b16 %v8616, %v8612
        %v9021 = vpack.c.b16 %v8617, %v8613
        %v9022 = vpack.c.b16 %v8622, %v8618
        %v9023 = vpack.c.b16 %v8623, %v8619
        %v9024 = vpack.c.b16 %v8624, %v8620
        %v9025 = vpack.c.b16 %v8625, %v8621
        %v9026 = vpack.c.b16 %v8630, %v8626
        %v9027 = vpack.c.b16 %v8631, %v8627
        %v9028 = vpack.c.b16 %v8632, %v8628
        %v9029 = vpack.c.b16 %v8633, %v8629
        %v9030 = vpack.c.b16 %v8638, %v8634
        %v9031 = vpack.c.b16 %v8639, %v8635
        %v9032 = vpack.c.b16 %v8640, %v8636
        %v9033 = vpack.c.b16 %v8641, %v8637
        %v9034 = vpack.c.b16 %v8646, %v8642
        %v9035 = vpack.c.b16 %v8647, %v8643
        %v9036 = vpack.c.b16 %v8648, %v8644
        %v9037 = vpack.c.b16 %v8649, %v8645
        %v9038 = vpack.c.b16 %v8654, %v8650
        %v9039 = vpack.c.b16 %v8655, %v8651
        %v9040 = vpack.c.b16 %v8656, %v8652
        %v9041 = vpack.c.b16 %v8657, %v8653
        %v9042 = vpack.c.b16 %v8662, %v8658
        %v9043 = vpack.c.b16 %v8663, %v8659
        %v9044 = vpack.c.b16 %v8664, %v8660
        %v9045 = vpack.c.b16 %v8665, %v8661
        %v9046 = vpack.c.b16 %v8670, %v8666
        %v9047 = vpack.c.b16 %v8671, %v8667
        %v9048 = vpack.c.b16 %v8672, %v8668
        %v9049 = vpack.c.b16 %v8673, %v8669
        %v9050 = vpack.c.b16 %v8678, %v8674
        %v9051 = vpack.c.b16 %v8679, %v8675
        %v9052 = vpack.c.b16 %v8680, %v8676
        %v9053 = vpack.c.b16 %v8681, %v8677
        %v9054 = vpack.c.b16 %v8686, %v8682
        %v9055 = vpack.c.b16 %v8687, %v8683
        %v9056 = vpack.c.b16 %v8688, %v8684
        %v9057 = vpack.c.b16 %v8689, %v8685
        %v9058 = vpack.c.b16 %v8694, %v8690
        %v9059 = vpack.c.b16 %v8695, %v8691
        %v9060 = vpack.c.b16 %v8696, %v8692
        %v9061 = vpack.c.b16 %v8697, %v8693
        %v9062 = vpack.c.b16 %v8702, %v8698
        %v9063 = vpack.c.b16 %v8703, %v8699
        %v9064 = vpack.c.b16 %v8704, %v8700
        %v9065 = vpack.c.b16 %v8705, %v8701
        %v9066 = vpack.c.b16 %v8710, %v8706
        %v9067 = vpack.c.b16 %v8711, %v8707
        %v9068 = vpack.c.b16 %v8712, %v8708
        %v9069 = vpack.c.b16 %v8713, %v8709
        %v9070 = vpack.c.b16 %v8718, %v8714
        %v9071 = vpack.c.b16 %v8719, %v8715
        %v9072 = vpack.c.b16 %v8720, %v8716
        %v9073 = vpack.c.b16 %v8721, %v8717
        %v9074 = vpack.c.b16 %v8726, %v8722
        %v9075 = vpack.c.b16 %v8727, %v8723
        %v9076 = vpack.c.b16 %v8728, %v8724
        %v9077 = vpack.c.b16 %v8729, %v8725
        %v9078 = vpack.c.b16 %v8734, %v8730
        %v9079 = vpack.c.b16 %v8735, %v8731
        %v9080 = vpack.c.b16 %v8736, %v8732
        %v9081 = vpack.c.b16 %v8737, %v8733
        %v9082 = vpack.c.b16 %v8742, %v8738
        %v9083 = vpack.c.b16 %v8743, %v8739
        %v9084 = vpack.c.b16 %v8744, %v8740
        %v9085 = vpack.c.b16 %v8745, %v8741
        %v9086 = vpack.c.b16 %v8750, %v8746
        %v9087 = vpack.c.b16 %v8751, %v8747
        %v9088 = vpack.c.b16 %v8752, %v8748
        %v9089 = vpack.c.b16 %v8753, %v8749
        %v9090 = vpack.c.b16 %v8758, %v8754
        %v9091 = vpack.c.b16 %v8759, %v8755
        %v9092 = vpack.c.b16 %v8760, %v8756
        %v9093 = vpack.c.b16 %v8761, %v8757
        %v9094 = vpack.c.b16 %v8766, %v8762
        %v9095 = vpack.c.b16 %v8767, %v8763
        %v9096 = vpack.c.b16 %v8768, %v8764
        %v9097 = vpack.c.b16 %v8769, %v8765
        %v9098 = vpack.c.b16 %v8774, %v8770
        %v9099 = vpack.c.b16 %v8775, %v8771
        %v9100 = vpack.c.b16 %v8776, %v8772
        %v9101 = vpack.c.b16 %v8777, %v8773
        %v9102 = vpack.c.b16 %v8782, %v8778
        %v9103 = vpack.c.b16 %v8783, %v8779
        %v9104 = vpack.c.b16 %v8784, %v8780
        %v9105 = vpack.c.b16 %v8785, %v8781
        %v9106 = vpack.c.b16 %v8790, %v8786
        %v9107 = vpack.c.b16 %v8791, %v8787
        %v9108 = vpack.c.b16 %v8792, %v8788
        %v9109 = vpack.c.b16 %v8793, %v8789
        %v9110 = vpack.c.b16 %v8798, %v8794
        %v9111 = vpack.c.b16 %v8799, %v8795
        %v9112 = vpack.c.b16 %v8800, %v8796
        %v9113 = vpack.c.b16 %v8801, %v8797
        %v9114 = vpack.c.b16 %v8806, %v8802
        %v9115 = vpack.c.b16 %v8807, %v8803
        %v9116 = vpack.c.b16 %v8808, %v8804
        %v9117 = vpack.c.b16 %v8809, %v8805
        %v9118 = vpack.c.b16 %v8814, %v8810
        %v9119 = vpack.c.b16 %v8815, %v8811
        %v9120 = vpack.c.b16 %v8816, %v8812
        %v9121 = vpack.c.b16 %v8817, %v8813
        %v9122 = vpack.c.b16 %v8822, %v8818
        %v9123 = vpack.c.b16 %v8823, %v8819
        %v9124 = vpack.c.b16 %v8824, %v8820
        %v9125 = vpack.c.b16 %v8825, %v8821
        %v9126 = vpack.c.b16 %v8830, %v8826
        %v9127 = vpack.c.b16 %v8831, %v8827
        %v9128 = vpack.c.b16 %v8832, %v8828
        %v9129 = vpack.c.b16 %v8833, %v8829
        %v9130 = vpack.c.b16 %v8838, %v8834
        %v9131 = vpack.c.b16 %v8839, %v8835
        %v9132 = vpack.c.b16 %v8840, %v8836
        %v9133 = vpack.c.b16 %v8841, %v8837
        %v9134 = vpack.c.b16 %v8846, %v8842
        %v9135 = vpack.c.b16 %v8847, %v8843
        %v9136 = vpack.c.b16 %v8848, %v8844
        %v9137 = vpack.c.b16 %v8849, %v8845
        %v9138 = vpack.c.b16 %v8854, %v8850
        %v9139 = vpack.c.b16 %v8855, %v8851
        %v9140 = vpack.c.b16 %v8856, %v8852
        %v9141 = vpack.c.b16 %v8857, %v8853
        %v9142 = vpack.c.b16 %v8862, %v8858
        %v9143 = vpack.c.b16 %v8863, %v8859
        %v9144 = vpack.c.b16 %v8864, %v8860
        %v9145 = vpack.c.b16 %v8865, %v8861
        %v9146 = vpack.c.b16 %v8870, %v8866
        %v9147 = vpack.c.b16 %v8871, %v8867
        %v9148 = vpack.c.b16 %v8872, %v8868
        %v9149 = vpack.c.b16 %v8873, %v8869
        %v9150 = vpack.c.b16 %v8878, %v8874
        %v9151 = vpack.c.b16 %v8879, %v8875
        %v9152 = vpack.c.b16 %v8880, %v8876
        %v9153 = vpack.c.b16 %v8881, %v8877
        %v9154 = vpack.c.b16 %v8886, %v8882
        %v9155 = vpack.c.b16 %v8887, %v8883
        %v9156 = vpack.c.b16 %v8888, %v8884
        %v9157 = vpack.c.b16 %v8889, %v8885
        %v9158 = vpack.c.b16 %v8894, %v8890
        %v9159 = vpack.c.b16 %v8895, %v8891
        %v9160 = vpack.c.b16 %v8896, %v8892
        %v9161 = vpack.c.b16 %v8897, %v8893
        %v9162 = vpack.c.b16 %v8902, %v8898
        %v9163 = vpack.c.b16 %v8903, %v8899
        %v9164 = vpack.c.b16 %v8904, %v8900
        %v9165 = vpack.c.b16 %v8905, %v8901
        %v9166 = vpack.c.b16 %v8910, %v8906
        %v9167 = vpack.c.b16 %v8911, %v8907
        %v9168 = vpack.c.b16 %v8912, %v8908
        %v9169 = vpack.c.b16 %v8913, %v8909
        %9426 = vmatprep.subr.bf16.mxu0 %v8943
        %9427 = vmatpush1.bf16.msra.mxu0 %v8942
        %9428 = vmatprep.subr.bf16.mxu0 %v8939
        %9429 = vmatpush1.bf16.msra.mxu0 %v8938
        %9430 = vmatprep.subr.bf16.mxu0 %v8935
        %9431 = vmatpush1.bf16.msra.mxu0 %v8934
        %9432 = vmatprep.subr.bf16.mxu0 %v8931
        %9433 = vmatpush1.bf16.msra.mxu0 %v8930
        %9434 = vmatprep.subr.bf16.mxu0 %v8927
        %9435 = vmatpush1.bf16.msra.mxu0 %v8926
        %9436 = vmatprep.subr.bf16.mxu0 %v8923
        %9437 = vmatpush1.bf16.msra.mxu0 %v8922
        %9438 = vmatprep.subr.bf16.mxu0 %v8919
        %9439 = vmatpush1.bf16.msra.mxu0 %v8918
        %9440 = vmatprep.subr.bf16.mxu0 %v8915
        %9441 = vmatpush1.bf16.msra.mxu0 %v8914
        %9442 = vmatprep.subr.bf16.mxu0 %v8975
        %9443 = vmatpush2.bf16.msra.mxu0 %v8974
        %9444 = vmatprep.subr.bf16.mxu0 %v8971
        %9445 = vmatpush2.bf16.msra.mxu0 %v8970
        %9446 = vmatprep.subr.bf16.mxu0 %v8967
        %9447 = vmatpush2.bf16.msra.mxu0 %v8966
        %9448 = vmatprep.subr.bf16.mxu0 %v8963
        %9449 = vmatpush2.bf16.msra.mxu0 %v8962
        %9450 = vmatprep.subr.bf16.mxu0 %v8959
        %9451 = vmatpush2.bf16.msra.mxu0 %v8958
        %9452 = vmatprep.subr.bf16.mxu0 %v8955
        %9453 = vmatpush2.bf16.msra.mxu0 %v8954
        %9454 = vmatprep.subr.bf16.mxu0 %v8951
        %9455 = vmatpush2.bf16.msra.mxu0 %v8950
        %9456 = vmatprep.subr.bf16.mxu0 %v8947
        %9457 = vmatpush2.bf16.msra.mxu0 %v8946
        %9458 = vmatprep.mubr.bf16.mxu0 %v7859
        %9459 = vmatmul.mubr.bf16.gmra.mxu0 %v7858
        %v9460 = vpop.f32.mrf.mxu0
        %v9461 = vadd.f32 %v8133, %v9460
        %v9462 = vpop.f32.mrf.mxu0
        %v9463 = vadd.f32 %v8137, %v9462
        %v9464 = vpop.f32.mrf.mxu0
        %v9465 = vadd.f32 %v8133, %v9464
        %v9466 = vpop.f32.mrf.mxu0
        %v9467 = vadd.f32 %v8137, %v9466
        %9468 = vmatprep.mubr.bf16.mxu0 %v7867
        %9469 = vmatmul.mubr.bf16.gmra.mxu0 %v7866
        %v9470 = vpop.f32.mrf.mxu0
        %v9471 = vadd.f32 %v8133, %v9470
        %v9472 = vpop.f32.mrf.mxu0
        %v9473 = vadd.f32 %v8137, %v9472
        %v9474 = vpop.f32.mrf.mxu0
        %v9475 = vadd.f32 %v8133, %v9474
        %v9476 = vpop.f32.mrf.mxu0
        %v9477 = vadd.f32 %v8137, %v9476
        %9478 = vdwg.mxu0
        %9479 = vmatprep.subr.bf16.mxu0 %v9007
        %9480 = vmatpush1.bf16.msra.mxu0 %v9006
        %9481 = vmatprep.subr.bf16.mxu0 %v9003
        %9482 = vmatpush1.bf16.msra.mxu0 %v9002
        %9483 = vmatprep.subr.bf16.mxu0 %v8999
        %9484 = vmatpush1.bf16.msra.mxu0 %v8998
        %9485 = vmatprep.subr.bf16.mxu0 %v8995
        %9486 = vmatpush1.bf16.msra.mxu0 %v8994
        %9487 = vmatprep.subr.bf16.mxu0 %v8991
        %9488 = vmatpush1.bf16.msra.mxu0 %v8990
        %9489 = vmatprep.subr.bf16.mxu0 %v8987
        %9490 = vmatpush1.bf16.msra.mxu0 %v8986
        %9491 = vmatprep.subr.bf16.mxu0 %v8983
        %9492 = vmatpush1.bf16.msra.mxu0 %v8982
        %9493 = vmatprep.subr.bf16.mxu0 %v8979
        %9494 = vmatpush1.bf16.msra.mxu0 %v8978
        %9495 = vmatprep.subr.bf16.mxu0 %v9039
        %9496 = vmatpush2.bf16.msra.mxu0 %v9038
        %9497 = vmatprep.subr.bf16.mxu0 %v9035
        %9498 = vmatpush2.bf16.msra.mxu0 %v9034
        %9499 = vmatprep.subr.bf16.mxu0 %v9031
        %9500 = vmatpush2.bf16.msra.mxu0 %v9030
        %9501 = vmatprep.subr.bf16.mxu0 %v9027
        %9502 = vmatpush2.bf16.msra.mxu0 %v9026
        %9503 = vmatprep.subr.bf16.mxu0 %v9023
        %9504 = vmatpush2.bf16.msra.mxu0 %v9022
        %9505 = vmatprep.subr.bf16.mxu0 %v9019
        %9506 = vmatpush2.bf16.msra.mxu0 %v9018
        %9507 = vmatprep.subr.bf16.mxu0 %v9015
        %9508 = vmatpush2.bf16.msra.mxu0 %v9014
        %9509 = vmatprep.subr.bf16.mxu0 %v9011
        %9510 = vmatpush2.bf16.msra.mxu0 %v9010
        %9511 = vmatprep.mubr.bf16.mxu0 %v7861
        %9512 = vmatmul.mubr.bf16.gmra.mxu0 %v7860
        %v9513 = vpop.f32.mrf.mxu0
        %v9514 = vadd.f32 %v9461, %v9513
        %v9515 = vpop.f32.mrf.mxu0
        %v9516 = vadd.f32 %v9463, %v9515
        %v9517 = vpop.f32.mrf.mxu0
        %v9518 = vadd.f32 %v9465, %v9517
        %v9519 = vpop.f32.mrf.mxu0
        %v9520 = vadd.f32 %v9467, %v9519
        %9521 = vmatprep.mubr.bf16.mxu0 %v7869
        %9522 = vmatmul.mubr.bf16.gmra.mxu0 %v7868
        %v9523 = vpop.f32.mrf.mxu0
        %v9524 = vadd.f32 %v9471, %v9523
        %v9525 = vpop.f32.mrf.mxu0
        %v9526 = vadd.f32 %v9473, %v9525
        %v9527 = vpop.f32.mrf.mxu0
        %v9528 = vadd.f32 %v9475, %v9527
        %v9529 = vpop.f32.mrf.mxu0
        %v9530 = vadd.f32 %v9477, %v9529
        %9531 = vdwg.mxu0
        %9532 = vmatprep.subr.bf16.mxu0 %v9071
        %9533 = vmatpush1.bf16.msra.mxu0 %v9070
        %9534 = vmatprep.subr.bf16.mxu0 %v9067
        %9535 = vmatpush1.bf16.msra.mxu0 %v9066
        %9536 = vmatprep.subr.bf16.mxu0 %v9063
        %9537 = vmatpush1.bf16.msra.mxu0 %v9062
        %9538 = vmatprep.subr.bf16.mxu0 %v9059
        %9539 = vmatpush1.bf16.msra.mxu0 %v9058
        %9540 = vmatprep.subr.bf16.mxu0 %v9055
        %9541 = vmatpush1.bf16.msra.mxu0 %v9054
        %9542 = vmatprep.subr.bf16.mxu0 %v9051
        %9543 = vmatpush1.bf16.msra.mxu0 %v9050
        %9544 = vmatprep.subr.bf16.mxu0 %v9047
        %9545 = vmatpush1.bf16.msra.mxu0 %v9046
        %9546 = vmatprep.subr.bf16.mxu0 %v9043
        %9547 = vmatpush1.bf16.msra.mxu0 %v9042
        %9548 = vmatprep.subr.bf16.mxu0 %v9103
        %9549 = vmatpush2.bf16.msra.mxu0 %v9102
        %9550 = vmatprep.subr.bf16.mxu0 %v9099
        %9551 = vmatpush2.bf16.msra.mxu0 %v9098
        %9552 = vmatprep.subr.bf16.mxu0 %v9095
        %9553 = vmatpush2.bf16.msra.mxu0 %v9094
        %9554 = vmatprep.subr.bf16.mxu0 %v9091
        %9555 = vmatpush2.bf16.msra.mxu0 %v9090
        %9556 = vmatprep.subr.bf16.mxu0 %v9087
        %9557 = vmatpush2.bf16.msra.mxu0 %v9086
        %9558 = vmatprep.subr.bf16.mxu0 %v9083
        %9559 = vmatpush2.bf16.msra.mxu0 %v9082
        %9560 = vmatprep.subr.bf16.mxu0 %v9079
        %9561 = vmatpush2.bf16.msra.mxu0 %v9078
        %9562 = vmatprep.subr.bf16.mxu0 %v9075
        %9563 = vmatpush2.bf16.msra.mxu0 %v9074
        %9564 = vmatprep.mubr.bf16.mxu0 %v7863
        %9565 = vmatmul.mubr.bf16.gmra.mxu0 %v7862
        %v9566 = vpop.f32.mrf.mxu0
        %v9567 = vadd.f32 %v9514, %v9566
        %v9568 = vpop.f32.mrf.mxu0
        %v9569 = vadd.f32 %v9516, %v9568
        %v9570 = vpop.f32.mrf.mxu0
        %v9571 = vadd.f32 %v9518, %v9570
        %v9572 = vpop.f32.mrf.mxu0
        %v9573 = vadd.f32 %v9520, %v9572
        %9574 = vmatprep.mubr.bf16.mxu0 %v7871
        %9575 = vmatmul.mubr.bf16.gmra.mxu0 %v7870
        %v9576 = vpop.f32.mrf.mxu0
        %v9577 = vadd.f32 %v9524, %v9576
        %v9578 = vpop.f32.mrf.mxu0
        %v9579 = vadd.f32 %v9526, %v9578
        %v9580 = vpop.f32.mrf.mxu0
        %v9581 = vadd.f32 %v9528, %v9580
        %v9582 = vpop.f32.mrf.mxu0
        %v9583 = vadd.f32 %v9530, %v9582
        %9584 = vdwg.mxu0
        %9585 = vmatprep.subr.bf16.mxu0 %v9135
        %9586 = vmatpush1.bf16.msra.mxu0 %v9134
        %9587 = vmatprep.subr.bf16.mxu0 %v9131
        %9588 = vmatpush1.bf16.msra.mxu0 %v9130
        %9589 = vmatprep.subr.bf16.mxu0 %v9127
        %9590 = vmatpush1.bf16.msra.mxu0 %v9126
        %9591 = vmatprep.subr.bf16.mxu0 %v9123
        %9592 = vmatpush1.bf16.msra.mxu0 %v9122
        %9593 = vmatprep.subr.bf16.mxu0 %v9119
        %9594 = vmatpush1.bf16.msra.mxu0 %v9118
        %9595 = vmatprep.subr.bf16.mxu0 %v9115
        %9596 = vmatpush1.bf16.msra.mxu0 %v9114
        %9597 = vmatprep.subr.bf16.mxu0 %v9111
        %9598 = vmatpush1.bf16.msra.mxu0 %v9110
        %9599 = vmatprep.subr.bf16.mxu0 %v9107
        %9600 = vmatpush1.bf16.msra.mxu0 %v9106
        %9601 = vmatprep.subr.bf16.mxu0 %v9167
        %9602 = vmatpush2.bf16.msra.mxu0 %v9166
        %9603 = vmatprep.subr.bf16.mxu0 %v9163
        %9604 = vmatpush2.bf16.msra.mxu0 %v9162
        %9605 = vmatprep.subr.bf16.mxu0 %v9159
        %9606 = vmatpush2.bf16.msra.mxu0 %v9158
        %9607 = vmatprep.subr.bf16.mxu0 %v9155
        %9608 = vmatpush2.bf16.msra.mxu0 %v9154
        %9609 = vmatprep.subr.bf16.mxu0 %v9151
        %9610 = vmatpush2.bf16.msra.mxu0 %v9150
        %9611 = vmatprep.subr.bf16.mxu0 %v9147
        %9612 = vmatpush2.bf16.msra.mxu0 %v9146
        %9613 = vmatprep.subr.bf16.mxu0 %v9143
        %9614 = vmatpush2.bf16.msra.mxu0 %v9142
        %9615 = vmatprep.subr.bf16.mxu0 %v9139
        %9616 = vmatpush2.bf16.msra.mxu0 %v9138
        %9617 = vmatprep.mubr.bf16.mxu0 %v7865
        %9618 = vmatmul.mubr.bf16.gmra.mxu0 %v7864
        %v9619 = vpop.f32.mrf.mxu0
        %v9620 = vadd.f32 %v9567, %v9619
        %v9621 = vpop.f32.mrf.mxu0
        %v9622 = vadd.f32 %v9569, %v9621
        %v9623 = vpop.f32.mrf.mxu0
        %v9624 = vadd.f32 %v9571, %v9623
        %v9625 = vpop.f32.mrf.mxu0
        %v9626 = vadd.f32 %v9573, %v9625
        %9627 = vmatprep.mubr.bf16.mxu0 %v7873
        %9628 = vmatmul.mubr.bf16.gmra.mxu0 %v7872
        %v9629 = vpop.f32.mrf.mxu0
        %v9630 = vadd.f32 %v9577, %v9629
        %v9631 = vpop.f32.mrf.mxu0
        %v9632 = vadd.f32 %v9579, %v9631
        %v9633 = vpop.f32.mrf.mxu0
        %v9634 = vadd.f32 %v9581, %v9633
        %v9635 = vpop.f32.mrf.mxu0
        %v9636 = vadd.f32 %v9583, %v9635
        %9637 = vdwg.mxu0
        %9638 = vmatprep.subr.bf16.mxu0 %v8945
        %9639 = vmatpush1.bf16.msra.mxu0 %v8944
        %9640 = vmatprep.subr.bf16.mxu0 %v8941
        %9641 = vmatpush1.bf16.msra.mxu0 %v8940
        %9642 = vmatprep.subr.bf16.mxu0 %v8937
        %9643 = vmatpush1.bf16.msra.mxu0 %v8936
        %9644 = vmatprep.subr.bf16.mxu0 %v8933
        %9645 = vmatpush1.bf16.msra.mxu0 %v8932
        %9646 = vmatprep.subr.bf16.mxu0 %v8929
        %9647 = vmatpush1.bf16.msra.mxu0 %v8928
        %9648 = vmatprep.subr.bf16.mxu0 %v8925
        %9649 = vmatpush1.bf16.msra.mxu0 %v8924
        %9650 = vmatprep.subr.bf16.mxu0 %v8921
        %9651 = vmatpush1.bf16.msra.mxu0 %v8920
        %9652 = vmatprep.subr.bf16.mxu0 %v8917
        %9653 = vmatpush1.bf16.msra.mxu0 %v8916
        %9654 = vmatprep.subr.bf16.mxu0 %v8977
        %9655 = vmatpush2.bf16.msra.mxu0 %v8976
        %9656 = vmatprep.subr.bf16.mxu0 %v8973
        %9657 = vmatpush2.bf16.msra.mxu0 %v8972
        %9658 = vmatprep.subr.bf16.mxu0 %v8969
        %9659 = vmatpush2.bf16.msra.mxu0 %v8968
        %9660 = vmatprep.subr.bf16.mxu0 %v8965
        %9661 = vmatpush2.bf16.msra.mxu0 %v8964
        %9662 = vmatprep.subr.bf16.mxu0 %v8961
        %9663 = vmatpush2.bf16.msra.mxu0 %v8960
        %9664 = vmatprep.subr.bf16.mxu0 %v8957
        %9665 = vmatpush2.bf16.msra.mxu0 %v8956
        %9666 = vmatprep.subr.bf16.mxu0 %v8953
        %9667 = vmatpush2.bf16.msra.mxu0 %v8952
        %9668 = vmatprep.subr.bf16.mxu0 %v8949
        %9669 = vmatpush2.bf16.msra.mxu0 %v8948
        %9670 = vmatprep.mubr.bf16.mxu0 %v7859
        %9671 = vmatmul.mubr.bf16.gmra.mxu0 %v7858
        %v9672 = vpop.f32.mrf.mxu0
        %v9673 = vadd.f32 %v8141, %v9672
        %v9674 = vpop.f32.mrf.mxu0
        %v9675 = vadd.f32 %v8145, %v9674
        %v9676 = vpop.f32.mrf.mxu0
        %v9677 = vadd.f32 %v8141, %v9676
        %v9678 = vpop.f32.mrf.mxu0
        %v9679 = vadd.f32 %v8145, %v9678
        %9680 = vmatprep.mubr.bf16.mxu0 %v7867
        %9681 = vmatmul.mubr.bf16.gmra.mxu0 %v7866
        %v9682 = vpop.f32.mrf.mxu0
        %v9683 = vadd.f32 %v8141, %v9682
        %v9684 = vpop.f32.mrf.mxu0
        %v9685 = vadd.f32 %v8145, %v9684
        %v9686 = vpop.f32.mrf.mxu0
        %v9687 = vadd.f32 %v8141, %v9686
        %v9688 = vpop.f32.mrf.mxu0
        %v9689 = vadd.f32 %v8145, %v9688
        %9690 = vdwg.mxu0
        %9691 = vmatprep.subr.bf16.mxu0 %v9009
        %9692 = vmatpush1.bf16.msra.mxu0 %v9008
        %9693 = vmatprep.subr.bf16.mxu0 %v9005
        %9694 = vmatpush1.bf16.msra.mxu0 %v9004
        %9695 = vmatprep.subr.bf16.mxu0 %v9001
        %9696 = vmatpush1.bf16.msra.mxu0 %v9000
        %9697 = vmatprep.subr.bf16.mxu0 %v8997
        %9698 = vmatpush1.bf16.msra.mxu0 %v8996
        %9699 = vmatprep.subr.bf16.mxu0 %v8993
        %9700 = vmatpush1.bf16.msra.mxu0 %v8992
        %9701 = vmatprep.subr.bf16.mxu0 %v8989
        %9702 = vmatpush1.bf16.msra.mxu0 %v8988
        %9703 = vmatprep.subr.bf16.mxu0 %v8985
        %9704 = vmatpush1.bf16.msra.mxu0 %v8984
        %9705 = vmatprep.subr.bf16.mxu0 %v8981
        %9706 = vmatpush1.bf16.msra.mxu0 %v8980
        %9707 = vmatprep.subr.bf16.mxu0 %v9041
        %9708 = vmatpush2.bf16.msra.mxu0 %v9040
        %9709 = vmatprep.subr.bf16.mxu0 %v9037
        %9710 = vmatpush2.bf16.msra.mxu0 %v9036
        %9711 = vmatprep.subr.bf16.mxu0 %v9033
        %9712 = vmatpush2.bf16.msra.mxu0 %v9032
        %9713 = vmatprep.subr.bf16.mxu0 %v9029
        %9714 = vmatpush2.bf16.msra.mxu0 %v9028
        %9715 = vmatprep.subr.bf16.mxu0 %v9025
        %9716 = vmatpush2.bf16.msra.mxu0 %v9024
        %9717 = vmatprep.subr.bf16.mxu0 %v9021
        %9718 = vmatpush2.bf16.msra.mxu0 %v9020
        %9719 = vmatprep.subr.bf16.mxu0 %v9017
        %9720 = vmatpush2.bf16.msra.mxu0 %v9016
        %9721 = vmatprep.subr.bf16.mxu0 %v9013
        %9722 = vmatpush2.bf16.msra.mxu0 %v9012
        %9723 = vmatprep.mubr.bf16.mxu0 %v7861
        %9724 = vmatmul.mubr.bf16.gmra.mxu0 %v7860
        %v9725 = vpop.f32.mrf.mxu0
        %v9726 = vadd.f32 %v9673, %v9725
        %v9727 = vpop.f32.mrf.mxu0
        %v9728 = vadd.f32 %v9675, %v9727
        %v9729 = vpop.f32.mrf.mxu0
        %v9730 = vadd.f32 %v9677, %v9729
        %v9731 = vpop.f32.mrf.mxu0
        %v9732 = vadd.f32 %v9679, %v9731
        %9733 = vmatprep.mubr.bf16.mxu0 %v7869
        %9734 = vmatmul.mubr.bf16.gmra.mxu0 %v7868
        %v9735 = vpop.f32.mrf.mxu0
        %v9736 = vadd.f32 %v9683, %v9735
        %v9737 = vpop.f32.mrf.mxu0
        %v9738 = vadd.f32 %v9685, %v9737
        %v9739 = vpop.f32.mrf.mxu0
        %v9740 = vadd.f32 %v9687, %v9739
        %v9741 = vpop.f32.mrf.mxu0
        %v9742 = vadd.f32 %v9689, %v9741
        %9743 = vdwg.mxu0
        %9744 = vmatprep.subr.bf16.mxu0 %v9073
        %9745 = vmatpush1.bf16.msra.mxu0 %v9072
        %9746 = vmatprep.subr.bf16.mxu0 %v9069
        %9747 = vmatpush1.bf16.msra.mxu0 %v9068
        %9748 = vmatprep.subr.bf16.mxu0 %v9065
        %9749 = vmatpush1.bf16.msra.mxu0 %v9064
        %9750 = vmatprep.subr.bf16.mxu0 %v9061
        %9751 = vmatpush1.bf16.msra.mxu0 %v9060
        %9752 = vmatprep.subr.bf16.mxu0 %v9057
        %9753 = vmatpush1.bf16.msra.mxu0 %v9056
        %9754 = vmatprep.subr.bf16.mxu0 %v9053
        %9755 = vmatpush1.bf16.msra.mxu0 %v9052
        %9756 = vmatprep.subr.bf16.mxu0 %v9049
        %9757 = vmatpush1.bf16.msra.mxu0 %v9048
        %9758 = vmatprep.subr.bf16.mxu0 %v9045
        %9759 = vmatpush1.bf16.msra.mxu0 %v9044
        %9760 = vmatprep.subr.bf16.mxu0 %v9105
        %9761 = vmatpush2.bf16.msra.mxu0 %v9104
        %9762 = vmatprep.subr.bf16.mxu0 %v9101
        %9763 = vmatpush2.bf16.msra.mxu0 %v9100
        %9764 = vmatprep.subr.bf16.mxu0 %v9097
        %9765 = vmatpush2.bf16.msra.mxu0 %v9096
        %9766 = vmatprep.subr.bf16.mxu0 %v9093
        %9767 = vmatpush2.bf16.msra.mxu0 %v9092
        %9768 = vmatprep.subr.bf16.mxu0 %v9089
        %9769 = vmatpush2.bf16.msra.mxu0 %v9088
        %9770 = vmatprep.subr.bf16.mxu0 %v9085
        %9771 = vmatpush2.bf16.msra.mxu0 %v9084
        %9772 = vmatprep.subr.bf16.mxu0 %v9081
        %9773 = vmatpush2.bf16.msra.mxu0 %v9080
        %9774 = vmatprep.subr.bf16.mxu0 %v9077
        %9775 = vmatpush2.bf16.msra.mxu0 %v9076
        %9776 = vmatprep.mubr.bf16.mxu0 %v7863
        %9777 = vmatmul.mubr.bf16.gmra.mxu0 %v7862
        %v9778 = vpop.f32.mrf.mxu0
        %v9779 = vadd.f32 %v9726, %v9778
        %v9780 = vpop.f32.mrf.mxu0
        %v9781 = vadd.f32 %v9728, %v9780
        %v9782 = vpop.f32.mrf.mxu0
        %v9783 = vadd.f32 %v9730, %v9782
        %v9784 = vpop.f32.mrf.mxu0
        %v9785 = vadd.f32 %v9732, %v9784
        %9786 = vmatprep.mubr.bf16.mxu0 %v7871
        %9787 = vmatmul.mubr.bf16.gmra.mxu0 %v7870
        %v9788 = vpop.f32.mrf.mxu0
        %v9789 = vadd.f32 %v9736, %v9788
        %v9790 = vpop.f32.mrf.mxu0
        %v9791 = vadd.f32 %v9738, %v9790
        %v9792 = vpop.f32.mrf.mxu0
        %v9793 = vadd.f32 %v9740, %v9792
        %v9794 = vpop.f32.mrf.mxu0
        %v9795 = vadd.f32 %v9742, %v9794
        %9796 = vdwg.mxu0
        %9797 = vmatprep.subr.bf16.mxu0 %v9137
        %9798 = vmatpush1.bf16.msra.mxu0 %v9136
        %9799 = vmatprep.subr.bf16.mxu0 %v9133
        %9800 = vmatpush1.bf16.msra.mxu0 %v9132
        %9801 = vmatprep.subr.bf16.mxu0 %v9129
        %9802 = vmatpush1.bf16.msra.mxu0 %v9128
        %9803 = vmatprep.subr.bf16.mxu0 %v9125
        %9804 = vmatpush1.bf16.msra.mxu0 %v9124
        %9805 = vmatprep.subr.bf16.mxu0 %v9121
        %9806 = vmatpush1.bf16.msra.mxu0 %v9120
        %9807 = vmatprep.subr.bf16.mxu0 %v9117
        %9808 = vmatpush1.bf16.msra.mxu0 %v9116
        %9809 = vmatprep.subr.bf16.mxu0 %v9113
        %9810 = vmatpush1.bf16.msra.mxu0 %v9112
        %9811 = vmatprep.subr.bf16.mxu0 %v9109
        %9812 = vmatpush1.bf16.msra.mxu0 %v9108
        %9813 = vmatprep.subr.bf16.mxu0 %v9169
        %9814 = vmatpush2.bf16.msra.mxu0 %v9168
        %9815 = vmatprep.subr.bf16.mxu0 %v9165
        %9816 = vmatpush2.bf16.msra.mxu0 %v9164
        %9817 = vmatprep.subr.bf16.mxu0 %v9161
        %9818 = vmatpush2.bf16.msra.mxu0 %v9160
        %9819 = vmatprep.subr.bf16.mxu0 %v9157
        %9820 = vmatpush2.bf16.msra.mxu0 %v9156
        %9821 = vmatprep.subr.bf16.mxu0 %v9153
        %9822 = vmatpush2.bf16.msra.mxu0 %v9152
        %9823 = vmatprep.subr.bf16.mxu0 %v9149
        %9824 = vmatpush2.bf16.msra.mxu0 %v9148
        %9825 = vmatprep.subr.bf16.mxu0 %v9145
        %9826 = vmatpush2.bf16.msra.mxu0 %v9144
        %9827 = vmatprep.subr.bf16.mxu0 %v9141
        %9828 = vmatpush2.bf16.msra.mxu0 %v9140
        %9829 = vmatprep.mubr.bf16.mxu0 %v7865
        %9830 = vmatmul.mubr.bf16.gmra.mxu0 %v7864
        %v9831 = vpop.f32.mrf.mxu0
        %v9832 = vadd.f32 %v9779, %v9831
        %v9833 = vpop.f32.mrf.mxu0
        %v9834 = vadd.f32 %v9781, %v9833
        %v9835 = vpop.f32.mrf.mxu0
        %v9836 = vadd.f32 %v9783, %v9835
        %v9837 = vpop.f32.mrf.mxu0
        %v9838 = vadd.f32 %v9785, %v9837
        %9839 = vmatprep.mubr.bf16.mxu0 %v7873
        %9840 = vmatmul.mubr.bf16.gmra.mxu0 %v7872
        %v9841 = vpop.f32.mrf.mxu0
        %v9842 = vadd.f32 %v9789, %v9841
        %v9843 = vpop.f32.mrf.mxu0
        %v9844 = vadd.f32 %v9791, %v9843
        %v9845 = vpop.f32.mrf.mxu0
        %v9846 = vadd.f32 %v9793, %v9845
        %v9847 = vpop.f32.mrf.mxu0
        %v9848 = vadd.f32 %v9795, %v9847
        %9849 = vdwg.mxu0
        %v9850 = vadd.f32 %v9620, %v5377
        %v9851 = vadd.f32 %v9622, %v5378
        %v9852 = vadd.f32 %v9832, %v5379
        %v9853 = vadd.f32 %v9834, %v5380
        %v9854 = vadd.f32 %v9624, %v5381
        %v9855 = vadd.f32 %v9626, %v5382
        %v9856 = vadd.f32 %v9836, %v5383
        %v9857 = vadd.f32 %v9838, %v5384
        %v9858 = vadd.f32 %v9630, %v5385
        %v9859 = vadd.f32 %v9632, %v5386
        %v9860 = vadd.f32 %v9842, %v5387
        %v9861 = vadd.f32 %v9844, %v5388
        %v9862 = vadd.f32 %v9634, %v5389
        %v9863 = vadd.f32 %v9636, %v5390
        %v9864 = vadd.f32 %v9846, %v5391
        %v9865 = vadd.f32 %v9848, %v5392
        %9866 = vst [vmem:[%s407] sm:$0xff] %v9850
        %9867 = vst [vmem:[%s407 + $0x8] sm:$0xff] %v9851
        %9868 = vst [vmem:[%s407 + $0x10] sm:$0xff] %v9852
        %9869 = vst [vmem:[%s407 + $0x18] sm:$0xff] %v9853
        %9870 = vst [vmem:[%s407 + $0x20] sm:$0xff] %v9854
        %9871 = vst [vmem:[%s407 + $0x28] sm:$0xff] %v9855
        %9872 = vst [vmem:[%s407 + $0x30] sm:$0xff] %v9856
        %9873 = vst [vmem:[%s407 + $0x38] sm:$0xff] %v9857
        %9874 = vst [vmem:[%s407 + $0x40] sm:$0xff] %v9858
        %9875 = vst [vmem:[%s407 + $0x48] sm:$0xff] %v9859
        %9876 = vst [vmem:[%s407 + $0x50] sm:$0xff] %v9860
        %9877 = vst [vmem:[%s407 + $0x58] sm:$0xff] %v9861
        %9878 = vst [vmem:[%s407 + $0x60] sm:$0xff] %v9862
        %9879 = vst [vmem:[%s407 + $0x68] sm:$0xff] %v9863
        %9880 = vst [vmem:[%s407 + $0x70] sm:$0xff] %v9864
        %9881 = vst [vmem:[%s407 + $0x78] sm:$0xff] %v9865
        %s9882 = sand.u32 %s194, 1
        %s9883 = scalar_lea.sflag [#allocation4], %s9882
        %s9884 = sand.u32 %s194, 1
        %s9885 = smul.addr %s9884, 128
        %s9886 = scalar_lea.vmem [#allocation14], %s9885
        // Predicated region
        $region77: #{tpu_custom_call.1} parent=47 // pred_check
          %p9887 = pneg %p204
        $region78: #{tpu_custom_call.1} parent=47 // pred_check_branch
          %9889 = sbr.rel (%p9887) target = $region80
        $region79: #{tpu_custom_call.1} parent=47 // pred_region
          %s9890 = smul.u32 2, %s29
          %s9892 = ssub.s32 2048, 2048
          %9893 = vsyncadd %s9883, %s9892
          %s9894 = smul.addr %s9890, 8
          %s9895 = smul.addr %s9894, 128
          %s9896 = scalar_lea.hbm %s7, %s9895
          %s9897 = sshll.u32 %s9886, 4
          %s9898 = int_to_ptr.vmem [resolvable:$true] %s9897
          %9903 = dma.vmem_to_hbm [thread:$0]  %s9898, 2048, %s9896, %s9883, 512, 512, 32
        $region80: #{tpu_custom_call.1} parent=47 // pred_fallthru
          _
      $region48: #{tpu_custom_call.1} parent=5 // pred_fallthru
        _
      %p9904 = scmp.le.s32.totalorder 2, %s24
      // Predicated region
      $region81: #{tpu_custom_call.1} parent=5 // pred_check
        %p9905 = pneg %p9904
      $region82: #{tpu_custom_call.1} parent=5 // pred_check_branch
        %9907 = sbr.rel (%p9905) target = $region84
      $region83: #{tpu_custom_call.1} parent=5 // pred_region
        %s9908 = ssub.s32 %s24, 2
        // Predicated region
        $region85: #{tpu_custom_call.1} parent=83 // pred_check
          %p9909 = pneg %p210
        $region86: #{tpu_custom_call.1} parent=83 // pred_check_branch
          %9911 = sbr.rel (%p9909) target = $region88
        $region87: #{tpu_custom_call.1} parent=83 // pred_region
          %s9912 = sand.u32 %s195, 1
          %s9913 = scalar_lea.sflag [#allocation4], %s9912
          %s9914 = sand.u32 %s195, 1
          %s9915 = smul.addr %s9914, 128
          %s9916 = scalar_lea.vmem [#allocation14], %s9915
          %9917 = dma.done %s9913, 2048
        $region88: #{tpu_custom_call.1} parent=83 // pred_fallthru
          _
      $region84: #{tpu_custom_call.1} parent=5 // pred_fallthru
        _
    $region6: #{tpu_custom_call.1} parent=1 // loop_footer
      %s28 = sadd.s32 1, %s24
    $region7: #{tpu_custom_call.1} parent=1 // loop_footer_branch
      %23 = sbr.rel target = $region3
    $region8: #{tpu_custom_call.1} parent=1 // loop_exit
      _
    %9918 = vsyncpa [#allocation3], 1
    %s9919 = scalar_lea.sflag [#allocation3], 1
    %9920 = vsyncpa %s9919, 1
    %9921 = vsyncpa [#allocation6], 1
    %s9922 = scalar_lea.sflag [#allocation6], 1
    %9923 = vsyncpa %s9922, 1
    %9924 = vsyncpa [#allocation9], 1
    %9925 = vsyncpa [#allocation12], 1
    %9926 = vsyncpa [#allocation4], 1
    %s9927 = scalar_lea.sflag [#allocation4], 1
    %9928 = vsyncpa %s9927, 1

</llo_original>
